<compile_context>
chip_gen: v7x
topology: tpu7x:2x2x1
jax: 0.10.0
libtpu: 0.0.40
codegen_flags: <defaults>
</compile_context>

<pallas_src>
import functools

import jax
import jax.numpy as jnp
import numpy as np
from jax.experimental import pallas as pl
from jax.experimental.pallas import tpu as pltpu

# Halo interior starts at this sublane offset (multiple of 8) so that all
# stores into the padded scratch buffers are tile-aligned.
_PAD_L = 8


def _make_fused_kernel(num_layers, H, W):
    """Builds a kernel that runs `num_layers` fused 3x3 conv + ReLU layers."""

    def kernel(*refs):
        # refs = (x, w0, b0, ..., w_{L-1}, b_{L-1}, out, xin_pad, act_pad)
        x_ref = refs[0]
        wb_refs = refs[1:1 + 2 * num_layers]
        o_ref = refs[1 + 2 * num_layers]
        xin_pad = refs[2 + 2 * num_layers]   # (H+2, W+16, Cin)  compute dtype
        act_pad = refs[3 + 2 * num_layers]   # (H+2, W+16, Cout) compute dtype

        Cout = o_ref.shape[-1]

        # Build the zero halo in VMEM (replaces wrapper-side jnp.pad, which
        # was a full extra HBM read+write of the activation).
        xin_pad[...] = jnp.zeros_like(xin_pad)
        xin_pad[1:H + 1, _PAD_L:_PAD_L + W, :] = x_ref[0]   # aligned store

        cur = xin_pad
        for layer in range(num_layers):
            w_ref = wb_refs[2 * layer]        # (9, C_l, Cout)
            b_ref = wb_refs[2 * layer + 1]    # (1, Cout) f32
            C = cur.shape[-1]

            # 3x3 conv as 9 shifted (H*W, C) @ (C, Cout) matmuls, accumulated
            # in vregs — no VMEM accumulator read-modify-write passes.
            acc = None
            for kh in range(3):
                for kw in range(3):
                    tap = cur[kh:kh + H, _PAD_L - 1 + kw:_PAD_L - 1 + kw + W, :]
                    tap = tap.reshape(H * W, C)
                    part = jnp.dot(tap, w_ref[kh * 3 + kw],
                                   preferred_element_type=jnp.float32)
                    acc = part if acc is None else acc + part

            y = jnp.maximum(acc + b_ref[...], 0.0)    # bias + ReLU in f32

            if layer + 1 < num_layers:
                # Keep the intermediate activation resident in VMEM, padded
                # for the next layer (interior store is tile-aligned).
                if layer == 0:
                    act_pad[...] = jnp.zeros_like(act_pad)
                act_pad[1:H + 1, _PAD_L:_PAD_L + W, :] = (
                    y.reshape(H, W, Cout).astype(act_pad.dtype))
                cur = act_pad
            else:
                o_ref[...] = y.reshape(1, H, W, Cout).astype(o_ref.dtype)

    return kernel


def _prep_layer_params(w_oihw, b, compute_dtype):
    """PyTorch OIHW weight -> (9, Cin, Cout) tap-stacked; bias -> (1, Cout)."""
    c_out, c_in = w_oihw.shape[0], w_oihw.shape[1]
    w_taps = jnp.transpose(w_oihw, (2, 3, 1, 0)).reshape(9, c_in, c_out)
    return w_taps.astype(compute_dtype), b.reshape(1, c_out).astype(jnp.float32)


@functools.partial(jax.jit, static_argnames=("compute_dtype",))
def conv_block_forward(x_nchw, params, compute_dtype=jnp.float32):
    """ConvBlock.forward. x_nchw: (N, Cin, H, W) -> (N, Cout, H, W)."""
    N, Cin, H, W = x_nchw.shape
    num_layers = len(params)
    Cout = params[0][0].shape[0]

    # NCHW -> NHWC (channels on the TPU lane dim); cast once for bf16 compute.
    x_nhwc = jnp.transpose(x_nchw, (0, 2, 3, 1)).astype(compute_dtype)

    args = [x_nhwc]
    in_specs = [pl.BlockSpec((1, H, W, Cin), lambda n: (n, 0, 0, 0))]
    for w_oihw, b in params:
        c_l = w_oihw.shape[1]
        w_taps, b2 = _prep_layer_params(w_oihw, b, compute_dtype)
        args += [w_taps, b2]
        in_specs += [
            pl.BlockSpec((9, c_l, Cout), lambda n: (0, 0, 0)),
            pl.BlockSpec((1, Cout), lambda n: (0, 0)),
        ]

    w_halo = _PAD_L + W + 8   # left halo (8) + interior + right halo
    kernel = _make_fused_kernel(num_layers, H, W)

    out_nhwc = pl.pallas_call(
        kernel,
        out_shape=jax.ShapeDtypeStruct((N, H, W, Cout), jnp.float32),
        grid_spec=pltpu.PrefetchScalarGridSpec(
            num_scalar_prefetch=0,
            grid=(N,),
            in_specs=in_specs,
            out_specs=pl.BlockSpec((1, H, W, Cout), lambda n: (n, 0, 0, 0)),
            scratch_shapes=[
                pltpu.VMEM((H + 2, w_halo, Cin), compute_dtype),
                pltpu.VMEM((H + 2, w_halo, Cout), compute_dtype),
            ],
        ),
        compiler_params=pltpu.CompilerParams(
            dimension_semantics=("parallel",),     # batch axis -> megacore
            vmem_limit_bytes=48 * 1024 * 1024,     # raise scoped-VMEM cap
        ),
    )(*args)

    return jnp.transpose(out_nhwc, (0, 3, 1, 2))   # NHWC -> NCHW


def init_conv_block_params(key, in_channels, out_channels, num_layers):
    """Deterministic params. PyTorch Conv2d weight shape: (Cout, Cin, 3, 3)."""
    assert num_layers in (2, 3)
    params = []
    cin = in_channels
    for _ in range(num_layers):
        key, kw, kb = jax.random.split(key, 3)
        fan_in = cin * 3 * 3
        bound = 1.0 / np.sqrt(fan_in)
        w_oihw = jax.random.uniform(
            kw, (out_channels, cin, 3, 3), jnp.float32, -bound, bound)
        b = jax.random.uniform(kb, (out_channels,), jnp.float32, -bound, bound)
        params.append((w_oihw, b))
        cin = out_channels
    return params


def _reference_forward(x_nchw, params):
    x = x_nchw
    for w_oihw, b in params:
        x = jax.lax.conv_general_dilated(
            x, w_oihw, window_strides=(1, 1), padding=((1, 1), (1, 1)),
            dimension_numbers=("NCHW", "OIHW", "NCHW"))
        x = jax.nn.relu(x + b[None, :, None, None])
    return x


if __name__ == "__main__":
    key = jax.random.PRNGKey(0)
    k_x, k_p2, k_p3 = jax.random.split(key, 3)

    N, C_in, C_out, H, W = 2, 4, 8, 16, 16

    x = jax.random.normal(k_x, (N, C_in, H, W), jnp.float32)

    # 2-layer ConvBlock, f32 compute.
    params2 = init_conv_block_params(k_p2, C_in, C_out, 2)
    out = jax.block_until_ready(conv_block_forward(x, params2))
    ref = _reference_forward(x, params2)
    np.testing.assert_allclose(np.asarray(out), np.asarray(ref),
                               rtol=1e-4, atol=1e-4)
    assert out.shape == (N, C_out, H, W)

    # Same block on the bf16 MXU path (f32 accumulation / epilogue).
    out_bf16 = jax.block_until_ready(
        conv_block_forward(x, params2, compute_dtype=jnp.bfloat16))
    np.testing.assert_allclose(np.asarray(out_bf16), np.asarray(ref),
                               rtol=5e-2, atol=1e-1)

    # 3-layer ConvBlock variant (exercises the 3-layer fusion path).
    params3 = init_conv_block_params(k_p3, C_in, C_out, 3)
    out3 = jax.block_until_ready(conv_block_forward(x, params3))
    ref3 = _reference_forward(x, params3)
    np.testing.assert_allclose(np.asarray(out3), np.asarray(ref3),
                               rtol=1e-4, atol=1e-4)

    print("KERNEL_OK")
</pallas_src>

<mosaic_0001>
module attributes {stable_mosaic.version = 11 : i64} {
  func.func @kernel(%arg0: i32, %arg1: memref<1x16x16x4xf32, #tpu.memory_space<vmem>>, %arg2: memref<9x4x8xf32, #tpu.memory_space<vmem>>, %arg3: memref<1x8xf32, #tpu.memory_space<vmem>>, %arg4: memref<9x8x8xf32, #tpu.memory_space<vmem>>, %arg5: memref<1x8xf32, #tpu.memory_space<vmem>>, %arg6: memref<1x16x16x8xf32, #tpu.memory_space<vmem>>, %arg7: memref<18x32x4xf32, #tpu.memory_space<vmem>>, %arg8: memref<18x32x8xf32, #tpu.memory_space<vmem>>) attributes {dimension_semantics = [#tpu.dimension_semantics<parallel>], iteration_bounds = array<i64: 2>, scalar_prefetch = 0 : i64, scratch_operands = 2 : i64, tpu.core_type = #tpu.core_type<tc>, window_params = [{transform_indices = @transform_0, window_bounds = array<i64: 1, 16, 16, 4>}, {pipeline_mode = #tpu.pipeline_mode<synchronous>, transform_indices = @transform_1, window_bounds = array<i64: 9, 4, 8>}, {pipeline_mode = #tpu.pipeline_mode<synchronous>, transform_indices = @transform_2, window_bounds = array<i64: 1, 8>}, {pipeline_mode = #tpu.pipeline_mode<synchronous>, transform_indices = @transform_3, window_bounds = array<i64: 9, 8, 8>}, {pipeline_mode = #tpu.pipeline_mode<synchronous>, transform_indices = @transform_4, window_bounds = array<i64: 1, 8>}, {transform_indices = @transform_5, window_bounds = array<i64: 1, 16, 16, 8>}]} {
    %cst = arith.constant 0.000000e+00 : f32
    %0 = vector.broadcast %cst : f32 to vector<18x32x4xf32>
    %c0 = arith.constant 0 : index
    %c0_0 = arith.constant 0 : index
    %c0_1 = arith.constant 0 : index
    %1 = vector.load %arg7[%c0, %c0_0, %c0_1] : memref<18x32x4xf32, #tpu.memory_space<vmem>>, vector<18x32x4xf32>
    tpu.vector_store %arg7[%c0, %c0_0, %c0_1], %0 {strides = array<i32>} : memref<18x32x4xf32, #tpu.memory_space<vmem>>, vector<18x32x4xf32>,
    %c0_2 = arith.constant 0 : index
    %c0_3 = arith.constant 0 : index
    %c0_4 = arith.constant 0 : index
    %c0_5 = arith.constant 0 : index
    %2 = vector.load %arg1[%c0_2, %c0_3, %c0_4, %c0_5] : memref<1x16x16x4xf32, #tpu.memory_space<vmem>>, vector<1x16x16x4xf32>
    %3 = vector.shape_cast %2 : vector<1x16x16x4xf32> to vector<16x16x4xf32>
    %c1 = arith.constant 1 : index
    %c8 = arith.constant 8 : index
    %c0_6 = arith.constant 0 : index
    %4 = vector.load %arg7[%c1, %c8, %c0_6] : memref<18x32x4xf32, #tpu.memory_space<vmem>>, vector<16x16x4xf32>
    tpu.vector_store %arg7[%c1, %c8, %c0_6], %3 {strides = array<i32>} : memref<18x32x4xf32, #tpu.memory_space<vmem>>, vector<16x16x4xf32>,
    %c0_7 = arith.constant 0 : index
    %c7 = arith.constant 7 : index
    %c0_8 = arith.constant 0 : index
    %5 = vector.load %arg7[%c0_7, %c7, %c0_8] : memref<18x32x4xf32, #tpu.memory_space<vmem>>, vector<16x16x4xf32>
    %6 = vector.shape_cast %5 : vector<16x16x4xf32> to vector<256x4xf32>
    %c0_9 = arith.constant 0 : index
    %c0_10 = arith.constant 0 : index
    %c0_11 = arith.constant 0 : index
    %7 = vector.load %arg2[%c0_9, %c0_10, %c0_11] : memref<9x4x8xf32, #tpu.memory_space<vmem>>, vector<1x4x8xf32>
    %8 = vector.shape_cast %7 : vector<1x4x8xf32> to vector<4x8xf32>
    %cst_12 = arith.constant dense<0.000000e+00> : vector<256x8xf32>
    %9 = tpu.matmul %6, %8, %cst_12 {dimension_numbers = #tpu.dot_dimension_numbers<[1], [0], [0], [1], [0, 0, 1, 1], [], []>} : vector<256x4xf32>, vector<4x8xf32>, vector<256x8xf32> -> vector<256x8xf32>
    %c0_13 = arith.constant 0 : index
    %c8_14 = arith.constant 8 : index
    %c0_15 = arith.constant 0 : index
    %10 = vector.load %arg7[%c0_13, %c8_14, %c0_15] : memref<18x32x4xf32, #tpu.memory_space<vmem>>, vector<16x16x4xf32>
    %11 = vector.shape_cast %10 : vector<16x16x4xf32> to vector<256x4xf32>
    %c1_16 = arith.constant 1 : index
    %c0_17 = arith.constant 0 : index
    %c0_18 = arith.constant 0 : index
    %12 = vector.load %arg2[%c1_16, %c0_17, %c0_18] : memref<9x4x8xf32, #tpu.memory_space<vmem>>, vector<1x4x8xf32>
    %13 = vector.shape_cast %12 : vector<1x4x8xf32> to vector<4x8xf32>
    %cst_19 = arith.constant dense<0.000000e+00> : vector<256x8xf32>
    %14 = tpu.matmul %11, %13, %cst_19 {dimension_numbers = #tpu.dot_dimension_numbers<[1], [0], [0], [1], [0, 0, 1, 1], [], []>} : vector<256x4xf32>, vector<4x8xf32>, vector<256x8xf32> -> vector<256x8xf32>
    %15 = arith.addf %9, %14 : vector<256x8xf32>
    %c0_20 = arith.constant 0 : index
    %c9 = arith.constant 9 : index
    %c0_21 = arith.constant 0 : index
    %16 = vector.load %arg7[%c0_20, %c9, %c0_21] : memref<18x32x4xf32, #tpu.memory_space<vmem>>, vector<16x16x4xf32>
    %17 = vector.shape_cast %16 : vector<16x16x4xf32> to vector<256x4xf32>
    %c2 = arith.constant 2 : index
    %c0_22 = arith.constant 0 : index
    %c0_23 = arith.constant 0 : index
    %18 = vector.load %arg2[%c2, %c0_22, %c0_23] : memref<9x4x8xf32, #tpu.memory_space<vmem>>, vector<1x4x8xf32>
    %19 = vector.shape_cast %18 : vector<1x4x8xf32> to vector<4x8xf32>
    %cst_24 = arith.constant dense<0.000000e+00> : vector<256x8xf32>
    %20 = tpu.matmul %17, %19, %cst_24 {dimension_numbers = #tpu.dot_dimension_numbers<[1], [0], [0], [1], [0, 0, 1, 1], [], []>} : vector<256x4xf32>, vector<4x8xf32>, vector<256x8xf32> -> vector<256x8xf32>
    %21 = arith.addf %15, %20 : vector<256x8xf32>
    %c1_25 = arith.constant 1 : index
    %c7_26 = arith.constant 7 : index
    %c0_27 = arith.constant 0 : index
    %22 = vector.load %arg7[%c1_25, %c7_26, %c0_27] : memref<18x32x4xf32, #tpu.memory_space<vmem>>, vector<16x16x4xf32>
    %23 = vector.shape_cast %22 : vector<16x16x4xf32> to vector<256x4xf32>
    %c3 = arith.constant 3 : index
    %c0_28 = arith.constant 0 : index
    %c0_29 = arith.constant 0 : index
    %24 = vector.load %arg2[%c3, %c0_28, %c0_29] : memref<9x4x8xf32, #tpu.memory_space<vmem>>, vector<1x4x8xf32>
    %25 = vector.shape_cast %24 : vector<1x4x8xf32> to vector<4x8xf32>
    %cst_30 = arith.constant dense<0.000000e+00> : vector<256x8xf32>
    %26 = tpu.matmul %23, %25, %cst_30 {dimension_numbers = #tpu.dot_dimension_numbers<[1], [0], [0], [1], [0, 0, 1, 1], [], []>} : vector<256x4xf32>, vector<4x8xf32>, vector<256x8xf32> -> vector<256x8xf32>
    %27 = arith.addf %21, %26 : vector<256x8xf32>
    %c1_31 = arith.constant 1 : index
    %c8_32 = arith.constant 8 : index
    %c0_33 = arith.constant 0 : index
    %28 = vector.load %arg7[%c1_31, %c8_32, %c0_33] : memref<18x32x4xf32, #tpu.memory_space<vmem>>, vector<16x16x4xf32>
    %29 = vector.shape_cast %28 : vector<16x16x4xf32> to vector<256x4xf32>
    %c4 = arith.constant 4 : index
    %c0_34 = arith.constant 0 : index
    %c0_35 = arith.constant 0 : index
    %30 = vector.load %arg2[%c4, %c0_34, %c0_35] : memref<9x4x8xf32, #tpu.memory_space<vmem>>, vector<1x4x8xf32>
    %31 = vector.shape_cast %30 : vector<1x4x8xf32> to vector<4x8xf32>
    %cst_36 = arith.constant dense<0.000000e+00> : vector<256x8xf32>
    %32 = tpu.matmul %29, %31, %cst_36 {dimension_numbers = #tpu.dot_dimension_numbers<[1], [0], [0], [1], [0, 0, 1, 1], [], []>} : vector<256x4xf32>, vector<4x8xf32>, vector<256x8xf32> -> vector<256x8xf32>
    %33 = arith.addf %27, %32 : vector<256x8xf32>
    %c1_37 = arith.constant 1 : index
    %c9_38 = arith.constant 9 : index
    %c0_39 = arith.constant 0 : index
    %34 = vector.load %arg7[%c1_37, %c9_38, %c0_39] : memref<18x32x4xf32, #tpu.memory_space<vmem>>, vector<16x16x4xf32>
    %35 = vector.shape_cast %34 : vector<16x16x4xf32> to vector<256x4xf32>
    %c5 = arith.constant 5 : index
    %c0_40 = arith.constant 0 : index
    %c0_41 = arith.constant 0 : index
    %36 = vector.load %arg2[%c5, %c0_40, %c0_41] : memref<9x4x8xf32, #tpu.memory_space<vmem>>, vector<1x4x8xf32>
    %37 = vector.shape_cast %36 : vector<1x4x8xf32> to vector<4x8xf32>
    %cst_42 = arith.constant dense<0.000000e+00> : vector<256x8xf32>
    %38 = tpu.matmul %35, %37, %cst_42 {dimension_numbers = #tpu.dot_dimension_numbers<[1], [0], [0], [1], [0, 0, 1, 1], [], []>} : vector<256x4xf32>, vector<4x8xf32>, vector<256x8xf32> -> vector<256x8xf32>
    %39 = arith.addf %33, %38 : vector<256x8xf32>
    %c2_43 = arith.constant 2 : index
    %c7_44 = arith.constant 7 : index
    %c0_45 = arith.constant 0 : index
    %40 = vector.load %arg7[%c2_43, %c7_44, %c0_45] : memref<18x32x4xf32, #tpu.memory_space<vmem>>, vector<16x16x4xf32>
    %41 = vector.shape_cast %40 : vector<16x16x4xf32> to vector<256x4xf32>
    %c6 = arith.constant 6 : index
    %c0_46 = arith.constant 0 : index
    %c0_47 = arith.constant 0 : index
    %42 = vector.load %arg2[%c6, %c0_46, %c0_47] : memref<9x4x8xf32, #tpu.memory_space<vmem>>, vector<1x4x8xf32>
    %43 = vector.shape_cast %42 : vector<1x4x8xf32> to vector<4x8xf32>
    %cst_48 = arith.constant dense<0.000000e+00> : vector<256x8xf32>
    %44 = tpu.matmul %41, %43, %cst_48 {dimension_numbers = #tpu.dot_dimension_numbers<[1], [0], [0], [1], [0, 0, 1, 1], [], []>} : vector<256x4xf32>, vector<4x8xf32>, vector<256x8xf32> -> vector<256x8xf32>
    %45 = arith.addf %39, %44 : vector<256x8xf32>
    %c2_49 = arith.constant 2 : index
    %c8_50 = arith.constant 8 : index
    %c0_51 = arith.constant 0 : index
    %46 = vector.load %arg7[%c2_49, %c8_50, %c0_51] : memref<18x32x4xf32, #tpu.memory_space<vmem>>, vector<16x16x4xf32>
    %47 = vector.shape_cast %46 : vector<16x16x4xf32> to vector<256x4xf32>
    %c7_52 = arith.constant 7 : index
    %c0_53 = arith.constant 0 : index
    %c0_54 = arith.constant 0 : index
    %48 = vector.load %arg2[%c7_52, %c0_53, %c0_54] : memref<9x4x8xf32, #tpu.memory_space<vmem>>, vector<1x4x8xf32>
    %49 = vector.shape_cast %48 : vector<1x4x8xf32> to vector<4x8xf32>
    %cst_55 = arith.constant dense<0.000000e+00> : vector<256x8xf32>
    %50 = tpu.matmul %47, %49, %cst_55 {dimension_numbers = #tpu.dot_dimension_numbers<[1], [0], [0], [1], [0, 0, 1, 1], [], []>} : vector<256x4xf32>, vector<4x8xf32>, vector<256x8xf32> -> vector<256x8xf32>
    %51 = arith.addf %45, %50 : vector<256x8xf32>
    %c2_56 = arith.constant 2 : index
    %c9_57 = arith.constant 9 : index
    %c0_58 = arith.constant 0 : index
    %52 = vector.load %arg7[%c2_56, %c9_57, %c0_58] : memref<18x32x4xf32, #tpu.memory_space<vmem>>, vector<16x16x4xf32>
    %53 = vector.shape_cast %52 : vector<16x16x4xf32> to vector<256x4xf32>
    %c8_59 = arith.constant 8 : index
    %c0_60 = arith.constant 0 : index
    %c0_61 = arith.constant 0 : index
    %54 = vector.load %arg2[%c8_59, %c0_60, %c0_61] : memref<9x4x8xf32, #tpu.memory_space<vmem>>, vector<1x4x8xf32>
    %55 = vector.shape_cast %54 : vector<1x4x8xf32> to vector<4x8xf32>
    %cst_62 = arith.constant dense<0.000000e+00> : vector<256x8xf32>
    %56 = tpu.matmul %53, %55, %cst_62 {dimension_numbers = #tpu.dot_dimension_numbers<[1], [0], [0], [1], [0, 0, 1, 1], [], []>} : vector<256x4xf32>, vector<4x8xf32>, vector<256x8xf32> -> vector<256x8xf32>
    %57 = arith.addf %51, %56 : vector<256x8xf32>
    %c0_63 = arith.constant 0 : index
    %c0_64 = arith.constant 0 : index
    %58 = vector.load %arg3[%c0_63, %c0_64] : memref<1x8xf32, #tpu.memory_space<vmem>>, vector<1x8xf32>
    %59 = vector.broadcast %58 : vector<1x8xf32> to vector<256x8xf32>
    %60 = arith.addf %57, %59 : vector<256x8xf32>
    %cst_65 = arith.constant 0.000000e+00 : f32
    %61 = vector.broadcast %cst_65 : f32 to vector<256x8xf32>
    %62 = arith.maximumf %60, %61 : vector<256x8xf32>
    %cst_66 = arith.constant 0.000000e+00 : f32
    %63 = vector.broadcast %cst_66 : f32 to vector<18x32x8xf32>
    %c0_67 = arith.constant 0 : index
    %c0_68 = arith.constant 0 : index
    %c0_69 = arith.constant 0 : index
    %64 = vector.load %arg8[%c0_67, %c0_68, %c0_69] : memref<18x32x8xf32, #tpu.memory_space<vmem>>, vector<18x32x8xf32>
    tpu.vector_store %arg8[%c0_67, %c0_68, %c0_69], %63 {strides = array<i32>} : memref<18x32x8xf32, #tpu.memory_space<vmem>>, vector<18x32x8xf32>,
    %65 = vector.shape_cast %62 : vector<256x8xf32> to vector<16x16x8xf32>
    %c1_70 = arith.constant 1 : index
    %c8_71 = arith.constant 8 : index
    %c0_72 = arith.constant 0 : index
    %66 = vector.load %arg8[%c1_70, %c8_71, %c0_72] : memref<18x32x8xf32, #tpu.memory_space<vmem>>, vector<16x16x8xf32>
    tpu.vector_store %arg8[%c1_70, %c8_71, %c0_72], %65 {strides = array<i32>} : memref<18x32x8xf32, #tpu.memory_space<vmem>>, vector<16x16x8xf32>,
    %c0_73 = arith.constant 0 : index
    %c7_74 = arith.constant 7 : index
    %c0_75 = arith.constant 0 : index
    %67 = vector.load %arg8[%c0_73, %c7_74, %c0_75] : memref<18x32x8xf32, #tpu.memory_space<vmem>>, vector<16x16x8xf32>
    %68 = vector.shape_cast %67 : vector<16x16x8xf32> to vector<256x8xf32>
    %c0_76 = arith.constant 0 : index
    %c0_77 = arith.constant 0 : index
    %c0_78 = arith.constant 0 : index
    %69 = vector.load %arg4[%c0_76, %c0_77, %c0_78] : memref<9x8x8xf32, #tpu.memory_space<vmem>>, vector<1x8x8xf32>
    %70 = vector.shape_cast %69 : vector<1x8x8xf32> to vector<8x8xf32>
    %cst_79 = arith.constant dense<0.000000e+00> : vector<256x8xf32>
    %71 = tpu.matmul %68, %70, %cst_79 {dimension_numbers = #tpu.dot_dimension_numbers<[1], [0], [0], [1], [0, 0, 1, 1], [], []>} : vector<256x8xf32>, vector<8x8xf32>, vector<256x8xf32> -> vector<256x8xf32>
    %c0_80 = arith.constant 0 : index
    %c8_81 = arith.constant 8 : index
    %c0_82 = arith.constant 0 : index
    %72 = vector.load %arg8[%c0_80, %c8_81, %c0_82] : memref<18x32x8xf32, #tpu.memory_space<vmem>>, vector<16x16x8xf32>
    %73 = vector.shape_cast %72 : vector<16x16x8xf32> to vector<256x8xf32>
    %c1_83 = arith.constant 1 : index
    %c0_84 = arith.constant 0 : index
    %c0_85 = arith.constant 0 : index
    %74 = vector.load %arg4[%c1_83, %c0_84, %c0_85] : memref<9x8x8xf32, #tpu.memory_space<vmem>>, vector<1x8x8xf32>
    %75 = vector.shape_cast %74 : vector<1x8x8xf32> to vector<8x8xf32>
    %cst_86 = arith.constant dense<0.000000e+00> : vector<256x8xf32>
    %76 = tpu.matmul %73, %75, %cst_86 {dimension_numbers = #tpu.dot_dimension_numbers<[1], [0], [0], [1], [0, 0, 1, 1], [], []>} : vector<256x8xf32>, vector<8x8xf32>, vector<256x8xf32> -> vector<256x8xf32>
    %77 = arith.addf %71, %76 : vector<256x8xf32>
    %c0_87 = arith.constant 0 : index
    %c9_88 = arith.constant 9 : index
    %c0_89 = arith.constant 0 : index
    %78 = vector.load %arg8[%c0_87, %c9_88, %c0_89] : memref<18x32x8xf32, #tpu.memory_space<vmem>>, vector<16x16x8xf32>
    %79 = vector.shape_cast %78 : vector<16x16x8xf32> to vector<256x8xf32>
    %c2_90 = arith.constant 2 : index
    %c0_91 = arith.constant 0 : index
    %c0_92 = arith.constant 0 : index
    %80 = vector.load %arg4[%c2_90, %c0_91, %c0_92] : memref<9x8x8xf32, #tpu.memory_space<vmem>>, vector<1x8x8xf32>
    %81 = vector.shape_cast %80 : vector<1x8x8xf32> to vector<8x8xf32>
    %cst_93 = arith.constant dense<0.000000e+00> : vector<256x8xf32>
    %82 = tpu.matmul %79, %81, %cst_93 {dimension_numbers = #tpu.dot_dimension_numbers<[1], [0], [0], [1], [0, 0, 1, 1], [], []>} : vector<256x8xf32>, vector<8x8xf32>, vector<256x8xf32> -> vector<256x8xf32>
    %83 = arith.addf %77, %82 : vector<256x8xf32>
    %c1_94 = arith.constant 1 : index
    %c7_95 = arith.constant 7 : index
    %c0_96 = arith.constant 0 : index
    %84 = vector.load %arg8[%c1_94, %c7_95, %c0_96] : memref<18x32x8xf32, #tpu.memory_space<vmem>>, vector<16x16x8xf32>
    %85 = vector.shape_cast %84 : vector<16x16x8xf32> to vector<256x8xf32>
    %c3_97 = arith.constant 3 : index
    %c0_98 = arith.constant 0 : index
    %c0_99 = arith.constant 0 : index
    %86 = vector.load %arg4[%c3_97, %c0_98, %c0_99] : memref<9x8x8xf32, #tpu.memory_space<vmem>>, vector<1x8x8xf32>
    %87 = vector.shape_cast %86 : vector<1x8x8xf32> to vector<8x8xf32>
    %cst_100 = arith.constant dense<0.000000e+00> : vector<256x8xf32>
    %88 = tpu.matmul %85, %87, %cst_100 {dimension_numbers = #tpu.dot_dimension_numbers<[1], [0], [0], [1], [0, 0, 1, 1], [], []>} : vector<256x8xf32>, vector<8x8xf32>, vector<256x8xf32> -> vector<256x8xf32>
    %89 = arith.addf %83, %88 : vector<256x8xf32>
    %c1_101 = arith.constant 1 : index
    %c8_102 = arith.constant 8 : index
    %c0_103 = arith.constant 0 : index
    %90 = vector.load %arg8[%c1_101, %c8_102, %c0_103] : memref<18x32x8xf32, #tpu.memory_space<vmem>>, vector<16x16x8xf32>
    %91 = vector.shape_cast %90 : vector<16x16x8xf32> to vector<256x8xf32>
    %c4_104 = arith.constant 4 : index
    %c0_105 = arith.constant 0 : index
    %c0_106 = arith.constant 0 : index
    %92 = vector.load %arg4[%c4_104, %c0_105, %c0_106] : memref<9x8x8xf32, #tpu.memory_space<vmem>>, vector<1x8x8xf32>
    %93 = vector.shape_cast %92 : vector<1x8x8xf32> to vector<8x8xf32>
    %cst_107 = arith.constant dense<0.000000e+00> : vector<256x8xf32>
    %94 = tpu.matmul %91, %93, %cst_107 {dimension_numbers = #tpu.dot_dimension_numbers<[1], [0], [0], [1], [0, 0, 1, 1], [], []>} : vector<256x8xf32>, vector<8x8xf32>, vector<256x8xf32> -> vector<256x8xf32>
    %95 = arith.addf %89, %94 : vector<256x8xf32>
    %c1_108 = arith.constant 1 : index
    %c9_109 = arith.constant 9 : index
    %c0_110 = arith.constant 0 : index
    %96 = vector.load %arg8[%c1_108, %c9_109, %c0_110] : memref<18x32x8xf32, #tpu.memory_space<vmem>>, vector<16x16x8xf32>
    %97 = vector.shape_cast %96 : vector<16x16x8xf32> to vector<256x8xf32>
    %c5_111 = arith.constant 5 : index
    %c0_112 = arith.constant 0 : index
    %c0_113 = arith.constant 0 : index
    %98 = vector.load %arg4[%c5_111, %c0_112, %c0_113] : memref<9x8x8xf32, #tpu.memory_space<vmem>>, vector<1x8x8xf32>
    %99 = vector.shape_cast %98 : vector<1x8x8xf32> to vector<8x8xf32>
    %cst_114 = arith.constant dense<0.000000e+00> : vector<256x8xf32>
    %100 = tpu.matmul %97, %99, %cst_114 {dimension_numbers = #tpu.dot_dimension_numbers<[1], [0], [0], [1], [0, 0, 1, 1], [], []>} : vector<256x8xf32>, vector<8x8xf32>, vector<256x8xf32> -> vector<256x8xf32>
    %101 = arith.addf %95, %100 : vector<256x8xf32>
    %c2_115 = arith.constant 2 : index
    %c7_116 = arith.constant 7 : index
    %c0_117 = arith.constant 0 : index
    %102 = vector.load %arg8[%c2_115, %c7_116, %c0_117] : memref<18x32x8xf32, #tpu.memory_space<vmem>>, vector<16x16x8xf32>
    %103 = vector.shape_cast %102 : vector<16x16x8xf32> to vector<256x8xf32>
    %c6_118 = arith.constant 6 : index
    %c0_119 = arith.constant 0 : index
    %c0_120 = arith.constant 0 : index
    %104 = vector.load %arg4[%c6_118, %c0_119, %c0_120] : memref<9x8x8xf32, #tpu.memory_space<vmem>>, vector<1x8x8xf32>
    %105 = vector.shape_cast %104 : vector<1x8x8xf32> to vector<8x8xf32>
    %cst_121 = arith.constant dense<0.000000e+00> : vector<256x8xf32>
    %106 = tpu.matmul %103, %105, %cst_121 {dimension_numbers = #tpu.dot_dimension_numbers<[1], [0], [0], [1], [0, 0, 1, 1], [], []>} : vector<256x8xf32>, vector<8x8xf32>, vector<256x8xf32> -> vector<256x8xf32>
    %107 = arith.addf %101, %106 : vector<256x8xf32>
    %c2_122 = arith.constant 2 : index
    %c8_123 = arith.constant 8 : index
    %c0_124 = arith.constant 0 : index
    %108 = vector.load %arg8[%c2_122, %c8_123, %c0_124] : memref<18x32x8xf32, #tpu.memory_space<vmem>>, vector<16x16x8xf32>
    %109 = vector.shape_cast %108 : vector<16x16x8xf32> to vector<256x8xf32>
    %c7_125 = arith.constant 7 : index
    %c0_126 = arith.constant 0 : index
    %c0_127 = arith.constant 0 : index
    %110 = vector.load %arg4[%c7_125, %c0_126, %c0_127] : memref<9x8x8xf32, #tpu.memory_space<vmem>>, vector<1x8x8xf32>
    %111 = vector.shape_cast %110 : vector<1x8x8xf32> to vector<8x8xf32>
    %cst_128 = arith.constant dense<0.000000e+00> : vector<256x8xf32>
    %112 = tpu.matmul %109, %111, %cst_128 {dimension_numbers = #tpu.dot_dimension_numbers<[1], [0], [0], [1], [0, 0, 1, 1], [], []>} : vector<256x8xf32>, vector<8x8xf32>, vector<256x8xf32> -> vector<256x8xf32>
    %113 = arith.addf %107, %112 : vector<256x8xf32>
    %c2_129 = arith.constant 2 : index
    %c9_130 = arith.constant 9 : index
    %c0_131 = arith.constant 0 : index
    %114 = vector.load %arg8[%c2_129, %c9_130, %c0_131] : memref<18x32x8xf32, #tpu.memory_space<vmem>>, vector<16x16x8xf32>
    %115 = vector.shape_cast %114 : vector<16x16x8xf32> to vector<256x8xf32>
    %c8_132 = arith.constant 8 : index
    %c0_133 = arith.constant 0 : index
    %c0_134 = arith.constant 0 : index
    %116 = vector.load %arg4[%c8_132, %c0_133, %c0_134] : memref<9x8x8xf32, #tpu.memory_space<vmem>>, vector<1x8x8xf32>
    %117 = vector.shape_cast %116 : vector<1x8x8xf32> to vector<8x8xf32>
    %cst_135 = arith.constant dense<0.000000e+00> : vector<256x8xf32>
    %118 = tpu.matmul %115, %117, %cst_135 {dimension_numbers = #tpu.dot_dimension_numbers<[1], [0], [0], [1], [0, 0, 1, 1], [], []>} : vector<256x8xf32>, vector<8x8xf32>, vector<256x8xf32> -> vector<256x8xf32>
    %119 = arith.addf %113, %118 : vector<256x8xf32>
    %c0_136 = arith.constant 0 : index
    %c0_137 = arith.constant 0 : index
    %120 = vector.load %arg5[%c0_136, %c0_137] : memref<1x8xf32, #tpu.memory_space<vmem>>, vector<1x8xf32>
    %121 = vector.broadcast %120 : vector<1x8xf32> to vector<256x8xf32>
    %122 = arith.addf %119, %121 : vector<256x8xf32>
    %cst_138 = arith.constant 0.000000e+00 : f32
    %123 = vector.broadcast %cst_138 : f32 to vector<256x8xf32>
    %124 = arith.maximumf %122, %123 : vector<256x8xf32>
    %125 = vector.shape_cast %124 : vector<256x8xf32> to vector<1x16x16x8xf32>
    %c0_139 = arith.constant 0 : index
    %c0_140 = arith.constant 0 : index
    %c0_141 = arith.constant 0 : index
    %c0_142 = arith.constant 0 : index
    %126 = vector.load %arg6[%c0_139, %c0_140, %c0_141, %c0_142] : memref<1x16x16x8xf32, #tpu.memory_space<vmem>>, vector<1x16x16x8xf32>
    tpu.vector_store %arg6[%c0_139, %c0_140, %c0_141, %c0_142], %125 {strides = array<i32>} : memref<1x16x16x8xf32, #tpu.memory_space<vmem>>, vector<1x16x16x8xf32>,
    return
  }
  func.func @transform_0(%arg0: i32) -> (i32, i32, i32, i32) {
    %c0_i32 = arith.constant 0 : i32
    %c0_i32_0 = arith.constant 0 : i32
    %c0_i32_1 = arith.constant 0 : i32
    %c0_i32_2 = arith.constant 0 : i32
    return %arg0, %c0_i32, %c0_i32_0, %c0_i32_1 : i32, i32, i32, i32
  }
  func.func @transform_1(%arg0: i32) -> (i32, i32, i32) {
    %c0_i32 = arith.constant 0 : i32
    %c0_i32_0 = arith.constant 0 : i32
    %c0_i32_1 = arith.constant 0 : i32
    %c0_i32_2 = arith.constant 0 : i32
    return %c0_i32, %c0_i32_0, %c0_i32_1 : i32, i32, i32
  }
  func.func @transform_2(%arg0: i32) -> (i32, i32) {
    %c0_i32 = arith.constant 0 : i32
    %c0_i32_0 = arith.constant 0 : i32
    %c0_i32_1 = arith.constant 0 : i32
    return %c0_i32, %c0_i32_0 : i32, i32
  }
  func.func @transform_3(%arg0: i32) -> (i32, i32, i32) {
    %c0_i32 = arith.constant 0 : i32
    %c0_i32_0 = arith.constant 0 : i32
    %c0_i32_1 = arith.constant 0 : i32
    %c0_i32_2 = arith.constant 0 : i32
    return %c0_i32, %c0_i32_0, %c0_i32_1 : i32, i32, i32
  }
  func.func @transform_4(%arg0: i32) -> (i32, i32) {
    %c0_i32 = arith.constant 0 : i32
    %c0_i32_0 = arith.constant 0 : i32
    %c0_i32_1 = arith.constant 0 : i32
    return %c0_i32, %c0_i32_0 : i32, i32
  }
  func.func @transform_5(%arg0: i32) -> (i32, i32, i32, i32) {
    %c0_i32 = arith.constant 0 : i32
    %c0_i32_0 = arith.constant 0 : i32
    %c0_i32_1 = arith.constant 0 : i32
    %c0_i32_2 = arith.constant 0 : i32
    return %arg0, %c0_i32, %c0_i32_0, %c0_i32_1 : i32, i32, i32, i32
  }
}

</mosaic_0001>

<llo_original>
// kernel: conv_block_forward.1
$region0: #{conv_block_forward.1}
  #allocation0 [shape = 'u32[]', space=smem, size = 0x4, offset = 0x4, fixed_abs, tag = 'smem constant byte address 0x4 - core index']
  #allocation1 [shape = 'u32[144,128]{1,0:T(1,128)}', space=vmem, size = 0x12000, scoped, tag = 'internal scratch']
  #allocation2 [shape = 'f32[18,32,4]{2,1,0:T(8,128)}', space=vmem, size = 0x48000, scoped, tag = 'scratch operand']
  #allocation3 [shape = 'f32[18,32,8]{2,1,0:T(8,128)}', space=vmem, size = 0x48000, scoped, tag = 'scratch operand']
  %s0 = inlined_call_operand.vmem [shape: f32[2,16,16,4], index: 0, kind: input, shape index: {}]
  %s1 = inlined_call_operand.vmem [shape: f32[9,4,8], index: 1, kind: input, shape index: {}]
  %s2 = inlined_call_operand.vmem [shape: f32[1,8], index: 2, kind: input, shape index: {}]
  %s3 = inlined_call_operand.vmem [shape: f32[9,8,8], index: 3, kind: input, shape index: {}]
  %s4 = inlined_call_operand.vmem [shape: f32[1,8], index: 4, kind: input, shape index: {}]
  %s5 = inlined_call_operand.vmem [shape: f32[2,16,16,8], index: 5, kind: output, shape index: {}]
  %s6 = sld [smem:[#allocation0]]
  $region53: #{conv_block_forward.1} parent=0
    _
  %s8 = ssub.s32 1, %s6
  %s9 = scalar_select 0, %s8, %s6
  loop: start=0, step=1, limit=4
  $region2: #{conv_block_forward.1} parent=0 // loop_pre_header
    _
  $region3: #{conv_block_forward.1} parent=0 // loop_header
    %s11 = sphi 0, %s15
    %p12 = scmp.ge.s32.totalorder %s11, 4
    %s21 = sphi 0, %s23
    %s24 = sphi 0, %s21
    %s25 = sphi 0, %s24
    %s41 = sphi 0, %s25
    %s45 = sphi 0, %s45
    %s47 = sphi 0, %s45
    %s48 = sphi 0, %s47
    %s62 = sphi 0, %s48
    %s66 = sphi 0, %s66
    %s68 = sphi 0, %s66
    %s69 = sphi 0, %s68
    %s83 = sphi 0, %s69
    %s87 = sphi 0, %s87
    %s89 = sphi 0, %s87
    %s90 = sphi 0, %s89
    %s104 = sphi 0, %s90
    %s108 = sphi 0, %s108
    %s110 = sphi 0, %s108
    %s111 = sphi 0, %s110
    %s125 = sphi 0, %s111
    %s131 = sphi 0, %s133
    %s134 = sphi 0, %s131
    %s135 = sphi 0, %s134
    %s151 = sphi 0, %s135
  $region4: #{conv_block_forward.1} parent=0 // loop_header_branch
    %14 = sbr.rel (%p12) target = $region8
  $region5: #{conv_block_forward.1} parent=0 // loop_body
    %s16 = ssub.s32 %s11, 1
    %s17 = ssub.s32 %s11, 2
    %s18 = sadd.s32 %s11, 1
    %s19 = ssub.s32 %s11, %s18
    %p20 = scmp.eq.s32.totalorder %s19, 0
    %s22 = sadd.s32 %s21, 1
    %s23 = scalar_select %p20, %s21, %s22
    %p26 = pneg %p20
    %p27 = scmp.eq.s32.totalorder %s11, 1
    %p28 = por %p26, %p27
    %p29 = scmp.ne.s32.totalorder %s21, %s24
    %p30 = scmp.eq.s32.totalorder %s11, 0
    %p31 = por %p29, %p30
    %p32 = scmp.ne.s32.totalorder %s21, %s24
    %p33 = scmp.eq.s32.totalorder %s16, 1
    %p34 = por %p32, %p33
    %p35 = scmp.ne.s32.totalorder %s24, %s25
    %p36 = scmp.eq.s32.totalorder %s16, 0
    %p37 = por %p35, %p36
    %p38 = scmp.ne.s32.totalorder %s24, %s25
    %p39 = scmp.eq.s32.totalorder %s17, 1
    %p40 = por %p38, %p39
    %p42 = scmp.ne.s32.totalorder %s25, %s41
    %p43 = scmp.eq.s32.totalorder %s17, 0
    %p44 = por %p42, %p43
    %s46 = sadd.s32 %s45, 1
    %p49 = scmp.eq.s32.totalorder %s11, 1
    %p50 = scmp.ne.s32.totalorder %s45, %s47
    %p51 = scmp.eq.s32.totalorder %s11, 0
    %p52 = por %p50, %p51
    %p53 = scmp.ne.s32.totalorder %s45, %s47
    %p54 = scmp.eq.s32.totalorder %s16, 1
    %p55 = por %p53, %p54
    %p56 = scmp.ne.s32.totalorder %s47, %s48
    %p57 = scmp.eq.s32.totalorder %s16, 0
    %p58 = por %p56, %p57
    %p59 = scmp.ne.s32.totalorder %s47, %s48
    %p60 = scmp.eq.s32.totalorder %s17, 1
    %p61 = por %p59, %p60
    %p63 = scmp.ne.s32.totalorder %s48, %s62
    %p64 = scmp.eq.s32.totalorder %s17, 0
    %p65 = por %p63, %p64
    %s67 = sadd.s32 %s66, 1
    %p70 = scmp.eq.s32.totalorder %s11, 1
    %p71 = scmp.ne.s32.totalorder %s66, %s68
    %p72 = scmp.eq.s32.totalorder %s11, 0
    %p73 = por %p71, %p72
    %p74 = scmp.ne.s32.totalorder %s66, %s68
    %p75 = scmp.eq.s32.totalorder %s16, 1
    %p76 = por %p74, %p75
    %p77 = scmp.ne.s32.totalorder %s68, %s69
    %p78 = scmp.eq.s32.totalorder %s16, 0
    %p79 = por %p77, %p78
    %p80 = scmp.ne.s32.totalorder %s68, %s69
    %p81 = scmp.eq.s32.totalorder %s17, 1
    %p82 = por %p80, %p81
    %p84 = scmp.ne.s32.totalorder %s69, %s83
    %p85 = scmp.eq.s32.totalorder %s17, 0
    %p86 = por %p84, %p85
    %s88 = sadd.s32 %s87, 1
    %p91 = scmp.eq.s32.totalorder %s11, 1
    %p92 = scmp.ne.s32.totalorder %s87, %s89
    %p93 = scmp.eq.s32.totalorder %s11, 0
    %p94 = por %p92, %p93
    %p95 = scmp.ne.s32.totalorder %s87, %s89
    %p96 = scmp.eq.s32.totalorder %s16, 1
    %p97 = por %p95, %p96
    %p98 = scmp.ne.s32.totalorder %s89, %s90
    %p99 = scmp.eq.s32.totalorder %s16, 0
    %p100 = por %p98, %p99
    %p101 = scmp.ne.s32.totalorder %s89, %s90
    %p102 = scmp.eq.s32.totalorder %s17, 1
    %p103 = por %p101, %p102
    %p105 = scmp.ne.s32.totalorder %s90, %s104
    %p106 = scmp.eq.s32.totalorder %s17, 0
    %p107 = por %p105, %p106
    %s109 = sadd.s32 %s108, 1
    %p112 = scmp.eq.s32.totalorder %s11, 1
    %p113 = scmp.ne.s32.totalorder %s108, %s110
    %p114 = scmp.eq.s32.totalorder %s11, 0
    %p115 = por %p113, %p114
    %p116 = scmp.ne.s32.totalorder %s108, %s110
    %p117 = scmp.eq.s32.totalorder %s16, 1
    %p118 = por %p116, %p117
    %p119 = scmp.ne.s32.totalorder %s110, %s111
    %p120 = scmp.eq.s32.totalorder %s16, 0
    %p121 = por %p119, %p120
    %p122 = scmp.ne.s32.totalorder %s110, %s111
    %p123 = scmp.eq.s32.totalorder %s17, 1
    %p124 = por %p122, %p123
    %p126 = scmp.ne.s32.totalorder %s111, %s125
    %p127 = scmp.eq.s32.totalorder %s17, 0
    %p128 = por %p126, %p127
    %s129 = ssub.s32 %s11, %s18
    %p130 = scmp.eq.s32.totalorder %s129, 0
    %s132 = sadd.s32 %s131, 1
    %s133 = scalar_select %p130, %s131, %s132
    %p136 = pneg %p130
    %p137 = scmp.eq.s32.totalorder %s11, 1
    %p138 = por %p136, %p137
    %p139 = scmp.ne.s32.totalorder %s131, %s134
    %p140 = scmp.eq.s32.totalorder %s11, 0
    %p141 = por %p139, %p140
    %p142 = scmp.ne.s32.totalorder %s131, %s134
    %p143 = scmp.eq.s32.totalorder %s16, 1
    %p144 = por %p142, %p143
    %p145 = scmp.ne.s32.totalorder %s134, %s135
    %p146 = scmp.eq.s32.totalorder %s16, 0
    %p147 = por %p145, %p146
    %p148 = scmp.ne.s32.totalorder %s134, %s135
    %p149 = scmp.eq.s32.totalorder %s17, 1
    %p150 = por %p148, %p149
    %p152 = scmp.ne.s32.totalorder %s135, %s151
    %p153 = scmp.eq.s32.totalorder %s17, 0
    %p154 = por %p152, %p153
    %p155 = scmp.le.s32.totalorder 1, %s11
    %p156 = scmp.lt.s32.totalorder %s11, 3
    %p157 = pnand %p155, %p156
    %p158 = pneg %p157
    // Predicated region
    $region9: #{conv_block_forward.1} parent=5 // pred_check
      _
    $region10: #{conv_block_forward.1} parent=5 // pred_check_branch
      %160 = sbr.rel (%p157) target = $region12
    $region11: #{conv_block_forward.1} parent=5 // pred_region
      %s161 = ssub.s32 %s11, 1
      // Predicated region
      $region13: #{conv_block_forward.1} parent=11 // pred_check
        %p162 = pneg %p58
      $region14: #{conv_block_forward.1} parent=11 // pred_check_branch
        %164 = sbr.rel (%p162) target = $region16
      $region15: #{conv_block_forward.1} parent=11 // pred_region
        _
      $region16: #{conv_block_forward.1} parent=11 // pred_fallthru
        _
      // Predicated region
      $region17: #{conv_block_forward.1} parent=11 // pred_check
        %p165 = pneg %p79
      $region18: #{conv_block_forward.1} parent=11 // pred_check_branch
        %167 = sbr.rel (%p165) target = $region20
      $region19: #{conv_block_forward.1} parent=11 // pred_region
        _
      $region20: #{conv_block_forward.1} parent=11 // pred_fallthru
        _
      // Predicated region
      $region21: #{conv_block_forward.1} parent=11 // pred_check
        %p168 = pneg %p100
      $region22: #{conv_block_forward.1} parent=11 // pred_check_branch
        %170 = sbr.rel (%p168) target = $region24
      $region23: #{conv_block_forward.1} parent=11 // pred_region
        _
      $region24: #{conv_block_forward.1} parent=11 // pred_fallthru
        _
      // Predicated region
      $region25: #{conv_block_forward.1} parent=11 // pred_check
        %p171 = pneg %p121
      $region26: #{conv_block_forward.1} parent=11 // pred_check_branch
        %173 = sbr.rel (%p171) target = $region28
      $region27: #{conv_block_forward.1} parent=11 // pred_region
        _
      $region28: #{conv_block_forward.1} parent=11 // pred_fallthru
        _
    $region12: #{conv_block_forward.1} parent=5 // pred_fallthru
      _
    %p174 = scmp.lt.s32.totalorder %s11, 2
    // Predicated region
    $region29: #{conv_block_forward.1} parent=5 // pred_check
      %p175 = pneg %p174
    $region30: #{conv_block_forward.1} parent=5 // pred_check_branch
      %177 = sbr.rel (%p175) target = $region32
    $region31: #{conv_block_forward.1} parent=5 // pred_region
      // Predicated region
      $region33: #{conv_block_forward.1} parent=31 // pred_check
        %p178 = pneg %p31
      $region34: #{conv_block_forward.1} parent=31 // pred_check_branch
        %180 = sbr.rel (%p178) target = $region36
      $region35: #{conv_block_forward.1} parent=31 // pred_region
        %p181 = scmp.lt.s32.totalorder %s11, 1
        %s182 = scalar_select %p181, %s11, 1
        %s183 = smul.addr %s182, 32
        %s184 = smul.addr %s183, 8
        %s185 = scalar_lea.vmem %s0, %s184
      $region36: #{conv_block_forward.1} parent=31 // pred_fallthru
        _
    $region32: #{conv_block_forward.1} parent=5 // pred_fallthru
      _
    %p186 = scmp.le.s32.totalorder 1, %s11
    %p187 = scmp.lt.s32.totalorder %s11, 3
    %p188 = pnand %p186, %p187
    %p189 = pneg %p188
    // Predicated region
    $region37: #{conv_block_forward.1} parent=5 // pred_check
      _
    $region38: #{conv_block_forward.1} parent=5 // pred_check_branch
      %191 = sbr.rel (%p188) target = $region40
    $region39: #{conv_block_forward.1} parent=5 // pred_region
      %s192 = ssub.s32 %s11, 1
      %p193 = scmp.lt.s32.totalorder %s16, 1
      %s194 = scalar_select %p193, %s16, 1
      %s195 = smul.addr %s194, 32
      %s196 = smul.addr %s195, 8
      %s197 = scalar_lea.vmem %s0, %s196
      %p198 = pneg %p37
      %p199 = pneg %p34
      %p200 = pneg %p58
      %p201 = pneg %p55
      %p202 = pneg %p79
      %p203 = pneg %p76
      %p204 = pneg %p100
      %p205 = pneg %p97
      %p206 = pneg %p121
      %p207 = pneg %p118
      %p208 = pneg %p147
      %p209 = pneg %p144
      %p210 = scmp.lt.s32.totalorder %s16, 1
      %s211 = scalar_select %p210, %s16, 1
      %s212 = smul.addr %s211, 32
      %s213 = smul.addr %s212, 8
      %s214 = scalar_lea.vmem %s5, %s213
      %p215 = scmp.lt.s32.totalorder %s16, 1
      %s216 = scalar_select %p215, %s16, 1
      %s217 = smul.addr %s216, 32
      %s218 = smul.addr %s217, 8
      %s219 = scalar_lea.vmem %s0, %s218
      %p220 = scmp.lt.s32.totalorder %s16, 1
      %s221 = scalar_select %p220, %s16, 1
      %s222 = smul.addr %s221, 32
      %s223 = smul.addr %s222, 8
      %s224 = scalar_lea.vmem %s5, %s223
      %vm225 = vcmask 31744
      %226 = vst.msk [vmem:[#allocation2] sm:$0xff] %vm225, 0.0
      %227 = vst.msk [vmem:[#allocation2 + $0x8] sm:$0xff] %vm225, 0.0
      %228 = vst.msk [vmem:[#allocation2 + $0x10] sm:$0xff] %vm225, 0.0
      %229 = vst.msk [vmem:[#allocation2 + $0x18] sm:$0xff] %vm225, 0.0
      %230 = vst.msk [vmem:[#allocation2 + $0x20] sm:$0xff] %vm225, 0.0
      %231 = vst.msk [vmem:[#allocation2 + $0x28] sm:$0xff] %vm225, 0.0
      %232 = vst.msk [vmem:[#allocation2 + $0x30] sm:$0xff] %vm225, 0.0
      %233 = vst.msk [vmem:[#allocation2 + $0x38] sm:$0xff] %vm225, 0.0
      %234 = vst.msk [vmem:[#allocation2 + $0x40] sm:$0xff] %vm225, 0.0
      %235 = vst.msk [vmem:[#allocation2 + $0x48] sm:$0xff] %vm225, 0.0
      %236 = vst.msk [vmem:[#allocation2 + $0x50] sm:$0xff] %vm225, 0.0
      %237 = vst.msk [vmem:[#allocation2 + $0x58] sm:$0xff] %vm225, 0.0
      %238 = vst.msk [vmem:[#allocation2 + $0x60] sm:$0xff] %vm225, 0.0
      %239 = vst.msk [vmem:[#allocation2 + $0x68] sm:$0xff] %vm225, 0.0
      %240 = vst.msk [vmem:[#allocation2 + $0x70] sm:$0xff] %vm225, 0.0
      %241 = vst.msk [vmem:[#allocation2 + $0x78] sm:$0xff] %vm225, 0.0
      %242 = vst.msk [vmem:[#allocation2 + $0x80] sm:$0xff] %vm225, 0.0
      %243 = vst.msk [vmem:[#allocation2 + $0x88] sm:$0xff] %vm225, 0.0
      %244 = vst.msk [vmem:[#allocation2 + $0x90] sm:$0xff] %vm225, 0.0
      %245 = vst.msk [vmem:[#allocation2 + $0x98] sm:$0xff] %vm225, 0.0
      %246 = vst.msk [vmem:[#allocation2 + $0xa0] sm:$0xff] %vm225, 0.0
      %247 = vst.msk [vmem:[#allocation2 + $0xa8] sm:$0xff] %vm225, 0.0
      %248 = vst.msk [vmem:[#allocation2 + $0xb0] sm:$0xff] %vm225, 0.0
      %249 = vst.msk [vmem:[#allocation2 + $0xb8] sm:$0xff] %vm225, 0.0
      %250 = vst.msk [vmem:[#allocation2 + $0xc0] sm:$0xff] %vm225, 0.0
      %251 = vst.msk [vmem:[#allocation2 + $0xc8] sm:$0xff] %vm225, 0.0
      %252 = vst.msk [vmem:[#allocation2 + $0xd0] sm:$0xff] %vm225, 0.0
      %253 = vst.msk [vmem:[#allocation2 + $0xd8] sm:$0xff] %vm225, 0.0
      %254 = vst.msk [vmem:[#allocation2 + $0xe0] sm:$0xff] %vm225, 0.0
      %255 = vst.msk [vmem:[#allocation2 + $0xe8] sm:$0xff] %vm225, 0.0
      %256 = vst.msk [vmem:[#allocation2 + $0xf0] sm:$0xff] %vm225, 0.0
      %257 = vst.msk [vmem:[#allocation2 + $0xf8] sm:$0xff] %vm225, 0.0
      %258 = vst.msk [vmem:[#allocation2 + $0x100] sm:$0xff] %vm225, 0.0
      %259 = vst.msk [vmem:[#allocation2 + $0x108] sm:$0xff] %vm225, 0.0
      %260 = vst.msk [vmem:[#allocation2 + $0x110] sm:$0xff] %vm225, 0.0
      %261 = vst.msk [vmem:[#allocation2 + $0x118] sm:$0xff] %vm225, 0.0
      %262 = vst.msk [vmem:[#allocation2 + $0x120] sm:$0xff] %vm225, 0.0
      %263 = vst.msk [vmem:[#allocation2 + $0x128] sm:$0xff] %vm225, 0.0
      %264 = vst.msk [vmem:[#allocation2 + $0x130] sm:$0xff] %vm225, 0.0
      %265 = vst.msk [vmem:[#allocation2 + $0x138] sm:$0xff] %vm225, 0.0
      %266 = vst.msk [vmem:[#allocation2 + $0x140] sm:$0xff] %vm225, 0.0
      %267 = vst.msk [vmem:[#allocation2 + $0x148] sm:$0xff] %vm225, 0.0
      %268 = vst.msk [vmem:[#allocation2 + $0x150] sm:$0xff] %vm225, 0.0
      %269 = vst.msk [vmem:[#allocation2 + $0x158] sm:$0xff] %vm225, 0.0
      %270 = vst.msk [vmem:[#allocation2 + $0x160] sm:$0xff] %vm225, 0.0
      %271 = vst.msk [vmem:[#allocation2 + $0x168] sm:$0xff] %vm225, 0.0
      %272 = vst.msk [vmem:[#allocation2 + $0x170] sm:$0xff] %vm225, 0.0
      %273 = vst.msk [vmem:[#allocation2 + $0x178] sm:$0xff] %vm225, 0.0
      %274 = vst.msk [vmem:[#allocation2 + $0x180] sm:$0xff] %vm225, 0.0
      %275 = vst.msk [vmem:[#allocation2 + $0x188] sm:$0xff] %vm225, 0.0
      %276 = vst.msk [vmem:[#allocation2 + $0x190] sm:$0xff] %vm225, 0.0
      %277 = vst.msk [vmem:[#allocation2 + $0x198] sm:$0xff] %vm225, 0.0
      %278 = vst.msk [vmem:[#allocation2 + $0x1a0] sm:$0xff] %vm225, 0.0
      %279 = vst.msk [vmem:[#allocation2 + $0x1a8] sm:$0xff] %vm225, 0.0
      %280 = vst.msk [vmem:[#allocation2 + $0x1b0] sm:$0xff] %vm225, 0.0
      %281 = vst.msk [vmem:[#allocation2 + $0x1b8] sm:$0xff] %vm225, 0.0
      %282 = vst.msk [vmem:[#allocation2 + $0x1c0] sm:$0xff] %vm225, 0.0
      %283 = vst.msk [vmem:[#allocation2 + $0x1c8] sm:$0xff] %vm225, 0.0
      %284 = vst.msk [vmem:[#allocation2 + $0x1d0] sm:$0xff] %vm225, 0.0
      %285 = vst.msk [vmem:[#allocation2 + $0x1d8] sm:$0xff] %vm225, 0.0
      %286 = vst.msk [vmem:[#allocation2 + $0x1e0] sm:$0xff] %vm225, 0.0
      %287 = vst.msk [vmem:[#allocation2 + $0x1e8] sm:$0xff] %vm225, 0.0
      %288 = vst.msk [vmem:[#allocation2 + $0x1f0] sm:$0xff] %vm225, 0.0
      %289 = vst.msk [vmem:[#allocation2 + $0x1f8] sm:$0xff] %vm225, 0.0
      %290 = vst.msk [vmem:[#allocation2 + $0x200] sm:$0xff] %vm225, 0.0
      %291 = vst.msk [vmem:[#allocation2 + $0x208] sm:$0xff] %vm225, 0.0
      %292 = vst.msk [vmem:[#allocation2 + $0x210] sm:$0xff] %vm225, 0.0
      %293 = vst.msk [vmem:[#allocation2 + $0x218] sm:$0xff] %vm225, 0.0
      %294 = vst.msk [vmem:[#allocation2 + $0x220] sm:$0xff] %vm225, 0.0
      %295 = vst.msk [vmem:[#allocation2 + $0x228] sm:$0xff] %vm225, 0.0
      %296 = vst.msk [vmem:[#allocation2 + $0x230] sm:$0xff] %vm225, 0.0
      %297 = vst.msk [vmem:[#allocation2 + $0x238] sm:$0xff] %vm225, 0.0
      %v298 = vld [vmem:[%s219] sm:$0xff]
      %v299 = vld [vmem:[%s219 + $0x8] sm:$0xff]
      %v300 = vld [vmem:[%s219 + $0x10] sm:$0xff]
      %v301 = vld [vmem:[%s219 + $0x18] sm:$0xff]
      %v302 = vld [vmem:[%s219 + $0x20] sm:$0xff]
      %v303 = vld [vmem:[%s219 + $0x28] sm:$0xff]
      %v304 = vld [vmem:[%s219 + $0x30] sm:$0xff]
      %v305 = vld [vmem:[%s219 + $0x38] sm:$0xff]
      %v306 = vld [vmem:[%s219 + $0x40] sm:$0xff]
      %v307 = vld [vmem:[%s219 + $0x48] sm:$0xff]
      %v308 = vld [vmem:[%s219 + $0x50] sm:$0xff]
      %v309 = vld [vmem:[%s219 + $0x58] sm:$0xff]
      %v310 = vld [vmem:[%s219 + $0x60] sm:$0xff]
      %v311 = vld [vmem:[%s219 + $0x68] sm:$0xff]
      %v312 = vld [vmem:[%s219 + $0x70] sm:$0xff]
      %v313 = vld [vmem:[%s219 + $0x78] sm:$0xff]
      %v314 = vld [vmem:[%s219 + $0x80] sm:$0xff]
      %v315 = vld [vmem:[%s219 + $0x88] sm:$0xff]
      %v316 = vld [vmem:[%s219 + $0x90] sm:$0xff]
      %v317 = vld [vmem:[%s219 + $0x98] sm:$0xff]
      %v318 = vld [vmem:[%s219 + $0xa0] sm:$0xff]
      %v319 = vld [vmem:[%s219 + $0xa8] sm:$0xff]
      %v320 = vld [vmem:[%s219 + $0xb0] sm:$0xff]
      %v321 = vld [vmem:[%s219 + $0xb8] sm:$0xff]
      %v322 = vld [vmem:[%s219 + $0xc0] sm:$0xff]
      %v323 = vld [vmem:[%s219 + $0xc8] sm:$0xff]
      %v324 = vld [vmem:[%s219 + $0xd0] sm:$0xff]
      %v325 = vld [vmem:[%s219 + $0xd8] sm:$0xff]
      %v326 = vld [vmem:[%s219 + $0xe0] sm:$0xff]
      %v327 = vld [vmem:[%s219 + $0xe8] sm:$0xff]
      %v328 = vld [vmem:[%s219 + $0xf0] sm:$0xff]
      %v329 = vld [vmem:[%s219 + $0xf8] sm:$0xff]
      %s330 = scalar_lea.vmem [#allocation2], 32
      %331 = vst.msk [vmem:[%s330 + $0x8] sm:$0xff] %vm225, %v298
      %332 = vst.msk [vmem:[%s330 + $0x10] sm:$0xff] %vm225, %v299
      %333 = vst.msk [vmem:[%s330 + $0x28] sm:$0xff] %vm225, %v300
      %334 = vst.msk [vmem:[%s330 + $0x30] sm:$0xff] %vm225, %v301
      %335 = vst.msk [vmem:[%s330 + $0x48] sm:$0xff] %vm225, %v302
      %336 = vst.msk [vmem:[%s330 + $0x50] sm:$0xff] %vm225, %v303
      %337 = vst.msk [vmem:[%s330 + $0x68] sm:$0xff] %vm225, %v304
      %338 = vst.msk [vmem:[%s330 + $0x70] sm:$0xff] %vm225, %v305
      %339 = vst.msk [vmem:[%s330 + $0x88] sm:$0xff] %vm225, %v306
      %340 = vst.msk [vmem:[%s330 + $0x90] sm:$0xff] %vm225, %v307
      %341 = vst.msk [vmem:[%s330 + $0xa8] sm:$0xff] %vm225, %v308
      %342 = vst.msk [vmem:[%s330 + $0xb0] sm:$0xff] %vm225, %v309
      %343 = vst.msk [vmem:[%s330 + $0xc8] sm:$0xff] %vm225, %v310
      %344 = vst.msk [vmem:[%s330 + $0xd0] sm:$0xff] %vm225, %v311
      %345 = vst.msk [vmem:[%s330 + $0xe8] sm:$0xff] %vm225, %v312
      %346 = vst.msk [vmem:[%s330 + $0xf0] sm:$0xff] %vm225, %v313
      %347 = vst.msk [vmem:[%s330 + $0x108] sm:$0xff] %vm225, %v314
      %348 = vst.msk [vmem:[%s330 + $0x110] sm:$0xff] %vm225, %v315
      %349 = vst.msk [vmem:[%s330 + $0x128] sm:$0xff] %vm225, %v316
      %350 = vst.msk [vmem:[%s330 + $0x130] sm:$0xff] %vm225, %v317
      %351 = vst.msk [vmem:[%s330 + $0x148] sm:$0xff] %vm225, %v318
      %352 = vst.msk [vmem:[%s330 + $0x150] sm:$0xff] %vm225, %v319
      %353 = vst.msk [vmem:[%s330 + $0x168] sm:$0xff] %vm225, %v320
      %354 = vst.msk [vmem:[%s330 + $0x170] sm:$0xff] %vm225, %v321
      %355 = vst.msk [vmem:[%s330 + $0x188] sm:$0xff] %vm225, %v322
      %356 = vst.msk [vmem:[%s330 + $0x190] sm:$0xff] %vm225, %v323
      %357 = vst.msk [vmem:[%s330 + $0x1a8] sm:$0xff] %vm225, %v324
      %358 = vst.msk [vmem:[%s330 + $0x1b0] sm:$0xff] %vm225, %v325
      %359 = vst.msk [vmem:[%s330 + $0x1c8] sm:$0xff] %vm225, %v326
      %360 = vst.msk [vmem:[%s330 + $0x1d0] sm:$0xff] %vm225, %v327
      %361 = vst.msk [vmem:[%s330 + $0x1e8] sm:$0xff] %vm225, %v328
      %362 = vst.msk [vmem:[%s330 + $0x1f0] sm:$0xff] %vm225, %v329
      %v363 = vld [vmem:[#allocation2 + $0x7] sm:$0xff]
      %v364 = vld [vmem:[#allocation2 + $0xf] sm:$0xff]
      %v365 = vld [vmem:[#allocation2 + $0x27] sm:$0xff]
      %v366 = vld [vmem:[#allocation2 + $0x2f] sm:$0xff]
      %v367 = vld [vmem:[#allocation2 + $0x47] sm:$0xff]
      %v368 = vld [vmem:[#allocation2 + $0x4f] sm:$0xff]
      %v369 = vld [vmem:[#allocation2 + $0x67] sm:$0xff]
      %v370 = vld [vmem:[#allocation2 + $0x6f] sm:$0xff]
      %v371 = vld [vmem:[#allocation2 + $0x87] sm:$0xff]
      %v372 = vld [vmem:[#allocation2 + $0x8f] sm:$0xff]
      %v373 = vld [vmem:[#allocation2 + $0xa7] sm:$0xff]
      %v374 = vld [vmem:[#allocation2 + $0xaf] sm:$0xff]
      %v375 = vld [vmem:[#allocation2 + $0xc7] sm:$0xff]
      %v376 = vld [vmem:[#allocation2 + $0xcf] sm:$0xff]
      %v377 = vld [vmem:[#allocation2 + $0xe7] sm:$0xff]
      %v378 = vld [vmem:[#allocation2 + $0xef] sm:$0xff]
      %v379 = vld [vmem:[#allocation2 + $0x107] sm:$0xff]
      %v380 = vld [vmem:[#allocation2 + $0x10f] sm:$0xff]
      %v381 = vld [vmem:[#allocation2 + $0x127] sm:$0xff]
      %v382 = vld [vmem:[#allocation2 + $0x12f] sm:$0xff]
      %v383 = vld [vmem:[#allocation2 + $0x147] sm:$0xff]
      %v384 = vld [vmem:[#allocation2 + $0x14f] sm:$0xff]
      %v385 = vld [vmem:[#allocation2 + $0x167] sm:$0xff]
      %v386 = vld [vmem:[#allocation2 + $0x16f] sm:$0xff]
      %v387 = vld [vmem:[#allocation2 + $0x187] sm:$0xff]
      %v388 = vld [vmem:[#allocation2 + $0x18f] sm:$0xff]
      %v389 = vld [vmem:[#allocation2 + $0x1a7] sm:$0xff]
      %v390 = vld [vmem:[#allocation2 + $0x1af] sm:$0xff]
      %v391 = vld [vmem:[#allocation2 + $0x1c7] sm:$0xff]
      %v392 = vld [vmem:[#allocation2 + $0x1cf] sm:$0xff]
      %v393 = vld [vmem:[#allocation2 + $0x1e7] sm:$0xff]
      %v394 = vld [vmem:[#allocation2 + $0x1ef] sm:$0xff]
      %v395 = vld [vmem:[%s1] sm:$0xf]
      %v396 = vld [vmem:[#allocation2 + $0x8] sm:$0xff]
      %v397 = vld [vmem:[#allocation2 + $0x10] sm:$0xff]
      %v398 = vld [vmem:[#allocation2 + $0x28] sm:$0xff]
      %v399 = vld [vmem:[#allocation2 + $0x30] sm:$0xff]
      %v400 = vld [vmem:[#allocation2 + $0x48] sm:$0xff]
      %v401 = vld [vmem:[#allocation2 + $0x50] sm:$0xff]
      %v402 = vld [vmem:[#allocation2 + $0x68] sm:$0xff]
      %v403 = vld [vmem:[#allocation2 + $0x70] sm:$0xff]
      %v404 = vld [vmem:[#allocation2 + $0x88] sm:$0xff]
      %v405 = vld [vmem:[#allocation2 + $0x90] sm:$0xff]
      %v406 = vld [vmem:[#allocation2 + $0xa8] sm:$0xff]
      %v407 = vld [vmem:[#allocation2 + $0xb0] sm:$0xff]
      %v408 = vld [vmem:[#allocation2 + $0xc8] sm:$0xff]
      %v409 = vld [vmem:[#allocation2 + $0xd0] sm:$0xff]
      %v410 = vld [vmem:[#allocation2 + $0xe8] sm:$0xff]
      %v411 = vld [vmem:[#allocation2 + $0xf0] sm:$0xff]
      %v412 = vld [vmem:[#allocation2 + $0x108] sm:$0xff]
      %v413 = vld [vmem:[#allocation2 + $0x110] sm:$0xff]
      %v414 = vld [vmem:[#allocation2 + $0x128] sm:$0xff]
      %v415 = vld [vmem:[#allocation2 + $0x130] sm:$0xff]
      %v416 = vld [vmem:[#allocation2 + $0x148] sm:$0xff]
      %v417 = vld [vmem:[#allocation2 + $0x150] sm:$0xff]
      %v418 = vld [vmem:[#allocation2 + $0x168] sm:$0xff]
      %v419 = vld [vmem:[#allocation2 + $0x170] sm:$0xff]
      %v420 = vld [vmem:[#allocation2 + $0x188] sm:$0xff]
      %v421 = vld [vmem:[#allocation2 + $0x190] sm:$0xff]
      %v422 = vld [vmem:[#allocation2 + $0x1a8] sm:$0xff]
      %v423 = vld [vmem:[#allocation2 + $0x1b0] sm:$0xff]
      %v424 = vld [vmem:[#allocation2 + $0x1c8] sm:$0xff]
      %v425 = vld [vmem:[#allocation2 + $0x1d0] sm:$0xff]
      %v426 = vld [vmem:[#allocation2 + $0x1e8] sm:$0xff]
      %v427 = vld [vmem:[#allocation2 + $0x1f0] sm:$0xff]
      %s428 = scalar_lea.vmem %s1, 4
      %v429 = vld [vmem:[%s428] sm:$0xf]
      %v431 = vsel %vm225, %v396, 0
      %v434 = vsel %vm225, %v397, 0
      %v437 = vsel %vm225, %v398, 0
      %v440 = vsel %vm225, %v399, 0
      %v443 = vsel %vm225, %v400, 0
      %v446 = vsel %vm225, %v401, 0
      %v449 = vsel %vm225, %v402, 0
      %v452 = vsel %vm225, %v403, 0
      %v455 = vsel %vm225, %v404, 0
      %v458 = vsel %vm225, %v405, 0
      %v461 = vsel %vm225, %v406, 0
      %v464 = vsel %vm225, %v407, 0
      %v467 = vsel %vm225, %v408, 0
      %v470 = vsel %vm225, %v409, 0
      %v473 = vsel %vm225, %v410, 0
      %v476 = vsel %vm225, %v411, 0
      %v479 = vsel %vm225, %v412, 0
      %v482 = vsel %vm225, %v413, 0
      %v485 = vsel %vm225, %v414, 0
      %v488 = vsel %vm225, %v415, 0
      %v491 = vsel %vm225, %v416, 0
      %v494 = vsel %vm225, %v417, 0
      %v497 = vsel %vm225, %v418, 0
      %v500 = vsel %vm225, %v419, 0
      %v503 = vsel %vm225, %v420, 0
      %v506 = vsel %vm225, %v421, 0
      %v509 = vsel %vm225, %v422, 0
      %v512 = vsel %vm225, %v423, 0
      %v515 = vsel %vm225, %v424, 0
      %v518 = vsel %vm225, %v425, 0
      %v521 = vsel %vm225, %v426, 0
      %v524 = vsel %vm225, %v427, 0
      %vm526 = vcmask 1043456
      %v528 = vsel %vm526, %v429, 0
      %530 = vmatprep.subr.mxu0 0.0
      %531 = vmatpush1.msra.mxu0 %v528
      %532 = vmatprep.subr.mxu0 0.0
      %533 = vmatpush1.msra.mxu0 0.0
      %534 = vmatprep.subr.mxu0 0.0
      %535 = vmatpush1.msra.mxu0 0.0
      %536 = vmatprep.subr.mxu0 0.0
      %537 = vmatpush1.msra.mxu0 0.0
      %538 = vmatprep.subr.mxu0 0.0
      %539 = vmatpush1.msra.mxu0 0.0
      %540 = vmatprep.subr.mxu0 0.0
      %541 = vmatpush1.msra.mxu0 0.0
      %542 = vmatprep.subr.mxu0 0.0
      %543 = vmatpush1.msra.mxu0 0.0
      %544 = vmatprep.subr.mxu0 0.0
      %545 = vmatpush1.msra.mxu0 0.0
      %546 = vmatprep.subr.mxu0 0.0
      %547 = vmatpush1.msra.mxu0 0.0
      %548 = vmatprep.subr.mxu0 0.0
      %549 = vmatpush1.msra.mxu0 0.0
      %550 = vmatprep.subr.mxu0 0.0
      %551 = vmatpush1.msra.mxu0 0.0
      %552 = vmatprep.subr.mxu0 0.0
      %553 = vmatpush1.msra.mxu0 0.0
      %554 = vmatprep.subr.mxu0 0.0
      %555 = vmatpush1.msra.mxu0 0.0
      %556 = vmatprep.subr.mxu0 0.0
      %557 = vmatpush1.msra.mxu0 0.0
      %558 = vmatprep.subr.mxu0 0.0
      %559 = vmatpush1.msra.mxu0 0.0
      %560 = vmatprep.subr.mxu0 0.0
      %561 = vmatpush1.msra.mxu0 0.0
      %562 = vmatprep.subr.mxu0 0.0
      %563 = vmatpush1.msra.mxu0 0.0
      %564 = vmatprep.subr.mxu0 0.0
      %565 = vmatpush1.msra.mxu0 0.0
      %566 = vmatprep.subr.mxu0 0.0
      %567 = vmatpush1.msra.mxu0 0.0
      %568 = vmatprep.subr.mxu0 0.0
      %569 = vmatpush1.msra.mxu0 0.0
      %570 = vmatprep.subr.mxu0 0.0
      %571 = vmatpush1.msra.mxu0 0.0
      %572 = vmatprep.subr.mxu0 0.0
      %573 = vmatpush1.msra.mxu0 0.0
      %574 = vmatprep.subr.mxu0 0.0
      %575 = vmatpush1.msra.mxu0 0.0
      %576 = vmatprep.subr.mxu0 0.0
      %577 = vmatpush1.msra.mxu0 0.0
      %578 = vmatprep.subr.mxu0 0.0
      %579 = vmatpush1.msra.mxu0 0.0
      %580 = vmatprep.subr.mxu0 0.0
      %581 = vmatpush1.msra.mxu0 0.0
      %582 = vmatprep.subr.mxu0 0.0
      %583 = vmatpush1.msra.mxu0 0.0
      %584 = vmatprep.subr.mxu0 0.0
      %585 = vmatpush1.msra.mxu0 0.0
      %586 = vmatprep.subr.mxu0 0.0
      %587 = vmatpush1.msra.mxu0 0.0
      %588 = vmatprep.subr.mxu0 0.0
      %589 = vmatpush1.msra.mxu0 0.0
      %590 = vmatprep.subr.mxu0 0.0
      %591 = vmatpush1.msra.mxu0 0.0
      %592 = vmatprep.subr.mxu0 0.0
      %593 = vmatpush1.msra.mxu0 0.0
      %594 = vmatprep.mubr.f32.mxu0 0.0
      %595 = vmatmul.mubr.f32.gmra.mrb[0].mxu0 %v431
      %v596 = vpop.f32.mrb[0].mxu0
      %v597 = vadd.f32 0.0, %v596
      %v598 = vpop.f32.mrb[0].mxu0
      %599 = vmatprep.mubr.f32.mxu0 0.0
      %600 = vmatmul.mubr.f32.gmra.mrb[0].mxu0 %v434
      %v601 = vpop.f32.mrb[0].mxu0
      %v602 = vadd.f32 0.0, %v601
      %v603 = vpop.f32.mrb[0].mxu0
      %604 = vmatprep.mubr.f32.mxu0 0.0
      %605 = vmatmul.mubr.f32.gmra.mrb[0].mxu0 %v437
      %v606 = vpop.f32.mrb[0].mxu0
      %v607 = vadd.f32 0.0, %v606
      %v608 = vpop.f32.mrb[0].mxu0
      %609 = vmatprep.mubr.f32.mxu0 0.0
      %610 = vmatmul.mubr.f32.gmra.mrb[0].mxu0 %v440
      %v611 = vpop.f32.mrb[0].mxu0
      %v612 = vadd.f32 0.0, %v611
      %v613 = vpop.f32.mrb[0].mxu0
      %614 = vmatprep.mubr.f32.mxu0 0.0
      %615 = vmatmul.mubr.f32.gmra.mrb[0].mxu0 %v443
      %v616 = vpop.f32.mrb[0].mxu0
      %v617 = vadd.f32 0.0, %v616
      %v618 = vpop.f32.mrb[0].mxu0
      %619 = vmatprep.mubr.f32.mxu0 0.0
      %620 = vmatmul.mubr.f32.gmra.mrb[0].mxu0 %v446
      %v621 = vpop.f32.mrb[0].mxu0
      %v622 = vadd.f32 0.0, %v621
      %v623 = vpop.f32.mrb[0].mxu0
      %624 = vmatprep.mubr.f32.mxu0 0.0
      %625 = vmatmul.mubr.f32.gmra.mrb[0].mxu0 %v449
      %v626 = vpop.f32.mrb[0].mxu0
      %v627 = vadd.f32 0.0, %v626
      %v628 = vpop.f32.mrb[0].mxu0
      %629 = vmatprep.mubr.f32.mxu0 0.0
      %630 = vmatmul.mubr.f32.gmra.mrb[0].mxu0 %v452
      %v631 = vpop.f32.mrb[0].mxu0
      %v632 = vadd.f32 0.0, %v631
      %v633 = vpop.f32.mrb[0].mxu0
      %634 = vmatprep.mubr.f32.mxu0 0.0
      %635 = vmatmul.mubr.f32.gmra.mrb[0].mxu0 %v455
      %v636 = vpop.f32.mrb[0].mxu0
      %v637 = vadd.f32 0.0, %v636
      %v638 = vpop.f32.mrb[0].mxu0
      %639 = vmatprep.mubr.f32.mxu0 0.0
      %640 = vmatmul.mubr.f32.gmra.mrb[0].mxu0 %v458
      %v641 = vpop.f32.mrb[0].mxu0
      %v642 = vadd.f32 0.0, %v641
      %v643 = vpop.f32.mrb[0].mxu0
      %644 = vmatprep.mubr.f32.mxu0 0.0
      %645 = vmatmul.mubr.f32.gmra.mrb[0].mxu0 %v461
      %v646 = vpop.f32.mrb[0].mxu0
      %v647 = vadd.f32 0.0, %v646
      %v648 = vpop.f32.mrb[0].mxu0
      %649 = vmatprep.mubr.f32.mxu0 0.0
      %650 = vmatmul.mubr.f32.gmra.mrb[0].mxu0 %v464
      %v651 = vpop.f32.mrb[0].mxu0
      %v652 = vadd.f32 0.0, %v651
      %v653 = vpop.f32.mrb[0].mxu0
      %654 = vmatprep.mubr.f32.mxu0 0.0
      %655 = vmatmul.mubr.f32.gmra.mrb[0].mxu0 %v467
      %v656 = vpop.f32.mrb[0].mxu0
      %v657 = vadd.f32 0.0, %v656
      %v658 = vpop.f32.mrb[0].mxu0
      %659 = vmatprep.mubr.f32.mxu0 0.0
      %660 = vmatmul.mubr.f32.gmra.mrb[0].mxu0 %v470
      %v661 = vpop.f32.mrb[0].mxu0
      %v662 = vadd.f32 0.0, %v661
      %v663 = vpop.f32.mrb[0].mxu0
      %664 = vmatprep.mubr.f32.mxu0 0.0
      %665 = vmatmul.mubr.f32.gmra.mrb[0].mxu0 %v473
      %v666 = vpop.f32.mrb[0].mxu0
      %v667 = vadd.f32 0.0, %v666
      %v668 = vpop.f32.mrb[0].mxu0
      %669 = vmatprep.mubr.f32.mxu0 0.0
      %670 = vmatmul.mubr.f32.gmra.mrb[0].mxu0 %v476
      %v671 = vpop.f32.mrb[0].mxu0
      %v672 = vadd.f32 0.0, %v671
      %v673 = vpop.f32.mrb[0].mxu0
      %674 = vmatprep.mubr.f32.mxu0 0.0
      %675 = vmatmul.mubr.f32.gmra.mrb[0].mxu0 %v479
      %v676 = vpop.f32.mrb[0].mxu0
      %v677 = vadd.f32 0.0, %v676
      %v678 = vpop.f32.mrb[0].mxu0
      %679 = vmatprep.mubr.f32.mxu0 0.0
      %680 = vmatmul.mubr.f32.gmra.mrb[0].mxu0 %v482
      %v681 = vpop.f32.mrb[0].mxu0
      %v682 = vadd.f32 0.0, %v681
      %v683 = vpop.f32.mrb[0].mxu0
      %684 = vmatprep.mubr.f32.mxu0 0.0
      %685 = vmatmul.mubr.f32.gmra.mrb[0].mxu0 %v485
      %v686 = vpop.f32.mrb[0].mxu0
      %v687 = vadd.f32 0.0, %v686
      %v688 = vpop.f32.mrb[0].mxu0
      %689 = vmatprep.mubr.f32.mxu0 0.0
      %690 = vmatmul.mubr.f32.gmra.mrb[0].mxu0 %v488
      %v691 = vpop.f32.mrb[0].mxu0
      %v692 = vadd.f32 0.0, %v691
      %v693 = vpop.f32.mrb[0].mxu0
      %694 = vmatprep.mubr.f32.mxu0 0.0
      %695 = vmatmul.mubr.f32.gmra.mrb[0].mxu0 %v491
      %v696 = vpop.f32.mrb[0].mxu0
      %v697 = vadd.f32 0.0, %v696
      %v698 = vpop.f32.mrb[0].mxu0
      %699 = vmatprep.mubr.f32.mxu0 0.0
      %700 = vmatmul.mubr.f32.gmra.mrb[0].mxu0 %v494
      %v701 = vpop.f32.mrb[0].mxu0
      %v702 = vadd.f32 0.0, %v701
      %v703 = vpop.f32.mrb[0].mxu0
      %704 = vmatprep.mubr.f32.mxu0 0.0
      %705 = vmatmul.mubr.f32.gmra.mrb[0].mxu0 %v497
      %v706 = vpop.f32.mrb[0].mxu0
      %v707 = vadd.f32 0.0, %v706
      %v708 = vpop.f32.mrb[0].mxu0
      %709 = vmatprep.mubr.f32.mxu0 0.0
      %710 = vmatmul.mubr.f32.gmra.mrb[0].mxu0 %v500
      %v711 = vpop.f32.mrb[0].mxu0
      %v712 = vadd.f32 0.0, %v711
      %v713 = vpop.f32.mrb[0].mxu0
      %714 = vmatprep.mubr.f32.mxu0 0.0
      %715 = vmatmul.mubr.f32.gmra.mrb[0].mxu0 %v503
      %v716 = vpop.f32.mrb[0].mxu0
      %v717 = vadd.f32 0.0, %v716
      %v718 = vpop.f32.mrb[0].mxu0
      %719 = vmatprep.mubr.f32.mxu0 0.0
      %720 = vmatmul.mubr.f32.gmra.mrb[0].mxu0 %v506
      %v721 = vpop.f32.mrb[0].mxu0
      %v722 = vadd.f32 0.0, %v721
      %v723 = vpop.f32.mrb[0].mxu0
      %724 = vmatprep.mubr.f32.mxu0 0.0
      %725 = vmatmul.mubr.f32.gmra.mrb[0].mxu0 %v509
      %v726 = vpop.f32.mrb[0].mxu0
      %v727 = vadd.f32 0.0, %v726
      %v728 = vpop.f32.mrb[0].mxu0
      %729 = vmatprep.mubr.f32.mxu0 0.0
      %730 = vmatmul.mubr.f32.gmra.mrb[0].mxu0 %v512
      %v731 = vpop.f32.mrb[0].mxu0
      %v732 = vadd.f32 0.0, %v731
      %v733 = vpop.f32.mrb[0].mxu0
      %734 = vmatprep.mubr.f32.mxu0 0.0
      %735 = vmatmul.mubr.f32.gmra.mrb[0].mxu0 %v515
      %v736 = vpop.f32.mrb[0].mxu0
      %v737 = vadd.f32 0.0, %v736
      %v738 = vpop.f32.mrb[0].mxu0
      %739 = vmatprep.mubr.f32.mxu0 0.0
      %740 = vmatmul.mubr.f32.gmra.mrb[0].mxu0 %v518
      %v741 = vpop.f32.mrb[0].mxu0
      %v742 = vadd.f32 0.0, %v741
      %v743 = vpop.f32.mrb[0].mxu0
      %744 = vmatprep.mubr.f32.mxu0 0.0
      %745 = vmatmul.mubr.f32.gmra.mrb[0].mxu0 %v521
      %v746 = vpop.f32.mrb[0].mxu0
      %v747 = vadd.f32 0.0, %v746
      %v748 = vpop.f32.mrb[0].mxu0
      %749 = vmatprep.mubr.f32.mxu0 0.0
      %750 = vmatmul.mubr.f32.gmra.mrb[0].mxu0 %v524
      %v751 = vpop.f32.mrb[0].mxu0
      %v752 = vadd.f32 0.0, %v751
      %v753 = vpop.f32.mrb[0].mxu0
      %754 = vdwg.mxu0
      %v756 = vsel %vm225, %v363, 0
      %v759 = vsel %vm225, %v364, 0
      %v762 = vsel %vm225, %v365, 0
      %v765 = vsel %vm225, %v366, 0
      %v768 = vsel %vm225, %v367, 0
      %v771 = vsel %vm225, %v368, 0
      %v774 = vsel %vm225, %v369, 0
      %v777 = vsel %vm225, %v370, 0
      %v780 = vsel %vm225, %v371, 0
      %v783 = vsel %vm225, %v372, 0
      %v786 = vsel %vm225, %v373, 0
      %v789 = vsel %vm225, %v374, 0
      %v792 = vsel %vm225, %v375, 0
      %v795 = vsel %vm225, %v376, 0
      %v798 = vsel %vm225, %v377, 0
      %v801 = vsel %vm225, %v378, 0
      %v804 = vsel %vm225, %v379, 0
      %v807 = vsel %vm225, %v380, 0
      %v810 = vsel %vm225, %v381, 0
      %v813 = vsel %vm225, %v382, 0
      %v816 = vsel %vm225, %v383, 0
      %v819 = vsel %vm225, %v384, 0
      %v822 = vsel %vm225, %v385, 0
      %v825 = vsel %vm225, %v386, 0
      %v828 = vsel %vm225, %v387, 0
      %v831 = vsel %vm225, %v388, 0
      %v834 = vsel %vm225, %v389, 0
      %v837 = vsel %vm225, %v390, 0
      %v840 = vsel %vm225, %v391, 0
      %v843 = vsel %vm225, %v392, 0
      %v846 = vsel %vm225, %v393, 0
      %v849 = vsel %vm225, %v394, 0
      %v852 = vsel %vm526, %v395, 0
      %854 = vmatprep.subr.mxu0 0.0
      %855 = vmatpush1.msra.mxu0 %v852
      %856 = vmatprep.subr.mxu0 0.0
      %857 = vmatpush1.msra.mxu0 0.0
      %858 = vmatprep.subr.mxu0 0.0
      %859 = vmatpush1.msra.mxu0 0.0
      %860 = vmatprep.subr.mxu0 0.0
      %861 = vmatpush1.msra.mxu0 0.0
      %862 = vmatprep.subr.mxu0 0.0
      %863 = vmatpush1.msra.mxu0 0.0
      %864 = vmatprep.subr.mxu0 0.0
      %865 = vmatpush1.msra.mxu0 0.0
      %866 = vmatprep.subr.mxu0 0.0
      %867 = vmatpush1.msra.mxu0 0.0
      %868 = vmatprep.subr.mxu0 0.0
      %869 = vmatpush1.msra.mxu0 0.0
      %870 = vmatprep.subr.mxu0 0.0
      %871 = vmatpush1.msra.mxu0 0.0
      %872 = vmatprep.subr.mxu0 0.0
      %873 = vmatpush1.msra.mxu0 0.0
      %874 = vmatprep.subr.mxu0 0.0
      %875 = vmatpush1.msra.mxu0 0.0
      %876 = vmatprep.subr.mxu0 0.0
      %877 = vmatpush1.msra.mxu0 0.0
      %878 = vmatprep.subr.mxu0 0.0
      %879 = vmatpush1.msra.mxu0 0.0
      %880 = vmatprep.subr.mxu0 0.0
      %881 = vmatpush1.msra.mxu0 0.0
      %882 = vmatprep.subr.mxu0 0.0
      %883 = vmatpush1.msra.mxu0 0.0
      %884 = vmatprep.subr.mxu0 0.0
      %885 = vmatpush1.msra.mxu0 0.0
      %886 = vmatprep.subr.mxu0 0.0
      %887 = vmatpush1.msra.mxu0 0.0
      %888 = vmatprep.subr.mxu0 0.0
      %889 = vmatpush1.msra.mxu0 0.0
      %890 = vmatprep.subr.mxu0 0.0
      %891 = vmatpush1.msra.mxu0 0.0
      %892 = vmatprep.subr.mxu0 0.0
      %893 = vmatpush1.msra.mxu0 0.0
      %894 = vmatprep.subr.mxu0 0.0
      %895 = vmatpush1.msra.mxu0 0.0
      %896 = vmatprep.subr.mxu0 0.0
      %897 = vmatpush1.msra.mxu0 0.0
      %898 = vmatprep.subr.mxu0 0.0
      %899 = vmatpush1.msra.mxu0 0.0
      %900 = vmatprep.subr.mxu0 0.0
      %901 = vmatpush1.msra.mxu0 0.0
      %902 = vmatprep.subr.mxu0 0.0
      %903 = vmatpush1.msra.mxu0 0.0
      %904 = vmatprep.subr.mxu0 0.0
      %905 = vmatpush1.msra.mxu0 0.0
      %906 = vmatprep.subr.mxu0 0.0
      %907 = vmatpush1.msra.mxu0 0.0
      %908 = vmatprep.subr.mxu0 0.0
      %909 = vmatpush1.msra.mxu0 0.0
      %910 = vmatprep.subr.mxu0 0.0
      %911 = vmatpush1.msra.mxu0 0.0
      %912 = vmatprep.subr.mxu0 0.0
      %913 = vmatpush1.msra.mxu0 0.0
      %914 = vmatprep.subr.mxu0 0.0
      %915 = vmatpush1.msra.mxu0 0.0
      %916 = vmatprep.subr.mxu0 0.0
      %917 = vmatpush1.msra.mxu0 0.0
      %918 = vmatprep.mubr.f32.mxu0 0.0
      %919 = vmatmul.mubr.f32.gmra.mrb[0].mxu0 %v756
      %v920 = vpop.f32.mrb[0].mxu0
      %v921 = vadd.f32 %v597, %v920
      %v922 = vpop.f32.mrb[0].mxu0
      %923 = vmatprep.mubr.f32.mxu0 0.0
      %924 = vmatmul.mubr.f32.gmra.mrb[0].mxu0 %v759
      %v925 = vpop.f32.mrb[0].mxu0
      %v926 = vadd.f32 %v602, %v925
      %v927 = vpop.f32.mrb[0].mxu0
      %928 = vmatprep.mubr.f32.mxu0 0.0
      %929 = vmatmul.mubr.f32.gmra.mrb[0].mxu0 %v762
      %v930 = vpop.f32.mrb[0].mxu0
      %v931 = vadd.f32 %v607, %v930
      %v932 = vpop.f32.mrb[0].mxu0
      %933 = vmatprep.mubr.f32.mxu0 0.0
      %934 = vmatmul.mubr.f32.gmra.mrb[0].mxu0 %v765
      %v935 = vpop.f32.mrb[0].mxu0
      %v936 = vadd.f32 %v612, %v935
      %v937 = vpop.f32.mrb[0].mxu0
      %938 = vmatprep.mubr.f32.mxu0 0.0
      %939 = vmatmul.mubr.f32.gmra.mrb[0].mxu0 %v768
      %v940 = vpop.f32.mrb[0].mxu0
      %v941 = vadd.f32 %v617, %v940
      %v942 = vpop.f32.mrb[0].mxu0
      %943 = vmatprep.mubr.f32.mxu0 0.0
      %944 = vmatmul.mubr.f32.gmra.mrb[0].mxu0 %v771
      %v945 = vpop.f32.mrb[0].mxu0
      %v946 = vadd.f32 %v622, %v945
      %v947 = vpop.f32.mrb[0].mxu0
      %948 = vmatprep.mubr.f32.mxu0 0.0
      %949 = vmatmul.mubr.f32.gmra.mrb[0].mxu0 %v774
      %v950 = vpop.f32.mrb[0].mxu0
      %v951 = vadd.f32 %v627, %v950
      %v952 = vpop.f32.mrb[0].mxu0
      %953 = vmatprep.mubr.f32.mxu0 0.0
      %954 = vmatmul.mubr.f32.gmra.mrb[0].mxu0 %v777
      %v955 = vpop.f32.mrb[0].mxu0
      %v956 = vadd.f32 %v632, %v955
      %v957 = vpop.f32.mrb[0].mxu0
      %958 = vmatprep.mubr.f32.mxu0 0.0
      %959 = vmatmul.mubr.f32.gmra.mrb[0].mxu0 %v780
      %v960 = vpop.f32.mrb[0].mxu0
      %v961 = vadd.f32 %v637, %v960
      %v962 = vpop.f32.mrb[0].mxu0
      %963 = vmatprep.mubr.f32.mxu0 0.0
      %964 = vmatmul.mubr.f32.gmra.mrb[0].mxu0 %v783
      %v965 = vpop.f32.mrb[0].mxu0
      %v966 = vadd.f32 %v642, %v965
      %v967 = vpop.f32.mrb[0].mxu0
      %968 = vmatprep.mubr.f32.mxu0 0.0
      %969 = vmatmul.mubr.f32.gmra.mrb[0].mxu0 %v786
      %v970 = vpop.f32.mrb[0].mxu0
      %v971 = vadd.f32 %v647, %v970
      %v972 = vpop.f32.mrb[0].mxu0
      %973 = vmatprep.mubr.f32.mxu0 0.0
      %974 = vmatmul.mubr.f32.gmra.mrb[0].mxu0 %v789
      %v975 = vpop.f32.mrb[0].mxu0
      %v976 = vadd.f32 %v652, %v975
      %v977 = vpop.f32.mrb[0].mxu0
      %978 = vmatprep.mubr.f32.mxu0 0.0
      %979 = vmatmul.mubr.f32.gmra.mrb[0].mxu0 %v792
      %v980 = vpop.f32.mrb[0].mxu0
      %v981 = vadd.f32 %v657, %v980
      %v982 = vpop.f32.mrb[0].mxu0
      %983 = vmatprep.mubr.f32.mxu0 0.0
      %984 = vmatmul.mubr.f32.gmra.mrb[0].mxu0 %v795
      %v985 = vpop.f32.mrb[0].mxu0
      %v986 = vadd.f32 %v662, %v985
      %v987 = vpop.f32.mrb[0].mxu0
      %988 = vmatprep.mubr.f32.mxu0 0.0
      %989 = vmatmul.mubr.f32.gmra.mrb[0].mxu0 %v798
      %v990 = vpop.f32.mrb[0].mxu0
      %v991 = vadd.f32 %v667, %v990
      %v992 = vpop.f32.mrb[0].mxu0
      %993 = vmatprep.mubr.f32.mxu0 0.0
      %994 = vmatmul.mubr.f32.gmra.mrb[0].mxu0 %v801
      %v995 = vpop.f32.mrb[0].mxu0
      %v996 = vadd.f32 %v672, %v995
      %v997 = vpop.f32.mrb[0].mxu0
      %998 = vmatprep.mubr.f32.mxu0 0.0
      %999 = vmatmul.mubr.f32.gmra.mrb[0].mxu0 %v804
      %v1000 = vpop.f32.mrb[0].mxu0
      %v1001 = vadd.f32 %v677, %v1000
      %v1002 = vpop.f32.mrb[0].mxu0
      %1003 = vmatprep.mubr.f32.mxu0 0.0
      %1004 = vmatmul.mubr.f32.gmra.mrb[0].mxu0 %v807
      %v1005 = vpop.f32.mrb[0].mxu0
      %v1006 = vadd.f32 %v682, %v1005
      %v1007 = vpop.f32.mrb[0].mxu0
      %1008 = vmatprep.mubr.f32.mxu0 0.0
      %1009 = vmatmul.mubr.f32.gmra.mrb[0].mxu0 %v810
      %v1010 = vpop.f32.mrb[0].mxu0
      %v1011 = vadd.f32 %v687, %v1010
      %v1012 = vpop.f32.mrb[0].mxu0
      %1013 = vmatprep.mubr.f32.mxu0 0.0
      %1014 = vmatmul.mubr.f32.gmra.mrb[0].mxu0 %v813
      %v1015 = vpop.f32.mrb[0].mxu0
      %v1016 = vadd.f32 %v692, %v1015
      %v1017 = vpop.f32.mrb[0].mxu0
      %1018 = vmatprep.mubr.f32.mxu0 0.0
      %1019 = vmatmul.mubr.f32.gmra.mrb[0].mxu0 %v816
      %v1020 = vpop.f32.mrb[0].mxu0
      %v1021 = vadd.f32 %v697, %v1020
      %v1022 = vpop.f32.mrb[0].mxu0
      %1023 = vmatprep.mubr.f32.mxu0 0.0
      %1024 = vmatmul.mubr.f32.gmra.mrb[0].mxu0 %v819
      %v1025 = vpop.f32.mrb[0].mxu0
      %v1026 = vadd.f32 %v702, %v1025
      %v1027 = vpop.f32.mrb[0].mxu0
      %1028 = vmatprep.mubr.f32.mxu0 0.0
      %1029 = vmatmul.mubr.f32.gmra.mrb[0].mxu0 %v822
      %v1030 = vpop.f32.mrb[0].mxu0
      %v1031 = vadd.f32 %v707, %v1030
      %v1032 = vpop.f32.mrb[0].mxu0
      %1033 = vmatprep.mubr.f32.mxu0 0.0
      %1034 = vmatmul.mubr.f32.gmra.mrb[0].mxu0 %v825
      %v1035 = vpop.f32.mrb[0].mxu0
      %v1036 = vadd.f32 %v712, %v1035
      %v1037 = vpop.f32.mrb[0].mxu0
      %1038 = vmatprep.mubr.f32.mxu0 0.0
      %1039 = vmatmul.mubr.f32.gmra.mrb[0].mxu0 %v828
      %v1040 = vpop.f32.mrb[0].mxu0
      %v1041 = vadd.f32 %v717, %v1040
      %v1042 = vpop.f32.mrb[0].mxu0
      %1043 = vmatprep.mubr.f32.mxu0 0.0
      %1044 = vmatmul.mubr.f32.gmra.mrb[0].mxu0 %v831
      %v1045 = vpop.f32.mrb[0].mxu0
      %v1046 = vadd.f32 %v722, %v1045
      %v1047 = vpop.f32.mrb[0].mxu0
      %1048 = vmatprep.mubr.f32.mxu0 0.0
      %1049 = vmatmul.mubr.f32.gmra.mrb[0].mxu0 %v834
      %v1050 = vpop.f32.mrb[0].mxu0
      %v1051 = vadd.f32 %v727, %v1050
      %v1052 = vpop.f32.mrb[0].mxu0
      %1053 = vmatprep.mubr.f32.mxu0 0.0
      %1054 = vmatmul.mubr.f32.gmra.mrb[0].mxu0 %v837
      %v1055 = vpop.f32.mrb[0].mxu0
      %v1056 = vadd.f32 %v732, %v1055
      %v1057 = vpop.f32.mrb[0].mxu0
      %1058 = vmatprep.mubr.f32.mxu0 0.0
      %1059 = vmatmul.mubr.f32.gmra.mrb[0].mxu0 %v840
      %v1060 = vpop.f32.mrb[0].mxu0
      %v1061 = vadd.f32 %v737, %v1060
      %v1062 = vpop.f32.mrb[0].mxu0
      %1063 = vmatprep.mubr.f32.mxu0 0.0
      %1064 = vmatmul.mubr.f32.gmra.mrb[0].mxu0 %v843
      %v1065 = vpop.f32.mrb[0].mxu0
      %v1066 = vadd.f32 %v742, %v1065
      %v1067 = vpop.f32.mrb[0].mxu0
      %1068 = vmatprep.mubr.f32.mxu0 0.0
      %1069 = vmatmul.mubr.f32.gmra.mrb[0].mxu0 %v846
      %v1070 = vpop.f32.mrb[0].mxu0
      %v1071 = vadd.f32 %v747, %v1070
      %v1072 = vpop.f32.mrb[0].mxu0
      %1073 = vmatprep.mubr.f32.mxu0 0.0
      %1074 = vmatmul.mubr.f32.gmra.mrb[0].mxu0 %v849
      %v1075 = vpop.f32.mrb[0].mxu0
      %v1076 = vadd.f32 %v752, %v1075
      %v1077 = vpop.f32.mrb[0].mxu0
      %1078 = vdwg.mxu0
      %v1079 = vld [vmem:[#allocation2 + $0x9] sm:$0xff]
      %v1080 = vld [vmem:[#allocation2 + $0x11] sm:$0xff]
      %v1081 = vld [vmem:[#allocation2 + $0x29] sm:$0xff]
      %v1082 = vld [vmem:[#allocation2 + $0x31] sm:$0xff]
      %v1083 = vld [vmem:[#allocation2 + $0x49] sm:$0xff]
      %v1084 = vld [vmem:[#allocation2 + $0x51] sm:$0xff]
      %v1085 = vld [vmem:[#allocation2 + $0x69] sm:$0xff]
      %v1086 = vld [vmem:[#allocation2 + $0x71] sm:$0xff]
      %v1087 = vld [vmem:[#allocation2 + $0x89] sm:$0xff]
      %v1088 = vld [vmem:[#allocation2 + $0x91] sm:$0xff]
      %v1089 = vld [vmem:[#allocation2 + $0xa9] sm:$0xff]
      %v1090 = vld [vmem:[#allocation2 + $0xb1] sm:$0xff]
      %v1091 = vld [vmem:[#allocation2 + $0xc9] sm:$0xff]
      %v1092 = vld [vmem:[#allocation2 + $0xd1] sm:$0xff]
      %v1093 = vld [vmem:[#allocation2 + $0xe9] sm:$0xff]
      %v1094 = vld [vmem:[#allocation2 + $0xf1] sm:$0xff]
      %v1095 = vld [vmem:[#allocation2 + $0x109] sm:$0xff]
      %v1096 = vld [vmem:[#allocation2 + $0x111] sm:$0xff]
      %v1097 = vld [vmem:[#allocation2 + $0x129] sm:$0xff]
      %v1098 = vld [vmem:[#allocation2 + $0x131] sm:$0xff]
      %v1099 = vld [vmem:[#allocation2 + $0x149] sm:$0xff]
      %v1100 = vld [vmem:[#allocation2 + $0x151] sm:$0xff]
      %v1101 = vld [vmem:[#allocation2 + $0x169] sm:$0xff]
      %v1102 = vld [vmem:[#allocation2 + $0x171] sm:$0xff]
      %v1103 = vld [vmem:[#allocation2 + $0x189] sm:$0xff]
      %v1104 = vld [vmem:[#allocation2 + $0x191] sm:$0xff]
      %v1105 = vld [vmem:[#allocation2 + $0x1a9] sm:$0xff]
      %v1106 = vld [vmem:[#allocation2 + $0x1b1] sm:$0xff]
      %v1107 = vld [vmem:[#allocation2 + $0x1c9] sm:$0xff]
      %v1108 = vld [vmem:[#allocation2 + $0x1d1] sm:$0xff]
      %v1109 = vld [vmem:[#allocation2 + $0x1e9] sm:$0xff]
      %v1110 = vld [vmem:[#allocation2 + $0x1f1] sm:$0xff]
      %s1111 = scalar_lea.vmem %s1, 8
      %v1112 = vld [vmem:[%s1111] sm:$0xf]
      %v1114 = vsel %vm225, %v1079, 0
      %v1117 = vsel %vm225, %v1080, 0
      %v1120 = vsel %vm225, %v1081, 0
      %v1123 = vsel %vm225, %v1082, 0
      %v1126 = vsel %vm225, %v1083, 0
      %v1129 = vsel %vm225, %v1084, 0
      %v1132 = vsel %vm225, %v1085, 0
      %v1135 = vsel %vm225, %v1086, 0
      %v1138 = vsel %vm225, %v1087, 0
      %v1141 = vsel %vm225, %v1088, 0
      %v1144 = vsel %vm225, %v1089, 0
      %v1147 = vsel %vm225, %v1090, 0
      %v1150 = vsel %vm225, %v1091, 0
      %v1153 = vsel %vm225, %v1092, 0
      %v1156 = vsel %vm225, %v1093, 0
      %v1159 = vsel %vm225, %v1094, 0
      %v1162 = vsel %vm225, %v1095, 0
      %v1165 = vsel %vm225, %v1096, 0
      %v1168 = vsel %vm225, %v1097, 0
      %v1171 = vsel %vm225, %v1098, 0
      %v1174 = vsel %vm225, %v1099, 0
      %v1177 = vsel %vm225, %v1100, 0
      %v1180 = vsel %vm225, %v1101, 0
      %v1183 = vsel %vm225, %v1102, 0
      %v1186 = vsel %vm225, %v1103, 0
      %v1189 = vsel %vm225, %v1104, 0
      %v1192 = vsel %vm225, %v1105, 0
      %v1195 = vsel %vm225, %v1106, 0
      %v1198 = vsel %vm225, %v1107, 0
      %v1201 = vsel %vm225, %v1108, 0
      %v1204 = vsel %vm225, %v1109, 0
      %v1207 = vsel %vm225, %v1110, 0
      %v1210 = vsel %vm526, %v1112, 0
      %1212 = vmatprep.subr.mxu0 0.0
      %1213 = vmatpush1.msra.mxu0 %v1210
      %1214 = vmatprep.subr.mxu0 0.0
      %1215 = vmatpush1.msra.mxu0 0.0
      %1216 = vmatprep.subr.mxu0 0.0
      %1217 = vmatpush1.msra.mxu0 0.0
      %1218 = vmatprep.subr.mxu0 0.0
      %1219 = vmatpush1.msra.mxu0 0.0
      %1220 = vmatprep.subr.mxu0 0.0
      %1221 = vmatpush1.msra.mxu0 0.0
      %1222 = vmatprep.subr.mxu0 0.0
      %1223 = vmatpush1.msra.mxu0 0.0
      %1224 = vmatprep.subr.mxu0 0.0
      %1225 = vmatpush1.msra.mxu0 0.0
      %1226 = vmatprep.subr.mxu0 0.0
      %1227 = vmatpush1.msra.mxu0 0.0
      %1228 = vmatprep.subr.mxu0 0.0
      %1229 = vmatpush1.msra.mxu0 0.0
      %1230 = vmatprep.subr.mxu0 0.0
      %1231 = vmatpush1.msra.mxu0 0.0
      %1232 = vmatprep.subr.mxu0 0.0
      %1233 = vmatpush1.msra.mxu0 0.0
      %1234 = vmatprep.subr.mxu0 0.0
      %1235 = vmatpush1.msra.mxu0 0.0
      %1236 = vmatprep.subr.mxu0 0.0
      %1237 = vmatpush1.msra.mxu0 0.0
      %1238 = vmatprep.subr.mxu0 0.0
      %1239 = vmatpush1.msra.mxu0 0.0
      %1240 = vmatprep.subr.mxu0 0.0
      %1241 = vmatpush1.msra.mxu0 0.0
      %1242 = vmatprep.subr.mxu0 0.0
      %1243 = vmatpush1.msra.mxu0 0.0
      %1244 = vmatprep.subr.mxu0 0.0
      %1245 = vmatpush1.msra.mxu0 0.0
      %1246 = vmatprep.subr.mxu0 0.0
      %1247 = vmatpush1.msra.mxu0 0.0
      %1248 = vmatprep.subr.mxu0 0.0
      %1249 = vmatpush1.msra.mxu0 0.0
      %1250 = vmatprep.subr.mxu0 0.0
      %1251 = vmatpush1.msra.mxu0 0.0
      %1252 = vmatprep.subr.mxu0 0.0
      %1253 = vmatpush1.msra.mxu0 0.0
      %1254 = vmatprep.subr.mxu0 0.0
      %1255 = vmatpush1.msra.mxu0 0.0
      %1256 = vmatprep.subr.mxu0 0.0
      %1257 = vmatpush1.msra.mxu0 0.0
      %1258 = vmatprep.subr.mxu0 0.0
      %1259 = vmatpush1.msra.mxu0 0.0
      %1260 = vmatprep.subr.mxu0 0.0
      %1261 = vmatpush1.msra.mxu0 0.0
      %1262 = vmatprep.subr.mxu0 0.0
      %1263 = vmatpush1.msra.mxu0 0.0
      %1264 = vmatprep.subr.mxu0 0.0
      %1265 = vmatpush1.msra.mxu0 0.0
      %1266 = vmatprep.subr.mxu0 0.0
      %1267 = vmatpush1.msra.mxu0 0.0
      %1268 = vmatprep.subr.mxu0 0.0
      %1269 = vmatpush1.msra.mxu0 0.0
      %1270 = vmatprep.subr.mxu0 0.0
      %1271 = vmatpush1.msra.mxu0 0.0
      %1272 = vmatprep.subr.mxu0 0.0
      %1273 = vmatpush1.msra.mxu0 0.0
      %1274 = vmatprep.subr.mxu0 0.0
      %1275 = vmatpush1.msra.mxu0 0.0
      %1276 = vmatprep.mubr.f32.mxu0 0.0
      %1277 = vmatmul.mubr.f32.gmra.mrb[0].mxu0 %v1114
      %v1278 = vpop.f32.mrb[0].mxu0
      %v1279 = vadd.f32 0.0, %v1278
      %v1280 = vpop.f32.mrb[0].mxu0
      %1281 = vmatprep.mubr.f32.mxu0 0.0
      %1282 = vmatmul.mubr.f32.gmra.mrb[0].mxu0 %v1117
      %v1283 = vpop.f32.mrb[0].mxu0
      %v1284 = vadd.f32 0.0, %v1283
      %v1285 = vpop.f32.mrb[0].mxu0
      %1286 = vmatprep.mubr.f32.mxu0 0.0
      %1287 = vmatmul.mubr.f32.gmra.mrb[0].mxu0 %v1120
      %v1288 = vpop.f32.mrb[0].mxu0
      %v1289 = vadd.f32 0.0, %v1288
      %v1290 = vpop.f32.mrb[0].mxu0
      %1291 = vmatprep.mubr.f32.mxu0 0.0
      %1292 = vmatmul.mubr.f32.gmra.mrb[0].mxu0 %v1123
      %v1293 = vpop.f32.mrb[0].mxu0
      %v1294 = vadd.f32 0.0, %v1293
      %v1295 = vpop.f32.mrb[0].mxu0
      %1296 = vmatprep.mubr.f32.mxu0 0.0
      %1297 = vmatmul.mubr.f32.gmra.mrb[0].mxu0 %v1126
      %v1298 = vpop.f32.mrb[0].mxu0
      %v1299 = vadd.f32 0.0, %v1298
      %v1300 = vpop.f32.mrb[0].mxu0
      %1301 = vmatprep.mubr.f32.mxu0 0.0
      %1302 = vmatmul.mubr.f32.gmra.mrb[0].mxu0 %v1129
      %v1303 = vpop.f32.mrb[0].mxu0
      %v1304 = vadd.f32 0.0, %v1303
      %v1305 = vpop.f32.mrb[0].mxu0
      %1306 = vmatprep.mubr.f32.mxu0 0.0
      %1307 = vmatmul.mubr.f32.gmra.mrb[0].mxu0 %v1132
      %v1308 = vpop.f32.mrb[0].mxu0
      %v1309 = vadd.f32 0.0, %v1308
      %v1310 = vpop.f32.mrb[0].mxu0
      %1311 = vmatprep.mubr.f32.mxu0 0.0
      %1312 = vmatmul.mubr.f32.gmra.mrb[0].mxu0 %v1135
      %v1313 = vpop.f32.mrb[0].mxu0
      %v1314 = vadd.f32 0.0, %v1313
      %v1315 = vpop.f32.mrb[0].mxu0
      %1316 = vmatprep.mubr.f32.mxu0 0.0
      %1317 = vmatmul.mubr.f32.gmra.mrb[0].mxu0 %v1138
      %v1318 = vpop.f32.mrb[0].mxu0
      %v1319 = vadd.f32 0.0, %v1318
      %v1320 = vpop.f32.mrb[0].mxu0
      %1321 = vmatprep.mubr.f32.mxu0 0.0
      %1322 = vmatmul.mubr.f32.gmra.mrb[0].mxu0 %v1141
      %v1323 = vpop.f32.mrb[0].mxu0
      %v1324 = vadd.f32 0.0, %v1323
      %v1325 = vpop.f32.mrb[0].mxu0
      %1326 = vmatprep.mubr.f32.mxu0 0.0
      %1327 = vmatmul.mubr.f32.gmra.mrb[0].mxu0 %v1144
      %v1328 = vpop.f32.mrb[0].mxu0
      %v1329 = vadd.f32 0.0, %v1328
      %v1330 = vpop.f32.mrb[0].mxu0
      %1331 = vmatprep.mubr.f32.mxu0 0.0
      %1332 = vmatmul.mubr.f32.gmra.mrb[0].mxu0 %v1147
      %v1333 = vpop.f32.mrb[0].mxu0
      %v1334 = vadd.f32 0.0, %v1333
      %v1335 = vpop.f32.mrb[0].mxu0
      %1336 = vmatprep.mubr.f32.mxu0 0.0
      %1337 = vmatmul.mubr.f32.gmra.mrb[0].mxu0 %v1150
      %v1338 = vpop.f32.mrb[0].mxu0
      %v1339 = vadd.f32 0.0, %v1338
      %v1340 = vpop.f32.mrb[0].mxu0
      %1341 = vmatprep.mubr.f32.mxu0 0.0
      %1342 = vmatmul.mubr.f32.gmra.mrb[0].mxu0 %v1153
      %v1343 = vpop.f32.mrb[0].mxu0
      %v1344 = vadd.f32 0.0, %v1343
      %v1345 = vpop.f32.mrb[0].mxu0
      %1346 = vmatprep.mubr.f32.mxu0 0.0
      %1347 = vmatmul.mubr.f32.gmra.mrb[0].mxu0 %v1156
      %v1348 = vpop.f32.mrb[0].mxu0
      %v1349 = vadd.f32 0.0, %v1348
      %v1350 = vpop.f32.mrb[0].mxu0
      %1351 = vmatprep.mubr.f32.mxu0 0.0
      %1352 = vmatmul.mubr.f32.gmra.mrb[0].mxu0 %v1159
      %v1353 = vpop.f32.mrb[0].mxu0
      %v1354 = vadd.f32 0.0, %v1353
      %v1355 = vpop.f32.mrb[0].mxu0
      %1356 = vmatprep.mubr.f32.mxu0 0.0
      %1357 = vmatmul.mubr.f32.gmra.mrb[0].mxu0 %v1162
      %v1358 = vpop.f32.mrb[0].mxu0
      %v1359 = vadd.f32 0.0, %v1358
      %v1360 = vpop.f32.mrb[0].mxu0
      %1361 = vmatprep.mubr.f32.mxu0 0.0
      %1362 = vmatmul.mubr.f32.gmra.mrb[0].mxu0 %v1165
      %v1363 = vpop.f32.mrb[0].mxu0
      %v1364 = vadd.f32 0.0, %v1363
      %v1365 = vpop.f32.mrb[0].mxu0
      %1366 = vmatprep.mubr.f32.mxu0 0.0
      %1367 = vmatmul.mubr.f32.gmra.mrb[0].mxu0 %v1168
      %v1368 = vpop.f32.mrb[0].mxu0
      %v1369 = vadd.f32 0.0, %v1368
      %v1370 = vpop.f32.mrb[0].mxu0
      %1371 = vmatprep.mubr.f32.mxu0 0.0
      %1372 = vmatmul.mubr.f32.gmra.mrb[0].mxu0 %v1171
      %v1373 = vpop.f32.mrb[0].mxu0
      %v1374 = vadd.f32 0.0, %v1373
      %v1375 = vpop.f32.mrb[0].mxu0
      %1376 = vmatprep.mubr.f32.mxu0 0.0
      %1377 = vmatmul.mubr.f32.gmra.mrb[0].mxu0 %v1174
      %v1378 = vpop.f32.mrb[0].mxu0
      %v1379 = vadd.f32 0.0, %v1378
      %v1380 = vpop.f32.mrb[0].mxu0
      %1381 = vmatprep.mubr.f32.mxu0 0.0
      %1382 = vmatmul.mubr.f32.gmra.mrb[0].mxu0 %v1177
      %v1383 = vpop.f32.mrb[0].mxu0
      %v1384 = vadd.f32 0.0, %v1383
      %v1385 = vpop.f32.mrb[0].mxu0
      %1386 = vmatprep.mubr.f32.mxu0 0.0
      %1387 = vmatmul.mubr.f32.gmra.mrb[0].mxu0 %v1180
      %v1388 = vpop.f32.mrb[0].mxu0
      %v1389 = vadd.f32 0.0, %v1388
      %v1390 = vpop.f32.mrb[0].mxu0
      %1391 = vmatprep.mubr.f32.mxu0 0.0
      %1392 = vmatmul.mubr.f32.gmra.mrb[0].mxu0 %v1183
      %v1393 = vpop.f32.mrb[0].mxu0
      %v1394 = vadd.f32 0.0, %v1393
      %v1395 = vpop.f32.mrb[0].mxu0
      %1396 = vmatprep.mubr.f32.mxu0 0.0
      %1397 = vmatmul.mubr.f32.gmra.mrb[0].mxu0 %v1186
      %v1398 = vpop.f32.mrb[0].mxu0
      %v1399 = vadd.f32 0.0, %v1398
      %v1400 = vpop.f32.mrb[0].mxu0
      %1401 = vmatprep.mubr.f32.mxu0 0.0
      %1402 = vmatmul.mubr.f32.gmra.mrb[0].mxu0 %v1189
      %v1403 = vpop.f32.mrb[0].mxu0
      %v1404 = vadd.f32 0.0, %v1403
      %v1405 = vpop.f32.mrb[0].mxu0
      %1406 = vmatprep.mubr.f32.mxu0 0.0
      %1407 = vmatmul.mubr.f32.gmra.mrb[0].mxu0 %v1192
      %v1408 = vpop.f32.mrb[0].mxu0
      %v1409 = vadd.f32 0.0, %v1408
      %v1410 = vpop.f32.mrb[0].mxu0
      %1411 = vmatprep.mubr.f32.mxu0 0.0
      %1412 = vmatmul.mubr.f32.gmra.mrb[0].mxu0 %v1195
      %v1413 = vpop.f32.mrb[0].mxu0
      %v1414 = vadd.f32 0.0, %v1413
      %v1415 = vpop.f32.mrb[0].mxu0
      %1416 = vmatprep.mubr.f32.mxu0 0.0
      %1417 = vmatmul.mubr.f32.gmra.mrb[0].mxu0 %v1198
      %v1418 = vpop.f32.mrb[0].mxu0
      %v1419 = vadd.f32 0.0, %v1418
      %v1420 = vpop.f32.mrb[0].mxu0
      %1421 = vmatprep.mubr.f32.mxu0 0.0
      %1422 = vmatmul.mubr.f32.gmra.mrb[0].mxu0 %v1201
      %v1423 = vpop.f32.mrb[0].mxu0
      %v1424 = vadd.f32 0.0, %v1423
      %v1425 = vpop.f32.mrb[0].mxu0
      %1426 = vmatprep.mubr.f32.mxu0 0.0
      %1427 = vmatmul.mubr.f32.gmra.mrb[0].mxu0 %v1204
      %v1428 = vpop.f32.mrb[0].mxu0
      %v1429 = vadd.f32 0.0, %v1428
      %v1430 = vpop.f32.mrb[0].mxu0
      %1431 = vmatprep.mubr.f32.mxu0 0.0
      %1432 = vmatmul.mubr.f32.gmra.mrb[0].mxu0 %v1207
      %v1433 = vpop.f32.mrb[0].mxu0
      %v1434 = vadd.f32 0.0, %v1433
      %v1435 = vpop.f32.mrb[0].mxu0
      %1436 = vdwg.mxu0
      %v1437 = vadd.f32 %v921, %v1279
      %v1438 = vadd.f32 %v926, %v1284
      %v1439 = vadd.f32 %v931, %v1289
      %v1440 = vadd.f32 %v936, %v1294
      %v1441 = vadd.f32 %v941, %v1299
      %v1442 = vadd.f32 %v946, %v1304
      %v1443 = vadd.f32 %v951, %v1309
      %v1444 = vadd.f32 %v956, %v1314
      %v1445 = vadd.f32 %v961, %v1319
      %v1446 = vadd.f32 %v966, %v1324
      %v1447 = vadd.f32 %v971, %v1329
      %v1448 = vadd.f32 %v976, %v1334
      %v1449 = vadd.f32 %v981, %v1339
      %v1450 = vadd.f32 %v986, %v1344
      %v1451 = vadd.f32 %v991, %v1349
      %v1452 = vadd.f32 %v996, %v1354
      %v1453 = vadd.f32 %v1001, %v1359
      %v1454 = vadd.f32 %v1006, %v1364
      %v1455 = vadd.f32 %v1011, %v1369
      %v1456 = vadd.f32 %v1016, %v1374
      %v1457 = vadd.f32 %v1021, %v1379
      %v1458 = vadd.f32 %v1026, %v1384
      %v1459 = vadd.f32 %v1031, %v1389
      %v1460 = vadd.f32 %v1036, %v1394
      %v1461 = vadd.f32 %v1041, %v1399
      %v1462 = vadd.f32 %v1046, %v1404
      %v1463 = vadd.f32 %v1051, %v1409
      %v1464 = vadd.f32 %v1056, %v1414
      %v1465 = vadd.f32 %v1061, %v1419
      %v1466 = vadd.f32 %v1066, %v1424
      %v1467 = vadd.f32 %v1071, %v1429
      %v1468 = vadd.f32 %v1076, %v1434
      %v1469 = vld [vmem:[%s330 + $0x7] sm:$0xff]
      %v1470 = vld [vmem:[%s330 + $0xf] sm:$0xff]
      %v1471 = vld [vmem:[%s330 + $0x27] sm:$0xff]
      %v1472 = vld [vmem:[%s330 + $0x2f] sm:$0xff]
      %v1473 = vld [vmem:[%s330 + $0x47] sm:$0xff]
      %v1474 = vld [vmem:[%s330 + $0x4f] sm:$0xff]
      %v1475 = vld [vmem:[%s330 + $0x67] sm:$0xff]
      %v1476 = vld [vmem:[%s330 + $0x6f] sm:$0xff]
      %v1477 = vld [vmem:[%s330 + $0x87] sm:$0xff]
      %v1478 = vld [vmem:[%s330 + $0x8f] sm:$0xff]
      %v1479 = vld [vmem:[%s330 + $0xa7] sm:$0xff]
      %v1480 = vld [vmem:[%s330 + $0xaf] sm:$0xff]
      %v1481 = vld [vmem:[%s330 + $0xc7] sm:$0xff]
      %v1482 = vld [vmem:[%s330 + $0xcf] sm:$0xff]
      %v1483 = vld [vmem:[%s330 + $0xe7] sm:$0xff]
      %v1484 = vld [vmem:[%s330 + $0xef] sm:$0xff]
      %v1485 = vld [vmem:[%s330 + $0x107] sm:$0xff]
      %v1486 = vld [vmem:[%s330 + $0x10f] sm:$0xff]
      %v1487 = vld [vmem:[%s330 + $0x127] sm:$0xff]
      %v1488 = vld [vmem:[%s330 + $0x12f] sm:$0xff]
      %v1489 = vld [vmem:[%s330 + $0x147] sm:$0xff]
      %v1490 = vld [vmem:[%s330 + $0x14f] sm:$0xff]
      %v1491 = vld [vmem:[%s330 + $0x167] sm:$0xff]
      %v1492 = vld [vmem:[%s330 + $0x16f] sm:$0xff]
      %v1493 = vld [vmem:[%s330 + $0x187] sm:$0xff]
      %v1494 = vld [vmem:[%s330 + $0x18f] sm:$0xff]
      %v1495 = vld [vmem:[%s330 + $0x1a7] sm:$0xff]
      %v1496 = vld [vmem:[%s330 + $0x1af] sm:$0xff]
      %v1497 = vld [vmem:[%s330 + $0x1c7] sm:$0xff]
      %v1498 = vld [vmem:[%s330 + $0x1cf] sm:$0xff]
      %v1499 = vld [vmem:[%s330 + $0x1e7] sm:$0xff]
      %v1500 = vld [vmem:[%s330 + $0x1ef] sm:$0xff]
      %s1501 = scalar_lea.vmem %s1, 12
      %v1502 = vld [vmem:[%s1501] sm:$0xf]
      %v1504 = vsel %vm225, %v1469, 0
      %v1507 = vsel %vm225, %v1470, 0
      %v1510 = vsel %vm225, %v1471, 0
      %v1513 = vsel %vm225, %v1472, 0
      %v1516 = vsel %vm225, %v1473, 0
      %v1519 = vsel %vm225, %v1474, 0
      %v1522 = vsel %vm225, %v1475, 0
      %v1525 = vsel %vm225, %v1476, 0
      %v1528 = vsel %vm225, %v1477, 0
      %v1531 = vsel %vm225, %v1478, 0
      %v1534 = vsel %vm225, %v1479, 0
      %v1537 = vsel %vm225, %v1480, 0
      %v1540 = vsel %vm225, %v1481, 0
      %v1543 = vsel %vm225, %v1482, 0
      %v1546 = vsel %vm225, %v1483, 0
      %v1549 = vsel %vm225, %v1484, 0
      %v1552 = vsel %vm225, %v1485, 0
      %v1555 = vsel %vm225, %v1486, 0
      %v1558 = vsel %vm225, %v1487, 0
      %v1561 = vsel %vm225, %v1488, 0
      %v1564 = vsel %vm225, %v1489, 0
      %v1567 = vsel %vm225, %v1490, 0
      %v1570 = vsel %vm225, %v1491, 0
      %v1573 = vsel %vm225, %v1492, 0
      %v1576 = vsel %vm225, %v1493, 0
      %v1579 = vsel %vm225, %v1494, 0
      %v1582 = vsel %vm225, %v1495, 0
      %v1585 = vsel %vm225, %v1496, 0
      %v1588 = vsel %vm225, %v1497, 0
      %v1591 = vsel %vm225, %v1498, 0
      %v1594 = vsel %vm225, %v1499, 0
      %v1597 = vsel %vm225, %v1500, 0
      %v1600 = vsel %vm526, %v1502, 0
      %1602 = vmatprep.subr.mxu0 0.0
      %1603 = vmatpush1.msra.mxu0 %v1600
      %1604 = vmatprep.subr.mxu0 0.0
      %1605 = vmatpush1.msra.mxu0 0.0
      %1606 = vmatprep.subr.mxu0 0.0
      %1607 = vmatpush1.msra.mxu0 0.0
      %1608 = vmatprep.subr.mxu0 0.0
      %1609 = vmatpush1.msra.mxu0 0.0
      %1610 = vmatprep.subr.mxu0 0.0
      %1611 = vmatpush1.msra.mxu0 0.0
      %1612 = vmatprep.subr.mxu0 0.0
      %1613 = vmatpush1.msra.mxu0 0.0
      %1614 = vmatprep.subr.mxu0 0.0
      %1615 = vmatpush1.msra.mxu0 0.0
      %1616 = vmatprep.subr.mxu0 0.0
      %1617 = vmatpush1.msra.mxu0 0.0
      %1618 = vmatprep.subr.mxu0 0.0
      %1619 = vmatpush1.msra.mxu0 0.0
      %1620 = vmatprep.subr.mxu0 0.0
      %1621 = vmatpush1.msra.mxu0 0.0
      %1622 = vmatprep.subr.mxu0 0.0
      %1623 = vmatpush1.msra.mxu0 0.0
      %1624 = vmatprep.subr.mxu0 0.0
      %1625 = vmatpush1.msra.mxu0 0.0
      %1626 = vmatprep.subr.mxu0 0.0
      %1627 = vmatpush1.msra.mxu0 0.0
      %1628 = vmatprep.subr.mxu0 0.0
      %1629 = vmatpush1.msra.mxu0 0.0
      %1630 = vmatprep.subr.mxu0 0.0
      %1631 = vmatpush1.msra.mxu0 0.0
      %1632 = vmatprep.subr.mxu0 0.0
      %1633 = vmatpush1.msra.mxu0 0.0
      %1634 = vmatprep.subr.mxu0 0.0
      %1635 = vmatpush1.msra.mxu0 0.0
      %1636 = vmatprep.subr.mxu0 0.0
      %1637 = vmatpush1.msra.mxu0 0.0
      %1638 = vmatprep.subr.mxu0 0.0
      %1639 = vmatpush1.msra.mxu0 0.0
      %1640 = vmatprep.subr.mxu0 0.0
      %1641 = vmatpush1.msra.mxu0 0.0
      %1642 = vmatprep.subr.mxu0 0.0
      %1643 = vmatpush1.msra.mxu0 0.0
      %1644 = vmatprep.subr.mxu0 0.0
      %1645 = vmatpush1.msra.mxu0 0.0
      %1646 = vmatprep.subr.mxu0 0.0
      %1647 = vmatpush1.msra.mxu0 0.0
      %1648 = vmatprep.subr.mxu0 0.0
      %1649 = vmatpush1.msra.mxu0 0.0
      %1650 = vmatprep.subr.mxu0 0.0
      %1651 = vmatpush1.msra.mxu0 0.0
      %1652 = vmatprep.subr.mxu0 0.0
      %1653 = vmatpush1.msra.mxu0 0.0
      %1654 = vmatprep.subr.mxu0 0.0
      %1655 = vmatpush1.msra.mxu0 0.0
      %1656 = vmatprep.subr.mxu0 0.0
      %1657 = vmatpush1.msra.mxu0 0.0
      %1658 = vmatprep.subr.mxu0 0.0
      %1659 = vmatpush1.msra.mxu0 0.0
      %1660 = vmatprep.subr.mxu0 0.0
      %1661 = vmatpush1.msra.mxu0 0.0
      %1662 = vmatprep.subr.mxu0 0.0
      %1663 = vmatpush1.msra.mxu0 0.0
      %1664 = vmatprep.subr.mxu0 0.0
      %1665 = vmatpush1.msra.mxu0 0.0
      %1666 = vmatprep.mubr.f32.mxu0 0.0
      %1667 = vmatmul.mubr.f32.gmra.mrb[0].mxu0 %v1504
      %v1668 = vpop.f32.mrb[0].mxu0
      %v1669 = vadd.f32 0.0, %v1668
      %v1670 = vpop.f32.mrb[0].mxu0
      %1671 = vmatprep.mubr.f32.mxu0 0.0
      %1672 = vmatmul.mubr.f32.gmra.mrb[0].mxu0 %v1507
      %v1673 = vpop.f32.mrb[0].mxu0
      %v1674 = vadd.f32 0.0, %v1673
      %v1675 = vpop.f32.mrb[0].mxu0
      %1676 = vmatprep.mubr.f32.mxu0 0.0
      %1677 = vmatmul.mubr.f32.gmra.mrb[0].mxu0 %v1510
      %v1678 = vpop.f32.mrb[0].mxu0
      %v1679 = vadd.f32 0.0, %v1678
      %v1680 = vpop.f32.mrb[0].mxu0
      %1681 = vmatprep.mubr.f32.mxu0 0.0
      %1682 = vmatmul.mubr.f32.gmra.mrb[0].mxu0 %v1513
      %v1683 = vpop.f32.mrb[0].mxu0
      %v1684 = vadd.f32 0.0, %v1683
      %v1685 = vpop.f32.mrb[0].mxu0
      %1686 = vmatprep.mubr.f32.mxu0 0.0
      %1687 = vmatmul.mubr.f32.gmra.mrb[0].mxu0 %v1516
      %v1688 = vpop.f32.mrb[0].mxu0
      %v1689 = vadd.f32 0.0, %v1688
      %v1690 = vpop.f32.mrb[0].mxu0
      %1691 = vmatprep.mubr.f32.mxu0 0.0
      %1692 = vmatmul.mubr.f32.gmra.mrb[0].mxu0 %v1519
      %v1693 = vpop.f32.mrb[0].mxu0
      %v1694 = vadd.f32 0.0, %v1693
      %v1695 = vpop.f32.mrb[0].mxu0
      %1696 = vmatprep.mubr.f32.mxu0 0.0
      %1697 = vmatmul.mubr.f32.gmra.mrb[0].mxu0 %v1522
      %v1698 = vpop.f32.mrb[0].mxu0
      %v1699 = vadd.f32 0.0, %v1698
      %v1700 = vpop.f32.mrb[0].mxu0
      %1701 = vmatprep.mubr.f32.mxu0 0.0
      %1702 = vmatmul.mubr.f32.gmra.mrb[0].mxu0 %v1525
      %v1703 = vpop.f32.mrb[0].mxu0
      %v1704 = vadd.f32 0.0, %v1703
      %v1705 = vpop.f32.mrb[0].mxu0
      %1706 = vmatprep.mubr.f32.mxu0 0.0
      %1707 = vmatmul.mubr.f32.gmra.mrb[0].mxu0 %v1528
      %v1708 = vpop.f32.mrb[0].mxu0
      %v1709 = vadd.f32 0.0, %v1708
      %v1710 = vpop.f32.mrb[0].mxu0
      %1711 = vmatprep.mubr.f32.mxu0 0.0
      %1712 = vmatmul.mubr.f32.gmra.mrb[0].mxu0 %v1531
      %v1713 = vpop.f32.mrb[0].mxu0
      %v1714 = vadd.f32 0.0, %v1713
      %v1715 = vpop.f32.mrb[0].mxu0
      %1716 = vmatprep.mubr.f32.mxu0 0.0
      %1717 = vmatmul.mubr.f32.gmra.mrb[0].mxu0 %v1534
      %v1718 = vpop.f32.mrb[0].mxu0
      %v1719 = vadd.f32 0.0, %v1718
      %v1720 = vpop.f32.mrb[0].mxu0
      %1721 = vmatprep.mubr.f32.mxu0 0.0
      %1722 = vmatmul.mubr.f32.gmra.mrb[0].mxu0 %v1537
      %v1723 = vpop.f32.mrb[0].mxu0
      %v1724 = vadd.f32 0.0, %v1723
      %v1725 = vpop.f32.mrb[0].mxu0
      %1726 = vmatprep.mubr.f32.mxu0 0.0
      %1727 = vmatmul.mubr.f32.gmra.mrb[0].mxu0 %v1540
      %v1728 = vpop.f32.mrb[0].mxu0
      %v1729 = vadd.f32 0.0, %v1728
      %v1730 = vpop.f32.mrb[0].mxu0
      %1731 = vmatprep.mubr.f32.mxu0 0.0
      %1732 = vmatmul.mubr.f32.gmra.mrb[0].mxu0 %v1543
      %v1733 = vpop.f32.mrb[0].mxu0
      %v1734 = vadd.f32 0.0, %v1733
      %v1735 = vpop.f32.mrb[0].mxu0
      %1736 = vmatprep.mubr.f32.mxu0 0.0
      %1737 = vmatmul.mubr.f32.gmra.mrb[0].mxu0 %v1546
      %v1738 = vpop.f32.mrb[0].mxu0
      %v1739 = vadd.f32 0.0, %v1738
      %v1740 = vpop.f32.mrb[0].mxu0
      %1741 = vmatprep.mubr.f32.mxu0 0.0
      %1742 = vmatmul.mubr.f32.gmra.mrb[0].mxu0 %v1549
      %v1743 = vpop.f32.mrb[0].mxu0
      %v1744 = vadd.f32 0.0, %v1743
      %v1745 = vpop.f32.mrb[0].mxu0
      %1746 = vmatprep.mubr.f32.mxu0 0.0
      %1747 = vmatmul.mubr.f32.gmra.mrb[0].mxu0 %v1552
      %v1748 = vpop.f32.mrb[0].mxu0
      %v1749 = vadd.f32 0.0, %v1748
      %v1750 = vpop.f32.mrb[0].mxu0
      %1751 = vmatprep.mubr.f32.mxu0 0.0
      %1752 = vmatmul.mubr.f32.gmra.mrb[0].mxu0 %v1555
      %v1753 = vpop.f32.mrb[0].mxu0
      %v1754 = vadd.f32 0.0, %v1753
      %v1755 = vpop.f32.mrb[0].mxu0
      %1756 = vmatprep.mubr.f32.mxu0 0.0
      %1757 = vmatmul.mubr.f32.gmra.mrb[0].mxu0 %v1558
      %v1758 = vpop.f32.mrb[0].mxu0
      %v1759 = vadd.f32 0.0, %v1758
      %v1760 = vpop.f32.mrb[0].mxu0
      %1761 = vmatprep.mubr.f32.mxu0 0.0
      %1762 = vmatmul.mubr.f32.gmra.mrb[0].mxu0 %v1561
      %v1763 = vpop.f32.mrb[0].mxu0
      %v1764 = vadd.f32 0.0, %v1763
      %v1765 = vpop.f32.mrb[0].mxu0
      %1766 = vmatprep.mubr.f32.mxu0 0.0
      %1767 = vmatmul.mubr.f32.gmra.mrb[0].mxu0 %v1564
      %v1768 = vpop.f32.mrb[0].mxu0
      %v1769 = vadd.f32 0.0, %v1768
      %v1770 = vpop.f32.mrb[0].mxu0
      %1771 = vmatprep.mubr.f32.mxu0 0.0
      %1772 = vmatmul.mubr.f32.gmra.mrb[0].mxu0 %v1567
      %v1773 = vpop.f32.mrb[0].mxu0
      %v1774 = vadd.f32 0.0, %v1773
      %v1775 = vpop.f32.mrb[0].mxu0
      %1776 = vmatprep.mubr.f32.mxu0 0.0
      %1777 = vmatmul.mubr.f32.gmra.mrb[0].mxu0 %v1570
      %v1778 = vpop.f32.mrb[0].mxu0
      %v1779 = vadd.f32 0.0, %v1778
      %v1780 = vpop.f32.mrb[0].mxu0
      %1781 = vmatprep.mubr.f32.mxu0 0.0
      %1782 = vmatmul.mubr.f32.gmra.mrb[0].mxu0 %v1573
      %v1783 = vpop.f32.mrb[0].mxu0
      %v1784 = vadd.f32 0.0, %v1783
      %v1785 = vpop.f32.mrb[0].mxu0
      %1786 = vmatprep.mubr.f32.mxu0 0.0
      %1787 = vmatmul.mubr.f32.gmra.mrb[0].mxu0 %v1576
      %v1788 = vpop.f32.mrb[0].mxu0
      %v1789 = vadd.f32 0.0, %v1788
      %v1790 = vpop.f32.mrb[0].mxu0
      %1791 = vmatprep.mubr.f32.mxu0 0.0
      %1792 = vmatmul.mubr.f32.gmra.mrb[0].mxu0 %v1579
      %v1793 = vpop.f32.mrb[0].mxu0
      %v1794 = vadd.f32 0.0, %v1793
      %v1795 = vpop.f32.mrb[0].mxu0
      %1796 = vmatprep.mubr.f32.mxu0 0.0
      %1797 = vmatmul.mubr.f32.gmra.mrb[0].mxu0 %v1582
      %v1798 = vpop.f32.mrb[0].mxu0
      %v1799 = vadd.f32 0.0, %v1798
      %v1800 = vpop.f32.mrb[0].mxu0
      %1801 = vmatprep.mubr.f32.mxu0 0.0
      %1802 = vmatmul.mubr.f32.gmra.mrb[0].mxu0 %v1585
      %v1803 = vpop.f32.mrb[0].mxu0
      %v1804 = vadd.f32 0.0, %v1803
      %v1805 = vpop.f32.mrb[0].mxu0
      %1806 = vmatprep.mubr.f32.mxu0 0.0
      %1807 = vmatmul.mubr.f32.gmra.mrb[0].mxu0 %v1588
      %v1808 = vpop.f32.mrb[0].mxu0
      %v1809 = vadd.f32 0.0, %v1808
      %v1810 = vpop.f32.mrb[0].mxu0
      %1811 = vmatprep.mubr.f32.mxu0 0.0
      %1812 = vmatmul.mubr.f32.gmra.mrb[0].mxu0 %v1591
      %v1813 = vpop.f32.mrb[0].mxu0
      %v1814 = vadd.f32 0.0, %v1813
      %v1815 = vpop.f32.mrb[0].mxu0
      %1816 = vmatprep.mubr.f32.mxu0 0.0
      %1817 = vmatmul.mubr.f32.gmra.mrb[0].mxu0 %v1594
      %v1818 = vpop.f32.mrb[0].mxu0
      %v1819 = vadd.f32 0.0, %v1818
      %v1820 = vpop.f32.mrb[0].mxu0
      %1821 = vmatprep.mubr.f32.mxu0 0.0
      %1822 = vmatmul.mubr.f32.gmra.mrb[0].mxu0 %v1597
      %v1823 = vpop.f32.mrb[0].mxu0
      %v1824 = vadd.f32 0.0, %v1823
      %v1825 = vpop.f32.mrb[0].mxu0
      %1826 = vdwg.mxu0
      %v1827 = vadd.f32 %v1437, %v1669
      %v1828 = vadd.f32 %v1438, %v1674
      %v1829 = vadd.f32 %v1439, %v1679
      %v1830 = vadd.f32 %v1440, %v1684
      %v1831 = vadd.f32 %v1441, %v1689
      %v1832 = vadd.f32 %v1442, %v1694
      %v1833 = vadd.f32 %v1443, %v1699
      %v1834 = vadd.f32 %v1444, %v1704
      %v1835 = vadd.f32 %v1445, %v1709
      %v1836 = vadd.f32 %v1446, %v1714
      %v1837 = vadd.f32 %v1447, %v1719
      %v1838 = vadd.f32 %v1448, %v1724
      %v1839 = vadd.f32 %v1449, %v1729
      %v1840 = vadd.f32 %v1450, %v1734
      %v1841 = vadd.f32 %v1451, %v1739
      %v1842 = vadd.f32 %v1452, %v1744
      %v1843 = vadd.f32 %v1453, %v1749
      %v1844 = vadd.f32 %v1454, %v1754
      %v1845 = vadd.f32 %v1455, %v1759
      %v1846 = vadd.f32 %v1456, %v1764
      %v1847 = vadd.f32 %v1457, %v1769
      %v1848 = vadd.f32 %v1458, %v1774
      %v1849 = vadd.f32 %v1459, %v1779
      %v1850 = vadd.f32 %v1460, %v1784
      %v1851 = vadd.f32 %v1461, %v1789
      %v1852 = vadd.f32 %v1462, %v1794
      %v1853 = vadd.f32 %v1463, %v1799
      %v1854 = vadd.f32 %v1464, %v1804
      %v1855 = vadd.f32 %v1465, %v1809
      %v1856 = vadd.f32 %v1466, %v1814
      %v1857 = vadd.f32 %v1467, %v1819
      %v1858 = vadd.f32 %v1468, %v1824
      %v1859 = vld [vmem:[%s330 + $0x8] sm:$0xff]
      %v1860 = vld [vmem:[%s330 + $0x10] sm:$0xff]
      %v1861 = vld [vmem:[%s330 + $0x28] sm:$0xff]
      %v1862 = vld [vmem:[%s330 + $0x30] sm:$0xff]
      %v1863 = vld [vmem:[%s330 + $0x48] sm:$0xff]
      %v1864 = vld [vmem:[%s330 + $0x50] sm:$0xff]
      %v1865 = vld [vmem:[%s330 + $0x68] sm:$0xff]
      %v1866 = vld [vmem:[%s330 + $0x70] sm:$0xff]
      %v1867 = vld [vmem:[%s330 + $0x88] sm:$0xff]
      %v1868 = vld [vmem:[%s330 + $0x90] sm:$0xff]
      %v1869 = vld [vmem:[%s330 + $0xa8] sm:$0xff]
      %v1870 = vld [vmem:[%s330 + $0xb0] sm:$0xff]
      %v1871 = vld [vmem:[%s330 + $0xc8] sm:$0xff]
      %v1872 = vld [vmem:[%s330 + $0xd0] sm:$0xff]
      %v1873 = vld [vmem:[%s330 + $0xe8] sm:$0xff]
      %v1874 = vld [vmem:[%s330 + $0xf0] sm:$0xff]
      %v1875 = vld [vmem:[%s330 + $0x108] sm:$0xff]
      %v1876 = vld [vmem:[%s330 + $0x110] sm:$0xff]
      %v1877 = vld [vmem:[%s330 + $0x128] sm:$0xff]
      %v1878 = vld [vmem:[%s330 + $0x130] sm:$0xff]
      %v1879 = vld [vmem:[%s330 + $0x148] sm:$0xff]
      %v1880 = vld [vmem:[%s330 + $0x150] sm:$0xff]
      %v1881 = vld [vmem:[%s330 + $0x168] sm:$0xff]
      %v1882 = vld [vmem:[%s330 + $0x170] sm:$0xff]
      %v1883 = vld [vmem:[%s330 + $0x188] sm:$0xff]
      %v1884 = vld [vmem:[%s330 + $0x190] sm:$0xff]
      %v1885 = vld [vmem:[%s330 + $0x1a8] sm:$0xff]
      %v1886 = vld [vmem:[%s330 + $0x1b0] sm:$0xff]
      %v1887 = vld [vmem:[%s330 + $0x1c8] sm:$0xff]
      %v1888 = vld [vmem:[%s330 + $0x1d0] sm:$0xff]
      %v1889 = vld [vmem:[%s330 + $0x1e8] sm:$0xff]
      %v1890 = vld [vmem:[%s330 + $0x1f0] sm:$0xff]
      %s1891 = scalar_lea.vmem %s1, 16
      %v1892 = vld [vmem:[%s1891] sm:$0xf]
      %v1894 = vsel %vm225, %v1859, 0
      %v1897 = vsel %vm225, %v1860, 0
      %v1900 = vsel %vm225, %v1861, 0
      %v1903 = vsel %vm225, %v1862, 0
      %v1906 = vsel %vm225, %v1863, 0
      %v1909 = vsel %vm225, %v1864, 0
      %v1912 = vsel %vm225, %v1865, 0
      %v1915 = vsel %vm225, %v1866, 0
      %v1918 = vsel %vm225, %v1867, 0
      %v1921 = vsel %vm225, %v1868, 0
      %v1924 = vsel %vm225, %v1869, 0
      %v1927 = vsel %vm225, %v1870, 0
      %v1930 = vsel %vm225, %v1871, 0
      %v1933 = vsel %vm225, %v1872, 0
      %v1936 = vsel %vm225, %v1873, 0
      %v1939 = vsel %vm225, %v1874, 0
      %v1942 = vsel %vm225, %v1875, 0
      %v1945 = vsel %vm225, %v1876, 0
      %v1948 = vsel %vm225, %v1877, 0
      %v1951 = vsel %vm225, %v1878, 0
      %v1954 = vsel %vm225, %v1879, 0
      %v1957 = vsel %vm225, %v1880, 0
      %v1960 = vsel %vm225, %v1881, 0
      %v1963 = vsel %vm225, %v1882, 0
      %v1966 = vsel %vm225, %v1883, 0
      %v1969 = vsel %vm225, %v1884, 0
      %v1972 = vsel %vm225, %v1885, 0
      %v1975 = vsel %vm225, %v1886, 0
      %v1978 = vsel %vm225, %v1887, 0
      %v1981 = vsel %vm225, %v1888, 0
      %v1984 = vsel %vm225, %v1889, 0
      %v1987 = vsel %vm225, %v1890, 0
      %v1990 = vsel %vm526, %v1892, 0
      %1992 = vmatprep.subr.mxu0 0.0
      %1993 = vmatpush1.msra.mxu0 %v1990
      %1994 = vmatprep.subr.mxu0 0.0
      %1995 = vmatpush1.msra.mxu0 0.0
      %1996 = vmatprep.subr.mxu0 0.0
      %1997 = vmatpush1.msra.mxu0 0.0
      %1998 = vmatprep.subr.mxu0 0.0
      %1999 = vmatpush1.msra.mxu0 0.0
      %2000 = vmatprep.subr.mxu0 0.0
      %2001 = vmatpush1.msra.mxu0 0.0
      %2002 = vmatprep.subr.mxu0 0.0
      %2003 = vmatpush1.msra.mxu0 0.0
      %2004 = vmatprep.subr.mxu0 0.0
      %2005 = vmatpush1.msra.mxu0 0.0
      %2006 = vmatprep.subr.mxu0 0.0
      %2007 = vmatpush1.msra.mxu0 0.0
      %2008 = vmatprep.subr.mxu0 0.0
      %2009 = vmatpush1.msra.mxu0 0.0
      %2010 = vmatprep.subr.mxu0 0.0
      %2011 = vmatpush1.msra.mxu0 0.0
      %2012 = vmatprep.subr.mxu0 0.0
      %2013 = vmatpush1.msra.mxu0 0.0
      %2014 = vmatprep.subr.mxu0 0.0
      %2015 = vmatpush1.msra.mxu0 0.0
      %2016 = vmatprep.subr.mxu0 0.0
      %2017 = vmatpush1.msra.mxu0 0.0
      %2018 = vmatprep.subr.mxu0 0.0
      %2019 = vmatpush1.msra.mxu0 0.0
      %2020 = vmatprep.subr.mxu0 0.0
      %2021 = vmatpush1.msra.mxu0 0.0
      %2022 = vmatprep.subr.mxu0 0.0
      %2023 = vmatpush1.msra.mxu0 0.0
      %2024 = vmatprep.subr.mxu0 0.0
      %2025 = vmatpush1.msra.mxu0 0.0
      %2026 = vmatprep.subr.mxu0 0.0
      %2027 = vmatpush1.msra.mxu0 0.0
      %2028 = vmatprep.subr.mxu0 0.0
      %2029 = vmatpush1.msra.mxu0 0.0
      %2030 = vmatprep.subr.mxu0 0.0
      %2031 = vmatpush1.msra.mxu0 0.0
      %2032 = vmatprep.subr.mxu0 0.0
      %2033 = vmatpush1.msra.mxu0 0.0
      %2034 = vmatprep.subr.mxu0 0.0
      %2035 = vmatpush1.msra.mxu0 0.0
      %2036 = vmatprep.subr.mxu0 0.0
      %2037 = vmatpush1.msra.mxu0 0.0
      %2038 = vmatprep.subr.mxu0 0.0
      %2039 = vmatpush1.msra.mxu0 0.0
      %2040 = vmatprep.subr.mxu0 0.0
      %2041 = vmatpush1.msra.mxu0 0.0
      %2042 = vmatprep.subr.mxu0 0.0
      %2043 = vmatpush1.msra.mxu0 0.0
      %2044 = vmatprep.subr.mxu0 0.0
      %2045 = vmatpush1.msra.mxu0 0.0
      %2046 = vmatprep.subr.mxu0 0.0
      %2047 = vmatpush1.msra.mxu0 0.0
      %2048 = vmatprep.subr.mxu0 0.0
      %2049 = vmatpush1.msra.mxu0 0.0
      %2050 = vmatprep.subr.mxu0 0.0
      %2051 = vmatpush1.msra.mxu0 0.0
      %2052 = vmatprep.subr.mxu0 0.0
      %2053 = vmatpush1.msra.mxu0 0.0
      %2054 = vmatprep.subr.mxu0 0.0
      %2055 = vmatpush1.msra.mxu0 0.0
      %2056 = vmatprep.mubr.f32.mxu0 0.0
      %2057 = vmatmul.mubr.f32.gmra.mrb[0].mxu0 %v1894
      %v2058 = vpop.f32.mrb[0].mxu0
      %v2059 = vadd.f32 0.0, %v2058
      %v2060 = vpop.f32.mrb[0].mxu0
      %2061 = vmatprep.mubr.f32.mxu0 0.0
      %2062 = vmatmul.mubr.f32.gmra.mrb[0].mxu0 %v1897
      %v2063 = vpop.f32.mrb[0].mxu0
      %v2064 = vadd.f32 0.0, %v2063
      %v2065 = vpop.f32.mrb[0].mxu0
      %2066 = vmatprep.mubr.f32.mxu0 0.0
      %2067 = vmatmul.mubr.f32.gmra.mrb[0].mxu0 %v1900
      %v2068 = vpop.f32.mrb[0].mxu0
      %v2069 = vadd.f32 0.0, %v2068
      %v2070 = vpop.f32.mrb[0].mxu0
      %2071 = vmatprep.mubr.f32.mxu0 0.0
      %2072 = vmatmul.mubr.f32.gmra.mrb[0].mxu0 %v1903
      %v2073 = vpop.f32.mrb[0].mxu0
      %v2074 = vadd.f32 0.0, %v2073
      %v2075 = vpop.f32.mrb[0].mxu0
      %2076 = vmatprep.mubr.f32.mxu0 0.0
      %2077 = vmatmul.mubr.f32.gmra.mrb[0].mxu0 %v1906
      %v2078 = vpop.f32.mrb[0].mxu0
      %v2079 = vadd.f32 0.0, %v2078
      %v2080 = vpop.f32.mrb[0].mxu0
      %2081 = vmatprep.mubr.f32.mxu0 0.0
      %2082 = vmatmul.mubr.f32.gmra.mrb[0].mxu0 %v1909
      %v2083 = vpop.f32.mrb[0].mxu0
      %v2084 = vadd.f32 0.0, %v2083
      %v2085 = vpop.f32.mrb[0].mxu0
      %2086 = vmatprep.mubr.f32.mxu0 0.0
      %2087 = vmatmul.mubr.f32.gmra.mrb[0].mxu0 %v1912
      %v2088 = vpop.f32.mrb[0].mxu0
      %v2089 = vadd.f32 0.0, %v2088
      %v2090 = vpop.f32.mrb[0].mxu0
      %2091 = vmatprep.mubr.f32.mxu0 0.0
      %2092 = vmatmul.mubr.f32.gmra.mrb[0].mxu0 %v1915
      %v2093 = vpop.f32.mrb[0].mxu0
      %v2094 = vadd.f32 0.0, %v2093
      %v2095 = vpop.f32.mrb[0].mxu0
      %2096 = vmatprep.mubr.f32.mxu0 0.0
      %2097 = vmatmul.mubr.f32.gmra.mrb[0].mxu0 %v1918
      %v2098 = vpop.f32.mrb[0].mxu0
      %v2099 = vadd.f32 0.0, %v2098
      %v2100 = vpop.f32.mrb[0].mxu0
      %2101 = vmatprep.mubr.f32.mxu0 0.0
      %2102 = vmatmul.mubr.f32.gmra.mrb[0].mxu0 %v1921
      %v2103 = vpop.f32.mrb[0].mxu0
      %v2104 = vadd.f32 0.0, %v2103
      %v2105 = vpop.f32.mrb[0].mxu0
      %2106 = vmatprep.mubr.f32.mxu0 0.0
      %2107 = vmatmul.mubr.f32.gmra.mrb[0].mxu0 %v1924
      %v2108 = vpop.f32.mrb[0].mxu0
      %v2109 = vadd.f32 0.0, %v2108
      %v2110 = vpop.f32.mrb[0].mxu0
      %2111 = vmatprep.mubr.f32.mxu0 0.0
      %2112 = vmatmul.mubr.f32.gmra.mrb[0].mxu0 %v1927
      %v2113 = vpop.f32.mrb[0].mxu0
      %v2114 = vadd.f32 0.0, %v2113
      %v2115 = vpop.f32.mrb[0].mxu0
      %2116 = vmatprep.mubr.f32.mxu0 0.0
      %2117 = vmatmul.mubr.f32.gmra.mrb[0].mxu0 %v1930
      %v2118 = vpop.f32.mrb[0].mxu0
      %v2119 = vadd.f32 0.0, %v2118
      %v2120 = vpop.f32.mrb[0].mxu0
      %2121 = vmatprep.mubr.f32.mxu0 0.0
      %2122 = vmatmul.mubr.f32.gmra.mrb[0].mxu0 %v1933
      %v2123 = vpop.f32.mrb[0].mxu0
      %v2124 = vadd.f32 0.0, %v2123
      %v2125 = vpop.f32.mrb[0].mxu0
      %2126 = vmatprep.mubr.f32.mxu0 0.0
      %2127 = vmatmul.mubr.f32.gmra.mrb[0].mxu0 %v1936
      %v2128 = vpop.f32.mrb[0].mxu0
      %v2129 = vadd.f32 0.0, %v2128
      %v2130 = vpop.f32.mrb[0].mxu0
      %2131 = vmatprep.mubr.f32.mxu0 0.0
      %2132 = vmatmul.mubr.f32.gmra.mrb[0].mxu0 %v1939
      %v2133 = vpop.f32.mrb[0].mxu0
      %v2134 = vadd.f32 0.0, %v2133
      %v2135 = vpop.f32.mrb[0].mxu0
      %2136 = vmatprep.mubr.f32.mxu0 0.0
      %2137 = vmatmul.mubr.f32.gmra.mrb[0].mxu0 %v1942
      %v2138 = vpop.f32.mrb[0].mxu0
      %v2139 = vadd.f32 0.0, %v2138
      %v2140 = vpop.f32.mrb[0].mxu0
      %2141 = vmatprep.mubr.f32.mxu0 0.0
      %2142 = vmatmul.mubr.f32.gmra.mrb[0].mxu0 %v1945
      %v2143 = vpop.f32.mrb[0].mxu0
      %v2144 = vadd.f32 0.0, %v2143
      %v2145 = vpop.f32.mrb[0].mxu0
      %2146 = vmatprep.mubr.f32.mxu0 0.0
      %2147 = vmatmul.mubr.f32.gmra.mrb[0].mxu0 %v1948
      %v2148 = vpop.f32.mrb[0].mxu0
      %v2149 = vadd.f32 0.0, %v2148
      %v2150 = vpop.f32.mrb[0].mxu0
      %2151 = vmatprep.mubr.f32.mxu0 0.0
      %2152 = vmatmul.mubr.f32.gmra.mrb[0].mxu0 %v1951
      %v2153 = vpop.f32.mrb[0].mxu0
      %v2154 = vadd.f32 0.0, %v2153
      %v2155 = vpop.f32.mrb[0].mxu0
      %2156 = vmatprep.mubr.f32.mxu0 0.0
      %2157 = vmatmul.mubr.f32.gmra.mrb[0].mxu0 %v1954
      %v2158 = vpop.f32.mrb[0].mxu0
      %v2159 = vadd.f32 0.0, %v2158
      %v2160 = vpop.f32.mrb[0].mxu0
      %2161 = vmatprep.mubr.f32.mxu0 0.0
      %2162 = vmatmul.mubr.f32.gmra.mrb[0].mxu0 %v1957
      %v2163 = vpop.f32.mrb[0].mxu0
      %v2164 = vadd.f32 0.0, %v2163
      %v2165 = vpop.f32.mrb[0].mxu0
      %2166 = vmatprep.mubr.f32.mxu0 0.0
      %2167 = vmatmul.mubr.f32.gmra.mrb[0].mxu0 %v1960
      %v2168 = vpop.f32.mrb[0].mxu0
      %v2169 = vadd.f32 0.0, %v2168
      %v2170 = vpop.f32.mrb[0].mxu0
      %2171 = vmatprep.mubr.f32.mxu0 0.0
      %2172 = vmatmul.mubr.f32.gmra.mrb[0].mxu0 %v1963
      %v2173 = vpop.f32.mrb[0].mxu0
      %v2174 = vadd.f32 0.0, %v2173
      %v2175 = vpop.f32.mrb[0].mxu0
      %2176 = vmatprep.mubr.f32.mxu0 0.0
      %2177 = vmatmul.mubr.f32.gmra.mrb[0].mxu0 %v1966
      %v2178 = vpop.f32.mrb[0].mxu0
      %v2179 = vadd.f32 0.0, %v2178
      %v2180 = vpop.f32.mrb[0].mxu0
      %2181 = vmatprep.mubr.f32.mxu0 0.0
      %2182 = vmatmul.mubr.f32.gmra.mrb[0].mxu0 %v1969
      %v2183 = vpop.f32.mrb[0].mxu0
      %v2184 = vadd.f32 0.0, %v2183
      %v2185 = vpop.f32.mrb[0].mxu0
      %2186 = vmatprep.mubr.f32.mxu0 0.0
      %2187 = vmatmul.mubr.f32.gmra.mrb[0].mxu0 %v1972
      %v2188 = vpop.f32.mrb[0].mxu0
      %v2189 = vadd.f32 0.0, %v2188
      %v2190 = vpop.f32.mrb[0].mxu0
      %2191 = vmatprep.mubr.f32.mxu0 0.0
      %2192 = vmatmul.mubr.f32.gmra.mrb[0].mxu0 %v1975
      %v2193 = vpop.f32.mrb[0].mxu0
      %v2194 = vadd.f32 0.0, %v2193
      %v2195 = vpop.f32.mrb[0].mxu0
      %2196 = vmatprep.mubr.f32.mxu0 0.0
      %2197 = vmatmul.mubr.f32.gmra.mrb[0].mxu0 %v1978
      %v2198 = vpop.f32.mrb[0].mxu0
      %v2199 = vadd.f32 0.0, %v2198
      %v2200 = vpop.f32.mrb[0].mxu0
      %2201 = vmatprep.mubr.f32.mxu0 0.0
      %2202 = vmatmul.mubr.f32.gmra.mrb[0].mxu0 %v1981
      %v2203 = vpop.f32.mrb[0].mxu0
      %v2204 = vadd.f32 0.0, %v2203
      %v2205 = vpop.f32.mrb[0].mxu0
      %2206 = vmatprep.mubr.f32.mxu0 0.0
      %2207 = vmatmul.mubr.f32.gmra.mrb[0].mxu0 %v1984
      %v2208 = vpop.f32.mrb[0].mxu0
      %v2209 = vadd.f32 0.0, %v2208
      %v2210 = vpop.f32.mrb[0].mxu0
      %2211 = vmatprep.mubr.f32.mxu0 0.0
      %2212 = vmatmul.mubr.f32.gmra.mrb[0].mxu0 %v1987
      %v2213 = vpop.f32.mrb[0].mxu0
      %v2214 = vadd.f32 0.0, %v2213
      %v2215 = vpop.f32.mrb[0].mxu0
      %2216 = vdwg.mxu0
      %v2217 = vadd.f32 %v1827, %v2059
      %v2218 = vadd.f32 %v1828, %v2064
      %v2219 = vadd.f32 %v1829, %v2069
      %v2220 = vadd.f32 %v1830, %v2074
      %v2221 = vadd.f32 %v1831, %v2079
      %v2222 = vadd.f32 %v1832, %v2084
      %v2223 = vadd.f32 %v1833, %v2089
      %v2224 = vadd.f32 %v1834, %v2094
      %v2225 = vadd.f32 %v1835, %v2099
      %v2226 = vadd.f32 %v1836, %v2104
      %v2227 = vadd.f32 %v1837, %v2109
      %v2228 = vadd.f32 %v1838, %v2114
      %v2229 = vadd.f32 %v1839, %v2119
      %v2230 = vadd.f32 %v1840, %v2124
      %v2231 = vadd.f32 %v1841, %v2129
      %v2232 = vadd.f32 %v1842, %v2134
      %v2233 = vadd.f32 %v1843, %v2139
      %v2234 = vadd.f32 %v1844, %v2144
      %v2235 = vadd.f32 %v1845, %v2149
      %v2236 = vadd.f32 %v1846, %v2154
      %v2237 = vadd.f32 %v1847, %v2159
      %v2238 = vadd.f32 %v1848, %v2164
      %v2239 = vadd.f32 %v1849, %v2169
      %v2240 = vadd.f32 %v1850, %v2174
      %v2241 = vadd.f32 %v1851, %v2179
      %v2242 = vadd.f32 %v1852, %v2184
      %v2243 = vadd.f32 %v1853, %v2189
      %v2244 = vadd.f32 %v1854, %v2194
      %v2245 = vadd.f32 %v1855, %v2199
      %v2246 = vadd.f32 %v1856, %v2204
      %v2247 = vadd.f32 %v1857, %v2209
      %v2248 = vadd.f32 %v1858, %v2214
      %v2249 = vld [vmem:[%s330 + $0x9] sm:$0xff]
      %v2250 = vld [vmem:[%s330 + $0x11] sm:$0xff]
      %v2251 = vld [vmem:[%s330 + $0x29] sm:$0xff]
      %v2252 = vld [vmem:[%s330 + $0x31] sm:$0xff]
      %v2253 = vld [vmem:[%s330 + $0x49] sm:$0xff]
      %v2254 = vld [vmem:[%s330 + $0x51] sm:$0xff]
      %v2255 = vld [vmem:[%s330 + $0x69] sm:$0xff]
      %v2256 = vld [vmem:[%s330 + $0x71] sm:$0xff]
      %v2257 = vld [vmem:[%s330 + $0x89] sm:$0xff]
      %v2258 = vld [vmem:[%s330 + $0x91] sm:$0xff]
      %v2259 = vld [vmem:[%s330 + $0xa9] sm:$0xff]
      %v2260 = vld [vmem:[%s330 + $0xb1] sm:$0xff]
      %v2261 = vld [vmem:[%s330 + $0xc9] sm:$0xff]
      %v2262 = vld [vmem:[%s330 + $0xd1] sm:$0xff]
      %v2263 = vld [vmem:[%s330 + $0xe9] sm:$0xff]
      %v2264 = vld [vmem:[%s330 + $0xf1] sm:$0xff]
      %v2265 = vld [vmem:[%s330 + $0x109] sm:$0xff]
      %v2266 = vld [vmem:[%s330 + $0x111] sm:$0xff]
      %v2267 = vld [vmem:[%s330 + $0x129] sm:$0xff]
      %v2268 = vld [vmem:[%s330 + $0x131] sm:$0xff]
      %v2269 = vld [vmem:[%s330 + $0x149] sm:$0xff]
      %v2270 = vld [vmem:[%s330 + $0x151] sm:$0xff]
      %v2271 = vld [vmem:[%s330 + $0x169] sm:$0xff]
      %v2272 = vld [vmem:[%s330 + $0x171] sm:$0xff]
      %v2273 = vld [vmem:[%s330 + $0x189] sm:$0xff]
      %v2274 = vld [vmem:[%s330 + $0x191] sm:$0xff]
      %v2275 = vld [vmem:[%s330 + $0x1a9] sm:$0xff]
      %v2276 = vld [vmem:[%s330 + $0x1b1] sm:$0xff]
      %v2277 = vld [vmem:[%s330 + $0x1c9] sm:$0xff]
      %v2278 = vld [vmem:[%s330 + $0x1d1] sm:$0xff]
      %v2279 = vld [vmem:[%s330 + $0x1e9] sm:$0xff]
      %v2280 = vld [vmem:[%s330 + $0x1f1] sm:$0xff]
      %s2281 = scalar_lea.vmem %s1, 20
      %v2282 = vld [vmem:[%s2281] sm:$0xf]
      %v2284 = vsel %vm225, %v2249, 0
      %v2287 = vsel %vm225, %v2250, 0
      %v2290 = vsel %vm225, %v2251, 0
      %v2293 = vsel %vm225, %v2252, 0
      %v2296 = vsel %vm225, %v2253, 0
      %v2299 = vsel %vm225, %v2254, 0
      %v2302 = vsel %vm225, %v2255, 0
      %v2305 = vsel %vm225, %v2256, 0
      %v2308 = vsel %vm225, %v2257, 0
      %v2311 = vsel %vm225, %v2258, 0
      %v2314 = vsel %vm225, %v2259, 0
      %v2317 = vsel %vm225, %v2260, 0
      %v2320 = vsel %vm225, %v2261, 0
      %v2323 = vsel %vm225, %v2262, 0
      %v2326 = vsel %vm225, %v2263, 0
      %v2329 = vsel %vm225, %v2264, 0
      %v2332 = vsel %vm225, %v2265, 0
      %v2335 = vsel %vm225, %v2266, 0
      %v2338 = vsel %vm225, %v2267, 0
      %v2341 = vsel %vm225, %v2268, 0
      %v2344 = vsel %vm225, %v2269, 0
      %v2347 = vsel %vm225, %v2270, 0
      %v2350 = vsel %vm225, %v2271, 0
      %v2353 = vsel %vm225, %v2272, 0
      %v2356 = vsel %vm225, %v2273, 0
      %v2359 = vsel %vm225, %v2274, 0
      %v2362 = vsel %vm225, %v2275, 0
      %v2365 = vsel %vm225, %v2276, 0
      %v2368 = vsel %vm225, %v2277, 0
      %v2371 = vsel %vm225, %v2278, 0
      %v2374 = vsel %vm225, %v2279, 0
      %v2377 = vsel %vm225, %v2280, 0
      %v2380 = vsel %vm526, %v2282, 0
      %2382 = vmatprep.subr.mxu0 0.0
      %2383 = vmatpush1.msra.mxu0 %v2380
      %2384 = vmatprep.subr.mxu0 0.0
      %2385 = vmatpush1.msra.mxu0 0.0
      %2386 = vmatprep.subr.mxu0 0.0
      %2387 = vmatpush1.msra.mxu0 0.0
      %2388 = vmatprep.subr.mxu0 0.0
      %2389 = vmatpush1.msra.mxu0 0.0
      %2390 = vmatprep.subr.mxu0 0.0
      %2391 = vmatpush1.msra.mxu0 0.0
      %2392 = vmatprep.subr.mxu0 0.0
      %2393 = vmatpush1.msra.mxu0 0.0
      %2394 = vmatprep.subr.mxu0 0.0
      %2395 = vmatpush1.msra.mxu0 0.0
      %2396 = vmatprep.subr.mxu0 0.0
      %2397 = vmatpush1.msra.mxu0 0.0
      %2398 = vmatprep.subr.mxu0 0.0
      %2399 = vmatpush1.msra.mxu0 0.0
      %2400 = vmatprep.subr.mxu0 0.0
      %2401 = vmatpush1.msra.mxu0 0.0
      %2402 = vmatprep.subr.mxu0 0.0
      %2403 = vmatpush1.msra.mxu0 0.0
      %2404 = vmatprep.subr.mxu0 0.0
      %2405 = vmatpush1.msra.mxu0 0.0
      %2406 = vmatprep.subr.mxu0 0.0
      %2407 = vmatpush1.msra.mxu0 0.0
      %2408 = vmatprep.subr.mxu0 0.0
      %2409 = vmatpush1.msra.mxu0 0.0
      %2410 = vmatprep.subr.mxu0 0.0
      %2411 = vmatpush1.msra.mxu0 0.0
      %2412 = vmatprep.subr.mxu0 0.0
      %2413 = vmatpush1.msra.mxu0 0.0
      %2414 = vmatprep.subr.mxu0 0.0
      %2415 = vmatpush1.msra.mxu0 0.0
      %2416 = vmatprep.subr.mxu0 0.0
      %2417 = vmatpush1.msra.mxu0 0.0
      %2418 = vmatprep.subr.mxu0 0.0
      %2419 = vmatpush1.msra.mxu0 0.0
      %2420 = vmatprep.subr.mxu0 0.0
      %2421 = vmatpush1.msra.mxu0 0.0
      %2422 = vmatprep.subr.mxu0 0.0
      %2423 = vmatpush1.msra.mxu0 0.0
      %2424 = vmatprep.subr.mxu0 0.0
      %2425 = vmatpush1.msra.mxu0 0.0
      %2426 = vmatprep.subr.mxu0 0.0
      %2427 = vmatpush1.msra.mxu0 0.0
      %2428 = vmatprep.subr.mxu0 0.0
      %2429 = vmatpush1.msra.mxu0 0.0
      %2430 = vmatprep.subr.mxu0 0.0
      %2431 = vmatpush1.msra.mxu0 0.0
      %2432 = vmatprep.subr.mxu0 0.0
      %2433 = vmatpush1.msra.mxu0 0.0
      %2434 = vmatprep.subr.mxu0 0.0
      %2435 = vmatpush1.msra.mxu0 0.0
      %2436 = vmatprep.subr.mxu0 0.0
      %2437 = vmatpush1.msra.mxu0 0.0
      %2438 = vmatprep.subr.mxu0 0.0
      %2439 = vmatpush1.msra.mxu0 0.0
      %2440 = vmatprep.subr.mxu0 0.0
      %2441 = vmatpush1.msra.mxu0 0.0
      %2442 = vmatprep.subr.mxu0 0.0
      %2443 = vmatpush1.msra.mxu0 0.0
      %2444 = vmatprep.subr.mxu0 0.0
      %2445 = vmatpush1.msra.mxu0 0.0
      %2446 = vmatprep.mubr.f32.mxu0 0.0
      %2447 = vmatmul.mubr.f32.gmra.mrb[0].mxu0 %v2284
      %v2448 = vpop.f32.mrb[0].mxu0
      %v2449 = vadd.f32 0.0, %v2448
      %v2450 = vpop.f32.mrb[0].mxu0
      %2451 = vmatprep.mubr.f32.mxu0 0.0
      %2452 = vmatmul.mubr.f32.gmra.mrb[0].mxu0 %v2287
      %v2453 = vpop.f32.mrb[0].mxu0
      %v2454 = vadd.f32 0.0, %v2453
      %v2455 = vpop.f32.mrb[0].mxu0
      %2456 = vmatprep.mubr.f32.mxu0 0.0
      %2457 = vmatmul.mubr.f32.gmra.mrb[0].mxu0 %v2290
      %v2458 = vpop.f32.mrb[0].mxu0
      %v2459 = vadd.f32 0.0, %v2458
      %v2460 = vpop.f32.mrb[0].mxu0
      %2461 = vmatprep.mubr.f32.mxu0 0.0
      %2462 = vmatmul.mubr.f32.gmra.mrb[0].mxu0 %v2293
      %v2463 = vpop.f32.mrb[0].mxu0
      %v2464 = vadd.f32 0.0, %v2463
      %v2465 = vpop.f32.mrb[0].mxu0
      %2466 = vmatprep.mubr.f32.mxu0 0.0
      %2467 = vmatmul.mubr.f32.gmra.mrb[0].mxu0 %v2296
      %v2468 = vpop.f32.mrb[0].mxu0
      %v2469 = vadd.f32 0.0, %v2468
      %v2470 = vpop.f32.mrb[0].mxu0
      %2471 = vmatprep.mubr.f32.mxu0 0.0
      %2472 = vmatmul.mubr.f32.gmra.mrb[0].mxu0 %v2299
      %v2473 = vpop.f32.mrb[0].mxu0
      %v2474 = vadd.f32 0.0, %v2473
      %v2475 = vpop.f32.mrb[0].mxu0
      %2476 = vmatprep.mubr.f32.mxu0 0.0
      %2477 = vmatmul.mubr.f32.gmra.mrb[0].mxu0 %v2302
      %v2478 = vpop.f32.mrb[0].mxu0
      %v2479 = vadd.f32 0.0, %v2478
      %v2480 = vpop.f32.mrb[0].mxu0
      %2481 = vmatprep.mubr.f32.mxu0 0.0
      %2482 = vmatmul.mubr.f32.gmra.mrb[0].mxu0 %v2305
      %v2483 = vpop.f32.mrb[0].mxu0
      %v2484 = vadd.f32 0.0, %v2483
      %v2485 = vpop.f32.mrb[0].mxu0
      %2486 = vmatprep.mubr.f32.mxu0 0.0
      %2487 = vmatmul.mubr.f32.gmra.mrb[0].mxu0 %v2308
      %v2488 = vpop.f32.mrb[0].mxu0
      %v2489 = vadd.f32 0.0, %v2488
      %v2490 = vpop.f32.mrb[0].mxu0
      %2491 = vmatprep.mubr.f32.mxu0 0.0
      %2492 = vmatmul.mubr.f32.gmra.mrb[0].mxu0 %v2311
      %v2493 = vpop.f32.mrb[0].mxu0
      %v2494 = vadd.f32 0.0, %v2493
      %v2495 = vpop.f32.mrb[0].mxu0
      %2496 = vmatprep.mubr.f32.mxu0 0.0
      %2497 = vmatmul.mubr.f32.gmra.mrb[0].mxu0 %v2314
      %v2498 = vpop.f32.mrb[0].mxu0
      %v2499 = vadd.f32 0.0, %v2498
      %v2500 = vpop.f32.mrb[0].mxu0
      %2501 = vmatprep.mubr.f32.mxu0 0.0
      %2502 = vmatmul.mubr.f32.gmra.mrb[0].mxu0 %v2317
      %v2503 = vpop.f32.mrb[0].mxu0
      %v2504 = vadd.f32 0.0, %v2503
      %v2505 = vpop.f32.mrb[0].mxu0
      %2506 = vmatprep.mubr.f32.mxu0 0.0
      %2507 = vmatmul.mubr.f32.gmra.mrb[0].mxu0 %v2320
      %v2508 = vpop.f32.mrb[0].mxu0
      %v2509 = vadd.f32 0.0, %v2508
      %v2510 = vpop.f32.mrb[0].mxu0
      %2511 = vmatprep.mubr.f32.mxu0 0.0
      %2512 = vmatmul.mubr.f32.gmra.mrb[0].mxu0 %v2323
      %v2513 = vpop.f32.mrb[0].mxu0
      %v2514 = vadd.f32 0.0, %v2513
      %v2515 = vpop.f32.mrb[0].mxu0
      %2516 = vmatprep.mubr.f32.mxu0 0.0
      %2517 = vmatmul.mubr.f32.gmra.mrb[0].mxu0 %v2326
      %v2518 = vpop.f32.mrb[0].mxu0
      %v2519 = vadd.f32 0.0, %v2518
      %v2520 = vpop.f32.mrb[0].mxu0
      %2521 = vmatprep.mubr.f32.mxu0 0.0
      %2522 = vmatmul.mubr.f32.gmra.mrb[0].mxu0 %v2329
      %v2523 = vpop.f32.mrb[0].mxu0
      %v2524 = vadd.f32 0.0, %v2523
      %v2525 = vpop.f32.mrb[0].mxu0
      %2526 = vmatprep.mubr.f32.mxu0 0.0
      %2527 = vmatmul.mubr.f32.gmra.mrb[0].mxu0 %v2332
      %v2528 = vpop.f32.mrb[0].mxu0
      %v2529 = vadd.f32 0.0, %v2528
      %v2530 = vpop.f32.mrb[0].mxu0
      %2531 = vmatprep.mubr.f32.mxu0 0.0
      %2532 = vmatmul.mubr.f32.gmra.mrb[0].mxu0 %v2335
      %v2533 = vpop.f32.mrb[0].mxu0
      %v2534 = vadd.f32 0.0, %v2533
      %v2535 = vpop.f32.mrb[0].mxu0
      %2536 = vmatprep.mubr.f32.mxu0 0.0
      %2537 = vmatmul.mubr.f32.gmra.mrb[0].mxu0 %v2338
      %v2538 = vpop.f32.mrb[0].mxu0
      %v2539 = vadd.f32 0.0, %v2538
      %v2540 = vpop.f32.mrb[0].mxu0
      %2541 = vmatprep.mubr.f32.mxu0 0.0
      %2542 = vmatmul.mubr.f32.gmra.mrb[0].mxu0 %v2341
      %v2543 = vpop.f32.mrb[0].mxu0
      %v2544 = vadd.f32 0.0, %v2543
      %v2545 = vpop.f32.mrb[0].mxu0
      %2546 = vmatprep.mubr.f32.mxu0 0.0
      %2547 = vmatmul.mubr.f32.gmra.mrb[0].mxu0 %v2344
      %v2548 = vpop.f32.mrb[0].mxu0
      %v2549 = vadd.f32 0.0, %v2548
      %v2550 = vpop.f32.mrb[0].mxu0
      %2551 = vmatprep.mubr.f32.mxu0 0.0
      %2552 = vmatmul.mubr.f32.gmra.mrb[0].mxu0 %v2347
      %v2553 = vpop.f32.mrb[0].mxu0
      %v2554 = vadd.f32 0.0, %v2553
      %v2555 = vpop.f32.mrb[0].mxu0
      %2556 = vmatprep.mubr.f32.mxu0 0.0
      %2557 = vmatmul.mubr.f32.gmra.mrb[0].mxu0 %v2350
      %v2558 = vpop.f32.mrb[0].mxu0
      %v2559 = vadd.f32 0.0, %v2558
      %v2560 = vpop.f32.mrb[0].mxu0
      %2561 = vmatprep.mubr.f32.mxu0 0.0
      %2562 = vmatmul.mubr.f32.gmra.mrb[0].mxu0 %v2353
      %v2563 = vpop.f32.mrb[0].mxu0
      %v2564 = vadd.f32 0.0, %v2563
      %v2565 = vpop.f32.mrb[0].mxu0
      %2566 = vmatprep.mubr.f32.mxu0 0.0
      %2567 = vmatmul.mubr.f32.gmra.mrb[0].mxu0 %v2356
      %v2568 = vpop.f32.mrb[0].mxu0
      %v2569 = vadd.f32 0.0, %v2568
      %v2570 = vpop.f32.mrb[0].mxu0
      %2571 = vmatprep.mubr.f32.mxu0 0.0
      %2572 = vmatmul.mubr.f32.gmra.mrb[0].mxu0 %v2359
      %v2573 = vpop.f32.mrb[0].mxu0
      %v2574 = vadd.f32 0.0, %v2573
      %v2575 = vpop.f32.mrb[0].mxu0
      %2576 = vmatprep.mubr.f32.mxu0 0.0
      %2577 = vmatmul.mubr.f32.gmra.mrb[0].mxu0 %v2362
      %v2578 = vpop.f32.mrb[0].mxu0
      %v2579 = vadd.f32 0.0, %v2578
      %v2580 = vpop.f32.mrb[0].mxu0
      %2581 = vmatprep.mubr.f32.mxu0 0.0
      %2582 = vmatmul.mubr.f32.gmra.mrb[0].mxu0 %v2365
      %v2583 = vpop.f32.mrb[0].mxu0
      %v2584 = vadd.f32 0.0, %v2583
      %v2585 = vpop.f32.mrb[0].mxu0
      %2586 = vmatprep.mubr.f32.mxu0 0.0
      %2587 = vmatmul.mubr.f32.gmra.mrb[0].mxu0 %v2368
      %v2588 = vpop.f32.mrb[0].mxu0
      %v2589 = vadd.f32 0.0, %v2588
      %v2590 = vpop.f32.mrb[0].mxu0
      %2591 = vmatprep.mubr.f32.mxu0 0.0
      %2592 = vmatmul.mubr.f32.gmra.mrb[0].mxu0 %v2371
      %v2593 = vpop.f32.mrb[0].mxu0
      %v2594 = vadd.f32 0.0, %v2593
      %v2595 = vpop.f32.mrb[0].mxu0
      %2596 = vmatprep.mubr.f32.mxu0 0.0
      %2597 = vmatmul.mubr.f32.gmra.mrb[0].mxu0 %v2374
      %v2598 = vpop.f32.mrb[0].mxu0
      %v2599 = vadd.f32 0.0, %v2598
      %v2600 = vpop.f32.mrb[0].mxu0
      %2601 = vmatprep.mubr.f32.mxu0 0.0
      %2602 = vmatmul.mubr.f32.gmra.mrb[0].mxu0 %v2377
      %v2603 = vpop.f32.mrb[0].mxu0
      %v2604 = vadd.f32 0.0, %v2603
      %v2605 = vpop.f32.mrb[0].mxu0
      %2606 = vdwg.mxu0
      %v2607 = vadd.f32 %v2217, %v2449
      %v2608 = vadd.f32 %v2218, %v2454
      %v2609 = vadd.f32 %v2219, %v2459
      %v2610 = vadd.f32 %v2220, %v2464
      %v2611 = vadd.f32 %v2221, %v2469
      %v2612 = vadd.f32 %v2222, %v2474
      %v2613 = vadd.f32 %v2223, %v2479
      %v2614 = vadd.f32 %v2224, %v2484
      %v2615 = vadd.f32 %v2225, %v2489
      %v2616 = vadd.f32 %v2226, %v2494
      %v2617 = vadd.f32 %v2227, %v2499
      %v2618 = vadd.f32 %v2228, %v2504
      %v2619 = vadd.f32 %v2229, %v2509
      %v2620 = vadd.f32 %v2230, %v2514
      %v2621 = vadd.f32 %v2231, %v2519
      %v2622 = vadd.f32 %v2232, %v2524
      %v2623 = vadd.f32 %v2233, %v2529
      %v2624 = vadd.f32 %v2234, %v2534
      %v2625 = vadd.f32 %v2235, %v2539
      %v2626 = vadd.f32 %v2236, %v2544
      %v2627 = vadd.f32 %v2237, %v2549
      %v2628 = vadd.f32 %v2238, %v2554
      %v2629 = vadd.f32 %v2239, %v2559
      %v2630 = vadd.f32 %v2240, %v2564
      %v2631 = vadd.f32 %v2241, %v2569
      %v2632 = vadd.f32 %v2242, %v2574
      %v2633 = vadd.f32 %v2243, %v2579
      %v2634 = vadd.f32 %v2244, %v2584
      %v2635 = vadd.f32 %v2245, %v2589
      %v2636 = vadd.f32 %v2246, %v2594
      %v2637 = vadd.f32 %v2247, %v2599
      %v2638 = vadd.f32 %v2248, %v2604
      %s2639 = scalar_lea.vmem [#allocation2], 64
      %v2640 = vld [vmem:[%s2639 + $0x7] sm:$0xff]
      %v2641 = vld [vmem:[%s2639 + $0xf] sm:$0xff]
      %v2642 = vld [vmem:[%s2639 + $0x27] sm:$0xff]
      %v2643 = vld [vmem:[%s2639 + $0x2f] sm:$0xff]
      %v2644 = vld [vmem:[%s2639 + $0x47] sm:$0xff]
      %v2645 = vld [vmem:[%s2639 + $0x4f] sm:$0xff]
      %v2646 = vld [vmem:[%s2639 + $0x67] sm:$0xff]
      %v2647 = vld [vmem:[%s2639 + $0x6f] sm:$0xff]
      %v2648 = vld [vmem:[%s2639 + $0x87] sm:$0xff]
      %v2649 = vld [vmem:[%s2639 + $0x8f] sm:$0xff]
      %v2650 = vld [vmem:[%s2639 + $0xa7] sm:$0xff]
      %v2651 = vld [vmem:[%s2639 + $0xaf] sm:$0xff]
      %v2652 = vld [vmem:[%s2639 + $0xc7] sm:$0xff]
      %v2653 = vld [vmem:[%s2639 + $0xcf] sm:$0xff]
      %v2654 = vld [vmem:[%s2639 + $0xe7] sm:$0xff]
      %v2655 = vld [vmem:[%s2639 + $0xef] sm:$0xff]
      %v2656 = vld [vmem:[%s2639 + $0x107] sm:$0xff]
      %v2657 = vld [vmem:[%s2639 + $0x10f] sm:$0xff]
      %v2658 = vld [vmem:[%s2639 + $0x127] sm:$0xff]
      %v2659 = vld [vmem:[%s2639 + $0x12f] sm:$0xff]
      %v2660 = vld [vmem:[%s2639 + $0x147] sm:$0xff]
      %v2661 = vld [vmem:[%s2639 + $0x14f] sm:$0xff]
      %v2662 = vld [vmem:[%s2639 + $0x167] sm:$0xff]
      %v2663 = vld [vmem:[%s2639 + $0x16f] sm:$0xff]
      %v2664 = vld [vmem:[%s2639 + $0x187] sm:$0xff]
      %v2665 = vld [vmem:[%s2639 + $0x18f] sm:$0xff]
      %v2666 = vld [vmem:[%s2639 + $0x1a7] sm:$0xff]
      %v2667 = vld [vmem:[%s2639 + $0x1af] sm:$0xff]
      %v2668 = vld [vmem:[%s2639 + $0x1c7] sm:$0xff]
      %v2669 = vld [vmem:[%s2639 + $0x1cf] sm:$0xff]
      %v2670 = vld [vmem:[%s2639 + $0x1e7] sm:$0xff]
      %v2671 = vld [vmem:[%s2639 + $0x1ef] sm:$0xff]
      %s2672 = scalar_lea.vmem %s1, 24
      %v2673 = vld [vmem:[%s2672] sm:$0xf]
      %v2675 = vsel %vm225, %v2640, 0
      %v2678 = vsel %vm225, %v2641, 0
      %v2681 = vsel %vm225, %v2642, 0
      %v2684 = vsel %vm225, %v2643, 0
      %v2687 = vsel %vm225, %v2644, 0
      %v2690 = vsel %vm225, %v2645, 0
      %v2693 = vsel %vm225, %v2646, 0
      %v2696 = vsel %vm225, %v2647, 0
      %v2699 = vsel %vm225, %v2648, 0
      %v2702 = vsel %vm225, %v2649, 0
      %v2705 = vsel %vm225, %v2650, 0
      %v2708 = vsel %vm225, %v2651, 0
      %v2711 = vsel %vm225, %v2652, 0
      %v2714 = vsel %vm225, %v2653, 0
      %v2717 = vsel %vm225, %v2654, 0
      %v2720 = vsel %vm225, %v2655, 0
      %v2723 = vsel %vm225, %v2656, 0
      %v2726 = vsel %vm225, %v2657, 0
      %v2729 = vsel %vm225, %v2658, 0
      %v2732 = vsel %vm225, %v2659, 0
      %v2735 = vsel %vm225, %v2660, 0
      %v2738 = vsel %vm225, %v2661, 0
      %v2741 = vsel %vm225, %v2662, 0
      %v2744 = vsel %vm225, %v2663, 0
      %v2747 = vsel %vm225, %v2664, 0
      %v2750 = vsel %vm225, %v2665, 0
      %v2753 = vsel %vm225, %v2666, 0
      %v2756 = vsel %vm225, %v2667, 0
      %v2759 = vsel %vm225, %v2668, 0
      %v2762 = vsel %vm225, %v2669, 0
      %v2765 = vsel %vm225, %v2670, 0
      %v2768 = vsel %vm225, %v2671, 0
      %v2771 = vsel %vm526, %v2673, 0
      %2773 = vmatprep.subr.mxu0 0.0
      %2774 = vmatpush1.msra.mxu0 %v2771
      %2775 = vmatprep.subr.mxu0 0.0
      %2776 = vmatpush1.msra.mxu0 0.0
      %2777 = vmatprep.subr.mxu0 0.0
      %2778 = vmatpush1.msra.mxu0 0.0
      %2779 = vmatprep.subr.mxu0 0.0
      %2780 = vmatpush1.msra.mxu0 0.0
      %2781 = vmatprep.subr.mxu0 0.0
      %2782 = vmatpush1.msra.mxu0 0.0
      %2783 = vmatprep.subr.mxu0 0.0
      %2784 = vmatpush1.msra.mxu0 0.0
      %2785 = vmatprep.subr.mxu0 0.0
      %2786 = vmatpush1.msra.mxu0 0.0
      %2787 = vmatprep.subr.mxu0 0.0
      %2788 = vmatpush1.msra.mxu0 0.0
      %2789 = vmatprep.subr.mxu0 0.0
      %2790 = vmatpush1.msra.mxu0 0.0
      %2791 = vmatprep.subr.mxu0 0.0
      %2792 = vmatpush1.msra.mxu0 0.0
      %2793 = vmatprep.subr.mxu0 0.0
      %2794 = vmatpush1.msra.mxu0 0.0
      %2795 = vmatprep.subr.mxu0 0.0
      %2796 = vmatpush1.msra.mxu0 0.0
      %2797 = vmatprep.subr.mxu0 0.0
      %2798 = vmatpush1.msra.mxu0 0.0
      %2799 = vmatprep.subr.mxu0 0.0
      %2800 = vmatpush1.msra.mxu0 0.0
      %2801 = vmatprep.subr.mxu0 0.0
      %2802 = vmatpush1.msra.mxu0 0.0
      %2803 = vmatprep.subr.mxu0 0.0
      %2804 = vmatpush1.msra.mxu0 0.0
      %2805 = vmatprep.subr.mxu0 0.0
      %2806 = vmatpush1.msra.mxu0 0.0
      %2807 = vmatprep.subr.mxu0 0.0
      %2808 = vmatpush1.msra.mxu0 0.0
      %2809 = vmatprep.subr.mxu0 0.0
      %2810 = vmatpush1.msra.mxu0 0.0
      %2811 = vmatprep.subr.mxu0 0.0
      %2812 = vmatpush1.msra.mxu0 0.0
      %2813 = vmatprep.subr.mxu0 0.0
      %2814 = vmatpush1.msra.mxu0 0.0
      %2815 = vmatprep.subr.mxu0 0.0
      %2816 = vmatpush1.msra.mxu0 0.0
      %2817 = vmatprep.subr.mxu0 0.0
      %2818 = vmatpush1.msra.mxu0 0.0
      %2819 = vmatprep.subr.mxu0 0.0
      %2820 = vmatpush1.msra.mxu0 0.0
      %2821 = vmatprep.subr.mxu0 0.0
      %2822 = vmatpush1.msra.mxu0 0.0
      %2823 = vmatprep.subr.mxu0 0.0
      %2824 = vmatpush1.msra.mxu0 0.0
      %2825 = vmatprep.subr.mxu0 0.0
      %2826 = vmatpush1.msra.mxu0 0.0
      %2827 = vmatprep.subr.mxu0 0.0
      %2828 = vmatpush1.msra.mxu0 0.0
      %2829 = vmatprep.subr.mxu0 0.0
      %2830 = vmatpush1.msra.mxu0 0.0
      %2831 = vmatprep.subr.mxu0 0.0
      %2832 = vmatpush1.msra.mxu0 0.0
      %2833 = vmatprep.subr.mxu0 0.0
      %2834 = vmatpush1.msra.mxu0 0.0
      %2835 = vmatprep.subr.mxu0 0.0
      %2836 = vmatpush1.msra.mxu0 0.0
      %2837 = vmatprep.mubr.f32.mxu0 0.0
      %2838 = vmatmul.mubr.f32.gmra.mrb[0].mxu0 %v2675
      %v2839 = vpop.f32.mrb[0].mxu0
      %v2840 = vadd.f32 0.0, %v2839
      %v2841 = vpop.f32.mrb[0].mxu0
      %2842 = vmatprep.mubr.f32.mxu0 0.0
      %2843 = vmatmul.mubr.f32.gmra.mrb[0].mxu0 %v2678
      %v2844 = vpop.f32.mrb[0].mxu0
      %v2845 = vadd.f32 0.0, %v2844
      %v2846 = vpop.f32.mrb[0].mxu0
      %2847 = vmatprep.mubr.f32.mxu0 0.0
      %2848 = vmatmul.mubr.f32.gmra.mrb[0].mxu0 %v2681
      %v2849 = vpop.f32.mrb[0].mxu0
      %v2850 = vadd.f32 0.0, %v2849
      %v2851 = vpop.f32.mrb[0].mxu0
      %2852 = vmatprep.mubr.f32.mxu0 0.0
      %2853 = vmatmul.mubr.f32.gmra.mrb[0].mxu0 %v2684
      %v2854 = vpop.f32.mrb[0].mxu0
      %v2855 = vadd.f32 0.0, %v2854
      %v2856 = vpop.f32.mrb[0].mxu0
      %2857 = vmatprep.mubr.f32.mxu0 0.0
      %2858 = vmatmul.mubr.f32.gmra.mrb[0].mxu0 %v2687
      %v2859 = vpop.f32.mrb[0].mxu0
      %v2860 = vadd.f32 0.0, %v2859
      %v2861 = vpop.f32.mrb[0].mxu0
      %2862 = vmatprep.mubr.f32.mxu0 0.0
      %2863 = vmatmul.mubr.f32.gmra.mrb[0].mxu0 %v2690
      %v2864 = vpop.f32.mrb[0].mxu0
      %v2865 = vadd.f32 0.0, %v2864
      %v2866 = vpop.f32.mrb[0].mxu0
      %2867 = vmatprep.mubr.f32.mxu0 0.0
      %2868 = vmatmul.mubr.f32.gmra.mrb[0].mxu0 %v2693
      %v2869 = vpop.f32.mrb[0].mxu0
      %v2870 = vadd.f32 0.0, %v2869
      %v2871 = vpop.f32.mrb[0].mxu0
      %2872 = vmatprep.mubr.f32.mxu0 0.0
      %2873 = vmatmul.mubr.f32.gmra.mrb[0].mxu0 %v2696
      %v2874 = vpop.f32.mrb[0].mxu0
      %v2875 = vadd.f32 0.0, %v2874
      %v2876 = vpop.f32.mrb[0].mxu0
      %2877 = vmatprep.mubr.f32.mxu0 0.0
      %2878 = vmatmul.mubr.f32.gmra.mrb[0].mxu0 %v2699
      %v2879 = vpop.f32.mrb[0].mxu0
      %v2880 = vadd.f32 0.0, %v2879
      %v2881 = vpop.f32.mrb[0].mxu0
      %2882 = vmatprep.mubr.f32.mxu0 0.0
      %2883 = vmatmul.mubr.f32.gmra.mrb[0].mxu0 %v2702
      %v2884 = vpop.f32.mrb[0].mxu0
      %v2885 = vadd.f32 0.0, %v2884
      %v2886 = vpop.f32.mrb[0].mxu0
      %2887 = vmatprep.mubr.f32.mxu0 0.0
      %2888 = vmatmul.mubr.f32.gmra.mrb[0].mxu0 %v2705
      %v2889 = vpop.f32.mrb[0].mxu0
      %v2890 = vadd.f32 0.0, %v2889
      %v2891 = vpop.f32.mrb[0].mxu0
      %2892 = vmatprep.mubr.f32.mxu0 0.0
      %2893 = vmatmul.mubr.f32.gmra.mrb[0].mxu0 %v2708
      %v2894 = vpop.f32.mrb[0].mxu0
      %v2895 = vadd.f32 0.0, %v2894
      %v2896 = vpop.f32.mrb[0].mxu0
      %2897 = vmatprep.mubr.f32.mxu0 0.0
      %2898 = vmatmul.mubr.f32.gmra.mrb[0].mxu0 %v2711
      %v2899 = vpop.f32.mrb[0].mxu0
      %v2900 = vadd.f32 0.0, %v2899
      %v2901 = vpop.f32.mrb[0].mxu0
      %2902 = vmatprep.mubr.f32.mxu0 0.0
      %2903 = vmatmul.mubr.f32.gmra.mrb[0].mxu0 %v2714
      %v2904 = vpop.f32.mrb[0].mxu0
      %v2905 = vadd.f32 0.0, %v2904
      %v2906 = vpop.f32.mrb[0].mxu0
      %2907 = vmatprep.mubr.f32.mxu0 0.0
      %2908 = vmatmul.mubr.f32.gmra.mrb[0].mxu0 %v2717
      %v2909 = vpop.f32.mrb[0].mxu0
      %v2910 = vadd.f32 0.0, %v2909
      %v2911 = vpop.f32.mrb[0].mxu0
      %2912 = vmatprep.mubr.f32.mxu0 0.0
      %2913 = vmatmul.mubr.f32.gmra.mrb[0].mxu0 %v2720
      %v2914 = vpop.f32.mrb[0].mxu0
      %v2915 = vadd.f32 0.0, %v2914
      %v2916 = vpop.f32.mrb[0].mxu0
      %2917 = vmatprep.mubr.f32.mxu0 0.0
      %2918 = vmatmul.mubr.f32.gmra.mrb[0].mxu0 %v2723
      %v2919 = vpop.f32.mrb[0].mxu0
      %v2920 = vadd.f32 0.0, %v2919
      %v2921 = vpop.f32.mrb[0].mxu0
      %2922 = vmatprep.mubr.f32.mxu0 0.0
      %2923 = vmatmul.mubr.f32.gmra.mrb[0].mxu0 %v2726
      %v2924 = vpop.f32.mrb[0].mxu0
      %v2925 = vadd.f32 0.0, %v2924
      %v2926 = vpop.f32.mrb[0].mxu0
      %2927 = vmatprep.mubr.f32.mxu0 0.0
      %2928 = vmatmul.mubr.f32.gmra.mrb[0].mxu0 %v2729
      %v2929 = vpop.f32.mrb[0].mxu0
      %v2930 = vadd.f32 0.0, %v2929
      %v2931 = vpop.f32.mrb[0].mxu0
      %2932 = vmatprep.mubr.f32.mxu0 0.0
      %2933 = vmatmul.mubr.f32.gmra.mrb[0].mxu0 %v2732
      %v2934 = vpop.f32.mrb[0].mxu0
      %v2935 = vadd.f32 0.0, %v2934
      %v2936 = vpop.f32.mrb[0].mxu0
      %2937 = vmatprep.mubr.f32.mxu0 0.0
      %2938 = vmatmul.mubr.f32.gmra.mrb[0].mxu0 %v2735
      %v2939 = vpop.f32.mrb[0].mxu0
      %v2940 = vadd.f32 0.0, %v2939
      %v2941 = vpop.f32.mrb[0].mxu0
      %2942 = vmatprep.mubr.f32.mxu0 0.0
      %2943 = vmatmul.mubr.f32.gmra.mrb[0].mxu0 %v2738
      %v2944 = vpop.f32.mrb[0].mxu0
      %v2945 = vadd.f32 0.0, %v2944
      %v2946 = vpop.f32.mrb[0].mxu0
      %2947 = vmatprep.mubr.f32.mxu0 0.0
      %2948 = vmatmul.mubr.f32.gmra.mrb[0].mxu0 %v2741
      %v2949 = vpop.f32.mrb[0].mxu0
      %v2950 = vadd.f32 0.0, %v2949
      %v2951 = vpop.f32.mrb[0].mxu0
      %2952 = vmatprep.mubr.f32.mxu0 0.0
      %2953 = vmatmul.mubr.f32.gmra.mrb[0].mxu0 %v2744
      %v2954 = vpop.f32.mrb[0].mxu0
      %v2955 = vadd.f32 0.0, %v2954
      %v2956 = vpop.f32.mrb[0].mxu0
      %2957 = vmatprep.mubr.f32.mxu0 0.0
      %2958 = vmatmul.mubr.f32.gmra.mrb[0].mxu0 %v2747
      %v2959 = vpop.f32.mrb[0].mxu0
      %v2960 = vadd.f32 0.0, %v2959
      %v2961 = vpop.f32.mrb[0].mxu0
      %2962 = vmatprep.mubr.f32.mxu0 0.0
      %2963 = vmatmul.mubr.f32.gmra.mrb[0].mxu0 %v2750
      %v2964 = vpop.f32.mrb[0].mxu0
      %v2965 = vadd.f32 0.0, %v2964
      %v2966 = vpop.f32.mrb[0].mxu0
      %2967 = vmatprep.mubr.f32.mxu0 0.0
      %2968 = vmatmul.mubr.f32.gmra.mrb[0].mxu0 %v2753
      %v2969 = vpop.f32.mrb[0].mxu0
      %v2970 = vadd.f32 0.0, %v2969
      %v2971 = vpop.f32.mrb[0].mxu0
      %2972 = vmatprep.mubr.f32.mxu0 0.0
      %2973 = vmatmul.mubr.f32.gmra.mrb[0].mxu0 %v2756
      %v2974 = vpop.f32.mrb[0].mxu0
      %v2975 = vadd.f32 0.0, %v2974
      %v2976 = vpop.f32.mrb[0].mxu0
      %2977 = vmatprep.mubr.f32.mxu0 0.0
      %2978 = vmatmul.mubr.f32.gmra.mrb[0].mxu0 %v2759
      %v2979 = vpop.f32.mrb[0].mxu0
      %v2980 = vadd.f32 0.0, %v2979
      %v2981 = vpop.f32.mrb[0].mxu0
      %2982 = vmatprep.mubr.f32.mxu0 0.0
      %2983 = vmatmul.mubr.f32.gmra.mrb[0].mxu0 %v2762
      %v2984 = vpop.f32.mrb[0].mxu0
      %v2985 = vadd.f32 0.0, %v2984
      %v2986 = vpop.f32.mrb[0].mxu0
      %2987 = vmatprep.mubr.f32.mxu0 0.0
      %2988 = vmatmul.mubr.f32.gmra.mrb[0].mxu0 %v2765
      %v2989 = vpop.f32.mrb[0].mxu0
      %v2990 = vadd.f32 0.0, %v2989
      %v2991 = vpop.f32.mrb[0].mxu0
      %2992 = vmatprep.mubr.f32.mxu0 0.0
      %2993 = vmatmul.mubr.f32.gmra.mrb[0].mxu0 %v2768
      %v2994 = vpop.f32.mrb[0].mxu0
      %v2995 = vadd.f32 0.0, %v2994
      %v2996 = vpop.f32.mrb[0].mxu0
      %2997 = vdwg.mxu0
      %v2998 = vadd.f32 %v2607, %v2840
      %v2999 = vadd.f32 %v2608, %v2845
      %v3000 = vadd.f32 %v2609, %v2850
      %v3001 = vadd.f32 %v2610, %v2855
      %v3002 = vadd.f32 %v2611, %v2860
      %v3003 = vadd.f32 %v2612, %v2865
      %v3004 = vadd.f32 %v2613, %v2870
      %v3005 = vadd.f32 %v2614, %v2875
      %v3006 = vadd.f32 %v2615, %v2880
      %v3007 = vadd.f32 %v2616, %v2885
      %v3008 = vadd.f32 %v2617, %v2890
      %v3009 = vadd.f32 %v2618, %v2895
      %v3010 = vadd.f32 %v2619, %v2900
      %v3011 = vadd.f32 %v2620, %v2905
      %v3012 = vadd.f32 %v2621, %v2910
      %v3013 = vadd.f32 %v2622, %v2915
      %v3014 = vadd.f32 %v2623, %v2920
      %v3015 = vadd.f32 %v2624, %v2925
      %v3016 = vadd.f32 %v2625, %v2930
      %v3017 = vadd.f32 %v2626, %v2935
      %v3018 = vadd.f32 %v2627, %v2940
      %v3019 = vadd.f32 %v2628, %v2945
      %v3020 = vadd.f32 %v2629, %v2950
      %v3021 = vadd.f32 %v2630, %v2955
      %v3022 = vadd.f32 %v2631, %v2960
      %v3023 = vadd.f32 %v2632, %v2965
      %v3024 = vadd.f32 %v2633, %v2970
      %v3025 = vadd.f32 %v2634, %v2975
      %v3026 = vadd.f32 %v2635, %v2980
      %v3027 = vadd.f32 %v2636, %v2985
      %v3028 = vadd.f32 %v2637, %v2990
      %v3029 = vadd.f32 %v2638, %v2995
      %v3030 = vld [vmem:[%s2639 + $0x8] sm:$0xff]
      %v3031 = vld [vmem:[%s2639 + $0x10] sm:$0xff]
      %v3032 = vld [vmem:[%s2639 + $0x28] sm:$0xff]
      %v3033 = vld [vmem:[%s2639 + $0x30] sm:$0xff]
      %v3034 = vld [vmem:[%s2639 + $0x48] sm:$0xff]
      %v3035 = vld [vmem:[%s2639 + $0x50] sm:$0xff]
      %v3036 = vld [vmem:[%s2639 + $0x68] sm:$0xff]
      %v3037 = vld [vmem:[%s2639 + $0x70] sm:$0xff]
      %v3038 = vld [vmem:[%s2639 + $0x88] sm:$0xff]
      %v3039 = vld [vmem:[%s2639 + $0x90] sm:$0xff]
      %v3040 = vld [vmem:[%s2639 + $0xa8] sm:$0xff]
      %v3041 = vld [vmem:[%s2639 + $0xb0] sm:$0xff]
      %v3042 = vld [vmem:[%s2639 + $0xc8] sm:$0xff]
      %v3043 = vld [vmem:[%s2639 + $0xd0] sm:$0xff]
      %v3044 = vld [vmem:[%s2639 + $0xe8] sm:$0xff]
      %v3045 = vld [vmem:[%s2639 + $0xf0] sm:$0xff]
      %v3046 = vld [vmem:[%s2639 + $0x108] sm:$0xff]
      %v3047 = vld [vmem:[%s2639 + $0x110] sm:$0xff]
      %v3048 = vld [vmem:[%s2639 + $0x128] sm:$0xff]
      %v3049 = vld [vmem:[%s2639 + $0x130] sm:$0xff]
      %v3050 = vld [vmem:[%s2639 + $0x148] sm:$0xff]
      %v3051 = vld [vmem:[%s2639 + $0x150] sm:$0xff]
      %v3052 = vld [vmem:[%s2639 + $0x168] sm:$0xff]
      %v3053 = vld [vmem:[%s2639 + $0x170] sm:$0xff]
      %v3054 = vld [vmem:[%s2639 + $0x188] sm:$0xff]
      %v3055 = vld [vmem:[%s2639 + $0x190] sm:$0xff]
      %v3056 = vld [vmem:[%s2639 + $0x1a8] sm:$0xff]
      %v3057 = vld [vmem:[%s2639 + $0x1b0] sm:$0xff]
      %v3058 = vld [vmem:[%s2639 + $0x1c8] sm:$0xff]
      %v3059 = vld [vmem:[%s2639 + $0x1d0] sm:$0xff]
      %v3060 = vld [vmem:[%s2639 + $0x1e8] sm:$0xff]
      %v3061 = vld [vmem:[%s2639 + $0x1f0] sm:$0xff]
      %s3062 = scalar_lea.vmem %s1, 28
      %v3063 = vld [vmem:[%s3062] sm:$0xf]
      %v3065 = vsel %vm225, %v3030, 0
      %v3068 = vsel %vm225, %v3031, 0
      %v3071 = vsel %vm225, %v3032, 0
      %v3074 = vsel %vm225, %v3033, 0
      %v3077 = vsel %vm225, %v3034, 0
      %v3080 = vsel %vm225, %v3035, 0
      %v3083 = vsel %vm225, %v3036, 0
      %v3086 = vsel %vm225, %v3037, 0
      %v3089 = vsel %vm225, %v3038, 0
      %v3092 = vsel %vm225, %v3039, 0
      %v3095 = vsel %vm225, %v3040, 0
      %v3098 = vsel %vm225, %v3041, 0
      %v3101 = vsel %vm225, %v3042, 0
      %v3104 = vsel %vm225, %v3043, 0
      %v3107 = vsel %vm225, %v3044, 0
      %v3110 = vsel %vm225, %v3045, 0
      %v3113 = vsel %vm225, %v3046, 0
      %v3116 = vsel %vm225, %v3047, 0
      %v3119 = vsel %vm225, %v3048, 0
      %v3122 = vsel %vm225, %v3049, 0
      %v3125 = vsel %vm225, %v3050, 0
      %v3128 = vsel %vm225, %v3051, 0
      %v3131 = vsel %vm225, %v3052, 0
      %v3134 = vsel %vm225, %v3053, 0
      %v3137 = vsel %vm225, %v3054, 0
      %v3140 = vsel %vm225, %v3055, 0
      %v3143 = vsel %vm225, %v3056, 0
      %v3146 = vsel %vm225, %v3057, 0
      %v3149 = vsel %vm225, %v3058, 0
      %v3152 = vsel %vm225, %v3059, 0
      %v3155 = vsel %vm225, %v3060, 0
      %v3158 = vsel %vm225, %v3061, 0
      %v3161 = vsel %vm526, %v3063, 0
      %3163 = vmatprep.subr.mxu0 0.0
      %3164 = vmatpush1.msra.mxu0 %v3161
      %3165 = vmatprep.subr.mxu0 0.0
      %3166 = vmatpush1.msra.mxu0 0.0
      %3167 = vmatprep.subr.mxu0 0.0
      %3168 = vmatpush1.msra.mxu0 0.0
      %3169 = vmatprep.subr.mxu0 0.0
      %3170 = vmatpush1.msra.mxu0 0.0
      %3171 = vmatprep.subr.mxu0 0.0
      %3172 = vmatpush1.msra.mxu0 0.0
      %3173 = vmatprep.subr.mxu0 0.0
      %3174 = vmatpush1.msra.mxu0 0.0
      %3175 = vmatprep.subr.mxu0 0.0
      %3176 = vmatpush1.msra.mxu0 0.0
      %3177 = vmatprep.subr.mxu0 0.0
      %3178 = vmatpush1.msra.mxu0 0.0
      %3179 = vmatprep.subr.mxu0 0.0
      %3180 = vmatpush1.msra.mxu0 0.0
      %3181 = vmatprep.subr.mxu0 0.0
      %3182 = vmatpush1.msra.mxu0 0.0
      %3183 = vmatprep.subr.mxu0 0.0
      %3184 = vmatpush1.msra.mxu0 0.0
      %3185 = vmatprep.subr.mxu0 0.0
      %3186 = vmatpush1.msra.mxu0 0.0
      %3187 = vmatprep.subr.mxu0 0.0
      %3188 = vmatpush1.msra.mxu0 0.0
      %3189 = vmatprep.subr.mxu0 0.0
      %3190 = vmatpush1.msra.mxu0 0.0
      %3191 = vmatprep.subr.mxu0 0.0
      %3192 = vmatpush1.msra.mxu0 0.0
      %3193 = vmatprep.subr.mxu0 0.0
      %3194 = vmatpush1.msra.mxu0 0.0
      %3195 = vmatprep.subr.mxu0 0.0
      %3196 = vmatpush1.msra.mxu0 0.0
      %3197 = vmatprep.subr.mxu0 0.0
      %3198 = vmatpush1.msra.mxu0 0.0
      %3199 = vmatprep.subr.mxu0 0.0
      %3200 = vmatpush1.msra.mxu0 0.0
      %3201 = vmatprep.subr.mxu0 0.0
      %3202 = vmatpush1.msra.mxu0 0.0
      %3203 = vmatprep.subr.mxu0 0.0
      %3204 = vmatpush1.msra.mxu0 0.0
      %3205 = vmatprep.subr.mxu0 0.0
      %3206 = vmatpush1.msra.mxu0 0.0
      %3207 = vmatprep.subr.mxu0 0.0
      %3208 = vmatpush1.msra.mxu0 0.0
      %3209 = vmatprep.subr.mxu0 0.0
      %3210 = vmatpush1.msra.mxu0 0.0
      %3211 = vmatprep.subr.mxu0 0.0
      %3212 = vmatpush1.msra.mxu0 0.0
      %3213 = vmatprep.subr.mxu0 0.0
      %3214 = vmatpush1.msra.mxu0 0.0
      %3215 = vmatprep.subr.mxu0 0.0
      %3216 = vmatpush1.msra.mxu0 0.0
      %3217 = vmatprep.subr.mxu0 0.0
      %3218 = vmatpush1.msra.mxu0 0.0
      %3219 = vmatprep.subr.mxu0 0.0
      %3220 = vmatpush1.msra.mxu0 0.0
      %3221 = vmatprep.subr.mxu0 0.0
      %3222 = vmatpush1.msra.mxu0 0.0
      %3223 = vmatprep.subr.mxu0 0.0
      %3224 = vmatpush1.msra.mxu0 0.0
      %3225 = vmatprep.subr.mxu0 0.0
      %3226 = vmatpush1.msra.mxu0 0.0
      %3227 = vmatprep.mubr.f32.mxu0 0.0
      %3228 = vmatmul.mubr.f32.gmra.mrb[0].mxu0 %v3065
      %v3229 = vpop.f32.mrb[0].mxu0
      %v3230 = vadd.f32 0.0, %v3229
      %v3231 = vpop.f32.mrb[0].mxu0
      %3232 = vmatprep.mubr.f32.mxu0 0.0
      %3233 = vmatmul.mubr.f32.gmra.mrb[0].mxu0 %v3068
      %v3234 = vpop.f32.mrb[0].mxu0
      %v3235 = vadd.f32 0.0, %v3234
      %v3236 = vpop.f32.mrb[0].mxu0
      %3237 = vmatprep.mubr.f32.mxu0 0.0
      %3238 = vmatmul.mubr.f32.gmra.mrb[0].mxu0 %v3071
      %v3239 = vpop.f32.mrb[0].mxu0
      %v3240 = vadd.f32 0.0, %v3239
      %v3241 = vpop.f32.mrb[0].mxu0
      %3242 = vmatprep.mubr.f32.mxu0 0.0
      %3243 = vmatmul.mubr.f32.gmra.mrb[0].mxu0 %v3074
      %v3244 = vpop.f32.mrb[0].mxu0
      %v3245 = vadd.f32 0.0, %v3244
      %v3246 = vpop.f32.mrb[0].mxu0
      %3247 = vmatprep.mubr.f32.mxu0 0.0
      %3248 = vmatmul.mubr.f32.gmra.mrb[0].mxu0 %v3077
      %v3249 = vpop.f32.mrb[0].mxu0
      %v3250 = vadd.f32 0.0, %v3249
      %v3251 = vpop.f32.mrb[0].mxu0
      %3252 = vmatprep.mubr.f32.mxu0 0.0
      %3253 = vmatmul.mubr.f32.gmra.mrb[0].mxu0 %v3080
      %v3254 = vpop.f32.mrb[0].mxu0
      %v3255 = vadd.f32 0.0, %v3254
      %v3256 = vpop.f32.mrb[0].mxu0
      %3257 = vmatprep.mubr.f32.mxu0 0.0
      %3258 = vmatmul.mubr.f32.gmra.mrb[0].mxu0 %v3083
      %v3259 = vpop.f32.mrb[0].mxu0
      %v3260 = vadd.f32 0.0, %v3259
      %v3261 = vpop.f32.mrb[0].mxu0
      %3262 = vmatprep.mubr.f32.mxu0 0.0
      %3263 = vmatmul.mubr.f32.gmra.mrb[0].mxu0 %v3086
      %v3264 = vpop.f32.mrb[0].mxu0
      %v3265 = vadd.f32 0.0, %v3264
      %v3266 = vpop.f32.mrb[0].mxu0
      %3267 = vmatprep.mubr.f32.mxu0 0.0
      %3268 = vmatmul.mubr.f32.gmra.mrb[0].mxu0 %v3089
      %v3269 = vpop.f32.mrb[0].mxu0
      %v3270 = vadd.f32 0.0, %v3269
      %v3271 = vpop.f32.mrb[0].mxu0
      %3272 = vmatprep.mubr.f32.mxu0 0.0
      %3273 = vmatmul.mubr.f32.gmra.mrb[0].mxu0 %v3092
      %v3274 = vpop.f32.mrb[0].mxu0
      %v3275 = vadd.f32 0.0, %v3274
      %v3276 = vpop.f32.mrb[0].mxu0
      %3277 = vmatprep.mubr.f32.mxu0 0.0
      %3278 = vmatmul.mubr.f32.gmra.mrb[0].mxu0 %v3095
      %v3279 = vpop.f32.mrb[0].mxu0
      %v3280 = vadd.f32 0.0, %v3279
      %v3281 = vpop.f32.mrb[0].mxu0
      %3282 = vmatprep.mubr.f32.mxu0 0.0
      %3283 = vmatmul.mubr.f32.gmra.mrb[0].mxu0 %v3098
      %v3284 = vpop.f32.mrb[0].mxu0
      %v3285 = vadd.f32 0.0, %v3284
      %v3286 = vpop.f32.mrb[0].mxu0
      %3287 = vmatprep.mubr.f32.mxu0 0.0
      %3288 = vmatmul.mubr.f32.gmra.mrb[0].mxu0 %v3101
      %v3289 = vpop.f32.mrb[0].mxu0
      %v3290 = vadd.f32 0.0, %v3289
      %v3291 = vpop.f32.mrb[0].mxu0
      %3292 = vmatprep.mubr.f32.mxu0 0.0
      %3293 = vmatmul.mubr.f32.gmra.mrb[0].mxu0 %v3104
      %v3294 = vpop.f32.mrb[0].mxu0
      %v3295 = vadd.f32 0.0, %v3294
      %v3296 = vpop.f32.mrb[0].mxu0
      %3297 = vmatprep.mubr.f32.mxu0 0.0
      %3298 = vmatmul.mubr.f32.gmra.mrb[0].mxu0 %v3107
      %v3299 = vpop.f32.mrb[0].mxu0
      %v3300 = vadd.f32 0.0, %v3299
      %v3301 = vpop.f32.mrb[0].mxu0
      %3302 = vmatprep.mubr.f32.mxu0 0.0
      %3303 = vmatmul.mubr.f32.gmra.mrb[0].mxu0 %v3110
      %v3304 = vpop.f32.mrb[0].mxu0
      %v3305 = vadd.f32 0.0, %v3304
      %v3306 = vpop.f32.mrb[0].mxu0
      %3307 = vmatprep.mubr.f32.mxu0 0.0
      %3308 = vmatmul.mubr.f32.gmra.mrb[0].mxu0 %v3113
      %v3309 = vpop.f32.mrb[0].mxu0
      %v3310 = vadd.f32 0.0, %v3309
      %v3311 = vpop.f32.mrb[0].mxu0
      %3312 = vmatprep.mubr.f32.mxu0 0.0
      %3313 = vmatmul.mubr.f32.gmra.mrb[0].mxu0 %v3116
      %v3314 = vpop.f32.mrb[0].mxu0
      %v3315 = vadd.f32 0.0, %v3314
      %v3316 = vpop.f32.mrb[0].mxu0
      %3317 = vmatprep.mubr.f32.mxu0 0.0
      %3318 = vmatmul.mubr.f32.gmra.mrb[0].mxu0 %v3119
      %v3319 = vpop.f32.mrb[0].mxu0
      %v3320 = vadd.f32 0.0, %v3319
      %v3321 = vpop.f32.mrb[0].mxu0
      %3322 = vmatprep.mubr.f32.mxu0 0.0
      %3323 = vmatmul.mubr.f32.gmra.mrb[0].mxu0 %v3122
      %v3324 = vpop.f32.mrb[0].mxu0
      %v3325 = vadd.f32 0.0, %v3324
      %v3326 = vpop.f32.mrb[0].mxu0
      %3327 = vmatprep.mubr.f32.mxu0 0.0
      %3328 = vmatmul.mubr.f32.gmra.mrb[0].mxu0 %v3125
      %v3329 = vpop.f32.mrb[0].mxu0
      %v3330 = vadd.f32 0.0, %v3329
      %v3331 = vpop.f32.mrb[0].mxu0
      %3332 = vmatprep.mubr.f32.mxu0 0.0
      %3333 = vmatmul.mubr.f32.gmra.mrb[0].mxu0 %v3128
      %v3334 = vpop.f32.mrb[0].mxu0
      %v3335 = vadd.f32 0.0, %v3334
      %v3336 = vpop.f32.mrb[0].mxu0
      %3337 = vmatprep.mubr.f32.mxu0 0.0
      %3338 = vmatmul.mubr.f32.gmra.mrb[0].mxu0 %v3131
      %v3339 = vpop.f32.mrb[0].mxu0
      %v3340 = vadd.f32 0.0, %v3339
      %v3341 = vpop.f32.mrb[0].mxu0
      %3342 = vmatprep.mubr.f32.mxu0 0.0
      %3343 = vmatmul.mubr.f32.gmra.mrb[0].mxu0 %v3134
      %v3344 = vpop.f32.mrb[0].mxu0
      %v3345 = vadd.f32 0.0, %v3344
      %v3346 = vpop.f32.mrb[0].mxu0
      %3347 = vmatprep.mubr.f32.mxu0 0.0
      %3348 = vmatmul.mubr.f32.gmra.mrb[0].mxu0 %v3137
      %v3349 = vpop.f32.mrb[0].mxu0
      %v3350 = vadd.f32 0.0, %v3349
      %v3351 = vpop.f32.mrb[0].mxu0
      %3352 = vmatprep.mubr.f32.mxu0 0.0
      %3353 = vmatmul.mubr.f32.gmra.mrb[0].mxu0 %v3140
      %v3354 = vpop.f32.mrb[0].mxu0
      %v3355 = vadd.f32 0.0, %v3354
      %v3356 = vpop.f32.mrb[0].mxu0
      %3357 = vmatprep.mubr.f32.mxu0 0.0
      %3358 = vmatmul.mubr.f32.gmra.mrb[0].mxu0 %v3143
      %v3359 = vpop.f32.mrb[0].mxu0
      %v3360 = vadd.f32 0.0, %v3359
      %v3361 = vpop.f32.mrb[0].mxu0
      %3362 = vmatprep.mubr.f32.mxu0 0.0
      %3363 = vmatmul.mubr.f32.gmra.mrb[0].mxu0 %v3146
      %v3364 = vpop.f32.mrb[0].mxu0
      %v3365 = vadd.f32 0.0, %v3364
      %v3366 = vpop.f32.mrb[0].mxu0
      %3367 = vmatprep.mubr.f32.mxu0 0.0
      %3368 = vmatmul.mubr.f32.gmra.mrb[0].mxu0 %v3149
      %v3369 = vpop.f32.mrb[0].mxu0
      %v3370 = vadd.f32 0.0, %v3369
      %v3371 = vpop.f32.mrb[0].mxu0
      %3372 = vmatprep.mubr.f32.mxu0 0.0
      %3373 = vmatmul.mubr.f32.gmra.mrb[0].mxu0 %v3152
      %v3374 = vpop.f32.mrb[0].mxu0
      %v3375 = vadd.f32 0.0, %v3374
      %v3376 = vpop.f32.mrb[0].mxu0
      %3377 = vmatprep.mubr.f32.mxu0 0.0
      %3378 = vmatmul.mubr.f32.gmra.mrb[0].mxu0 %v3155
      %v3379 = vpop.f32.mrb[0].mxu0
      %v3380 = vadd.f32 0.0, %v3379
      %v3381 = vpop.f32.mrb[0].mxu0
      %3382 = vmatprep.mubr.f32.mxu0 0.0
      %3383 = vmatmul.mubr.f32.gmra.mrb[0].mxu0 %v3158
      %v3384 = vpop.f32.mrb[0].mxu0
      %v3385 = vadd.f32 0.0, %v3384
      %v3386 = vpop.f32.mrb[0].mxu0
      %3387 = vdwg.mxu0
      %v3388 = vadd.f32 %v2998, %v3230
      %v3389 = vadd.f32 %v2999, %v3235
      %v3390 = vadd.f32 %v3000, %v3240
      %v3391 = vadd.f32 %v3001, %v3245
      %v3392 = vadd.f32 %v3002, %v3250
      %v3393 = vadd.f32 %v3003, %v3255
      %v3394 = vadd.f32 %v3004, %v3260
      %v3395 = vadd.f32 %v3005, %v3265
      %v3396 = vadd.f32 %v3006, %v3270
      %v3397 = vadd.f32 %v3007, %v3275
      %v3398 = vadd.f32 %v3008, %v3280
      %v3399 = vadd.f32 %v3009, %v3285
      %v3400 = vadd.f32 %v3010, %v3290
      %v3401 = vadd.f32 %v3011, %v3295
      %v3402 = vadd.f32 %v3012, %v3300
      %v3403 = vadd.f32 %v3013, %v3305
      %v3404 = vadd.f32 %v3014, %v3310
      %v3405 = vadd.f32 %v3015, %v3315
      %v3406 = vadd.f32 %v3016, %v3320
      %v3407 = vadd.f32 %v3017, %v3325
      %v3408 = vadd.f32 %v3018, %v3330
      %v3409 = vadd.f32 %v3019, %v3335
      %v3410 = vadd.f32 %v3020, %v3340
      %v3411 = vadd.f32 %v3021, %v3345
      %v3412 = vadd.f32 %v3022, %v3350
      %v3413 = vadd.f32 %v3023, %v3355
      %v3414 = vadd.f32 %v3024, %v3360
      %v3415 = vadd.f32 %v3025, %v3365
      %v3416 = vadd.f32 %v3026, %v3370
      %v3417 = vadd.f32 %v3027, %v3375
      %v3418 = vadd.f32 %v3028, %v3380
      %v3419 = vadd.f32 %v3029, %v3385
      %v3420 = vld [vmem:[%s2639 + $0x9] sm:$0xff]
      %v3421 = vld [vmem:[%s2639 + $0x11] sm:$0xff]
      %v3422 = vld [vmem:[%s2639 + $0x29] sm:$0xff]
      %v3423 = vld [vmem:[%s2639 + $0x31] sm:$0xff]
      %v3424 = vld [vmem:[%s2639 + $0x49] sm:$0xff]
      %v3425 = vld [vmem:[%s2639 + $0x51] sm:$0xff]
      %v3426 = vld [vmem:[%s2639 + $0x69] sm:$0xff]
      %v3427 = vld [vmem:[%s2639 + $0x71] sm:$0xff]
      %v3428 = vld [vmem:[%s2639 + $0x89] sm:$0xff]
      %v3429 = vld [vmem:[%s2639 + $0x91] sm:$0xff]
      %v3430 = vld [vmem:[%s2639 + $0xa9] sm:$0xff]
      %v3431 = vld [vmem:[%s2639 + $0xb1] sm:$0xff]
      %v3432 = vld [vmem:[%s2639 + $0xc9] sm:$0xff]
      %v3433 = vld [vmem:[%s2639 + $0xd1] sm:$0xff]
      %v3434 = vld [vmem:[%s2639 + $0xe9] sm:$0xff]
      %v3435 = vld [vmem:[%s2639 + $0xf1] sm:$0xff]
      %v3436 = vld [vmem:[%s2639 + $0x109] sm:$0xff]
      %v3437 = vld [vmem:[%s2639 + $0x111] sm:$0xff]
      %v3438 = vld [vmem:[%s2639 + $0x129] sm:$0xff]
      %v3439 = vld [vmem:[%s2639 + $0x131] sm:$0xff]
      %v3440 = vld [vmem:[%s2639 + $0x149] sm:$0xff]
      %v3441 = vld [vmem:[%s2639 + $0x151] sm:$0xff]
      %v3442 = vld [vmem:[%s2639 + $0x169] sm:$0xff]
      %v3443 = vld [vmem:[%s2639 + $0x171] sm:$0xff]
      %v3444 = vld [vmem:[%s2639 + $0x189] sm:$0xff]
      %v3445 = vld [vmem:[%s2639 + $0x191] sm:$0xff]
      %v3446 = vld [vmem:[%s2639 + $0x1a9] sm:$0xff]
      %v3447 = vld [vmem:[%s2639 + $0x1b1] sm:$0xff]
      %v3448 = vld [vmem:[%s2639 + $0x1c9] sm:$0xff]
      %v3449 = vld [vmem:[%s2639 + $0x1d1] sm:$0xff]
      %v3450 = vld [vmem:[%s2639 + $0x1e9] sm:$0xff]
      %v3451 = vld [vmem:[%s2639 + $0x1f1] sm:$0xff]
      %s3452 = scalar_lea.vmem %s1, 32
      %v3453 = vld [vmem:[%s3452] sm:$0xf]
      %v3455 = vsel %vm225, %v3420, 0
      %v3458 = vsel %vm225, %v3421, 0
      %v3461 = vsel %vm225, %v3422, 0
      %v3464 = vsel %vm225, %v3423, 0
      %v3467 = vsel %vm225, %v3424, 0
      %v3470 = vsel %vm225, %v3425, 0
      %v3473 = vsel %vm225, %v3426, 0
      %v3476 = vsel %vm225, %v3427, 0
      %v3479 = vsel %vm225, %v3428, 0
      %v3482 = vsel %vm225, %v3429, 0
      %v3485 = vsel %vm225, %v3430, 0
      %v3488 = vsel %vm225, %v3431, 0
      %v3491 = vsel %vm225, %v3432, 0
      %v3494 = vsel %vm225, %v3433, 0
      %v3497 = vsel %vm225, %v3434, 0
      %v3500 = vsel %vm225, %v3435, 0
      %v3503 = vsel %vm225, %v3436, 0
      %v3506 = vsel %vm225, %v3437, 0
      %v3509 = vsel %vm225, %v3438, 0
      %v3512 = vsel %vm225, %v3439, 0
      %v3515 = vsel %vm225, %v3440, 0
      %v3518 = vsel %vm225, %v3441, 0
      %v3521 = vsel %vm225, %v3442, 0
      %v3524 = vsel %vm225, %v3443, 0
      %v3527 = vsel %vm225, %v3444, 0
      %v3530 = vsel %vm225, %v3445, 0
      %v3533 = vsel %vm225, %v3446, 0
      %v3536 = vsel %vm225, %v3447, 0
      %v3539 = vsel %vm225, %v3448, 0
      %v3542 = vsel %vm225, %v3449, 0
      %v3545 = vsel %vm225, %v3450, 0
      %v3548 = vsel %vm225, %v3451, 0
      %v3551 = vsel %vm526, %v3453, 0
      %3553 = vmatprep.subr.mxu0 0.0
      %3554 = vmatpush1.msra.mxu0 %v3551
      %3555 = vmatprep.subr.mxu0 0.0
      %3556 = vmatpush1.msra.mxu0 0.0
      %3557 = vmatprep.subr.mxu0 0.0
      %3558 = vmatpush1.msra.mxu0 0.0
      %3559 = vmatprep.subr.mxu0 0.0
      %3560 = vmatpush1.msra.mxu0 0.0
      %3561 = vmatprep.subr.mxu0 0.0
      %3562 = vmatpush1.msra.mxu0 0.0
      %3563 = vmatprep.subr.mxu0 0.0
      %3564 = vmatpush1.msra.mxu0 0.0
      %3565 = vmatprep.subr.mxu0 0.0
      %3566 = vmatpush1.msra.mxu0 0.0
      %3567 = vmatprep.subr.mxu0 0.0
      %3568 = vmatpush1.msra.mxu0 0.0
      %3569 = vmatprep.subr.mxu0 0.0
      %3570 = vmatpush1.msra.mxu0 0.0
      %3571 = vmatprep.subr.mxu0 0.0
      %3572 = vmatpush1.msra.mxu0 0.0
      %3573 = vmatprep.subr.mxu0 0.0
      %3574 = vmatpush1.msra.mxu0 0.0
      %3575 = vmatprep.subr.mxu0 0.0
      %3576 = vmatpush1.msra.mxu0 0.0
      %3577 = vmatprep.subr.mxu0 0.0
      %3578 = vmatpush1.msra.mxu0 0.0
      %3579 = vmatprep.subr.mxu0 0.0
      %3580 = vmatpush1.msra.mxu0 0.0
      %3581 = vmatprep.subr.mxu0 0.0
      %3582 = vmatpush1.msra.mxu0 0.0
      %3583 = vmatprep.subr.mxu0 0.0
      %3584 = vmatpush1.msra.mxu0 0.0
      %3585 = vmatprep.subr.mxu0 0.0
      %3586 = vmatpush1.msra.mxu0 0.0
      %3587 = vmatprep.subr.mxu0 0.0
      %3588 = vmatpush1.msra.mxu0 0.0
      %3589 = vmatprep.subr.mxu0 0.0
      %3590 = vmatpush1.msra.mxu0 0.0
      %3591 = vmatprep.subr.mxu0 0.0
      %3592 = vmatpush1.msra.mxu0 0.0
      %3593 = vmatprep.subr.mxu0 0.0
      %3594 = vmatpush1.msra.mxu0 0.0
      %3595 = vmatprep.subr.mxu0 0.0
      %3596 = vmatpush1.msra.mxu0 0.0
      %3597 = vmatprep.subr.mxu0 0.0
      %3598 = vmatpush1.msra.mxu0 0.0
      %3599 = vmatprep.subr.mxu0 0.0
      %3600 = vmatpush1.msra.mxu0 0.0
      %3601 = vmatprep.subr.mxu0 0.0
      %3602 = vmatpush1.msra.mxu0 0.0
      %3603 = vmatprep.subr.mxu0 0.0
      %3604 = vmatpush1.msra.mxu0 0.0
      %3605 = vmatprep.subr.mxu0 0.0
      %3606 = vmatpush1.msra.mxu0 0.0
      %3607 = vmatprep.subr.mxu0 0.0
      %3608 = vmatpush1.msra.mxu0 0.0
      %3609 = vmatprep.subr.mxu0 0.0
      %3610 = vmatpush1.msra.mxu0 0.0
      %3611 = vmatprep.subr.mxu0 0.0
      %3612 = vmatpush1.msra.mxu0 0.0
      %3613 = vmatprep.subr.mxu0 0.0
      %3614 = vmatpush1.msra.mxu0 0.0
      %3615 = vmatprep.subr.mxu0 0.0
      %3616 = vmatpush1.msra.mxu0 0.0
      %3617 = vmatprep.mubr.f32.mxu0 0.0
      %3618 = vmatmul.mubr.f32.gmra.mrb[0].mxu0 %v3455
      %v3619 = vpop.f32.mrb[0].mxu0
      %v3620 = vadd.f32 0.0, %v3619
      %v3621 = vpop.f32.mrb[0].mxu0
      %3622 = vmatprep.mubr.f32.mxu0 0.0
      %3623 = vmatmul.mubr.f32.gmra.mrb[0].mxu0 %v3458
      %v3624 = vpop.f32.mrb[0].mxu0
      %v3625 = vadd.f32 0.0, %v3624
      %v3626 = vpop.f32.mrb[0].mxu0
      %3627 = vmatprep.mubr.f32.mxu0 0.0
      %3628 = vmatmul.mubr.f32.gmra.mrb[0].mxu0 %v3461
      %v3629 = vpop.f32.mrb[0].mxu0
      %v3630 = vadd.f32 0.0, %v3629
      %v3631 = vpop.f32.mrb[0].mxu0
      %3632 = vmatprep.mubr.f32.mxu0 0.0
      %3633 = vmatmul.mubr.f32.gmra.mrb[0].mxu0 %v3464
      %v3634 = vpop.f32.mrb[0].mxu0
      %v3635 = vadd.f32 0.0, %v3634
      %v3636 = vpop.f32.mrb[0].mxu0
      %3637 = vmatprep.mubr.f32.mxu0 0.0
      %3638 = vmatmul.mubr.f32.gmra.mrb[0].mxu0 %v3467
      %v3639 = vpop.f32.mrb[0].mxu0
      %v3640 = vadd.f32 0.0, %v3639
      %v3641 = vpop.f32.mrb[0].mxu0
      %3642 = vmatprep.mubr.f32.mxu0 0.0
      %3643 = vmatmul.mubr.f32.gmra.mrb[0].mxu0 %v3470
      %v3644 = vpop.f32.mrb[0].mxu0
      %v3645 = vadd.f32 0.0, %v3644
      %v3646 = vpop.f32.mrb[0].mxu0
      %3647 = vmatprep.mubr.f32.mxu0 0.0
      %3648 = vmatmul.mubr.f32.gmra.mrb[0].mxu0 %v3473
      %v3649 = vpop.f32.mrb[0].mxu0
      %v3650 = vadd.f32 0.0, %v3649
      %v3651 = vpop.f32.mrb[0].mxu0
      %3652 = vmatprep.mubr.f32.mxu0 0.0
      %3653 = vmatmul.mubr.f32.gmra.mrb[0].mxu0 %v3476
      %v3654 = vpop.f32.mrb[0].mxu0
      %v3655 = vadd.f32 0.0, %v3654
      %v3656 = vpop.f32.mrb[0].mxu0
      %3657 = vmatprep.mubr.f32.mxu0 0.0
      %3658 = vmatmul.mubr.f32.gmra.mrb[0].mxu0 %v3479
      %v3659 = vpop.f32.mrb[0].mxu0
      %v3660 = vadd.f32 0.0, %v3659
      %v3661 = vpop.f32.mrb[0].mxu0
      %3662 = vmatprep.mubr.f32.mxu0 0.0
      %3663 = vmatmul.mubr.f32.gmra.mrb[0].mxu0 %v3482
      %v3664 = vpop.f32.mrb[0].mxu0
      %v3665 = vadd.f32 0.0, %v3664
      %v3666 = vpop.f32.mrb[0].mxu0
      %3667 = vmatprep.mubr.f32.mxu0 0.0
      %3668 = vmatmul.mubr.f32.gmra.mrb[0].mxu0 %v3485
      %v3669 = vpop.f32.mrb[0].mxu0
      %v3670 = vadd.f32 0.0, %v3669
      %v3671 = vpop.f32.mrb[0].mxu0
      %3672 = vmatprep.mubr.f32.mxu0 0.0
      %3673 = vmatmul.mubr.f32.gmra.mrb[0].mxu0 %v3488
      %v3674 = vpop.f32.mrb[0].mxu0
      %v3675 = vadd.f32 0.0, %v3674
      %v3676 = vpop.f32.mrb[0].mxu0
      %3677 = vmatprep.mubr.f32.mxu0 0.0
      %3678 = vmatmul.mubr.f32.gmra.mrb[0].mxu0 %v3491
      %v3679 = vpop.f32.mrb[0].mxu0
      %v3680 = vadd.f32 0.0, %v3679
      %v3681 = vpop.f32.mrb[0].mxu0
      %3682 = vmatprep.mubr.f32.mxu0 0.0
      %3683 = vmatmul.mubr.f32.gmra.mrb[0].mxu0 %v3494
      %v3684 = vpop.f32.mrb[0].mxu0
      %v3685 = vadd.f32 0.0, %v3684
      %v3686 = vpop.f32.mrb[0].mxu0
      %3687 = vmatprep.mubr.f32.mxu0 0.0
      %3688 = vmatmul.mubr.f32.gmra.mrb[0].mxu0 %v3497
      %v3689 = vpop.f32.mrb[0].mxu0
      %v3690 = vadd.f32 0.0, %v3689
      %v3691 = vpop.f32.mrb[0].mxu0
      %3692 = vmatprep.mubr.f32.mxu0 0.0
      %3693 = vmatmul.mubr.f32.gmra.mrb[0].mxu0 %v3500
      %v3694 = vpop.f32.mrb[0].mxu0
      %v3695 = vadd.f32 0.0, %v3694
      %v3696 = vpop.f32.mrb[0].mxu0
      %3697 = vmatprep.mubr.f32.mxu0 0.0
      %3698 = vmatmul.mubr.f32.gmra.mrb[0].mxu0 %v3503
      %v3699 = vpop.f32.mrb[0].mxu0
      %v3700 = vadd.f32 0.0, %v3699
      %v3701 = vpop.f32.mrb[0].mxu0
      %3702 = vmatprep.mubr.f32.mxu0 0.0
      %3703 = vmatmul.mubr.f32.gmra.mrb[0].mxu0 %v3506
      %v3704 = vpop.f32.mrb[0].mxu0
      %v3705 = vadd.f32 0.0, %v3704
      %v3706 = vpop.f32.mrb[0].mxu0
      %3707 = vmatprep.mubr.f32.mxu0 0.0
      %3708 = vmatmul.mubr.f32.gmra.mrb[0].mxu0 %v3509
      %v3709 = vpop.f32.mrb[0].mxu0
      %v3710 = vadd.f32 0.0, %v3709
      %v3711 = vpop.f32.mrb[0].mxu0
      %3712 = vmatprep.mubr.f32.mxu0 0.0
      %3713 = vmatmul.mubr.f32.gmra.mrb[0].mxu0 %v3512
      %v3714 = vpop.f32.mrb[0].mxu0
      %v3715 = vadd.f32 0.0, %v3714
      %v3716 = vpop.f32.mrb[0].mxu0
      %3717 = vmatprep.mubr.f32.mxu0 0.0
      %3718 = vmatmul.mubr.f32.gmra.mrb[0].mxu0 %v3515
      %v3719 = vpop.f32.mrb[0].mxu0
      %v3720 = vadd.f32 0.0, %v3719
      %v3721 = vpop.f32.mrb[0].mxu0
      %3722 = vmatprep.mubr.f32.mxu0 0.0
      %3723 = vmatmul.mubr.f32.gmra.mrb[0].mxu0 %v3518
      %v3724 = vpop.f32.mrb[0].mxu0
      %v3725 = vadd.f32 0.0, %v3724
      %v3726 = vpop.f32.mrb[0].mxu0
      %3727 = vmatprep.mubr.f32.mxu0 0.0
      %3728 = vmatmul.mubr.f32.gmra.mrb[0].mxu0 %v3521
      %v3729 = vpop.f32.mrb[0].mxu0
      %v3730 = vadd.f32 0.0, %v3729
      %v3731 = vpop.f32.mrb[0].mxu0
      %3732 = vmatprep.mubr.f32.mxu0 0.0
      %3733 = vmatmul.mubr.f32.gmra.mrb[0].mxu0 %v3524
      %v3734 = vpop.f32.mrb[0].mxu0
      %v3735 = vadd.f32 0.0, %v3734
      %v3736 = vpop.f32.mrb[0].mxu0
      %3737 = vmatprep.mubr.f32.mxu0 0.0
      %3738 = vmatmul.mubr.f32.gmra.mrb[0].mxu0 %v3527
      %v3739 = vpop.f32.mrb[0].mxu0
      %v3740 = vadd.f32 0.0, %v3739
      %v3741 = vpop.f32.mrb[0].mxu0
      %3742 = vmatprep.mubr.f32.mxu0 0.0
      %3743 = vmatmul.mubr.f32.gmra.mrb[0].mxu0 %v3530
      %v3744 = vpop.f32.mrb[0].mxu0
      %v3745 = vadd.f32 0.0, %v3744
      %v3746 = vpop.f32.mrb[0].mxu0
      %3747 = vmatprep.mubr.f32.mxu0 0.0
      %3748 = vmatmul.mubr.f32.gmra.mrb[0].mxu0 %v3533
      %v3749 = vpop.f32.mrb[0].mxu0
      %v3750 = vadd.f32 0.0, %v3749
      %v3751 = vpop.f32.mrb[0].mxu0
      %3752 = vmatprep.mubr.f32.mxu0 0.0
      %3753 = vmatmul.mubr.f32.gmra.mrb[0].mxu0 %v3536
      %v3754 = vpop.f32.mrb[0].mxu0
      %v3755 = vadd.f32 0.0, %v3754
      %v3756 = vpop.f32.mrb[0].mxu0
      %3757 = vmatprep.mubr.f32.mxu0 0.0
      %3758 = vmatmul.mubr.f32.gmra.mrb[0].mxu0 %v3539
      %v3759 = vpop.f32.mrb[0].mxu0
      %v3760 = vadd.f32 0.0, %v3759
      %v3761 = vpop.f32.mrb[0].mxu0
      %3762 = vmatprep.mubr.f32.mxu0 0.0
      %3763 = vmatmul.mubr.f32.gmra.mrb[0].mxu0 %v3542
      %v3764 = vpop.f32.mrb[0].mxu0
      %v3765 = vadd.f32 0.0, %v3764
      %v3766 = vpop.f32.mrb[0].mxu0
      %3767 = vmatprep.mubr.f32.mxu0 0.0
      %3768 = vmatmul.mubr.f32.gmra.mrb[0].mxu0 %v3545
      %v3769 = vpop.f32.mrb[0].mxu0
      %v3770 = vadd.f32 0.0, %v3769
      %v3771 = vpop.f32.mrb[0].mxu0
      %3772 = vmatprep.mubr.f32.mxu0 0.0
      %3773 = vmatmul.mubr.f32.gmra.mrb[0].mxu0 %v3548
      %v3774 = vpop.f32.mrb[0].mxu0
      %v3775 = vadd.f32 0.0, %v3774
      %v3776 = vpop.f32.mrb[0].mxu0
      %3777 = vdwg.mxu0
      %v3778 = vadd.f32 %v3388, %v3620
      %v3779 = vadd.f32 %v3389, %v3625
      %v3780 = vadd.f32 %v3390, %v3630
      %v3781 = vadd.f32 %v3391, %v3635
      %v3782 = vadd.f32 %v3392, %v3640
      %v3783 = vadd.f32 %v3393, %v3645
      %v3784 = vadd.f32 %v3394, %v3650
      %v3785 = vadd.f32 %v3395, %v3655
      %v3786 = vadd.f32 %v3396, %v3660
      %v3787 = vadd.f32 %v3397, %v3665
      %v3788 = vadd.f32 %v3398, %v3670
      %v3789 = vadd.f32 %v3399, %v3675
      %v3790 = vadd.f32 %v3400, %v3680
      %v3791 = vadd.f32 %v3401, %v3685
      %v3792 = vadd.f32 %v3402, %v3690
      %v3793 = vadd.f32 %v3403, %v3695
      %v3794 = vadd.f32 %v3404, %v3700
      %v3795 = vadd.f32 %v3405, %v3705
      %v3796 = vadd.f32 %v3406, %v3710
      %v3797 = vadd.f32 %v3407, %v3715
      %v3798 = vadd.f32 %v3408, %v3720
      %v3799 = vadd.f32 %v3409, %v3725
      %v3800 = vadd.f32 %v3410, %v3730
      %v3801 = vadd.f32 %v3411, %v3735
      %v3802 = vadd.f32 %v3412, %v3740
      %v3803 = vadd.f32 %v3413, %v3745
      %v3804 = vadd.f32 %v3414, %v3750
      %v3805 = vadd.f32 %v3415, %v3755
      %v3806 = vadd.f32 %v3416, %v3760
      %v3807 = vadd.f32 %v3417, %v3765
      %v3808 = vadd.f32 %v3418, %v3770
      %v3809 = vadd.f32 %v3419, %v3775
      %v3810 = vld [vmem:[%s2] sm:$0x1]
      %v3812 = vlaneseq
      %v3813 = vshrl.u32 %v3812, 7
      %v3814 = vsub.s32 0, %v3813
      %v3815 = vrot.slane %v3810, %v3814
      %v3817 = vadd.f32 %v3778, %v3815
      %v3818 = vadd.f32 %v3779, %v3815
      %v3819 = vadd.f32 %v3780, %v3815
      %v3820 = vadd.f32 %v3781, %v3815
      %v3821 = vadd.f32 %v3782, %v3815
      %v3822 = vadd.f32 %v3783, %v3815
      %v3823 = vadd.f32 %v3784, %v3815
      %v3824 = vadd.f32 %v3785, %v3815
      %v3825 = vadd.f32 %v3786, %v3815
      %v3826 = vadd.f32 %v3787, %v3815
      %v3827 = vadd.f32 %v3788, %v3815
      %v3828 = vadd.f32 %v3789, %v3815
      %v3829 = vadd.f32 %v3790, %v3815
      %v3830 = vadd.f32 %v3791, %v3815
      %v3831 = vadd.f32 %v3792, %v3815
      %v3832 = vadd.f32 %v3793, %v3815
      %v3833 = vadd.f32 %v3794, %v3815
      %v3834 = vadd.f32 %v3795, %v3815
      %v3835 = vadd.f32 %v3796, %v3815
      %v3836 = vadd.f32 %v3797, %v3815
      %v3837 = vadd.f32 %v3798, %v3815
      %v3838 = vadd.f32 %v3799, %v3815
      %v3839 = vadd.f32 %v3800, %v3815
      %v3840 = vadd.f32 %v3801, %v3815
      %v3841 = vadd.f32 %v3802, %v3815
      %v3842 = vadd.f32 %v3803, %v3815
      %v3843 = vadd.f32 %v3804, %v3815
      %v3844 = vadd.f32 %v3805, %v3815
      %v3845 = vadd.f32 %v3806, %v3815
      %v3846 = vadd.f32 %v3807, %v3815
      %v3847 = vadd.f32 %v3808, %v3815
      %v3848 = vadd.f32 %v3809, %v3815
      %v3849 = vmax.f32 %v3817, 0.0
      %v3850 = vmax.f32 %v3818, 0.0
      %v3851 = vmax.f32 %v3819, 0.0
      %v3852 = vmax.f32 %v3820, 0.0
      %v3853 = vmax.f32 %v3821, 0.0
      %v3854 = vmax.f32 %v3822, 0.0
      %v3855 = vmax.f32 %v3823, 0.0
      %v3856 = vmax.f32 %v3824, 0.0
      %v3857 = vmax.f32 %v3825, 0.0
      %v3858 = vmax.f32 %v3826, 0.0
      %v3859 = vmax.f32 %v3827, 0.0
      %v3860 = vmax.f32 %v3828, 0.0
      %v3861 = vmax.f32 %v3829, 0.0
      %v3862 = vmax.f32 %v3830, 0.0
      %v3863 = vmax.f32 %v3831, 0.0
      %v3864 = vmax.f32 %v3832, 0.0
      %v3865 = vmax.f32 %v3833, 0.0
      %v3866 = vmax.f32 %v3834, 0.0
      %v3867 = vmax.f32 %v3835, 0.0
      %v3868 = vmax.f32 %v3836, 0.0
      %v3869 = vmax.f32 %v3837, 0.0
      %v3870 = vmax.f32 %v3838, 0.0
      %v3871 = vmax.f32 %v3839, 0.0
      %v3872 = vmax.f32 %v3840, 0.0
      %v3873 = vmax.f32 %v3841, 0.0
      %v3874 = vmax.f32 %v3842, 0.0
      %v3875 = vmax.f32 %v3843, 0.0
      %v3876 = vmax.f32 %v3844, 0.0
      %v3877 = vmax.f32 %v3845, 0.0
      %v3878 = vmax.f32 %v3846, 0.0
      %v3879 = vmax.f32 %v3847, 0.0
      %v3880 = vmax.f32 %v3848, 0.0
      %vm3881 = vcmask 64512
      %3882 = vst.msk [vmem:[#allocation3] sm:$0xff] %vm3881, 0.0
      %3883 = vst.msk [vmem:[#allocation3 + $0x8] sm:$0xff] %vm3881, 0.0
      %3884 = vst.msk [vmem:[#allocation3 + $0x10] sm:$0xff] %vm3881, 0.0
      %3885 = vst.msk [vmem:[#allocation3 + $0x18] sm:$0xff] %vm3881, 0.0
      %3886 = vst.msk [vmem:[#allocation3 + $0x20] sm:$0xff] %vm3881, 0.0
      %3887 = vst.msk [vmem:[#allocation3 + $0x28] sm:$0xff] %vm3881, 0.0
      %3888 = vst.msk [vmem:[#allocation3 + $0x30] sm:$0xff] %vm3881, 0.0
      %3889 = vst.msk [vmem:[#allocation3 + $0x38] sm:$0xff] %vm3881, 0.0
      %3890 = vst.msk [vmem:[#allocation3 + $0x40] sm:$0xff] %vm3881, 0.0
      %3891 = vst.msk [vmem:[#allocation3 + $0x48] sm:$0xff] %vm3881, 0.0
      %3892 = vst.msk [vmem:[#allocation3 + $0x50] sm:$0xff] %vm3881, 0.0
      %3893 = vst.msk [vmem:[#allocation3 + $0x58] sm:$0xff] %vm3881, 0.0
      %3894 = vst.msk [vmem:[#allocation3 + $0x60] sm:$0xff] %vm3881, 0.0
      %3895 = vst.msk [vmem:[#allocation3 + $0x68] sm:$0xff] %vm3881, 0.0
      %3896 = vst.msk [vmem:[#allocation3 + $0x70] sm:$0xff] %vm3881, 0.0
      %3897 = vst.msk [vmem:[#allocation3 + $0x78] sm:$0xff] %vm3881, 0.0
      %3898 = vst.msk [vmem:[#allocation3 + $0x80] sm:$0xff] %vm3881, 0.0
      %3899 = vst.msk [vmem:[#allocation3 + $0x88] sm:$0xff] %vm3881, 0.0
      %3900 = vst.msk [vmem:[#allocation3 + $0x90] sm:$0xff] %vm3881, 0.0
      %3901 = vst.msk [vmem:[#allocation3 + $0x98] sm:$0xff] %vm3881, 0.0
      %3902 = vst.msk [vmem:[#allocation3 + $0xa0] sm:$0xff] %vm3881, 0.0
      %3903 = vst.msk [vmem:[#allocation3 + $0xa8] sm:$0xff] %vm3881, 0.0
      %3904 = vst.msk [vmem:[#allocation3 + $0xb0] sm:$0xff] %vm3881, 0.0
      %3905 = vst.msk [vmem:[#allocation3 + $0xb8] sm:$0xff] %vm3881, 0.0
      %3906 = vst.msk [vmem:[#allocation3 + $0xc0] sm:$0xff] %vm3881, 0.0
      %3907 = vst.msk [vmem:[#allocation3 + $0xc8] sm:$0xff] %vm3881, 0.0
      %3908 = vst.msk [vmem:[#allocation3 + $0xd0] sm:$0xff] %vm3881, 0.0
      %3909 = vst.msk [vmem:[#allocation3 + $0xd8] sm:$0xff] %vm3881, 0.0
      %3910 = vst.msk [vmem:[#allocation3 + $0xe0] sm:$0xff] %vm3881, 0.0
      %3911 = vst.msk [vmem:[#allocation3 + $0xe8] sm:$0xff] %vm3881, 0.0
      %3912 = vst.msk [vmem:[#allocation3 + $0xf0] sm:$0xff] %vm3881, 0.0
      %3913 = vst.msk [vmem:[#allocation3 + $0xf8] sm:$0xff] %vm3881, 0.0
      %3914 = vst.msk [vmem:[#allocation3 + $0x100] sm:$0xff] %vm3881, 0.0
      %3915 = vst.msk [vmem:[#allocation3 + $0x108] sm:$0xff] %vm3881, 0.0
      %3916 = vst.msk [vmem:[#allocation3 + $0x110] sm:$0xff] %vm3881, 0.0
      %3917 = vst.msk [vmem:[#allocation3 + $0x118] sm:$0xff] %vm3881, 0.0
      %3918 = vst.msk [vmem:[#allocation3 + $0x120] sm:$0xff] %vm3881, 0.0
      %3919 = vst.msk [vmem:[#allocation3 + $0x128] sm:$0xff] %vm3881, 0.0
      %3920 = vst.msk [vmem:[#allocation3 + $0x130] sm:$0xff] %vm3881, 0.0
      %3921 = vst.msk [vmem:[#allocation3 + $0x138] sm:$0xff] %vm3881, 0.0
      %3922 = vst.msk [vmem:[#allocation3 + $0x140] sm:$0xff] %vm3881, 0.0
      %3923 = vst.msk [vmem:[#allocation3 + $0x148] sm:$0xff] %vm3881, 0.0
      %3924 = vst.msk [vmem:[#allocation3 + $0x150] sm:$0xff] %vm3881, 0.0
      %3925 = vst.msk [vmem:[#allocation3 + $0x158] sm:$0xff] %vm3881, 0.0
      %3926 = vst.msk [vmem:[#allocation3 + $0x160] sm:$0xff] %vm3881, 0.0
      %3927 = vst.msk [vmem:[#allocation3 + $0x168] sm:$0xff] %vm3881, 0.0
      %3928 = vst.msk [vmem:[#allocation3 + $0x170] sm:$0xff] %vm3881, 0.0
      %3929 = vst.msk [vmem:[#allocation3 + $0x178] sm:$0xff] %vm3881, 0.0
      %3930 = vst.msk [vmem:[#allocation3 + $0x180] sm:$0xff] %vm3881, 0.0
      %3931 = vst.msk [vmem:[#allocation3 + $0x188] sm:$0xff] %vm3881, 0.0
      %3932 = vst.msk [vmem:[#allocation3 + $0x190] sm:$0xff] %vm3881, 0.0
      %3933 = vst.msk [vmem:[#allocation3 + $0x198] sm:$0xff] %vm3881, 0.0
      %3934 = vst.msk [vmem:[#allocation3 + $0x1a0] sm:$0xff] %vm3881, 0.0
      %3935 = vst.msk [vmem:[#allocation3 + $0x1a8] sm:$0xff] %vm3881, 0.0
      %3936 = vst.msk [vmem:[#allocation3 + $0x1b0] sm:$0xff] %vm3881, 0.0
      %3937 = vst.msk [vmem:[#allocation3 + $0x1b8] sm:$0xff] %vm3881, 0.0
      %3938 = vst.msk [vmem:[#allocation3 + $0x1c0] sm:$0xff] %vm3881, 0.0
      %3939 = vst.msk [vmem:[#allocation3 + $0x1c8] sm:$0xff] %vm3881, 0.0
      %3940 = vst.msk [vmem:[#allocation3 + $0x1d0] sm:$0xff] %vm3881, 0.0
      %3941 = vst.msk [vmem:[#allocation3 + $0x1d8] sm:$0xff] %vm3881, 0.0
      %3942 = vst.msk [vmem:[#allocation3 + $0x1e0] sm:$0xff] %vm3881, 0.0
      %3943 = vst.msk [vmem:[#allocation3 + $0x1e8] sm:$0xff] %vm3881, 0.0
      %3944 = vst.msk [vmem:[#allocation3 + $0x1f0] sm:$0xff] %vm3881, 0.0
      %3945 = vst.msk [vmem:[#allocation3 + $0x1f8] sm:$0xff] %vm3881, 0.0
      %3946 = vst.msk [vmem:[#allocation3 + $0x200] sm:$0xff] %vm3881, 0.0
      %3947 = vst.msk [vmem:[#allocation3 + $0x208] sm:$0xff] %vm3881, 0.0
      %3948 = vst.msk [vmem:[#allocation3 + $0x210] sm:$0xff] %vm3881, 0.0
      %3949 = vst.msk [vmem:[#allocation3 + $0x218] sm:$0xff] %vm3881, 0.0
      %3950 = vst.msk [vmem:[#allocation3 + $0x220] sm:$0xff] %vm3881, 0.0
      %3951 = vst.msk [vmem:[#allocation3 + $0x228] sm:$0xff] %vm3881, 0.0
      %3952 = vst.msk [vmem:[#allocation3 + $0x230] sm:$0xff] %vm3881, 0.0
      %3953 = vst.msk [vmem:[#allocation3 + $0x238] sm:$0xff] %vm3881, 0.0
      %s3954 = scalar_lea.vmem [#allocation3], 32
      %3955 = vst.msk [vmem:[%s3954 + $0x8] sm:$0xff] %vm3881, %v3849
      %3956 = vst.msk [vmem:[%s3954 + $0x10] sm:$0xff] %vm3881, %v3850
      %3957 = vst.msk [vmem:[%s3954 + $0x28] sm:$0xff] %vm3881, %v3851
      %3958 = vst.msk [vmem:[%s3954 + $0x30] sm:$0xff] %vm3881, %v3852
      %3959 = vst.msk [vmem:[%s3954 + $0x48] sm:$0xff] %vm3881, %v3853
      %3960 = vst.msk [vmem:[%s3954 + $0x50] sm:$0xff] %vm3881, %v3854
      %3961 = vst.msk [vmem:[%s3954 + $0x68] sm:$0xff] %vm3881, %v3855
      %3962 = vst.msk [vmem:[%s3954 + $0x70] sm:$0xff] %vm3881, %v3856
      %3963 = vst.msk [vmem:[%s3954 + $0x88] sm:$0xff] %vm3881, %v3857
      %3964 = vst.msk [vmem:[%s3954 + $0x90] sm:$0xff] %vm3881, %v3858
      %3965 = vst.msk [vmem:[%s3954 + $0xa8] sm:$0xff] %vm3881, %v3859
      %3966 = vst.msk [vmem:[%s3954 + $0xb0] sm:$0xff] %vm3881, %v3860
      %3967 = vst.msk [vmem:[%s3954 + $0xc8] sm:$0xff] %vm3881, %v3861
      %3968 = vst.msk [vmem:[%s3954 + $0xd0] sm:$0xff] %vm3881, %v3862
      %3969 = vst.msk [vmem:[%s3954 + $0xe8] sm:$0xff] %vm3881, %v3863
      %3970 = vst.msk [vmem:[%s3954 + $0xf0] sm:$0xff] %vm3881, %v3864
      %3971 = vst.msk [vmem:[%s3954 + $0x108] sm:$0xff] %vm3881, %v3865
      %3972 = vst.msk [vmem:[%s3954 + $0x110] sm:$0xff] %vm3881, %v3866
      %3973 = vst.msk [vmem:[%s3954 + $0x128] sm:$0xff] %vm3881, %v3867
      %3974 = vst.msk [vmem:[%s3954 + $0x130] sm:$0xff] %vm3881, %v3868
      %3975 = vst.msk [vmem:[%s3954 + $0x148] sm:$0xff] %vm3881, %v3869
      %3976 = vst.msk [vmem:[%s3954 + $0x150] sm:$0xff] %vm3881, %v3870
      %3977 = vst.msk [vmem:[%s3954 + $0x168] sm:$0xff] %vm3881, %v3871
      %3978 = vst.msk [vmem:[%s3954 + $0x170] sm:$0xff] %vm3881, %v3872
      %3979 = vst.msk [vmem:[%s3954 + $0x188] sm:$0xff] %vm3881, %v3873
      %3980 = vst.msk [vmem:[%s3954 + $0x190] sm:$0xff] %vm3881, %v3874
      %3981 = vst.msk [vmem:[%s3954 + $0x1a8] sm:$0xff] %vm3881, %v3875
      %3982 = vst.msk [vmem:[%s3954 + $0x1b0] sm:$0xff] %vm3881, %v3876
      %3983 = vst.msk [vmem:[%s3954 + $0x1c8] sm:$0xff] %vm3881, %v3877
      %3984 = vst.msk [vmem:[%s3954 + $0x1d0] sm:$0xff] %vm3881, %v3878
      %3985 = vst.msk [vmem:[%s3954 + $0x1e8] sm:$0xff] %vm3881, %v3879
      %3986 = vst.msk [vmem:[%s3954 + $0x1f0] sm:$0xff] %vm3881, %v3880
      %v3987 = vld [vmem:[#allocation3 + $0x7] sm:$0xff]
      %v3988 = vld [vmem:[#allocation3 + $0xf] sm:$0xff]
      %v3989 = vld [vmem:[#allocation3 + $0x27] sm:$0xff]
      %v3990 = vld [vmem:[#allocation3 + $0x2f] sm:$0xff]
      %v3991 = vld [vmem:[#allocation3 + $0x47] sm:$0xff]
      %v3992 = vld [vmem:[#allocation3 + $0x4f] sm:$0xff]
      %v3993 = vld [vmem:[#allocation3 + $0x67] sm:$0xff]
      %v3994 = vld [vmem:[#allocation3 + $0x6f] sm:$0xff]
      %v3995 = vld [vmem:[#allocation3 + $0x87] sm:$0xff]
      %v3996 = vld [vmem:[#allocation3 + $0x8f] sm:$0xff]
      %v3997 = vld [vmem:[#allocation3 + $0xa7] sm:$0xff]
      %v3998 = vld [vmem:[#allocation3 + $0xaf] sm:$0xff]
      %v3999 = vld [vmem:[#allocation3 + $0xc7] sm:$0xff]
      %v4000 = vld [vmem:[#allocation3 + $0xcf] sm:$0xff]
      %v4001 = vld [vmem:[#allocation3 + $0xe7] sm:$0xff]
      %v4002 = vld [vmem:[#allocation3 + $0xef] sm:$0xff]
      %v4003 = vld [vmem:[#allocation3 + $0x107] sm:$0xff]
      %v4004 = vld [vmem:[#allocation3 + $0x10f] sm:$0xff]
      %v4005 = vld [vmem:[#allocation3 + $0x127] sm:$0xff]
      %v4006 = vld [vmem:[#allocation3 + $0x12f] sm:$0xff]
      %v4007 = vld [vmem:[#allocation3 + $0x147] sm:$0xff]
      %v4008 = vld [vmem:[#allocation3 + $0x14f] sm:$0xff]
      %v4009 = vld [vmem:[#allocation3 + $0x167] sm:$0xff]
      %v4010 = vld [vmem:[#allocation3 + $0x16f] sm:$0xff]
      %v4011 = vld [vmem:[#allocation3 + $0x187] sm:$0xff]
      %v4012 = vld [vmem:[#allocation3 + $0x18f] sm:$0xff]
      %v4013 = vld [vmem:[#allocation3 + $0x1a7] sm:$0xff]
      %v4014 = vld [vmem:[#allocation3 + $0x1af] sm:$0xff]
      %v4015 = vld [vmem:[#allocation3 + $0x1c7] sm:$0xff]
      %v4016 = vld [vmem:[#allocation3 + $0x1cf] sm:$0xff]
      %v4017 = vld [vmem:[#allocation3 + $0x1e7] sm:$0xff]
      %v4018 = vld [vmem:[#allocation3 + $0x1ef] sm:$0xff]
      %v4019 = vld [vmem:[%s3] sm:$0xff]
      %v4020 = vld [vmem:[#allocation3 + $0x8] sm:$0xff]
      %v4021 = vld [vmem:[#allocation3 + $0x10] sm:$0xff]
      %v4022 = vld [vmem:[#allocation3 + $0x28] sm:$0xff]
      %v4023 = vld [vmem:[#allocation3 + $0x30] sm:$0xff]
      %v4024 = vld [vmem:[#allocation3 + $0x48] sm:$0xff]
      %v4025 = vld [vmem:[#allocation3 + $0x50] sm:$0xff]
      %v4026 = vld [vmem:[#allocation3 + $0x68] sm:$0xff]
      %v4027 = vld [vmem:[#allocation3 + $0x70] sm:$0xff]
      %v4028 = vld [vmem:[#allocation3 + $0x88] sm:$0xff]
      %v4029 = vld [vmem:[#allocation3 + $0x90] sm:$0xff]
      %v4030 = vld [vmem:[#allocation3 + $0xa8] sm:$0xff]
      %v4031 = vld [vmem:[#allocation3 + $0xb0] sm:$0xff]
      %v4032 = vld [vmem:[#allocation3 + $0xc8] sm:$0xff]
      %v4033 = vld [vmem:[#allocation3 + $0xd0] sm:$0xff]
      %v4034 = vld [vmem:[#allocation3 + $0xe8] sm:$0xff]
      %v4035 = vld [vmem:[#allocation3 + $0xf0] sm:$0xff]
      %v4036 = vld [vmem:[#allocation3 + $0x108] sm:$0xff]
      %v4037 = vld [vmem:[#allocation3 + $0x110] sm:$0xff]
      %v4038 = vld [vmem:[#allocation3 + $0x128] sm:$0xff]
      %v4039 = vld [vmem:[#allocation3 + $0x130] sm:$0xff]
      %v4040 = vld [vmem:[#allocation3 + $0x148] sm:$0xff]
      %v4041 = vld [vmem:[#allocation3 + $0x150] sm:$0xff]
      %v4042 = vld [vmem:[#allocation3 + $0x168] sm:$0xff]
      %v4043 = vld [vmem:[#allocation3 + $0x170] sm:$0xff]
      %v4044 = vld [vmem:[#allocation3 + $0x188] sm:$0xff]
      %v4045 = vld [vmem:[#allocation3 + $0x190] sm:$0xff]
      %v4046 = vld [vmem:[#allocation3 + $0x1a8] sm:$0xff]
      %v4047 = vld [vmem:[#allocation3 + $0x1b0] sm:$0xff]
      %v4048 = vld [vmem:[#allocation3 + $0x1c8] sm:$0xff]
      %v4049 = vld [vmem:[#allocation3 + $0x1d0] sm:$0xff]
      %v4050 = vld [vmem:[#allocation3 + $0x1e8] sm:$0xff]
      %v4051 = vld [vmem:[#allocation3 + $0x1f0] sm:$0xff]
      %s4052 = scalar_lea.vmem %s3, 8
      %v4053 = vld [vmem:[%s4052] sm:$0xff]
      %v4055 = vsel %vm3881, %v4020, 0
      %v4058 = vsel %vm3881, %v4021, 0
      %v4061 = vsel %vm3881, %v4022, 0
      %v4064 = vsel %vm3881, %v4023, 0
      %v4067 = vsel %vm3881, %v4024, 0
      %v4070 = vsel %vm3881, %v4025, 0
      %v4073 = vsel %vm3881, %v4026, 0
      %v4076 = vsel %vm3881, %v4027, 0
      %v4079 = vsel %vm3881, %v4028, 0
      %v4082 = vsel %vm3881, %v4029, 0
      %v4085 = vsel %vm3881, %v4030, 0
      %v4088 = vsel %vm3881, %v4031, 0
      %v4091 = vsel %vm3881, %v4032, 0
      %v4094 = vsel %vm3881, %v4033, 0
      %v4097 = vsel %vm3881, %v4034, 0
      %v4100 = vsel %vm3881, %v4035, 0
      %v4103 = vsel %vm3881, %v4036, 0
      %v4106 = vsel %vm3881, %v4037, 0
      %v4109 = vsel %vm3881, %v4038, 0
      %v4112 = vsel %vm3881, %v4039, 0
      %v4115 = vsel %vm3881, %v4040, 0
      %v4118 = vsel %vm3881, %v4041, 0
      %v4121 = vsel %vm3881, %v4042, 0
      %v4124 = vsel %vm3881, %v4043, 0
      %v4127 = vsel %vm3881, %v4044, 0
      %v4130 = vsel %vm3881, %v4045, 0
      %v4133 = vsel %vm3881, %v4046, 0
      %v4136 = vsel %vm3881, %v4047, 0
      %v4139 = vsel %vm3881, %v4048, 0
      %v4142 = vsel %vm3881, %v4049, 0
      %v4145 = vsel %vm3881, %v4050, 0
      %v4148 = vsel %vm3881, %v4051, 0
      %4150 = vmatprep.subr.mxu0 0.0
      %4151 = vmatpush1.msra.mxu0 %v4053
      %4152 = vmatprep.subr.mxu0 0.0
      %4153 = vmatpush1.msra.mxu0 0.0
      %4154 = vmatprep.subr.mxu0 0.0
      %4155 = vmatpush1.msra.mxu0 0.0
      %4156 = vmatprep.subr.mxu0 0.0
      %4157 = vmatpush1.msra.mxu0 0.0
      %4158 = vmatprep.subr.mxu0 0.0
      %4159 = vmatpush1.msra.mxu0 0.0
      %4160 = vmatprep.subr.mxu0 0.0
      %4161 = vmatpush1.msra.mxu0 0.0
      %4162 = vmatprep.subr.mxu0 0.0
      %4163 = vmatpush1.msra.mxu0 0.0
      %4164 = vmatprep.subr.mxu0 0.0
      %4165 = vmatpush1.msra.mxu0 0.0
      %4166 = vmatprep.subr.mxu0 0.0
      %4167 = vmatpush1.msra.mxu0 0.0
      %4168 = vmatprep.subr.mxu0 0.0
      %4169 = vmatpush1.msra.mxu0 0.0
      %4170 = vmatprep.subr.mxu0 0.0
      %4171 = vmatpush1.msra.mxu0 0.0
      %4172 = vmatprep.subr.mxu0 0.0
      %4173 = vmatpush1.msra.mxu0 0.0
      %4174 = vmatprep.subr.mxu0 0.0
      %4175 = vmatpush1.msra.mxu0 0.0
      %4176 = vmatprep.subr.mxu0 0.0
      %4177 = vmatpush1.msra.mxu0 0.0
      %4178 = vmatprep.subr.mxu0 0.0
      %4179 = vmatpush1.msra.mxu0 0.0
      %4180 = vmatprep.subr.mxu0 0.0
      %4181 = vmatpush1.msra.mxu0 0.0
      %4182 = vmatprep.subr.mxu0 0.0
      %4183 = vmatpush1.msra.mxu0 0.0
      %4184 = vmatprep.subr.mxu0 0.0
      %4185 = vmatpush1.msra.mxu0 0.0
      %4186 = vmatprep.subr.mxu0 0.0
      %4187 = vmatpush1.msra.mxu0 0.0
      %4188 = vmatprep.subr.mxu0 0.0
      %4189 = vmatpush1.msra.mxu0 0.0
      %4190 = vmatprep.subr.mxu0 0.0
      %4191 = vmatpush1.msra.mxu0 0.0
      %4192 = vmatprep.subr.mxu0 0.0
      %4193 = vmatpush1.msra.mxu0 0.0
      %4194 = vmatprep.subr.mxu0 0.0
      %4195 = vmatpush1.msra.mxu0 0.0
      %4196 = vmatprep.subr.mxu0 0.0
      %4197 = vmatpush1.msra.mxu0 0.0
      %4198 = vmatprep.subr.mxu0 0.0
      %4199 = vmatpush1.msra.mxu0 0.0
      %4200 = vmatprep.subr.mxu0 0.0
      %4201 = vmatpush1.msra.mxu0 0.0
      %4202 = vmatprep.subr.mxu0 0.0
      %4203 = vmatpush1.msra.mxu0 0.0
      %4204 = vmatprep.subr.mxu0 0.0
      %4205 = vmatpush1.msra.mxu0 0.0
      %4206 = vmatprep.subr.mxu0 0.0
      %4207 = vmatpush1.msra.mxu0 0.0
      %4208 = vmatprep.subr.mxu0 0.0
      %4209 = vmatpush1.msra.mxu0 0.0
      %4210 = vmatprep.subr.mxu0 0.0
      %4211 = vmatpush1.msra.mxu0 0.0
      %4212 = vmatprep.subr.mxu0 0.0
      %4213 = vmatpush1.msra.mxu0 0.0
      %4214 = vmatprep.mubr.f32.mxu0 0.0
      %4215 = vmatmul.mubr.f32.gmra.mrb[0].mxu0 %v4055
      %v4216 = vpop.f32.mrb[0].mxu0
      %v4217 = vadd.f32 0.0, %v4216
      %v4218 = vpop.f32.mrb[0].mxu0
      %4219 = vmatprep.mubr.f32.mxu0 0.0
      %4220 = vmatmul.mubr.f32.gmra.mrb[0].mxu0 %v4058
      %v4221 = vpop.f32.mrb[0].mxu0
      %v4222 = vadd.f32 0.0, %v4221
      %v4223 = vpop.f32.mrb[0].mxu0
      %4224 = vmatprep.mubr.f32.mxu0 0.0
      %4225 = vmatmul.mubr.f32.gmra.mrb[0].mxu0 %v4061
      %v4226 = vpop.f32.mrb[0].mxu0
      %v4227 = vadd.f32 0.0, %v4226
      %v4228 = vpop.f32.mrb[0].mxu0
      %4229 = vmatprep.mubr.f32.mxu0 0.0
      %4230 = vmatmul.mubr.f32.gmra.mrb[0].mxu0 %v4064
      %v4231 = vpop.f32.mrb[0].mxu0
      %v4232 = vadd.f32 0.0, %v4231
      %v4233 = vpop.f32.mrb[0].mxu0
      %4234 = vmatprep.mubr.f32.mxu0 0.0
      %4235 = vmatmul.mubr.f32.gmra.mrb[0].mxu0 %v4067
      %v4236 = vpop.f32.mrb[0].mxu0
      %v4237 = vadd.f32 0.0, %v4236
      %v4238 = vpop.f32.mrb[0].mxu0
      %4239 = vmatprep.mubr.f32.mxu0 0.0
      %4240 = vmatmul.mubr.f32.gmra.mrb[0].mxu0 %v4070
      %v4241 = vpop.f32.mrb[0].mxu0
      %v4242 = vadd.f32 0.0, %v4241
      %v4243 = vpop.f32.mrb[0].mxu0
      %4244 = vmatprep.mubr.f32.mxu0 0.0
      %4245 = vmatmul.mubr.f32.gmra.mrb[0].mxu0 %v4073
      %v4246 = vpop.f32.mrb[0].mxu0
      %v4247 = vadd.f32 0.0, %v4246
      %v4248 = vpop.f32.mrb[0].mxu0
      %4249 = vmatprep.mubr.f32.mxu0 0.0
      %4250 = vmatmul.mubr.f32.gmra.mrb[0].mxu0 %v4076
      %v4251 = vpop.f32.mrb[0].mxu0
      %v4252 = vadd.f32 0.0, %v4251
      %v4253 = vpop.f32.mrb[0].mxu0
      %4254 = vmatprep.mubr.f32.mxu0 0.0
      %4255 = vmatmul.mubr.f32.gmra.mrb[0].mxu0 %v4079
      %v4256 = vpop.f32.mrb[0].mxu0
      %v4257 = vadd.f32 0.0, %v4256
      %v4258 = vpop.f32.mrb[0].mxu0
      %4259 = vmatprep.mubr.f32.mxu0 0.0
      %4260 = vmatmul.mubr.f32.gmra.mrb[0].mxu0 %v4082
      %v4261 = vpop.f32.mrb[0].mxu0
      %v4262 = vadd.f32 0.0, %v4261
      %v4263 = vpop.f32.mrb[0].mxu0
      %4264 = vmatprep.mubr.f32.mxu0 0.0
      %4265 = vmatmul.mubr.f32.gmra.mrb[0].mxu0 %v4085
      %v4266 = vpop.f32.mrb[0].mxu0
      %v4267 = vadd.f32 0.0, %v4266
      %v4268 = vpop.f32.mrb[0].mxu0
      %4269 = vmatprep.mubr.f32.mxu0 0.0
      %4270 = vmatmul.mubr.f32.gmra.mrb[0].mxu0 %v4088
      %v4271 = vpop.f32.mrb[0].mxu0
      %v4272 = vadd.f32 0.0, %v4271
      %v4273 = vpop.f32.mrb[0].mxu0
      %4274 = vmatprep.mubr.f32.mxu0 0.0
      %4275 = vmatmul.mubr.f32.gmra.mrb[0].mxu0 %v4091
      %v4276 = vpop.f32.mrb[0].mxu0
      %v4277 = vadd.f32 0.0, %v4276
      %v4278 = vpop.f32.mrb[0].mxu0
      %4279 = vmatprep.mubr.f32.mxu0 0.0
      %4280 = vmatmul.mubr.f32.gmra.mrb[0].mxu0 %v4094
      %v4281 = vpop.f32.mrb[0].mxu0
      %v4282 = vadd.f32 0.0, %v4281
      %v4283 = vpop.f32.mrb[0].mxu0
      %4284 = vmatprep.mubr.f32.mxu0 0.0
      %4285 = vmatmul.mubr.f32.gmra.mrb[0].mxu0 %v4097
      %v4286 = vpop.f32.mrb[0].mxu0
      %v4287 = vadd.f32 0.0, %v4286
      %v4288 = vpop.f32.mrb[0].mxu0
      %4289 = vmatprep.mubr.f32.mxu0 0.0
      %4290 = vmatmul.mubr.f32.gmra.mrb[0].mxu0 %v4100
      %v4291 = vpop.f32.mrb[0].mxu0
      %v4292 = vadd.f32 0.0, %v4291
      %v4293 = vpop.f32.mrb[0].mxu0
      %4294 = vmatprep.mubr.f32.mxu0 0.0
      %4295 = vmatmul.mubr.f32.gmra.mrb[0].mxu0 %v4103
      %v4296 = vpop.f32.mrb[0].mxu0
      %v4297 = vadd.f32 0.0, %v4296
      %v4298 = vpop.f32.mrb[0].mxu0
      %4299 = vmatprep.mubr.f32.mxu0 0.0
      %4300 = vmatmul.mubr.f32.gmra.mrb[0].mxu0 %v4106
      %v4301 = vpop.f32.mrb[0].mxu0
      %v4302 = vadd.f32 0.0, %v4301
      %v4303 = vpop.f32.mrb[0].mxu0
      %4304 = vmatprep.mubr.f32.mxu0 0.0
      %4305 = vmatmul.mubr.f32.gmra.mrb[0].mxu0 %v4109
      %v4306 = vpop.f32.mrb[0].mxu0
      %v4307 = vadd.f32 0.0, %v4306
      %v4308 = vpop.f32.mrb[0].mxu0
      %4309 = vmatprep.mubr.f32.mxu0 0.0
      %4310 = vmatmul.mubr.f32.gmra.mrb[0].mxu0 %v4112
      %v4311 = vpop.f32.mrb[0].mxu0
      %v4312 = vadd.f32 0.0, %v4311
      %v4313 = vpop.f32.mrb[0].mxu0
      %4314 = vmatprep.mubr.f32.mxu0 0.0
      %4315 = vmatmul.mubr.f32.gmra.mrb[0].mxu0 %v4115
      %v4316 = vpop.f32.mrb[0].mxu0
      %v4317 = vadd.f32 0.0, %v4316
      %v4318 = vpop.f32.mrb[0].mxu0
      %4319 = vmatprep.mubr.f32.mxu0 0.0
      %4320 = vmatmul.mubr.f32.gmra.mrb[0].mxu0 %v4118
      %v4321 = vpop.f32.mrb[0].mxu0
      %v4322 = vadd.f32 0.0, %v4321
      %v4323 = vpop.f32.mrb[0].mxu0
      %4324 = vmatprep.mubr.f32.mxu0 0.0
      %4325 = vmatmul.mubr.f32.gmra.mrb[0].mxu0 %v4121
      %v4326 = vpop.f32.mrb[0].mxu0
      %v4327 = vadd.f32 0.0, %v4326
      %v4328 = vpop.f32.mrb[0].mxu0
      %4329 = vmatprep.mubr.f32.mxu0 0.0
      %4330 = vmatmul.mubr.f32.gmra.mrb[0].mxu0 %v4124
      %v4331 = vpop.f32.mrb[0].mxu0
      %v4332 = vadd.f32 0.0, %v4331
      %v4333 = vpop.f32.mrb[0].mxu0
      %4334 = vmatprep.mubr.f32.mxu0 0.0
      %4335 = vmatmul.mubr.f32.gmra.mrb[0].mxu0 %v4127
      %v4336 = vpop.f32.mrb[0].mxu0
      %v4337 = vadd.f32 0.0, %v4336
      %v4338 = vpop.f32.mrb[0].mxu0
      %4339 = vmatprep.mubr.f32.mxu0 0.0
      %4340 = vmatmul.mubr.f32.gmra.mrb[0].mxu0 %v4130
      %v4341 = vpop.f32.mrb[0].mxu0
      %v4342 = vadd.f32 0.0, %v4341
      %v4343 = vpop.f32.mrb[0].mxu0
      %4344 = vmatprep.mubr.f32.mxu0 0.0
      %4345 = vmatmul.mubr.f32.gmra.mrb[0].mxu0 %v4133
      %v4346 = vpop.f32.mrb[0].mxu0
      %v4347 = vadd.f32 0.0, %v4346
      %v4348 = vpop.f32.mrb[0].mxu0
      %4349 = vmatprep.mubr.f32.mxu0 0.0
      %4350 = vmatmul.mubr.f32.gmra.mrb[0].mxu0 %v4136
      %v4351 = vpop.f32.mrb[0].mxu0
      %v4352 = vadd.f32 0.0, %v4351
      %v4353 = vpop.f32.mrb[0].mxu0
      %4354 = vmatprep.mubr.f32.mxu0 0.0
      %4355 = vmatmul.mubr.f32.gmra.mrb[0].mxu0 %v4139
      %v4356 = vpop.f32.mrb[0].mxu0
      %v4357 = vadd.f32 0.0, %v4356
      %v4358 = vpop.f32.mrb[0].mxu0
      %4359 = vmatprep.mubr.f32.mxu0 0.0
      %4360 = vmatmul.mubr.f32.gmra.mrb[0].mxu0 %v4142
      %v4361 = vpop.f32.mrb[0].mxu0
      %v4362 = vadd.f32 0.0, %v4361
      %v4363 = vpop.f32.mrb[0].mxu0
      %4364 = vmatprep.mubr.f32.mxu0 0.0
      %4365 = vmatmul.mubr.f32.gmra.mrb[0].mxu0 %v4145
      %v4366 = vpop.f32.mrb[0].mxu0
      %v4367 = vadd.f32 0.0, %v4366
      %v4368 = vpop.f32.mrb[0].mxu0
      %4369 = vmatprep.mubr.f32.mxu0 0.0
      %4370 = vmatmul.mubr.f32.gmra.mrb[0].mxu0 %v4148
      %v4371 = vpop.f32.mrb[0].mxu0
      %v4372 = vadd.f32 0.0, %v4371
      %v4373 = vpop.f32.mrb[0].mxu0
      %4374 = vdwg.mxu0
      %v4376 = vsel %vm3881, %v3987, 0
      %v4379 = vsel %vm3881, %v3988, 0
      %v4382 = vsel %vm3881, %v3989, 0
      %v4385 = vsel %vm3881, %v3990, 0
      %v4388 = vsel %vm3881, %v3991, 0
      %v4391 = vsel %vm3881, %v3992, 0
      %v4394 = vsel %vm3881, %v3993, 0
      %v4397 = vsel %vm3881, %v3994, 0
      %v4400 = vsel %vm3881, %v3995, 0
      %v4403 = vsel %vm3881, %v3996, 0
      %v4406 = vsel %vm3881, %v3997, 0
      %v4409 = vsel %vm3881, %v3998, 0
      %v4412 = vsel %vm3881, %v3999, 0
      %v4415 = vsel %vm3881, %v4000, 0
      %v4418 = vsel %vm3881, %v4001, 0
      %v4421 = vsel %vm3881, %v4002, 0
      %v4424 = vsel %vm3881, %v4003, 0
      %v4427 = vsel %vm3881, %v4004, 0
      %v4430 = vsel %vm3881, %v4005, 0
      %v4433 = vsel %vm3881, %v4006, 0
      %v4436 = vsel %vm3881, %v4007, 0
      %v4439 = vsel %vm3881, %v4008, 0
      %v4442 = vsel %vm3881, %v4009, 0
      %v4445 = vsel %vm3881, %v4010, 0
      %v4448 = vsel %vm3881, %v4011, 0
      %v4451 = vsel %vm3881, %v4012, 0
      %v4454 = vsel %vm3881, %v4013, 0
      %v4457 = vsel %vm3881, %v4014, 0
      %v4460 = vsel %vm3881, %v4015, 0
      %v4463 = vsel %vm3881, %v4016, 0
      %v4466 = vsel %vm3881, %v4017, 0
      %v4469 = vsel %vm3881, %v4018, 0
      %4471 = vmatprep.subr.mxu0 0.0
      %4472 = vmatpush1.msra.mxu0 %v4019
      %4473 = vmatprep.subr.mxu0 0.0
      %4474 = vmatpush1.msra.mxu0 0.0
      %4475 = vmatprep.subr.mxu0 0.0
      %4476 = vmatpush1.msra.mxu0 0.0
      %4477 = vmatprep.subr.mxu0 0.0
      %4478 = vmatpush1.msra.mxu0 0.0
      %4479 = vmatprep.subr.mxu0 0.0
      %4480 = vmatpush1.msra.mxu0 0.0
      %4481 = vmatprep.subr.mxu0 0.0
      %4482 = vmatpush1.msra.mxu0 0.0
      %4483 = vmatprep.subr.mxu0 0.0
      %4484 = vmatpush1.msra.mxu0 0.0
      %4485 = vmatprep.subr.mxu0 0.0
      %4486 = vmatpush1.msra.mxu0 0.0
      %4487 = vmatprep.subr.mxu0 0.0
      %4488 = vmatpush1.msra.mxu0 0.0
      %4489 = vmatprep.subr.mxu0 0.0
      %4490 = vmatpush1.msra.mxu0 0.0
      %4491 = vmatprep.subr.mxu0 0.0
      %4492 = vmatpush1.msra.mxu0 0.0
      %4493 = vmatprep.subr.mxu0 0.0
      %4494 = vmatpush1.msra.mxu0 0.0
      %4495 = vmatprep.subr.mxu0 0.0
      %4496 = vmatpush1.msra.mxu0 0.0
      %4497 = vmatprep.subr.mxu0 0.0
      %4498 = vmatpush1.msra.mxu0 0.0
      %4499 = vmatprep.subr.mxu0 0.0
      %4500 = vmatpush1.msra.mxu0 0.0
      %4501 = vmatprep.subr.mxu0 0.0
      %4502 = vmatpush1.msra.mxu0 0.0
      %4503 = vmatprep.subr.mxu0 0.0
      %4504 = vmatpush1.msra.mxu0 0.0
      %4505 = vmatprep.subr.mxu0 0.0
      %4506 = vmatpush1.msra.mxu0 0.0
      %4507 = vmatprep.subr.mxu0 0.0
      %4508 = vmatpush1.msra.mxu0 0.0
      %4509 = vmatprep.subr.mxu0 0.0
      %4510 = vmatpush1.msra.mxu0 0.0
      %4511 = vmatprep.subr.mxu0 0.0
      %4512 = vmatpush1.msra.mxu0 0.0
      %4513 = vmatprep.subr.mxu0 0.0
      %4514 = vmatpush1.msra.mxu0 0.0
      %4515 = vmatprep.subr.mxu0 0.0
      %4516 = vmatpush1.msra.mxu0 0.0
      %4517 = vmatprep.subr.mxu0 0.0
      %4518 = vmatpush1.msra.mxu0 0.0
      %4519 = vmatprep.subr.mxu0 0.0
      %4520 = vmatpush1.msra.mxu0 0.0
      %4521 = vmatprep.subr.mxu0 0.0
      %4522 = vmatpush1.msra.mxu0 0.0
      %4523 = vmatprep.subr.mxu0 0.0
      %4524 = vmatpush1.msra.mxu0 0.0
      %4525 = vmatprep.subr.mxu0 0.0
      %4526 = vmatpush1.msra.mxu0 0.0
      %4527 = vmatprep.subr.mxu0 0.0
      %4528 = vmatpush1.msra.mxu0 0.0
      %4529 = vmatprep.subr.mxu0 0.0
      %4530 = vmatpush1.msra.mxu0 0.0
      %4531 = vmatprep.subr.mxu0 0.0
      %4532 = vmatpush1.msra.mxu0 0.0
      %4533 = vmatprep.subr.mxu0 0.0
      %4534 = vmatpush1.msra.mxu0 0.0
      %4535 = vmatprep.mubr.f32.mxu0 0.0
      %4536 = vmatmul.mubr.f32.gmra.mrb[0].mxu0 %v4376
      %v4537 = vpop.f32.mrb[0].mxu0
      %v4538 = vadd.f32 %v4217, %v4537
      %v4539 = vpop.f32.mrb[0].mxu0
      %4540 = vmatprep.mubr.f32.mxu0 0.0
      %4541 = vmatmul.mubr.f32.gmra.mrb[0].mxu0 %v4379
      %v4542 = vpop.f32.mrb[0].mxu0
      %v4543 = vadd.f32 %v4222, %v4542
      %v4544 = vpop.f32.mrb[0].mxu0
      %4545 = vmatprep.mubr.f32.mxu0 0.0
      %4546 = vmatmul.mubr.f32.gmra.mrb[0].mxu0 %v4382
      %v4547 = vpop.f32.mrb[0].mxu0
      %v4548 = vadd.f32 %v4227, %v4547
      %v4549 = vpop.f32.mrb[0].mxu0
      %4550 = vmatprep.mubr.f32.mxu0 0.0
      %4551 = vmatmul.mubr.f32.gmra.mrb[0].mxu0 %v4385
      %v4552 = vpop.f32.mrb[0].mxu0
      %v4553 = vadd.f32 %v4232, %v4552
      %v4554 = vpop.f32.mrb[0].mxu0
      %4555 = vmatprep.mubr.f32.mxu0 0.0
      %4556 = vmatmul.mubr.f32.gmra.mrb[0].mxu0 %v4388
      %v4557 = vpop.f32.mrb[0].mxu0
      %v4558 = vadd.f32 %v4237, %v4557
      %v4559 = vpop.f32.mrb[0].mxu0
      %4560 = vmatprep.mubr.f32.mxu0 0.0
      %4561 = vmatmul.mubr.f32.gmra.mrb[0].mxu0 %v4391
      %v4562 = vpop.f32.mrb[0].mxu0
      %v4563 = vadd.f32 %v4242, %v4562
      %v4564 = vpop.f32.mrb[0].mxu0
      %4565 = vmatprep.mubr.f32.mxu0 0.0
      %4566 = vmatmul.mubr.f32.gmra.mrb[0].mxu0 %v4394
      %v4567 = vpop.f32.mrb[0].mxu0
      %v4568 = vadd.f32 %v4247, %v4567
      %v4569 = vpop.f32.mrb[0].mxu0
      %4570 = vmatprep.mubr.f32.mxu0 0.0
      %4571 = vmatmul.mubr.f32.gmra.mrb[0].mxu0 %v4397
      %v4572 = vpop.f32.mrb[0].mxu0
      %v4573 = vadd.f32 %v4252, %v4572
      %v4574 = vpop.f32.mrb[0].mxu0
      %4575 = vmatprep.mubr.f32.mxu0 0.0
      %4576 = vmatmul.mubr.f32.gmra.mrb[0].mxu0 %v4400
      %v4577 = vpop.f32.mrb[0].mxu0
      %v4578 = vadd.f32 %v4257, %v4577
      %v4579 = vpop.f32.mrb[0].mxu0
      %4580 = vmatprep.mubr.f32.mxu0 0.0
      %4581 = vmatmul.mubr.f32.gmra.mrb[0].mxu0 %v4403
      %v4582 = vpop.f32.mrb[0].mxu0
      %v4583 = vadd.f32 %v4262, %v4582
      %v4584 = vpop.f32.mrb[0].mxu0
      %4585 = vmatprep.mubr.f32.mxu0 0.0
      %4586 = vmatmul.mubr.f32.gmra.mrb[0].mxu0 %v4406
      %v4587 = vpop.f32.mrb[0].mxu0
      %v4588 = vadd.f32 %v4267, %v4587
      %v4589 = vpop.f32.mrb[0].mxu0
      %4590 = vmatprep.mubr.f32.mxu0 0.0
      %4591 = vmatmul.mubr.f32.gmra.mrb[0].mxu0 %v4409
      %v4592 = vpop.f32.mrb[0].mxu0
      %v4593 = vadd.f32 %v4272, %v4592
      %v4594 = vpop.f32.mrb[0].mxu0
      %4595 = vmatprep.mubr.f32.mxu0 0.0
      %4596 = vmatmul.mubr.f32.gmra.mrb[0].mxu0 %v4412
      %v4597 = vpop.f32.mrb[0].mxu0
      %v4598 = vadd.f32 %v4277, %v4597
      %v4599 = vpop.f32.mrb[0].mxu0
      %4600 = vmatprep.mubr.f32.mxu0 0.0
      %4601 = vmatmul.mubr.f32.gmra.mrb[0].mxu0 %v4415
      %v4602 = vpop.f32.mrb[0].mxu0
      %v4603 = vadd.f32 %v4282, %v4602
      %v4604 = vpop.f32.mrb[0].mxu0
      %4605 = vmatprep.mubr.f32.mxu0 0.0
      %4606 = vmatmul.mubr.f32.gmra.mrb[0].mxu0 %v4418
      %v4607 = vpop.f32.mrb[0].mxu0
      %v4608 = vadd.f32 %v4287, %v4607
      %v4609 = vpop.f32.mrb[0].mxu0
      %4610 = vmatprep.mubr.f32.mxu0 0.0
      %4611 = vmatmul.mubr.f32.gmra.mrb[0].mxu0 %v4421
      %v4612 = vpop.f32.mrb[0].mxu0
      %v4613 = vadd.f32 %v4292, %v4612
      %v4614 = vpop.f32.mrb[0].mxu0
      %4615 = vmatprep.mubr.f32.mxu0 0.0
      %4616 = vmatmul.mubr.f32.gmra.mrb[0].mxu0 %v4424
      %v4617 = vpop.f32.mrb[0].mxu0
      %v4618 = vadd.f32 %v4297, %v4617
      %v4619 = vpop.f32.mrb[0].mxu0
      %4620 = vmatprep.mubr.f32.mxu0 0.0
      %4621 = vmatmul.mubr.f32.gmra.mrb[0].mxu0 %v4427
      %v4622 = vpop.f32.mrb[0].mxu0
      %v4623 = vadd.f32 %v4302, %v4622
      %v4624 = vpop.f32.mrb[0].mxu0
      %4625 = vmatprep.mubr.f32.mxu0 0.0
      %4626 = vmatmul.mubr.f32.gmra.mrb[0].mxu0 %v4430
      %v4627 = vpop.f32.mrb[0].mxu0
      %v4628 = vadd.f32 %v4307, %v4627
      %v4629 = vpop.f32.mrb[0].mxu0
      %4630 = vmatprep.mubr.f32.mxu0 0.0
      %4631 = vmatmul.mubr.f32.gmra.mrb[0].mxu0 %v4433
      %v4632 = vpop.f32.mrb[0].mxu0
      %v4633 = vadd.f32 %v4312, %v4632
      %v4634 = vpop.f32.mrb[0].mxu0
      %4635 = vmatprep.mubr.f32.mxu0 0.0
      %4636 = vmatmul.mubr.f32.gmra.mrb[0].mxu0 %v4436
      %v4637 = vpop.f32.mrb[0].mxu0
      %v4638 = vadd.f32 %v4317, %v4637
      %v4639 = vpop.f32.mrb[0].mxu0
      %4640 = vmatprep.mubr.f32.mxu0 0.0
      %4641 = vmatmul.mubr.f32.gmra.mrb[0].mxu0 %v4439
      %v4642 = vpop.f32.mrb[0].mxu0
      %v4643 = vadd.f32 %v4322, %v4642
      %v4644 = vpop.f32.mrb[0].mxu0
      %4645 = vmatprep.mubr.f32.mxu0 0.0
      %4646 = vmatmul.mubr.f32.gmra.mrb[0].mxu0 %v4442
      %v4647 = vpop.f32.mrb[0].mxu0
      %v4648 = vadd.f32 %v4327, %v4647
      %v4649 = vpop.f32.mrb[0].mxu0
      %4650 = vmatprep.mubr.f32.mxu0 0.0
      %4651 = vmatmul.mubr.f32.gmra.mrb[0].mxu0 %v4445
      %v4652 = vpop.f32.mrb[0].mxu0
      %v4653 = vadd.f32 %v4332, %v4652
      %v4654 = vpop.f32.mrb[0].mxu0
      %4655 = vmatprep.mubr.f32.mxu0 0.0
      %4656 = vmatmul.mubr.f32.gmra.mrb[0].mxu0 %v4448
      %v4657 = vpop.f32.mrb[0].mxu0
      %v4658 = vadd.f32 %v4337, %v4657
      %v4659 = vpop.f32.mrb[0].mxu0
      %4660 = vmatprep.mubr.f32.mxu0 0.0
      %4661 = vmatmul.mubr.f32.gmra.mrb[0].mxu0 %v4451
      %v4662 = vpop.f32.mrb[0].mxu0
      %v4663 = vadd.f32 %v4342, %v4662
      %v4664 = vpop.f32.mrb[0].mxu0
      %4665 = vmatprep.mubr.f32.mxu0 0.0
      %4666 = vmatmul.mubr.f32.gmra.mrb[0].mxu0 %v4454
      %v4667 = vpop.f32.mrb[0].mxu0
      %v4668 = vadd.f32 %v4347, %v4667
      %v4669 = vpop.f32.mrb[0].mxu0
      %4670 = vmatprep.mubr.f32.mxu0 0.0
      %4671 = vmatmul.mubr.f32.gmra.mrb[0].mxu0 %v4457
      %v4672 = vpop.f32.mrb[0].mxu0
      %v4673 = vadd.f32 %v4352, %v4672
      %v4674 = vpop.f32.mrb[0].mxu0
      %4675 = vmatprep.mubr.f32.mxu0 0.0
      %4676 = vmatmul.mubr.f32.gmra.mrb[0].mxu0 %v4460
      %v4677 = vpop.f32.mrb[0].mxu0
      %v4678 = vadd.f32 %v4357, %v4677
      %v4679 = vpop.f32.mrb[0].mxu0
      %4680 = vmatprep.mubr.f32.mxu0 0.0
      %4681 = vmatmul.mubr.f32.gmra.mrb[0].mxu0 %v4463
      %v4682 = vpop.f32.mrb[0].mxu0
      %v4683 = vadd.f32 %v4362, %v4682
      %v4684 = vpop.f32.mrb[0].mxu0
      %4685 = vmatprep.mubr.f32.mxu0 0.0
      %4686 = vmatmul.mubr.f32.gmra.mrb[0].mxu0 %v4466
      %v4687 = vpop.f32.mrb[0].mxu0
      %v4688 = vadd.f32 %v4367, %v4687
      %v4689 = vpop.f32.mrb[0].mxu0
      %4690 = vmatprep.mubr.f32.mxu0 0.0
      %4691 = vmatmul.mubr.f32.gmra.mrb[0].mxu0 %v4469
      %v4692 = vpop.f32.mrb[0].mxu0
      %v4693 = vadd.f32 %v4372, %v4692
      %v4694 = vpop.f32.mrb[0].mxu0
      %4695 = vdwg.mxu0
      %v4696 = vld [vmem:[#allocation3 + $0x9] sm:$0xff]
      %v4697 = vld [vmem:[#allocation3 + $0x11] sm:$0xff]
      %v4698 = vld [vmem:[#allocation3 + $0x29] sm:$0xff]
      %v4699 = vld [vmem:[#allocation3 + $0x31] sm:$0xff]
      %v4700 = vld [vmem:[#allocation3 + $0x49] sm:$0xff]
      %v4701 = vld [vmem:[#allocation3 + $0x51] sm:$0xff]
      %v4702 = vld [vmem:[#allocation3 + $0x69] sm:$0xff]
      %v4703 = vld [vmem:[#allocation3 + $0x71] sm:$0xff]
      %v4704 = vld [vmem:[#allocation3 + $0x89] sm:$0xff]
      %v4705 = vld [vmem:[#allocation3 + $0x91] sm:$0xff]
      %v4706 = vld [vmem:[#allocation3 + $0xa9] sm:$0xff]
      %v4707 = vld [vmem:[#allocation3 + $0xb1] sm:$0xff]
      %v4708 = vld [vmem:[#allocation3 + $0xc9] sm:$0xff]
      %v4709 = vld [vmem:[#allocation3 + $0xd1] sm:$0xff]
      %v4710 = vld [vmem:[#allocation3 + $0xe9] sm:$0xff]
      %v4711 = vld [vmem:[#allocation3 + $0xf1] sm:$0xff]
      %v4712 = vld [vmem:[#allocation3 + $0x109] sm:$0xff]
      %v4713 = vld [vmem:[#allocation3 + $0x111] sm:$0xff]
      %v4714 = vld [vmem:[#allocation3 + $0x129] sm:$0xff]
      %v4715 = vld [vmem:[#allocation3 + $0x131] sm:$0xff]
      %v4716 = vld [vmem:[#allocation3 + $0x149] sm:$0xff]
      %v4717 = vld [vmem:[#allocation3 + $0x151] sm:$0xff]
      %v4718 = vld [vmem:[#allocation3 + $0x169] sm:$0xff]
      %v4719 = vld [vmem:[#allocation3 + $0x171] sm:$0xff]
      %v4720 = vld [vmem:[#allocation3 + $0x189] sm:$0xff]
      %v4721 = vld [vmem:[#allocation3 + $0x191] sm:$0xff]
      %v4722 = vld [vmem:[#allocation3 + $0x1a9] sm:$0xff]
      %v4723 = vld [vmem:[#allocation3 + $0x1b1] sm:$0xff]
      %v4724 = vld [vmem:[#allocation3 + $0x1c9] sm:$0xff]
      %v4725 = vld [vmem:[#allocation3 + $0x1d1] sm:$0xff]
      %v4726 = vld [vmem:[#allocation3 + $0x1e9] sm:$0xff]
      %v4727 = vld [vmem:[#allocation3 + $0x1f1] sm:$0xff]
      %s4728 = scalar_lea.vmem %s3, 16
      %v4729 = vld [vmem:[%s4728] sm:$0xff]
      %v4731 = vsel %vm3881, %v4696, 0
      %v4734 = vsel %vm3881, %v4697, 0
      %v4737 = vsel %vm3881, %v4698, 0
      %v4740 = vsel %vm3881, %v4699, 0
      %v4743 = vsel %vm3881, %v4700, 0
      %v4746 = vsel %vm3881, %v4701, 0
      %v4749 = vsel %vm3881, %v4702, 0
      %v4752 = vsel %vm3881, %v4703, 0
      %v4755 = vsel %vm3881, %v4704, 0
      %v4758 = vsel %vm3881, %v4705, 0
      %v4761 = vsel %vm3881, %v4706, 0
      %v4764 = vsel %vm3881, %v4707, 0
      %v4767 = vsel %vm3881, %v4708, 0
      %v4770 = vsel %vm3881, %v4709, 0
      %v4773 = vsel %vm3881, %v4710, 0
      %v4776 = vsel %vm3881, %v4711, 0
      %v4779 = vsel %vm3881, %v4712, 0
      %v4782 = vsel %vm3881, %v4713, 0
      %v4785 = vsel %vm3881, %v4714, 0
      %v4788 = vsel %vm3881, %v4715, 0
      %v4791 = vsel %vm3881, %v4716, 0
      %v4794 = vsel %vm3881, %v4717, 0
      %v4797 = vsel %vm3881, %v4718, 0
      %v4800 = vsel %vm3881, %v4719, 0
      %v4803 = vsel %vm3881, %v4720, 0
      %v4806 = vsel %vm3881, %v4721, 0
      %v4809 = vsel %vm3881, %v4722, 0
      %v4812 = vsel %vm3881, %v4723, 0
      %v4815 = vsel %vm3881, %v4724, 0
      %v4818 = vsel %vm3881, %v4725, 0
      %v4821 = vsel %vm3881, %v4726, 0
      %v4824 = vsel %vm3881, %v4727, 0
      %4826 = vmatprep.subr.mxu0 0.0
      %4827 = vmatpush1.msra.mxu0 %v4729
      %4828 = vmatprep.subr.mxu0 0.0
      %4829 = vmatpush1.msra.mxu0 0.0
      %4830 = vmatprep.subr.mxu0 0.0
      %4831 = vmatpush1.msra.mxu0 0.0
      %4832 = vmatprep.subr.mxu0 0.0
      %4833 = vmatpush1.msra.mxu0 0.0
      %4834 = vmatprep.subr.mxu0 0.0
      %4835 = vmatpush1.msra.mxu0 0.0
      %4836 = vmatprep.subr.mxu0 0.0
      %4837 = vmatpush1.msra.mxu0 0.0
      %4838 = vmatprep.subr.mxu0 0.0
      %4839 = vmatpush1.msra.mxu0 0.0
      %4840 = vmatprep.subr.mxu0 0.0
      %4841 = vmatpush1.msra.mxu0 0.0
      %4842 = vmatprep.subr.mxu0 0.0
      %4843 = vmatpush1.msra.mxu0 0.0
      %4844 = vmatprep.subr.mxu0 0.0
      %4845 = vmatpush1.msra.mxu0 0.0
      %4846 = vmatprep.subr.mxu0 0.0
      %4847 = vmatpush1.msra.mxu0 0.0
      %4848 = vmatprep.subr.mxu0 0.0
      %4849 = vmatpush1.msra.mxu0 0.0
      %4850 = vmatprep.subr.mxu0 0.0
      %4851 = vmatpush1.msra.mxu0 0.0
      %4852 = vmatprep.subr.mxu0 0.0
      %4853 = vmatpush1.msra.mxu0 0.0
      %4854 = vmatprep.subr.mxu0 0.0
      %4855 = vmatpush1.msra.mxu0 0.0
      %4856 = vmatprep.subr.mxu0 0.0
      %4857 = vmatpush1.msra.mxu0 0.0
      %4858 = vmatprep.subr.mxu0 0.0
      %4859 = vmatpush1.msra.mxu0 0.0
      %4860 = vmatprep.subr.mxu0 0.0
      %4861 = vmatpush1.msra.mxu0 0.0
      %4862 = vmatprep.subr.mxu0 0.0
      %4863 = vmatpush1.msra.mxu0 0.0
      %4864 = vmatprep.subr.mxu0 0.0
      %4865 = vmatpush1.msra.mxu0 0.0
      %4866 = vmatprep.subr.mxu0 0.0
      %4867 = vmatpush1.msra.mxu0 0.0
      %4868 = vmatprep.subr.mxu0 0.0
      %4869 = vmatpush1.msra.mxu0 0.0
      %4870 = vmatprep.subr.mxu0 0.0
      %4871 = vmatpush1.msra.mxu0 0.0
      %4872 = vmatprep.subr.mxu0 0.0
      %4873 = vmatpush1.msra.mxu0 0.0
      %4874 = vmatprep.subr.mxu0 0.0
      %4875 = vmatpush1.msra.mxu0 0.0
      %4876 = vmatprep.subr.mxu0 0.0
      %4877 = vmatpush1.msra.mxu0 0.0
      %4878 = vmatprep.subr.mxu0 0.0
      %4879 = vmatpush1.msra.mxu0 0.0
      %4880 = vmatprep.subr.mxu0 0.0
      %4881 = vmatpush1.msra.mxu0 0.0
      %4882 = vmatprep.subr.mxu0 0.0
      %4883 = vmatpush1.msra.mxu0 0.0
      %4884 = vmatprep.subr.mxu0 0.0
      %4885 = vmatpush1.msra.mxu0 0.0
      %4886 = vmatprep.subr.mxu0 0.0
      %4887 = vmatpush1.msra.mxu0 0.0
      %4888 = vmatprep.subr.mxu0 0.0
      %4889 = vmatpush1.msra.mxu0 0.0
      %4890 = vmatprep.mubr.f32.mxu0 0.0
      %4891 = vmatmul.mubr.f32.gmra.mrb[0].mxu0 %v4731
      %v4892 = vpop.f32.mrb[0].mxu0
      %v4893 = vadd.f32 0.0, %v4892
      %v4894 = vpop.f32.mrb[0].mxu0
      %4895 = vmatprep.mubr.f32.mxu0 0.0
      %4896 = vmatmul.mubr.f32.gmra.mrb[0].mxu0 %v4734
      %v4897 = vpop.f32.mrb[0].mxu0
      %v4898 = vadd.f32 0.0, %v4897
      %v4899 = vpop.f32.mrb[0].mxu0
      %4900 = vmatprep.mubr.f32.mxu0 0.0
      %4901 = vmatmul.mubr.f32.gmra.mrb[0].mxu0 %v4737
      %v4902 = vpop.f32.mrb[0].mxu0
      %v4903 = vadd.f32 0.0, %v4902
      %v4904 = vpop.f32.mrb[0].mxu0
      %4905 = vmatprep.mubr.f32.mxu0 0.0
      %4906 = vmatmul.mubr.f32.gmra.mrb[0].mxu0 %v4740
      %v4907 = vpop.f32.mrb[0].mxu0
      %v4908 = vadd.f32 0.0, %v4907
      %v4909 = vpop.f32.mrb[0].mxu0
      %4910 = vmatprep.mubr.f32.mxu0 0.0
      %4911 = vmatmul.mubr.f32.gmra.mrb[0].mxu0 %v4743
      %v4912 = vpop.f32.mrb[0].mxu0
      %v4913 = vadd.f32 0.0, %v4912
      %v4914 = vpop.f32.mrb[0].mxu0
      %4915 = vmatprep.mubr.f32.mxu0 0.0
      %4916 = vmatmul.mubr.f32.gmra.mrb[0].mxu0 %v4746
      %v4917 = vpop.f32.mrb[0].mxu0
      %v4918 = vadd.f32 0.0, %v4917
      %v4919 = vpop.f32.mrb[0].mxu0
      %4920 = vmatprep.mubr.f32.mxu0 0.0
      %4921 = vmatmul.mubr.f32.gmra.mrb[0].mxu0 %v4749
      %v4922 = vpop.f32.mrb[0].mxu0
      %v4923 = vadd.f32 0.0, %v4922
      %v4924 = vpop.f32.mrb[0].mxu0
      %4925 = vmatprep.mubr.f32.mxu0 0.0
      %4926 = vmatmul.mubr.f32.gmra.mrb[0].mxu0 %v4752
      %v4927 = vpop.f32.mrb[0].mxu0
      %v4928 = vadd.f32 0.0, %v4927
      %v4929 = vpop.f32.mrb[0].mxu0
      %4930 = vmatprep.mubr.f32.mxu0 0.0
      %4931 = vmatmul.mubr.f32.gmra.mrb[0].mxu0 %v4755
      %v4932 = vpop.f32.mrb[0].mxu0
      %v4933 = vadd.f32 0.0, %v4932
      %v4934 = vpop.f32.mrb[0].mxu0
      %4935 = vmatprep.mubr.f32.mxu0 0.0
      %4936 = vmatmul.mubr.f32.gmra.mrb[0].mxu0 %v4758
      %v4937 = vpop.f32.mrb[0].mxu0
      %v4938 = vadd.f32 0.0, %v4937
      %v4939 = vpop.f32.mrb[0].mxu0
      %4940 = vmatprep.mubr.f32.mxu0 0.0
      %4941 = vmatmul.mubr.f32.gmra.mrb[0].mxu0 %v4761
      %v4942 = vpop.f32.mrb[0].mxu0
      %v4943 = vadd.f32 0.0, %v4942
      %v4944 = vpop.f32.mrb[0].mxu0
      %4945 = vmatprep.mubr.f32.mxu0 0.0
      %4946 = vmatmul.mubr.f32.gmra.mrb[0].mxu0 %v4764
      %v4947 = vpop.f32.mrb[0].mxu0
      %v4948 = vadd.f32 0.0, %v4947
      %v4949 = vpop.f32.mrb[0].mxu0
      %4950 = vmatprep.mubr.f32.mxu0 0.0
      %4951 = vmatmul.mubr.f32.gmra.mrb[0].mxu0 %v4767
      %v4952 = vpop.f32.mrb[0].mxu0
      %v4953 = vadd.f32 0.0, %v4952
      %v4954 = vpop.f32.mrb[0].mxu0
      %4955 = vmatprep.mubr.f32.mxu0 0.0
      %4956 = vmatmul.mubr.f32.gmra.mrb[0].mxu0 %v4770
      %v4957 = vpop.f32.mrb[0].mxu0
      %v4958 = vadd.f32 0.0, %v4957
      %v4959 = vpop.f32.mrb[0].mxu0
      %4960 = vmatprep.mubr.f32.mxu0 0.0
      %4961 = vmatmul.mubr.f32.gmra.mrb[0].mxu0 %v4773
      %v4962 = vpop.f32.mrb[0].mxu0
      %v4963 = vadd.f32 0.0, %v4962
      %v4964 = vpop.f32.mrb[0].mxu0
      %4965 = vmatprep.mubr.f32.mxu0 0.0
      %4966 = vmatmul.mubr.f32.gmra.mrb[0].mxu0 %v4776
      %v4967 = vpop.f32.mrb[0].mxu0
      %v4968 = vadd.f32 0.0, %v4967
      %v4969 = vpop.f32.mrb[0].mxu0
      %4970 = vmatprep.mubr.f32.mxu0 0.0
      %4971 = vmatmul.mubr.f32.gmra.mrb[0].mxu0 %v4779
      %v4972 = vpop.f32.mrb[0].mxu0
      %v4973 = vadd.f32 0.0, %v4972
      %v4974 = vpop.f32.mrb[0].mxu0
      %4975 = vmatprep.mubr.f32.mxu0 0.0
      %4976 = vmatmul.mubr.f32.gmra.mrb[0].mxu0 %v4782
      %v4977 = vpop.f32.mrb[0].mxu0
      %v4978 = vadd.f32 0.0, %v4977
      %v4979 = vpop.f32.mrb[0].mxu0
      %4980 = vmatprep.mubr.f32.mxu0 0.0
      %4981 = vmatmul.mubr.f32.gmra.mrb[0].mxu0 %v4785
      %v4982 = vpop.f32.mrb[0].mxu0
      %v4983 = vadd.f32 0.0, %v4982
      %v4984 = vpop.f32.mrb[0].mxu0
      %4985 = vmatprep.mubr.f32.mxu0 0.0
      %4986 = vmatmul.mubr.f32.gmra.mrb[0].mxu0 %v4788
      %v4987 = vpop.f32.mrb[0].mxu0
      %v4988 = vadd.f32 0.0, %v4987
      %v4989 = vpop.f32.mrb[0].mxu0
      %4990 = vmatprep.mubr.f32.mxu0 0.0
      %4991 = vmatmul.mubr.f32.gmra.mrb[0].mxu0 %v4791
      %v4992 = vpop.f32.mrb[0].mxu0
      %v4993 = vadd.f32 0.0, %v4992
      %v4994 = vpop.f32.mrb[0].mxu0
      %4995 = vmatprep.mubr.f32.mxu0 0.0
      %4996 = vmatmul.mubr.f32.gmra.mrb[0].mxu0 %v4794
      %v4997 = vpop.f32.mrb[0].mxu0
      %v4998 = vadd.f32 0.0, %v4997
      %v4999 = vpop.f32.mrb[0].mxu0
      %5000 = vmatprep.mubr.f32.mxu0 0.0
      %5001 = vmatmul.mubr.f32.gmra.mrb[0].mxu0 %v4797
      %v5002 = vpop.f32.mrb[0].mxu0
      %v5003 = vadd.f32 0.0, %v5002
      %v5004 = vpop.f32.mrb[0].mxu0
      %5005 = vmatprep.mubr.f32.mxu0 0.0
      %5006 = vmatmul.mubr.f32.gmra.mrb[0].mxu0 %v4800
      %v5007 = vpop.f32.mrb[0].mxu0
      %v5008 = vadd.f32 0.0, %v5007
      %v5009 = vpop.f32.mrb[0].mxu0
      %5010 = vmatprep.mubr.f32.mxu0 0.0
      %5011 = vmatmul.mubr.f32.gmra.mrb[0].mxu0 %v4803
      %v5012 = vpop.f32.mrb[0].mxu0
      %v5013 = vadd.f32 0.0, %v5012
      %v5014 = vpop.f32.mrb[0].mxu0
      %5015 = vmatprep.mubr.f32.mxu0 0.0
      %5016 = vmatmul.mubr.f32.gmra.mrb[0].mxu0 %v4806
      %v5017 = vpop.f32.mrb[0].mxu0
      %v5018 = vadd.f32 0.0, %v5017
      %v5019 = vpop.f32.mrb[0].mxu0
      %5020 = vmatprep.mubr.f32.mxu0 0.0
      %5021 = vmatmul.mubr.f32.gmra.mrb[0].mxu0 %v4809
      %v5022 = vpop.f32.mrb[0].mxu0
      %v5023 = vadd.f32 0.0, %v5022
      %v5024 = vpop.f32.mrb[0].mxu0
      %5025 = vmatprep.mubr.f32.mxu0 0.0
      %5026 = vmatmul.mubr.f32.gmra.mrb[0].mxu0 %v4812
      %v5027 = vpop.f32.mrb[0].mxu0
      %v5028 = vadd.f32 0.0, %v5027
      %v5029 = vpop.f32.mrb[0].mxu0
      %5030 = vmatprep.mubr.f32.mxu0 0.0
      %5031 = vmatmul.mubr.f32.gmra.mrb[0].mxu0 %v4815
      %v5032 = vpop.f32.mrb[0].mxu0
      %v5033 = vadd.f32 0.0, %v5032
      %v5034 = vpop.f32.mrb[0].mxu0
      %5035 = vmatprep.mubr.f32.mxu0 0.0
      %5036 = vmatmul.mubr.f32.gmra.mrb[0].mxu0 %v4818
      %v5037 = vpop.f32.mrb[0].mxu0
      %v5038 = vadd.f32 0.0, %v5037
      %v5039 = vpop.f32.mrb[0].mxu0
      %5040 = vmatprep.mubr.f32.mxu0 0.0
      %5041 = vmatmul.mubr.f32.gmra.mrb[0].mxu0 %v4821
      %v5042 = vpop.f32.mrb[0].mxu0
      %v5043 = vadd.f32 0.0, %v5042
      %v5044 = vpop.f32.mrb[0].mxu0
      %5045 = vmatprep.mubr.f32.mxu0 0.0
      %5046 = vmatmul.mubr.f32.gmra.mrb[0].mxu0 %v4824
      %v5047 = vpop.f32.mrb[0].mxu0
      %v5048 = vadd.f32 0.0, %v5047
      %v5049 = vpop.f32.mrb[0].mxu0
      %5050 = vdwg.mxu0
      %v5051 = vadd.f32 %v4538, %v4893
      %v5052 = vadd.f32 %v4543, %v4898
      %v5053 = vadd.f32 %v4548, %v4903
      %v5054 = vadd.f32 %v4553, %v4908
      %v5055 = vadd.f32 %v4558, %v4913
      %v5056 = vadd.f32 %v4563, %v4918
      %v5057 = vadd.f32 %v4568, %v4923
      %v5058 = vadd.f32 %v4573, %v4928
      %v5059 = vadd.f32 %v4578, %v4933
      %v5060 = vadd.f32 %v4583, %v4938
      %v5061 = vadd.f32 %v4588, %v4943
      %v5062 = vadd.f32 %v4593, %v4948
      %v5063 = vadd.f32 %v4598, %v4953
      %v5064 = vadd.f32 %v4603, %v4958
      %v5065 = vadd.f32 %v4608, %v4963
      %v5066 = vadd.f32 %v4613, %v4968
      %v5067 = vadd.f32 %v4618, %v4973
      %v5068 = vadd.f32 %v4623, %v4978
      %v5069 = vadd.f32 %v4628, %v4983
      %v5070 = vadd.f32 %v4633, %v4988
      %v5071 = vadd.f32 %v4638, %v4993
      %v5072 = vadd.f32 %v4643, %v4998
      %v5073 = vadd.f32 %v4648, %v5003
      %v5074 = vadd.f32 %v4653, %v5008
      %v5075 = vadd.f32 %v4658, %v5013
      %v5076 = vadd.f32 %v4663, %v5018
      %v5077 = vadd.f32 %v4668, %v5023
      %v5078 = vadd.f32 %v4673, %v5028
      %v5079 = vadd.f32 %v4678, %v5033
      %v5080 = vadd.f32 %v4683, %v5038
      %v5081 = vadd.f32 %v4688, %v5043
      %v5082 = vadd.f32 %v4693, %v5048
      %v5083 = vld [vmem:[%s3954 + $0x7] sm:$0xff]
      %v5084 = vld [vmem:[%s3954 + $0xf] sm:$0xff]
      %v5085 = vld [vmem:[%s3954 + $0x27] sm:$0xff]
      %v5086 = vld [vmem:[%s3954 + $0x2f] sm:$0xff]
      %v5087 = vld [vmem:[%s3954 + $0x47] sm:$0xff]
      %v5088 = vld [vmem:[%s3954 + $0x4f] sm:$0xff]
      %v5089 = vld [vmem:[%s3954 + $0x67] sm:$0xff]
      %v5090 = vld [vmem:[%s3954 + $0x6f] sm:$0xff]
      %v5091 = vld [vmem:[%s3954 + $0x87] sm:$0xff]
      %v5092 = vld [vmem:[%s3954 + $0x8f] sm:$0xff]
      %v5093 = vld [vmem:[%s3954 + $0xa7] sm:$0xff]
      %v5094 = vld [vmem:[%s3954 + $0xaf] sm:$0xff]
      %v5095 = vld [vmem:[%s3954 + $0xc7] sm:$0xff]
      %v5096 = vld [vmem:[%s3954 + $0xcf] sm:$0xff]
      %v5097 = vld [vmem:[%s3954 + $0xe7] sm:$0xff]
      %v5098 = vld [vmem:[%s3954 + $0xef] sm:$0xff]
      %v5099 = vld [vmem:[%s3954 + $0x107] sm:$0xff]
      %v5100 = vld [vmem:[%s3954 + $0x10f] sm:$0xff]
      %v5101 = vld [vmem:[%s3954 + $0x127] sm:$0xff]
      %v5102 = vld [vmem:[%s3954 + $0x12f] sm:$0xff]
      %v5103 = vld [vmem:[%s3954 + $0x147] sm:$0xff]
      %v5104 = vld [vmem:[%s3954 + $0x14f] sm:$0xff]
      %v5105 = vld [vmem:[%s3954 + $0x167] sm:$0xff]
      %v5106 = vld [vmem:[%s3954 + $0x16f] sm:$0xff]
      %v5107 = vld [vmem:[%s3954 + $0x187] sm:$0xff]
      %v5108 = vld [vmem:[%s3954 + $0x18f] sm:$0xff]
      %v5109 = vld [vmem:[%s3954 + $0x1a7] sm:$0xff]
      %v5110 = vld [vmem:[%s3954 + $0x1af] sm:$0xff]
      %v5111 = vld [vmem:[%s3954 + $0x1c7] sm:$0xff]
      %v5112 = vld [vmem:[%s3954 + $0x1cf] sm:$0xff]
      %v5113 = vld [vmem:[%s3954 + $0x1e7] sm:$0xff]
      %v5114 = vld [vmem:[%s3954 + $0x1ef] sm:$0xff]
      %s5115 = scalar_lea.vmem %s3, 24
      %v5116 = vld [vmem:[%s5115] sm:$0xff]
      %v5118 = vsel %vm3881, %v5083, 0
      %v5121 = vsel %vm3881, %v5084, 0
      %v5124 = vsel %vm3881, %v5085, 0
      %v5127 = vsel %vm3881, %v5086, 0
      %v5130 = vsel %vm3881, %v5087, 0
      %v5133 = vsel %vm3881, %v5088, 0
      %v5136 = vsel %vm3881, %v5089, 0
      %v5139 = vsel %vm3881, %v5090, 0
      %v5142 = vsel %vm3881, %v5091, 0
      %v5145 = vsel %vm3881, %v5092, 0
      %v5148 = vsel %vm3881, %v5093, 0
      %v5151 = vsel %vm3881, %v5094, 0
      %v5154 = vsel %vm3881, %v5095, 0
      %v5157 = vsel %vm3881, %v5096, 0
      %v5160 = vsel %vm3881, %v5097, 0
      %v5163 = vsel %vm3881, %v5098, 0
      %v5166 = vsel %vm3881, %v5099, 0
      %v5169 = vsel %vm3881, %v5100, 0
      %v5172 = vsel %vm3881, %v5101, 0
      %v5175 = vsel %vm3881, %v5102, 0
      %v5178 = vsel %vm3881, %v5103, 0
      %v5181 = vsel %vm3881, %v5104, 0
      %v5184 = vsel %vm3881, %v5105, 0
      %v5187 = vsel %vm3881, %v5106, 0
      %v5190 = vsel %vm3881, %v5107, 0
      %v5193 = vsel %vm3881, %v5108, 0
      %v5196 = vsel %vm3881, %v5109, 0
      %v5199 = vsel %vm3881, %v5110, 0
      %v5202 = vsel %vm3881, %v5111, 0
      %v5205 = vsel %vm3881, %v5112, 0
      %v5208 = vsel %vm3881, %v5113, 0
      %v5211 = vsel %vm3881, %v5114, 0
      %5213 = vmatprep.subr.mxu0 0.0
      %5214 = vmatpush1.msra.mxu0 %v5116
      %5215 = vmatprep.subr.mxu0 0.0
      %5216 = vmatpush1.msra.mxu0 0.0
      %5217 = vmatprep.subr.mxu0 0.0
      %5218 = vmatpush1.msra.mxu0 0.0
      %5219 = vmatprep.subr.mxu0 0.0
      %5220 = vmatpush1.msra.mxu0 0.0
      %5221 = vmatprep.subr.mxu0 0.0
      %5222 = vmatpush1.msra.mxu0 0.0
      %5223 = vmatprep.subr.mxu0 0.0
      %5224 = vmatpush1.msra.mxu0 0.0
      %5225 = vmatprep.subr.mxu0 0.0
      %5226 = vmatpush1.msra.mxu0 0.0
      %5227 = vmatprep.subr.mxu0 0.0
      %5228 = vmatpush1.msra.mxu0 0.0
      %5229 = vmatprep.subr.mxu0 0.0
      %5230 = vmatpush1.msra.mxu0 0.0
      %5231 = vmatprep.subr.mxu0 0.0
      %5232 = vmatpush1.msra.mxu0 0.0
      %5233 = vmatprep.subr.mxu0 0.0
      %5234 = vmatpush1.msra.mxu0 0.0
      %5235 = vmatprep.subr.mxu0 0.0
      %5236 = vmatpush1.msra.mxu0 0.0
      %5237 = vmatprep.subr.mxu0 0.0
      %5238 = vmatpush1.msra.mxu0 0.0
      %5239 = vmatprep.subr.mxu0 0.0
      %5240 = vmatpush1.msra.mxu0 0.0
      %5241 = vmatprep.subr.mxu0 0.0
      %5242 = vmatpush1.msra.mxu0 0.0
      %5243 = vmatprep.subr.mxu0 0.0
      %5244 = vmatpush1.msra.mxu0 0.0
      %5245 = vmatprep.subr.mxu0 0.0
      %5246 = vmatpush1.msra.mxu0 0.0
      %5247 = vmatprep.subr.mxu0 0.0
      %5248 = vmatpush1.msra.mxu0 0.0
      %5249 = vmatprep.subr.mxu0 0.0
      %5250 = vmatpush1.msra.mxu0 0.0
      %5251 = vmatprep.subr.mxu0 0.0
      %5252 = vmatpush1.msra.mxu0 0.0
      %5253 = vmatprep.subr.mxu0 0.0
      %5254 = vmatpush1.msra.mxu0 0.0
      %5255 = vmatprep.subr.mxu0 0.0
      %5256 = vmatpush1.msra.mxu0 0.0
      %5257 = vmatprep.subr.mxu0 0.0
      %5258 = vmatpush1.msra.mxu0 0.0
      %5259 = vmatprep.subr.mxu0 0.0
      %5260 = vmatpush1.msra.mxu0 0.0
      %5261 = vmatprep.subr.mxu0 0.0
      %5262 = vmatpush1.msra.mxu0 0.0
      %5263 = vmatprep.subr.mxu0 0.0
      %5264 = vmatpush1.msra.mxu0 0.0
      %5265 = vmatprep.subr.mxu0 0.0
      %5266 = vmatpush1.msra.mxu0 0.0
      %5267 = vmatprep.subr.mxu0 0.0
      %5268 = vmatpush1.msra.mxu0 0.0
      %5269 = vmatprep.subr.mxu0 0.0
      %5270 = vmatpush1.msra.mxu0 0.0
      %5271 = vmatprep.subr.mxu0 0.0
      %5272 = vmatpush1.msra.mxu0 0.0
      %5273 = vmatprep.subr.mxu0 0.0
      %5274 = vmatpush1.msra.mxu0 0.0
      %5275 = vmatprep.subr.mxu0 0.0
      %5276 = vmatpush1.msra.mxu0 0.0
      %5277 = vmatprep.mubr.f32.mxu0 0.0
      %5278 = vmatmul.mubr.f32.gmra.mrb[0].mxu0 %v5118
      %v5279 = vpop.f32.mrb[0].mxu0
      %v5280 = vadd.f32 0.0, %v5279
      %v5281 = vpop.f32.mrb[0].mxu0
      %5282 = vmatprep.mubr.f32.mxu0 0.0
      %5283 = vmatmul.mubr.f32.gmra.mrb[0].mxu0 %v5121
      %v5284 = vpop.f32.mrb[0].mxu0
      %v5285 = vadd.f32 0.0, %v5284
      %v5286 = vpop.f32.mrb[0].mxu0
      %5287 = vmatprep.mubr.f32.mxu0 0.0
      %5288 = vmatmul.mubr.f32.gmra.mrb[0].mxu0 %v5124
      %v5289 = vpop.f32.mrb[0].mxu0
      %v5290 = vadd.f32 0.0, %v5289
      %v5291 = vpop.f32.mrb[0].mxu0
      %5292 = vmatprep.mubr.f32.mxu0 0.0
      %5293 = vmatmul.mubr.f32.gmra.mrb[0].mxu0 %v5127
      %v5294 = vpop.f32.mrb[0].mxu0
      %v5295 = vadd.f32 0.0, %v5294
      %v5296 = vpop.f32.mrb[0].mxu0
      %5297 = vmatprep.mubr.f32.mxu0 0.0
      %5298 = vmatmul.mubr.f32.gmra.mrb[0].mxu0 %v5130
      %v5299 = vpop.f32.mrb[0].mxu0
      %v5300 = vadd.f32 0.0, %v5299
      %v5301 = vpop.f32.mrb[0].mxu0
      %5302 = vmatprep.mubr.f32.mxu0 0.0
      %5303 = vmatmul.mubr.f32.gmra.mrb[0].mxu0 %v5133
      %v5304 = vpop.f32.mrb[0].mxu0
      %v5305 = vadd.f32 0.0, %v5304
      %v5306 = vpop.f32.mrb[0].mxu0
      %5307 = vmatprep.mubr.f32.mxu0 0.0
      %5308 = vmatmul.mubr.f32.gmra.mrb[0].mxu0 %v5136
      %v5309 = vpop.f32.mrb[0].mxu0
      %v5310 = vadd.f32 0.0, %v5309
      %v5311 = vpop.f32.mrb[0].mxu0
      %5312 = vmatprep.mubr.f32.mxu0 0.0
      %5313 = vmatmul.mubr.f32.gmra.mrb[0].mxu0 %v5139
      %v5314 = vpop.f32.mrb[0].mxu0
      %v5315 = vadd.f32 0.0, %v5314
      %v5316 = vpop.f32.mrb[0].mxu0
      %5317 = vmatprep.mubr.f32.mxu0 0.0
      %5318 = vmatmul.mubr.f32.gmra.mrb[0].mxu0 %v5142
      %v5319 = vpop.f32.mrb[0].mxu0
      %v5320 = vadd.f32 0.0, %v5319
      %v5321 = vpop.f32.mrb[0].mxu0
      %5322 = vmatprep.mubr.f32.mxu0 0.0
      %5323 = vmatmul.mubr.f32.gmra.mrb[0].mxu0 %v5145
      %v5324 = vpop.f32.mrb[0].mxu0
      %v5325 = vadd.f32 0.0, %v5324
      %v5326 = vpop.f32.mrb[0].mxu0
      %5327 = vmatprep.mubr.f32.mxu0 0.0
      %5328 = vmatmul.mubr.f32.gmra.mrb[0].mxu0 %v5148
      %v5329 = vpop.f32.mrb[0].mxu0
      %v5330 = vadd.f32 0.0, %v5329
      %v5331 = vpop.f32.mrb[0].mxu0
      %5332 = vmatprep.mubr.f32.mxu0 0.0
      %5333 = vmatmul.mubr.f32.gmra.mrb[0].mxu0 %v5151
      %v5334 = vpop.f32.mrb[0].mxu0
      %v5335 = vadd.f32 0.0, %v5334
      %v5336 = vpop.f32.mrb[0].mxu0
      %5337 = vmatprep.mubr.f32.mxu0 0.0
      %5338 = vmatmul.mubr.f32.gmra.mrb[0].mxu0 %v5154
      %v5339 = vpop.f32.mrb[0].mxu0
      %v5340 = vadd.f32 0.0, %v5339
      %v5341 = vpop.f32.mrb[0].mxu0
      %5342 = vmatprep.mubr.f32.mxu0 0.0
      %5343 = vmatmul.mubr.f32.gmra.mrb[0].mxu0 %v5157
      %v5344 = vpop.f32.mrb[0].mxu0
      %v5345 = vadd.f32 0.0, %v5344
      %v5346 = vpop.f32.mrb[0].mxu0
      %5347 = vmatprep.mubr.f32.mxu0 0.0
      %5348 = vmatmul.mubr.f32.gmra.mrb[0].mxu0 %v5160
      %v5349 = vpop.f32.mrb[0].mxu0
      %v5350 = vadd.f32 0.0, %v5349
      %v5351 = vpop.f32.mrb[0].mxu0
      %5352 = vmatprep.mubr.f32.mxu0 0.0
      %5353 = vmatmul.mubr.f32.gmra.mrb[0].mxu0 %v5163
      %v5354 = vpop.f32.mrb[0].mxu0
      %v5355 = vadd.f32 0.0, %v5354
      %v5356 = vpop.f32.mrb[0].mxu0
      %5357 = vmatprep.mubr.f32.mxu0 0.0
      %5358 = vmatmul.mubr.f32.gmra.mrb[0].mxu0 %v5166
      %v5359 = vpop.f32.mrb[0].mxu0
      %v5360 = vadd.f32 0.0, %v5359
      %v5361 = vpop.f32.mrb[0].mxu0
      %5362 = vmatprep.mubr.f32.mxu0 0.0
      %5363 = vmatmul.mubr.f32.gmra.mrb[0].mxu0 %v5169
      %v5364 = vpop.f32.mrb[0].mxu0
      %v5365 = vadd.f32 0.0, %v5364
      %v5366 = vpop.f32.mrb[0].mxu0
      %5367 = vmatprep.mubr.f32.mxu0 0.0
      %5368 = vmatmul.mubr.f32.gmra.mrb[0].mxu0 %v5172
      %v5369 = vpop.f32.mrb[0].mxu0
      %v5370 = vadd.f32 0.0, %v5369
      %v5371 = vpop.f32.mrb[0].mxu0
      %5372 = vmatprep.mubr.f32.mxu0 0.0
      %5373 = vmatmul.mubr.f32.gmra.mrb[0].mxu0 %v5175
      %v5374 = vpop.f32.mrb[0].mxu0
      %v5375 = vadd.f32 0.0, %v5374
      %v5376 = vpop.f32.mrb[0].mxu0
      %5377 = vmatprep.mubr.f32.mxu0 0.0
      %5378 = vmatmul.mubr.f32.gmra.mrb[0].mxu0 %v5178
      %v5379 = vpop.f32.mrb[0].mxu0
      %v5380 = vadd.f32 0.0, %v5379
      %v5381 = vpop.f32.mrb[0].mxu0
      %5382 = vmatprep.mubr.f32.mxu0 0.0
      %5383 = vmatmul.mubr.f32.gmra.mrb[0].mxu0 %v5181
      %v5384 = vpop.f32.mrb[0].mxu0
      %v5385 = vadd.f32 0.0, %v5384
      %v5386 = vpop.f32.mrb[0].mxu0
      %5387 = vmatprep.mubr.f32.mxu0 0.0
      %5388 = vmatmul.mubr.f32.gmra.mrb[0].mxu0 %v5184
      %v5389 = vpop.f32.mrb[0].mxu0
      %v5390 = vadd.f32 0.0, %v5389
      %v5391 = vpop.f32.mrb[0].mxu0
      %5392 = vmatprep.mubr.f32.mxu0 0.0
      %5393 = vmatmul.mubr.f32.gmra.mrb[0].mxu0 %v5187
      %v5394 = vpop.f32.mrb[0].mxu0
      %v5395 = vadd.f32 0.0, %v5394
      %v5396 = vpop.f32.mrb[0].mxu0
      %5397 = vmatprep.mubr.f32.mxu0 0.0
      %5398 = vmatmul.mubr.f32.gmra.mrb[0].mxu0 %v5190
      %v5399 = vpop.f32.mrb[0].mxu0
      %v5400 = vadd.f32 0.0, %v5399
      %v5401 = vpop.f32.mrb[0].mxu0
      %5402 = vmatprep.mubr.f32.mxu0 0.0
      %5403 = vmatmul.mubr.f32.gmra.mrb[0].mxu0 %v5193
      %v5404 = vpop.f32.mrb[0].mxu0
      %v5405 = vadd.f32 0.0, %v5404
      %v5406 = vpop.f32.mrb[0].mxu0
      %5407 = vmatprep.mubr.f32.mxu0 0.0
      %5408 = vmatmul.mubr.f32.gmra.mrb[0].mxu0 %v5196
      %v5409 = vpop.f32.mrb[0].mxu0
      %v5410 = vadd.f32 0.0, %v5409
      %v5411 = vpop.f32.mrb[0].mxu0
      %5412 = vmatprep.mubr.f32.mxu0 0.0
      %5413 = vmatmul.mubr.f32.gmra.mrb[0].mxu0 %v5199
      %v5414 = vpop.f32.mrb[0].mxu0
      %v5415 = vadd.f32 0.0, %v5414
      %v5416 = vpop.f32.mrb[0].mxu0
      %5417 = vmatprep.mubr.f32.mxu0 0.0
      %5418 = vmatmul.mubr.f32.gmra.mrb[0].mxu0 %v5202
      %v5419 = vpop.f32.mrb[0].mxu0
      %v5420 = vadd.f32 0.0, %v5419
      %v5421 = vpop.f32.mrb[0].mxu0
      %5422 = vmatprep.mubr.f32.mxu0 0.0
      %5423 = vmatmul.mubr.f32.gmra.mrb[0].mxu0 %v5205
      %v5424 = vpop.f32.mrb[0].mxu0
      %v5425 = vadd.f32 0.0, %v5424
      %v5426 = vpop.f32.mrb[0].mxu0
      %5427 = vmatprep.mubr.f32.mxu0 0.0
      %5428 = vmatmul.mubr.f32.gmra.mrb[0].mxu0 %v5208
      %v5429 = vpop.f32.mrb[0].mxu0
      %v5430 = vadd.f32 0.0, %v5429
      %v5431 = vpop.f32.mrb[0].mxu0
      %5432 = vmatprep.mubr.f32.mxu0 0.0
      %5433 = vmatmul.mubr.f32.gmra.mrb[0].mxu0 %v5211
      %v5434 = vpop.f32.mrb[0].mxu0
      %v5435 = vadd.f32 0.0, %v5434
      %v5436 = vpop.f32.mrb[0].mxu0
      %5437 = vdwg.mxu0
      %v5438 = vadd.f32 %v5051, %v5280
      %v5439 = vadd.f32 %v5052, %v5285
      %v5440 = vadd.f32 %v5053, %v5290
      %v5441 = vadd.f32 %v5054, %v5295
      %v5442 = vadd.f32 %v5055, %v5300
      %v5443 = vadd.f32 %v5056, %v5305
      %v5444 = vadd.f32 %v5057, %v5310
      %v5445 = vadd.f32 %v5058, %v5315
      %v5446 = vadd.f32 %v5059, %v5320
      %v5447 = vadd.f32 %v5060, %v5325
      %v5448 = vadd.f32 %v5061, %v5330
      %v5449 = vadd.f32 %v5062, %v5335
      %v5450 = vadd.f32 %v5063, %v5340
      %v5451 = vadd.f32 %v5064, %v5345
      %v5452 = vadd.f32 %v5065, %v5350
      %v5453 = vadd.f32 %v5066, %v5355
      %v5454 = vadd.f32 %v5067, %v5360
      %v5455 = vadd.f32 %v5068, %v5365
      %v5456 = vadd.f32 %v5069, %v5370
      %v5457 = vadd.f32 %v5070, %v5375
      %v5458 = vadd.f32 %v5071, %v5380
      %v5459 = vadd.f32 %v5072, %v5385
      %v5460 = vadd.f32 %v5073, %v5390
      %v5461 = vadd.f32 %v5074, %v5395
      %v5462 = vadd.f32 %v5075, %v5400
      %v5463 = vadd.f32 %v5076, %v5405
      %v5464 = vadd.f32 %v5077, %v5410
      %v5465 = vadd.f32 %v5078, %v5415
      %v5466 = vadd.f32 %v5079, %v5420
      %v5467 = vadd.f32 %v5080, %v5425
      %v5468 = vadd.f32 %v5081, %v5430
      %v5469 = vadd.f32 %v5082, %v5435
      %v5470 = vld [vmem:[%s3954 + $0x8] sm:$0xff]
      %v5471 = vld [vmem:[%s3954 + $0x10] sm:$0xff]
      %v5472 = vld [vmem:[%s3954 + $0x28] sm:$0xff]
      %v5473 = vld [vmem:[%s3954 + $0x30] sm:$0xff]
      %v5474 = vld [vmem:[%s3954 + $0x48] sm:$0xff]
      %v5475 = vld [vmem:[%s3954 + $0x50] sm:$0xff]
      %v5476 = vld [vmem:[%s3954 + $0x68] sm:$0xff]
      %v5477 = vld [vmem:[%s3954 + $0x70] sm:$0xff]
      %v5478 = vld [vmem:[%s3954 + $0x88] sm:$0xff]
      %v5479 = vld [vmem:[%s3954 + $0x90] sm:$0xff]
      %v5480 = vld [vmem:[%s3954 + $0xa8] sm:$0xff]
      %v5481 = vld [vmem:[%s3954 + $0xb0] sm:$0xff]
      %v5482 = vld [vmem:[%s3954 + $0xc8] sm:$0xff]
      %v5483 = vld [vmem:[%s3954 + $0xd0] sm:$0xff]
      %v5484 = vld [vmem:[%s3954 + $0xe8] sm:$0xff]
      %v5485 = vld [vmem:[%s3954 + $0xf0] sm:$0xff]
      %v5486 = vld [vmem:[%s3954 + $0x108] sm:$0xff]
      %v5487 = vld [vmem:[%s3954 + $0x110] sm:$0xff]
      %v5488 = vld [vmem:[%s3954 + $0x128] sm:$0xff]
      %v5489 = vld [vmem:[%s3954 + $0x130] sm:$0xff]
      %v5490 = vld [vmem:[%s3954 + $0x148] sm:$0xff]
      %v5491 = vld [vmem:[%s3954 + $0x150] sm:$0xff]
      %v5492 = vld [vmem:[%s3954 + $0x168] sm:$0xff]
      %v5493 = vld [vmem:[%s3954 + $0x170] sm:$0xff]
      %v5494 = vld [vmem:[%s3954 + $0x188] sm:$0xff]
      %v5495 = vld [vmem:[%s3954 + $0x190] sm:$0xff]
      %v5496 = vld [vmem:[%s3954 + $0x1a8] sm:$0xff]
      %v5497 = vld [vmem:[%s3954 + $0x1b0] sm:$0xff]
      %v5498 = vld [vmem:[%s3954 + $0x1c8] sm:$0xff]
      %v5499 = vld [vmem:[%s3954 + $0x1d0] sm:$0xff]
      %v5500 = vld [vmem:[%s3954 + $0x1e8] sm:$0xff]
      %v5501 = vld [vmem:[%s3954 + $0x1f0] sm:$0xff]
      %s5502 = scalar_lea.vmem %s3, 32
      %v5503 = vld [vmem:[%s5502] sm:$0xff]
      %v5505 = vsel %vm3881, %v5470, 0
      %v5508 = vsel %vm3881, %v5471, 0
      %v5511 = vsel %vm3881, %v5472, 0
      %v5514 = vsel %vm3881, %v5473, 0
      %v5517 = vsel %vm3881, %v5474, 0
      %v5520 = vsel %vm3881, %v5475, 0
      %v5523 = vsel %vm3881, %v5476, 0
      %v5526 = vsel %vm3881, %v5477, 0
      %v5529 = vsel %vm3881, %v5478, 0
      %v5532 = vsel %vm3881, %v5479, 0
      %v5535 = vsel %vm3881, %v5480, 0
      %v5538 = vsel %vm3881, %v5481, 0
      %v5541 = vsel %vm3881, %v5482, 0
      %v5544 = vsel %vm3881, %v5483, 0
      %v5547 = vsel %vm3881, %v5484, 0
      %v5550 = vsel %vm3881, %v5485, 0
      %v5553 = vsel %vm3881, %v5486, 0
      %v5556 = vsel %vm3881, %v5487, 0
      %v5559 = vsel %vm3881, %v5488, 0
      %v5562 = vsel %vm3881, %v5489, 0
      %v5565 = vsel %vm3881, %v5490, 0
      %v5568 = vsel %vm3881, %v5491, 0
      %v5571 = vsel %vm3881, %v5492, 0
      %v5574 = vsel %vm3881, %v5493, 0
      %v5577 = vsel %vm3881, %v5494, 0
      %v5580 = vsel %vm3881, %v5495, 0
      %v5583 = vsel %vm3881, %v5496, 0
      %v5586 = vsel %vm3881, %v5497, 0
      %v5589 = vsel %vm3881, %v5498, 0
      %v5592 = vsel %vm3881, %v5499, 0
      %v5595 = vsel %vm3881, %v5500, 0
      %v5598 = vsel %vm3881, %v5501, 0
      %5600 = vmatprep.subr.mxu0 0.0
      %5601 = vmatpush1.msra.mxu0 %v5503
      %5602 = vmatprep.subr.mxu0 0.0
      %5603 = vmatpush1.msra.mxu0 0.0
      %5604 = vmatprep.subr.mxu0 0.0
      %5605 = vmatpush1.msra.mxu0 0.0
      %5606 = vmatprep.subr.mxu0 0.0
      %5607 = vmatpush1.msra.mxu0 0.0
      %5608 = vmatprep.subr.mxu0 0.0
      %5609 = vmatpush1.msra.mxu0 0.0
      %5610 = vmatprep.subr.mxu0 0.0
      %5611 = vmatpush1.msra.mxu0 0.0
      %5612 = vmatprep.subr.mxu0 0.0
      %5613 = vmatpush1.msra.mxu0 0.0
      %5614 = vmatprep.subr.mxu0 0.0
      %5615 = vmatpush1.msra.mxu0 0.0
      %5616 = vmatprep.subr.mxu0 0.0
      %5617 = vmatpush1.msra.mxu0 0.0
      %5618 = vmatprep.subr.mxu0 0.0
      %5619 = vmatpush1.msra.mxu0 0.0
      %5620 = vmatprep.subr.mxu0 0.0
      %5621 = vmatpush1.msra.mxu0 0.0
      %5622 = vmatprep.subr.mxu0 0.0
      %5623 = vmatpush1.msra.mxu0 0.0
      %5624 = vmatprep.subr.mxu0 0.0
      %5625 = vmatpush1.msra.mxu0 0.0
      %5626 = vmatprep.subr.mxu0 0.0
      %5627 = vmatpush1.msra.mxu0 0.0
      %5628 = vmatprep.subr.mxu0 0.0
      %5629 = vmatpush1.msra.mxu0 0.0
      %5630 = vmatprep.subr.mxu0 0.0
      %5631 = vmatpush1.msra.mxu0 0.0
      %5632 = vmatprep.subr.mxu0 0.0
      %5633 = vmatpush1.msra.mxu0 0.0
      %5634 = vmatprep.subr.mxu0 0.0
      %5635 = vmatpush1.msra.mxu0 0.0
      %5636 = vmatprep.subr.mxu0 0.0
      %5637 = vmatpush1.msra.mxu0 0.0
      %5638 = vmatprep.subr.mxu0 0.0
      %5639 = vmatpush1.msra.mxu0 0.0
      %5640 = vmatprep.subr.mxu0 0.0
      %5641 = vmatpush1.msra.mxu0 0.0
      %5642 = vmatprep.subr.mxu0 0.0
      %5643 = vmatpush1.msra.mxu0 0.0
      %5644 = vmatprep.subr.mxu0 0.0
      %5645 = vmatpush1.msra.mxu0 0.0
      %5646 = vmatprep.subr.mxu0 0.0
      %5647 = vmatpush1.msra.mxu0 0.0
      %5648 = vmatprep.subr.mxu0 0.0
      %5649 = vmatpush1.msra.mxu0 0.0
      %5650 = vmatprep.subr.mxu0 0.0
      %5651 = vmatpush1.msra.mxu0 0.0
      %5652 = vmatprep.subr.mxu0 0.0
      %5653 = vmatpush1.msra.mxu0 0.0
      %5654 = vmatprep.subr.mxu0 0.0
      %5655 = vmatpush1.msra.mxu0 0.0
      %5656 = vmatprep.subr.mxu0 0.0
      %5657 = vmatpush1.msra.mxu0 0.0
      %5658 = vmatprep.subr.mxu0 0.0
      %5659 = vmatpush1.msra.mxu0 0.0
      %5660 = vmatprep.subr.mxu0 0.0
      %5661 = vmatpush1.msra.mxu0 0.0
      %5662 = vmatprep.subr.mxu0 0.0
      %5663 = vmatpush1.msra.mxu0 0.0
      %5664 = vmatprep.mubr.f32.mxu0 0.0
      %5665 = vmatmul.mubr.f32.gmra.mrb[0].mxu0 %v5505
      %v5666 = vpop.f32.mrb[0].mxu0
      %v5667 = vadd.f32 0.0, %v5666
      %v5668 = vpop.f32.mrb[0].mxu0
      %5669 = vmatprep.mubr.f32.mxu0 0.0
      %5670 = vmatmul.mubr.f32.gmra.mrb[0].mxu0 %v5508
      %v5671 = vpop.f32.mrb[0].mxu0
      %v5672 = vadd.f32 0.0, %v5671
      %v5673 = vpop.f32.mrb[0].mxu0
      %5674 = vmatprep.mubr.f32.mxu0 0.0
      %5675 = vmatmul.mubr.f32.gmra.mrb[0].mxu0 %v5511
      %v5676 = vpop.f32.mrb[0].mxu0
      %v5677 = vadd.f32 0.0, %v5676
      %v5678 = vpop.f32.mrb[0].mxu0
      %5679 = vmatprep.mubr.f32.mxu0 0.0
      %5680 = vmatmul.mubr.f32.gmra.mrb[0].mxu0 %v5514
      %v5681 = vpop.f32.mrb[0].mxu0
      %v5682 = vadd.f32 0.0, %v5681
      %v5683 = vpop.f32.mrb[0].mxu0
      %5684 = vmatprep.mubr.f32.mxu0 0.0
      %5685 = vmatmul.mubr.f32.gmra.mrb[0].mxu0 %v5517
      %v5686 = vpop.f32.mrb[0].mxu0
      %v5687 = vadd.f32 0.0, %v5686
      %v5688 = vpop.f32.mrb[0].mxu0
      %5689 = vmatprep.mubr.f32.mxu0 0.0
      %5690 = vmatmul.mubr.f32.gmra.mrb[0].mxu0 %v5520
      %v5691 = vpop.f32.mrb[0].mxu0
      %v5692 = vadd.f32 0.0, %v5691
      %v5693 = vpop.f32.mrb[0].mxu0
      %5694 = vmatprep.mubr.f32.mxu0 0.0
      %5695 = vmatmul.mubr.f32.gmra.mrb[0].mxu0 %v5523
      %v5696 = vpop.f32.mrb[0].mxu0
      %v5697 = vadd.f32 0.0, %v5696
      %v5698 = vpop.f32.mrb[0].mxu0
      %5699 = vmatprep.mubr.f32.mxu0 0.0
      %5700 = vmatmul.mubr.f32.gmra.mrb[0].mxu0 %v5526
      %v5701 = vpop.f32.mrb[0].mxu0
      %v5702 = vadd.f32 0.0, %v5701
      %v5703 = vpop.f32.mrb[0].mxu0
      %5704 = vmatprep.mubr.f32.mxu0 0.0
      %5705 = vmatmul.mubr.f32.gmra.mrb[0].mxu0 %v5529
      %v5706 = vpop.f32.mrb[0].mxu0
      %v5707 = vadd.f32 0.0, %v5706
      %v5708 = vpop.f32.mrb[0].mxu0
      %5709 = vmatprep.mubr.f32.mxu0 0.0
      %5710 = vmatmul.mubr.f32.gmra.mrb[0].mxu0 %v5532
      %v5711 = vpop.f32.mrb[0].mxu0
      %v5712 = vadd.f32 0.0, %v5711
      %v5713 = vpop.f32.mrb[0].mxu0
      %5714 = vmatprep.mubr.f32.mxu0 0.0
      %5715 = vmatmul.mubr.f32.gmra.mrb[0].mxu0 %v5535
      %v5716 = vpop.f32.mrb[0].mxu0
      %v5717 = vadd.f32 0.0, %v5716
      %v5718 = vpop.f32.mrb[0].mxu0
      %5719 = vmatprep.mubr.f32.mxu0 0.0
      %5720 = vmatmul.mubr.f32.gmra.mrb[0].mxu0 %v5538
      %v5721 = vpop.f32.mrb[0].mxu0
      %v5722 = vadd.f32 0.0, %v5721
      %v5723 = vpop.f32.mrb[0].mxu0
      %5724 = vmatprep.mubr.f32.mxu0 0.0
      %5725 = vmatmul.mubr.f32.gmra.mrb[0].mxu0 %v5541
      %v5726 = vpop.f32.mrb[0].mxu0
      %v5727 = vadd.f32 0.0, %v5726
      %v5728 = vpop.f32.mrb[0].mxu0
      %5729 = vmatprep.mubr.f32.mxu0 0.0
      %5730 = vmatmul.mubr.f32.gmra.mrb[0].mxu0 %v5544
      %v5731 = vpop.f32.mrb[0].mxu0
      %v5732 = vadd.f32 0.0, %v5731
      %v5733 = vpop.f32.mrb[0].mxu0
      %5734 = vmatprep.mubr.f32.mxu0 0.0
      %5735 = vmatmul.mubr.f32.gmra.mrb[0].mxu0 %v5547
      %v5736 = vpop.f32.mrb[0].mxu0
      %v5737 = vadd.f32 0.0, %v5736
      %v5738 = vpop.f32.mrb[0].mxu0
      %5739 = vmatprep.mubr.f32.mxu0 0.0
      %5740 = vmatmul.mubr.f32.gmra.mrb[0].mxu0 %v5550
      %v5741 = vpop.f32.mrb[0].mxu0
      %v5742 = vadd.f32 0.0, %v5741
      %v5743 = vpop.f32.mrb[0].mxu0
      %5744 = vmatprep.mubr.f32.mxu0 0.0
      %5745 = vmatmul.mubr.f32.gmra.mrb[0].mxu0 %v5553
      %v5746 = vpop.f32.mrb[0].mxu0
      %v5747 = vadd.f32 0.0, %v5746
      %v5748 = vpop.f32.mrb[0].mxu0
      %5749 = vmatprep.mubr.f32.mxu0 0.0
      %5750 = vmatmul.mubr.f32.gmra.mrb[0].mxu0 %v5556
      %v5751 = vpop.f32.mrb[0].mxu0
      %v5752 = vadd.f32 0.0, %v5751
      %v5753 = vpop.f32.mrb[0].mxu0
      %5754 = vmatprep.mubr.f32.mxu0 0.0
      %5755 = vmatmul.mubr.f32.gmra.mrb[0].mxu0 %v5559
      %v5756 = vpop.f32.mrb[0].mxu0
      %v5757 = vadd.f32 0.0, %v5756
      %v5758 = vpop.f32.mrb[0].mxu0
      %5759 = vmatprep.mubr.f32.mxu0 0.0
      %5760 = vmatmul.mubr.f32.gmra.mrb[0].mxu0 %v5562
      %v5761 = vpop.f32.mrb[0].mxu0
      %v5762 = vadd.f32 0.0, %v5761
      %v5763 = vpop.f32.mrb[0].mxu0
      %5764 = vmatprep.mubr.f32.mxu0 0.0
      %5765 = vmatmul.mubr.f32.gmra.mrb[0].mxu0 %v5565
      %v5766 = vpop.f32.mrb[0].mxu0
      %v5767 = vadd.f32 0.0, %v5766
      %v5768 = vpop.f32.mrb[0].mxu0
      %5769 = vmatprep.mubr.f32.mxu0 0.0
      %5770 = vmatmul.mubr.f32.gmra.mrb[0].mxu0 %v5568
      %v5771 = vpop.f32.mrb[0].mxu0
      %v5772 = vadd.f32 0.0, %v5771
      %v5773 = vpop.f32.mrb[0].mxu0
      %5774 = vmatprep.mubr.f32.mxu0 0.0
      %5775 = vmatmul.mubr.f32.gmra.mrb[0].mxu0 %v5571
      %v5776 = vpop.f32.mrb[0].mxu0
      %v5777 = vadd.f32 0.0, %v5776
      %v5778 = vpop.f32.mrb[0].mxu0
      %5779 = vmatprep.mubr.f32.mxu0 0.0
      %5780 = vmatmul.mubr.f32.gmra.mrb[0].mxu0 %v5574
      %v5781 = vpop.f32.mrb[0].mxu0
      %v5782 = vadd.f32 0.0, %v5781
      %v5783 = vpop.f32.mrb[0].mxu0
      %5784 = vmatprep.mubr.f32.mxu0 0.0
      %5785 = vmatmul.mubr.f32.gmra.mrb[0].mxu0 %v5577
      %v5786 = vpop.f32.mrb[0].mxu0
      %v5787 = vadd.f32 0.0, %v5786
      %v5788 = vpop.f32.mrb[0].mxu0
      %5789 = vmatprep.mubr.f32.mxu0 0.0
      %5790 = vmatmul.mubr.f32.gmra.mrb[0].mxu0 %v5580
      %v5791 = vpop.f32.mrb[0].mxu0
      %v5792 = vadd.f32 0.0, %v5791
      %v5793 = vpop.f32.mrb[0].mxu0
      %5794 = vmatprep.mubr.f32.mxu0 0.0
      %5795 = vmatmul.mubr.f32.gmra.mrb[0].mxu0 %v5583
      %v5796 = vpop.f32.mrb[0].mxu0
      %v5797 = vadd.f32 0.0, %v5796
      %v5798 = vpop.f32.mrb[0].mxu0
      %5799 = vmatprep.mubr.f32.mxu0 0.0
      %5800 = vmatmul.mubr.f32.gmra.mrb[0].mxu0 %v5586
      %v5801 = vpop.f32.mrb[0].mxu0
      %v5802 = vadd.f32 0.0, %v5801
      %v5803 = vpop.f32.mrb[0].mxu0
      %5804 = vmatprep.mubr.f32.mxu0 0.0
      %5805 = vmatmul.mubr.f32.gmra.mrb[0].mxu0 %v5589
      %v5806 = vpop.f32.mrb[0].mxu0
      %v5807 = vadd.f32 0.0, %v5806
      %v5808 = vpop.f32.mrb[0].mxu0
      %5809 = vmatprep.mubr.f32.mxu0 0.0
      %5810 = vmatmul.mubr.f32.gmra.mrb[0].mxu0 %v5592
      %v5811 = vpop.f32.mrb[0].mxu0
      %v5812 = vadd.f32 0.0, %v5811
      %v5813 = vpop.f32.mrb[0].mxu0
      %5814 = vmatprep.mubr.f32.mxu0 0.0
      %5815 = vmatmul.mubr.f32.gmra.mrb[0].mxu0 %v5595
      %v5816 = vpop.f32.mrb[0].mxu0
      %v5817 = vadd.f32 0.0, %v5816
      %v5818 = vpop.f32.mrb[0].mxu0
      %5819 = vmatprep.mubr.f32.mxu0 0.0
      %5820 = vmatmul.mubr.f32.gmra.mrb[0].mxu0 %v5598
      %v5821 = vpop.f32.mrb[0].mxu0
      %v5822 = vadd.f32 0.0, %v5821
      %v5823 = vpop.f32.mrb[0].mxu0
      %5824 = vdwg.mxu0
      %v5825 = vadd.f32 %v5438, %v5667
      %v5826 = vadd.f32 %v5439, %v5672
      %v5827 = vadd.f32 %v5440, %v5677
      %v5828 = vadd.f32 %v5441, %v5682
      %v5829 = vadd.f32 %v5442, %v5687
      %v5830 = vadd.f32 %v5443, %v5692
      %v5831 = vadd.f32 %v5444, %v5697
      %v5832 = vadd.f32 %v5445, %v5702
      %v5833 = vadd.f32 %v5446, %v5707
      %v5834 = vadd.f32 %v5447, %v5712
      %v5835 = vadd.f32 %v5448, %v5717
      %v5836 = vadd.f32 %v5449, %v5722
      %v5837 = vadd.f32 %v5450, %v5727
      %v5838 = vadd.f32 %v5451, %v5732
      %v5839 = vadd.f32 %v5452, %v5737
      %v5840 = vadd.f32 %v5453, %v5742
      %v5841 = vadd.f32 %v5454, %v5747
      %v5842 = vadd.f32 %v5455, %v5752
      %v5843 = vadd.f32 %v5456, %v5757
      %v5844 = vadd.f32 %v5457, %v5762
      %v5845 = vadd.f32 %v5458, %v5767
      %v5846 = vadd.f32 %v5459, %v5772
      %v5847 = vadd.f32 %v5460, %v5777
      %v5848 = vadd.f32 %v5461, %v5782
      %v5849 = vadd.f32 %v5462, %v5787
      %v5850 = vadd.f32 %v5463, %v5792
      %v5851 = vadd.f32 %v5464, %v5797
      %v5852 = vadd.f32 %v5465, %v5802
      %v5853 = vadd.f32 %v5466, %v5807
      %v5854 = vadd.f32 %v5467, %v5812
      %v5855 = vadd.f32 %v5468, %v5817
      %v5856 = vadd.f32 %v5469, %v5822
      %v5857 = vld [vmem:[%s3954 + $0x9] sm:$0xff]
      %v5858 = vld [vmem:[%s3954 + $0x11] sm:$0xff]
      %v5859 = vld [vmem:[%s3954 + $0x29] sm:$0xff]
      %v5860 = vld [vmem:[%s3954 + $0x31] sm:$0xff]
      %v5861 = vld [vmem:[%s3954 + $0x49] sm:$0xff]
      %v5862 = vld [vmem:[%s3954 + $0x51] sm:$0xff]
      %v5863 = vld [vmem:[%s3954 + $0x69] sm:$0xff]
      %v5864 = vld [vmem:[%s3954 + $0x71] sm:$0xff]
      %v5865 = vld [vmem:[%s3954 + $0x89] sm:$0xff]
      %v5866 = vld [vmem:[%s3954 + $0x91] sm:$0xff]
      %v5867 = vld [vmem:[%s3954 + $0xa9] sm:$0xff]
      %v5868 = vld [vmem:[%s3954 + $0xb1] sm:$0xff]
      %v5869 = vld [vmem:[%s3954 + $0xc9] sm:$0xff]
      %v5870 = vld [vmem:[%s3954 + $0xd1] sm:$0xff]
      %v5871 = vld [vmem:[%s3954 + $0xe9] sm:$0xff]
      %v5872 = vld [vmem:[%s3954 + $0xf1] sm:$0xff]
      %v5873 = vld [vmem:[%s3954 + $0x109] sm:$0xff]
      %v5874 = vld [vmem:[%s3954 + $0x111] sm:$0xff]
      %v5875 = vld [vmem:[%s3954 + $0x129] sm:$0xff]
      %v5876 = vld [vmem:[%s3954 + $0x131] sm:$0xff]
      %v5877 = vld [vmem:[%s3954 + $0x149] sm:$0xff]
      %v5878 = vld [vmem:[%s3954 + $0x151] sm:$0xff]
      %v5879 = vld [vmem:[%s3954 + $0x169] sm:$0xff]
      %v5880 = vld [vmem:[%s3954 + $0x171] sm:$0xff]
      %v5881 = vld [vmem:[%s3954 + $0x189] sm:$0xff]
      %v5882 = vld [vmem:[%s3954 + $0x191] sm:$0xff]
      %v5883 = vld [vmem:[%s3954 + $0x1a9] sm:$0xff]
      %v5884 = vld [vmem:[%s3954 + $0x1b1] sm:$0xff]
      %v5885 = vld [vmem:[%s3954 + $0x1c9] sm:$0xff]
      %v5886 = vld [vmem:[%s3954 + $0x1d1] sm:$0xff]
      %v5887 = vld [vmem:[%s3954 + $0x1e9] sm:$0xff]
      %v5888 = vld [vmem:[%s3954 + $0x1f1] sm:$0xff]
      %s5889 = scalar_lea.vmem %s3, 40
      %v5890 = vld [vmem:[%s5889] sm:$0xff]
      %v5892 = vsel %vm3881, %v5857, 0
      %v5895 = vsel %vm3881, %v5858, 0
      %v5898 = vsel %vm3881, %v5859, 0
      %v5901 = vsel %vm3881, %v5860, 0
      %v5904 = vsel %vm3881, %v5861, 0
      %v5907 = vsel %vm3881, %v5862, 0
      %v5910 = vsel %vm3881, %v5863, 0
      %v5913 = vsel %vm3881, %v5864, 0
      %v5916 = vsel %vm3881, %v5865, 0
      %v5919 = vsel %vm3881, %v5866, 0
      %v5922 = vsel %vm3881, %v5867, 0
      %v5925 = vsel %vm3881, %v5868, 0
      %v5928 = vsel %vm3881, %v5869, 0
      %v5931 = vsel %vm3881, %v5870, 0
      %v5934 = vsel %vm3881, %v5871, 0
      %v5937 = vsel %vm3881, %v5872, 0
      %v5940 = vsel %vm3881, %v5873, 0
      %v5943 = vsel %vm3881, %v5874, 0
      %v5946 = vsel %vm3881, %v5875, 0
      %v5949 = vsel %vm3881, %v5876, 0
      %v5952 = vsel %vm3881, %v5877, 0
      %v5955 = vsel %vm3881, %v5878, 0
      %v5958 = vsel %vm3881, %v5879, 0
      %v5961 = vsel %vm3881, %v5880, 0
      %v5964 = vsel %vm3881, %v5881, 0
      %v5967 = vsel %vm3881, %v5882, 0
      %v5970 = vsel %vm3881, %v5883, 0
      %v5973 = vsel %vm3881, %v5884, 0
      %v5976 = vsel %vm3881, %v5885, 0
      %v5979 = vsel %vm3881, %v5886, 0
      %v5982 = vsel %vm3881, %v5887, 0
      %v5985 = vsel %vm3881, %v5888, 0
      %5987 = vmatprep.subr.mxu0 0.0
      %5988 = vmatpush1.msra.mxu0 %v5890
      %5989 = vmatprep.subr.mxu0 0.0
      %5990 = vmatpush1.msra.mxu0 0.0
      %5991 = vmatprep.subr.mxu0 0.0
      %5992 = vmatpush1.msra.mxu0 0.0
      %5993 = vmatprep.subr.mxu0 0.0
      %5994 = vmatpush1.msra.mxu0 0.0
      %5995 = vmatprep.subr.mxu0 0.0
      %5996 = vmatpush1.msra.mxu0 0.0
      %5997 = vmatprep.subr.mxu0 0.0
      %5998 = vmatpush1.msra.mxu0 0.0
      %5999 = vmatprep.subr.mxu0 0.0
      %6000 = vmatpush1.msra.mxu0 0.0
      %6001 = vmatprep.subr.mxu0 0.0
      %6002 = vmatpush1.msra.mxu0 0.0
      %6003 = vmatprep.subr.mxu0 0.0
      %6004 = vmatpush1.msra.mxu0 0.0
      %6005 = vmatprep.subr.mxu0 0.0
      %6006 = vmatpush1.msra.mxu0 0.0
      %6007 = vmatprep.subr.mxu0 0.0
      %6008 = vmatpush1.msra.mxu0 0.0
      %6009 = vmatprep.subr.mxu0 0.0
      %6010 = vmatpush1.msra.mxu0 0.0
      %6011 = vmatprep.subr.mxu0 0.0
      %6012 = vmatpush1.msra.mxu0 0.0
      %6013 = vmatprep.subr.mxu0 0.0
      %6014 = vmatpush1.msra.mxu0 0.0
      %6015 = vmatprep.subr.mxu0 0.0
      %6016 = vmatpush1.msra.mxu0 0.0
      %6017 = vmatprep.subr.mxu0 0.0
      %6018 = vmatpush1.msra.mxu0 0.0
      %6019 = vmatprep.subr.mxu0 0.0
      %6020 = vmatpush1.msra.mxu0 0.0
      %6021 = vmatprep.subr.mxu0 0.0
      %6022 = vmatpush1.msra.mxu0 0.0
      %6023 = vmatprep.subr.mxu0 0.0
      %6024 = vmatpush1.msra.mxu0 0.0
      %6025 = vmatprep.subr.mxu0 0.0
      %6026 = vmatpush1.msra.mxu0 0.0
      %6027 = vmatprep.subr.mxu0 0.0
      %6028 = vmatpush1.msra.mxu0 0.0
      %6029 = vmatprep.subr.mxu0 0.0
      %6030 = vmatpush1.msra.mxu0 0.0
      %6031 = vmatprep.subr.mxu0 0.0
      %6032 = vmatpush1.msra.mxu0 0.0
      %6033 = vmatprep.subr.mxu0 0.0
      %6034 = vmatpush1.msra.mxu0 0.0
      %6035 = vmatprep.subr.mxu0 0.0
      %6036 = vmatpush1.msra.mxu0 0.0
      %6037 = vmatprep.subr.mxu0 0.0
      %6038 = vmatpush1.msra.mxu0 0.0
      %6039 = vmatprep.subr.mxu0 0.0
      %6040 = vmatpush1.msra.mxu0 0.0
      %6041 = vmatprep.subr.mxu0 0.0
      %6042 = vmatpush1.msra.mxu0 0.0
      %6043 = vmatprep.subr.mxu0 0.0
      %6044 = vmatpush1.msra.mxu0 0.0
      %6045 = vmatprep.subr.mxu0 0.0
      %6046 = vmatpush1.msra.mxu0 0.0
      %6047 = vmatprep.subr.mxu0 0.0
      %6048 = vmatpush1.msra.mxu0 0.0
      %6049 = vmatprep.subr.mxu0 0.0
      %6050 = vmatpush1.msra.mxu0 0.0
      %6051 = vmatprep.mubr.f32.mxu0 0.0
      %6052 = vmatmul.mubr.f32.gmra.mrb[0].mxu0 %v5892
      %v6053 = vpop.f32.mrb[0].mxu0
      %v6054 = vadd.f32 0.0, %v6053
      %v6055 = vpop.f32.mrb[0].mxu0
      %6056 = vmatprep.mubr.f32.mxu0 0.0
      %6057 = vmatmul.mubr.f32.gmra.mrb[0].mxu0 %v5895
      %v6058 = vpop.f32.mrb[0].mxu0
      %v6059 = vadd.f32 0.0, %v6058
      %v6060 = vpop.f32.mrb[0].mxu0
      %6061 = vmatprep.mubr.f32.mxu0 0.0
      %6062 = vmatmul.mubr.f32.gmra.mrb[0].mxu0 %v5898
      %v6063 = vpop.f32.mrb[0].mxu0
      %v6064 = vadd.f32 0.0, %v6063
      %v6065 = vpop.f32.mrb[0].mxu0
      %6066 = vmatprep.mubr.f32.mxu0 0.0
      %6067 = vmatmul.mubr.f32.gmra.mrb[0].mxu0 %v5901
      %v6068 = vpop.f32.mrb[0].mxu0
      %v6069 = vadd.f32 0.0, %v6068
      %v6070 = vpop.f32.mrb[0].mxu0
      %6071 = vmatprep.mubr.f32.mxu0 0.0
      %6072 = vmatmul.mubr.f32.gmra.mrb[0].mxu0 %v5904
      %v6073 = vpop.f32.mrb[0].mxu0
      %v6074 = vadd.f32 0.0, %v6073
      %v6075 = vpop.f32.mrb[0].mxu0
      %6076 = vmatprep.mubr.f32.mxu0 0.0
      %6077 = vmatmul.mubr.f32.gmra.mrb[0].mxu0 %v5907
      %v6078 = vpop.f32.mrb[0].mxu0
      %v6079 = vadd.f32 0.0, %v6078
      %v6080 = vpop.f32.mrb[0].mxu0
      %6081 = vmatprep.mubr.f32.mxu0 0.0
      %6082 = vmatmul.mubr.f32.gmra.mrb[0].mxu0 %v5910
      %v6083 = vpop.f32.mrb[0].mxu0
      %v6084 = vadd.f32 0.0, %v6083
      %v6085 = vpop.f32.mrb[0].mxu0
      %6086 = vmatprep.mubr.f32.mxu0 0.0
      %6087 = vmatmul.mubr.f32.gmra.mrb[0].mxu0 %v5913
      %v6088 = vpop.f32.mrb[0].mxu0
      %v6089 = vadd.f32 0.0, %v6088
      %v6090 = vpop.f32.mrb[0].mxu0
      %6091 = vmatprep.mubr.f32.mxu0 0.0
      %6092 = vmatmul.mubr.f32.gmra.mrb[0].mxu0 %v5916
      %v6093 = vpop.f32.mrb[0].mxu0
      %v6094 = vadd.f32 0.0, %v6093
      %v6095 = vpop.f32.mrb[0].mxu0
      %6096 = vmatprep.mubr.f32.mxu0 0.0
      %6097 = vmatmul.mubr.f32.gmra.mrb[0].mxu0 %v5919
      %v6098 = vpop.f32.mrb[0].mxu0
      %v6099 = vadd.f32 0.0, %v6098
      %v6100 = vpop.f32.mrb[0].mxu0
      %6101 = vmatprep.mubr.f32.mxu0 0.0
      %6102 = vmatmul.mubr.f32.gmra.mrb[0].mxu0 %v5922
      %v6103 = vpop.f32.mrb[0].mxu0
      %v6104 = vadd.f32 0.0, %v6103
      %v6105 = vpop.f32.mrb[0].mxu0
      %6106 = vmatprep.mubr.f32.mxu0 0.0
      %6107 = vmatmul.mubr.f32.gmra.mrb[0].mxu0 %v5925
      %v6108 = vpop.f32.mrb[0].mxu0
      %v6109 = vadd.f32 0.0, %v6108
      %v6110 = vpop.f32.mrb[0].mxu0
      %6111 = vmatprep.mubr.f32.mxu0 0.0
      %6112 = vmatmul.mubr.f32.gmra.mrb[0].mxu0 %v5928
      %v6113 = vpop.f32.mrb[0].mxu0
      %v6114 = vadd.f32 0.0, %v6113
      %v6115 = vpop.f32.mrb[0].mxu0
      %6116 = vmatprep.mubr.f32.mxu0 0.0
      %6117 = vmatmul.mubr.f32.gmra.mrb[0].mxu0 %v5931
      %v6118 = vpop.f32.mrb[0].mxu0
      %v6119 = vadd.f32 0.0, %v6118
      %v6120 = vpop.f32.mrb[0].mxu0
      %6121 = vmatprep.mubr.f32.mxu0 0.0
      %6122 = vmatmul.mubr.f32.gmra.mrb[0].mxu0 %v5934
      %v6123 = vpop.f32.mrb[0].mxu0
      %v6124 = vadd.f32 0.0, %v6123
      %v6125 = vpop.f32.mrb[0].mxu0
      %6126 = vmatprep.mubr.f32.mxu0 0.0
      %6127 = vmatmul.mubr.f32.gmra.mrb[0].mxu0 %v5937
      %v6128 = vpop.f32.mrb[0].mxu0
      %v6129 = vadd.f32 0.0, %v6128
      %v6130 = vpop.f32.mrb[0].mxu0
      %6131 = vmatprep.mubr.f32.mxu0 0.0
      %6132 = vmatmul.mubr.f32.gmra.mrb[0].mxu0 %v5940
      %v6133 = vpop.f32.mrb[0].mxu0
      %v6134 = vadd.f32 0.0, %v6133
      %v6135 = vpop.f32.mrb[0].mxu0
      %6136 = vmatprep.mubr.f32.mxu0 0.0
      %6137 = vmatmul.mubr.f32.gmra.mrb[0].mxu0 %v5943
      %v6138 = vpop.f32.mrb[0].mxu0
      %v6139 = vadd.f32 0.0, %v6138
      %v6140 = vpop.f32.mrb[0].mxu0
      %6141 = vmatprep.mubr.f32.mxu0 0.0
      %6142 = vmatmul.mubr.f32.gmra.mrb[0].mxu0 %v5946
      %v6143 = vpop.f32.mrb[0].mxu0
      %v6144 = vadd.f32 0.0, %v6143
      %v6145 = vpop.f32.mrb[0].mxu0
      %6146 = vmatprep.mubr.f32.mxu0 0.0
      %6147 = vmatmul.mubr.f32.gmra.mrb[0].mxu0 %v5949
      %v6148 = vpop.f32.mrb[0].mxu0
      %v6149 = vadd.f32 0.0, %v6148
      %v6150 = vpop.f32.mrb[0].mxu0
      %6151 = vmatprep.mubr.f32.mxu0 0.0
      %6152 = vmatmul.mubr.f32.gmra.mrb[0].mxu0 %v5952
      %v6153 = vpop.f32.mrb[0].mxu0
      %v6154 = vadd.f32 0.0, %v6153
      %v6155 = vpop.f32.mrb[0].mxu0
      %6156 = vmatprep.mubr.f32.mxu0 0.0
      %6157 = vmatmul.mubr.f32.gmra.mrb[0].mxu0 %v5955
      %v6158 = vpop.f32.mrb[0].mxu0
      %v6159 = vadd.f32 0.0, %v6158
      %v6160 = vpop.f32.mrb[0].mxu0
      %6161 = vmatprep.mubr.f32.mxu0 0.0
      %6162 = vmatmul.mubr.f32.gmra.mrb[0].mxu0 %v5958
      %v6163 = vpop.f32.mrb[0].mxu0
      %v6164 = vadd.f32 0.0, %v6163
      %v6165 = vpop.f32.mrb[0].mxu0
      %6166 = vmatprep.mubr.f32.mxu0 0.0
      %6167 = vmatmul.mubr.f32.gmra.mrb[0].mxu0 %v5961
      %v6168 = vpop.f32.mrb[0].mxu0
      %v6169 = vadd.f32 0.0, %v6168
      %v6170 = vpop.f32.mrb[0].mxu0
      %6171 = vmatprep.mubr.f32.mxu0 0.0
      %6172 = vmatmul.mubr.f32.gmra.mrb[0].mxu0 %v5964
      %v6173 = vpop.f32.mrb[0].mxu0
      %v6174 = vadd.f32 0.0, %v6173
      %v6175 = vpop.f32.mrb[0].mxu0
      %6176 = vmatprep.mubr.f32.mxu0 0.0
      %6177 = vmatmul.mubr.f32.gmra.mrb[0].mxu0 %v5967
      %v6178 = vpop.f32.mrb[0].mxu0
      %v6179 = vadd.f32 0.0, %v6178
      %v6180 = vpop.f32.mrb[0].mxu0
      %6181 = vmatprep.mubr.f32.mxu0 0.0
      %6182 = vmatmul.mubr.f32.gmra.mrb[0].mxu0 %v5970
      %v6183 = vpop.f32.mrb[0].mxu0
      %v6184 = vadd.f32 0.0, %v6183
      %v6185 = vpop.f32.mrb[0].mxu0
      %6186 = vmatprep.mubr.f32.mxu0 0.0
      %6187 = vmatmul.mubr.f32.gmra.mrb[0].mxu0 %v5973
      %v6188 = vpop.f32.mrb[0].mxu0
      %v6189 = vadd.f32 0.0, %v6188
      %v6190 = vpop.f32.mrb[0].mxu0
      %6191 = vmatprep.mubr.f32.mxu0 0.0
      %6192 = vmatmul.mubr.f32.gmra.mrb[0].mxu0 %v5976
      %v6193 = vpop.f32.mrb[0].mxu0
      %v6194 = vadd.f32 0.0, %v6193
      %v6195 = vpop.f32.mrb[0].mxu0
      %6196 = vmatprep.mubr.f32.mxu0 0.0
      %6197 = vmatmul.mubr.f32.gmra.mrb[0].mxu0 %v5979
      %v6198 = vpop.f32.mrb[0].mxu0
      %v6199 = vadd.f32 0.0, %v6198
      %v6200 = vpop.f32.mrb[0].mxu0
      %6201 = vmatprep.mubr.f32.mxu0 0.0
      %6202 = vmatmul.mubr.f32.gmra.mrb[0].mxu0 %v5982
      %v6203 = vpop.f32.mrb[0].mxu0
      %v6204 = vadd.f32 0.0, %v6203
      %v6205 = vpop.f32.mrb[0].mxu0
      %6206 = vmatprep.mubr.f32.mxu0 0.0
      %6207 = vmatmul.mubr.f32.gmra.mrb[0].mxu0 %v5985
      %v6208 = vpop.f32.mrb[0].mxu0
      %v6209 = vadd.f32 0.0, %v6208
      %v6210 = vpop.f32.mrb[0].mxu0
      %6211 = vdwg.mxu0
      %v6212 = vadd.f32 %v5825, %v6054
      %v6213 = vadd.f32 %v5826, %v6059
      %v6214 = vadd.f32 %v5827, %v6064
      %v6215 = vadd.f32 %v5828, %v6069
      %v6216 = vadd.f32 %v5829, %v6074
      %v6217 = vadd.f32 %v5830, %v6079
      %v6218 = vadd.f32 %v5831, %v6084
      %v6219 = vadd.f32 %v5832, %v6089
      %v6220 = vadd.f32 %v5833, %v6094
      %v6221 = vadd.f32 %v5834, %v6099
      %v6222 = vadd.f32 %v5835, %v6104
      %v6223 = vadd.f32 %v5836, %v6109
      %v6224 = vadd.f32 %v5837, %v6114
      %v6225 = vadd.f32 %v5838, %v6119
      %v6226 = vadd.f32 %v5839, %v6124
      %v6227 = vadd.f32 %v5840, %v6129
      %v6228 = vadd.f32 %v5841, %v6134
      %v6229 = vadd.f32 %v5842, %v6139
      %v6230 = vadd.f32 %v5843, %v6144
      %v6231 = vadd.f32 %v5844, %v6149
      %v6232 = vadd.f32 %v5845, %v6154
      %v6233 = vadd.f32 %v5846, %v6159
      %v6234 = vadd.f32 %v5847, %v6164
      %v6235 = vadd.f32 %v5848, %v6169
      %v6236 = vadd.f32 %v5849, %v6174
      %v6237 = vadd.f32 %v5850, %v6179
      %v6238 = vadd.f32 %v5851, %v6184
      %v6239 = vadd.f32 %v5852, %v6189
      %v6240 = vadd.f32 %v5853, %v6194
      %v6241 = vadd.f32 %v5854, %v6199
      %v6242 = vadd.f32 %v5855, %v6204
      %v6243 = vadd.f32 %v5856, %v6209
      %s6244 = scalar_lea.vmem [#allocation3], 64
      %v6245 = vld [vmem:[%s6244 + $0x7] sm:$0xff]
      %v6246 = vld [vmem:[%s6244 + $0xf] sm:$0xff]
      %v6247 = vld [vmem:[%s6244 + $0x27] sm:$0xff]
      %v6248 = vld [vmem:[%s6244 + $0x2f] sm:$0xff]
      %v6249 = vld [vmem:[%s6244 + $0x47] sm:$0xff]
      %v6250 = vld [vmem:[%s6244 + $0x4f] sm:$0xff]
      %v6251 = vld [vmem:[%s6244 + $0x67] sm:$0xff]
      %v6252 = vld [vmem:[%s6244 + $0x6f] sm:$0xff]
      %v6253 = vld [vmem:[%s6244 + $0x87] sm:$0xff]
      %v6254 = vld [vmem:[%s6244 + $0x8f] sm:$0xff]
      %v6255 = vld [vmem:[%s6244 + $0xa7] sm:$0xff]
      %v6256 = vld [vmem:[%s6244 + $0xaf] sm:$0xff]
      %v6257 = vld [vmem:[%s6244 + $0xc7] sm:$0xff]
      %v6258 = vld [vmem:[%s6244 + $0xcf] sm:$0xff]
      %v6259 = vld [vmem:[%s6244 + $0xe7] sm:$0xff]
      %v6260 = vld [vmem:[%s6244 + $0xef] sm:$0xff]
      %v6261 = vld [vmem:[%s6244 + $0x107] sm:$0xff]
      %v6262 = vld [vmem:[%s6244 + $0x10f] sm:$0xff]
      %v6263 = vld [vmem:[%s6244 + $0x127] sm:$0xff]
      %v6264 = vld [vmem:[%s6244 + $0x12f] sm:$0xff]
      %v6265 = vld [vmem:[%s6244 + $0x147] sm:$0xff]
      %v6266 = vld [vmem:[%s6244 + $0x14f] sm:$0xff]
      %v6267 = vld [vmem:[%s6244 + $0x167] sm:$0xff]
      %v6268 = vld [vmem:[%s6244 + $0x16f] sm:$0xff]
      %v6269 = vld [vmem:[%s6244 + $0x187] sm:$0xff]
      %v6270 = vld [vmem:[%s6244 + $0x18f] sm:$0xff]
      %v6271 = vld [vmem:[%s6244 + $0x1a7] sm:$0xff]
      %v6272 = vld [vmem:[%s6244 + $0x1af] sm:$0xff]
      %v6273 = vld [vmem:[%s6244 + $0x1c7] sm:$0xff]
      %v6274 = vld [vmem:[%s6244 + $0x1cf] sm:$0xff]
      %v6275 = vld [vmem:[%s6244 + $0x1e7] sm:$0xff]
      %v6276 = vld [vmem:[%s6244 + $0x1ef] sm:$0xff]
      %s6277 = scalar_lea.vmem %s3, 48
      %v6278 = vld [vmem:[%s6277] sm:$0xff]
      %v6280 = vsel %vm3881, %v6245, 0
      %v6283 = vsel %vm3881, %v6246, 0
      %v6286 = vsel %vm3881, %v6247, 0
      %v6289 = vsel %vm3881, %v6248, 0
      %v6292 = vsel %vm3881, %v6249, 0
      %v6295 = vsel %vm3881, %v6250, 0
      %v6298 = vsel %vm3881, %v6251, 0
      %v6301 = vsel %vm3881, %v6252, 0
      %v6304 = vsel %vm3881, %v6253, 0
      %v6307 = vsel %vm3881, %v6254, 0
      %v6310 = vsel %vm3881, %v6255, 0
      %v6313 = vsel %vm3881, %v6256, 0
      %v6316 = vsel %vm3881, %v6257, 0
      %v6319 = vsel %vm3881, %v6258, 0
      %v6322 = vsel %vm3881, %v6259, 0
      %v6325 = vsel %vm3881, %v6260, 0
      %v6328 = vsel %vm3881, %v6261, 0
      %v6331 = vsel %vm3881, %v6262, 0
      %v6334 = vsel %vm3881, %v6263, 0
      %v6337 = vsel %vm3881, %v6264, 0
      %v6340 = vsel %vm3881, %v6265, 0
      %v6343 = vsel %vm3881, %v6266, 0
      %v6346 = vsel %vm3881, %v6267, 0
      %v6349 = vsel %vm3881, %v6268, 0
      %v6352 = vsel %vm3881, %v6269, 0
      %v6355 = vsel %vm3881, %v6270, 0
      %v6358 = vsel %vm3881, %v6271, 0
      %v6361 = vsel %vm3881, %v6272, 0
      %v6364 = vsel %vm3881, %v6273, 0
      %v6367 = vsel %vm3881, %v6274, 0
      %v6370 = vsel %vm3881, %v6275, 0
      %v6373 = vsel %vm3881, %v6276, 0
      %6375 = vmatprep.subr.mxu0 0.0
      %6376 = vmatpush1.msra.mxu0 %v6278
      %6377 = vmatprep.subr.mxu0 0.0
      %6378 = vmatpush1.msra.mxu0 0.0
      %6379 = vmatprep.subr.mxu0 0.0
      %6380 = vmatpush1.msra.mxu0 0.0
      %6381 = vmatprep.subr.mxu0 0.0
      %6382 = vmatpush1.msra.mxu0 0.0
      %6383 = vmatprep.subr.mxu0 0.0
      %6384 = vmatpush1.msra.mxu0 0.0
      %6385 = vmatprep.subr.mxu0 0.0
      %6386 = vmatpush1.msra.mxu0 0.0
      %6387 = vmatprep.subr.mxu0 0.0
      %6388 = vmatpush1.msra.mxu0 0.0
      %6389 = vmatprep.subr.mxu0 0.0
      %6390 = vmatpush1.msra.mxu0 0.0
      %6391 = vmatprep.subr.mxu0 0.0
      %6392 = vmatpush1.msra.mxu0 0.0
      %6393 = vmatprep.subr.mxu0 0.0
      %6394 = vmatpush1.msra.mxu0 0.0
      %6395 = vmatprep.subr.mxu0 0.0
      %6396 = vmatpush1.msra.mxu0 0.0
      %6397 = vmatprep.subr.mxu0 0.0
      %6398 = vmatpush1.msra.mxu0 0.0
      %6399 = vmatprep.subr.mxu0 0.0
      %6400 = vmatpush1.msra.mxu0 0.0
      %6401 = vmatprep.subr.mxu0 0.0
      %6402 = vmatpush1.msra.mxu0 0.0
      %6403 = vmatprep.subr.mxu0 0.0
      %6404 = vmatpush1.msra.mxu0 0.0
      %6405 = vmatprep.subr.mxu0 0.0
      %6406 = vmatpush1.msra.mxu0 0.0
      %6407 = vmatprep.subr.mxu0 0.0
      %6408 = vmatpush1.msra.mxu0 0.0
      %6409 = vmatprep.subr.mxu0 0.0
      %6410 = vmatpush1.msra.mxu0 0.0
      %6411 = vmatprep.subr.mxu0 0.0
      %6412 = vmatpush1.msra.mxu0 0.0
      %6413 = vmatprep.subr.mxu0 0.0
      %6414 = vmatpush1.msra.mxu0 0.0
      %6415 = vmatprep.subr.mxu0 0.0
      %6416 = vmatpush1.msra.mxu0 0.0
      %6417 = vmatprep.subr.mxu0 0.0
      %6418 = vmatpush1.msra.mxu0 0.0
      %6419 = vmatprep.subr.mxu0 0.0
      %6420 = vmatpush1.msra.mxu0 0.0
      %6421 = vmatprep.subr.mxu0 0.0
      %6422 = vmatpush1.msra.mxu0 0.0
      %6423 = vmatprep.subr.mxu0 0.0
      %6424 = vmatpush1.msra.mxu0 0.0
      %6425 = vmatprep.subr.mxu0 0.0
      %6426 = vmatpush1.msra.mxu0 0.0
      %6427 = vmatprep.subr.mxu0 0.0
      %6428 = vmatpush1.msra.mxu0 0.0
      %6429 = vmatprep.subr.mxu0 0.0
      %6430 = vmatpush1.msra.mxu0 0.0
      %6431 = vmatprep.subr.mxu0 0.0
      %6432 = vmatpush1.msra.mxu0 0.0
      %6433 = vmatprep.subr.mxu0 0.0
      %6434 = vmatpush1.msra.mxu0 0.0
      %6435 = vmatprep.subr.mxu0 0.0
      %6436 = vmatpush1.msra.mxu0 0.0
      %6437 = vmatprep.subr.mxu0 0.0
      %6438 = vmatpush1.msra.mxu0 0.0
      %6439 = vmatprep.mubr.f32.mxu0 0.0
      %6440 = vmatmul.mubr.f32.gmra.mrb[0].mxu0 %v6280
      %v6441 = vpop.f32.mrb[0].mxu0
      %v6442 = vadd.f32 0.0, %v6441
      %v6443 = vpop.f32.mrb[0].mxu0
      %6444 = vmatprep.mubr.f32.mxu0 0.0
      %6445 = vmatmul.mubr.f32.gmra.mrb[0].mxu0 %v6283
      %v6446 = vpop.f32.mrb[0].mxu0
      %v6447 = vadd.f32 0.0, %v6446
      %v6448 = vpop.f32.mrb[0].mxu0
      %6449 = vmatprep.mubr.f32.mxu0 0.0
      %6450 = vmatmul.mubr.f32.gmra.mrb[0].mxu0 %v6286
      %v6451 = vpop.f32.mrb[0].mxu0
      %v6452 = vadd.f32 0.0, %v6451
      %v6453 = vpop.f32.mrb[0].mxu0
      %6454 = vmatprep.mubr.f32.mxu0 0.0
      %6455 = vmatmul.mubr.f32.gmra.mrb[0].mxu0 %v6289
      %v6456 = vpop.f32.mrb[0].mxu0
      %v6457 = vadd.f32 0.0, %v6456
      %v6458 = vpop.f32.mrb[0].mxu0
      %6459 = vmatprep.mubr.f32.mxu0 0.0
      %6460 = vmatmul.mubr.f32.gmra.mrb[0].mxu0 %v6292
      %v6461 = vpop.f32.mrb[0].mxu0
      %v6462 = vadd.f32 0.0, %v6461
      %v6463 = vpop.f32.mrb[0].mxu0
      %6464 = vmatprep.mubr.f32.mxu0 0.0
      %6465 = vmatmul.mubr.f32.gmra.mrb[0].mxu0 %v6295
      %v6466 = vpop.f32.mrb[0].mxu0
      %v6467 = vadd.f32 0.0, %v6466
      %v6468 = vpop.f32.mrb[0].mxu0
      %6469 = vmatprep.mubr.f32.mxu0 0.0
      %6470 = vmatmul.mubr.f32.gmra.mrb[0].mxu0 %v6298
      %v6471 = vpop.f32.mrb[0].mxu0
      %v6472 = vadd.f32 0.0, %v6471
      %v6473 = vpop.f32.mrb[0].mxu0
      %6474 = vmatprep.mubr.f32.mxu0 0.0
      %6475 = vmatmul.mubr.f32.gmra.mrb[0].mxu0 %v6301
      %v6476 = vpop.f32.mrb[0].mxu0
      %v6477 = vadd.f32 0.0, %v6476
      %v6478 = vpop.f32.mrb[0].mxu0
      %6479 = vmatprep.mubr.f32.mxu0 0.0
      %6480 = vmatmul.mubr.f32.gmra.mrb[0].mxu0 %v6304
      %v6481 = vpop.f32.mrb[0].mxu0
      %v6482 = vadd.f32 0.0, %v6481
      %v6483 = vpop.f32.mrb[0].mxu0
      %6484 = vmatprep.mubr.f32.mxu0 0.0
      %6485 = vmatmul.mubr.f32.gmra.mrb[0].mxu0 %v6307
      %v6486 = vpop.f32.mrb[0].mxu0
      %v6487 = vadd.f32 0.0, %v6486
      %v6488 = vpop.f32.mrb[0].mxu0
      %6489 = vmatprep.mubr.f32.mxu0 0.0
      %6490 = vmatmul.mubr.f32.gmra.mrb[0].mxu0 %v6310
      %v6491 = vpop.f32.mrb[0].mxu0
      %v6492 = vadd.f32 0.0, %v6491
      %v6493 = vpop.f32.mrb[0].mxu0
      %6494 = vmatprep.mubr.f32.mxu0 0.0
      %6495 = vmatmul.mubr.f32.gmra.mrb[0].mxu0 %v6313
      %v6496 = vpop.f32.mrb[0].mxu0
      %v6497 = vadd.f32 0.0, %v6496
      %v6498 = vpop.f32.mrb[0].mxu0
      %6499 = vmatprep.mubr.f32.mxu0 0.0
      %6500 = vmatmul.mubr.f32.gmra.mrb[0].mxu0 %v6316
      %v6501 = vpop.f32.mrb[0].mxu0
      %v6502 = vadd.f32 0.0, %v6501
      %v6503 = vpop.f32.mrb[0].mxu0
      %6504 = vmatprep.mubr.f32.mxu0 0.0
      %6505 = vmatmul.mubr.f32.gmra.mrb[0].mxu0 %v6319
      %v6506 = vpop.f32.mrb[0].mxu0
      %v6507 = vadd.f32 0.0, %v6506
      %v6508 = vpop.f32.mrb[0].mxu0
      %6509 = vmatprep.mubr.f32.mxu0 0.0
      %6510 = vmatmul.mubr.f32.gmra.mrb[0].mxu0 %v6322
      %v6511 = vpop.f32.mrb[0].mxu0
      %v6512 = vadd.f32 0.0, %v6511
      %v6513 = vpop.f32.mrb[0].mxu0
      %6514 = vmatprep.mubr.f32.mxu0 0.0
      %6515 = vmatmul.mubr.f32.gmra.mrb[0].mxu0 %v6325
      %v6516 = vpop.f32.mrb[0].mxu0
      %v6517 = vadd.f32 0.0, %v6516
      %v6518 = vpop.f32.mrb[0].mxu0
      %6519 = vmatprep.mubr.f32.mxu0 0.0
      %6520 = vmatmul.mubr.f32.gmra.mrb[0].mxu0 %v6328
      %v6521 = vpop.f32.mrb[0].mxu0
      %v6522 = vadd.f32 0.0, %v6521
      %v6523 = vpop.f32.mrb[0].mxu0
      %6524 = vmatprep.mubr.f32.mxu0 0.0
      %6525 = vmatmul.mubr.f32.gmra.mrb[0].mxu0 %v6331
      %v6526 = vpop.f32.mrb[0].mxu0
      %v6527 = vadd.f32 0.0, %v6526
      %v6528 = vpop.f32.mrb[0].mxu0
      %6529 = vmatprep.mubr.f32.mxu0 0.0
      %6530 = vmatmul.mubr.f32.gmra.mrb[0].mxu0 %v6334
      %v6531 = vpop.f32.mrb[0].mxu0
      %v6532 = vadd.f32 0.0, %v6531
      %v6533 = vpop.f32.mrb[0].mxu0
      %6534 = vmatprep.mubr.f32.mxu0 0.0
      %6535 = vmatmul.mubr.f32.gmra.mrb[0].mxu0 %v6337
      %v6536 = vpop.f32.mrb[0].mxu0
      %v6537 = vadd.f32 0.0, %v6536
      %v6538 = vpop.f32.mrb[0].mxu0
      %6539 = vmatprep.mubr.f32.mxu0 0.0
      %6540 = vmatmul.mubr.f32.gmra.mrb[0].mxu0 %v6340
      %v6541 = vpop.f32.mrb[0].mxu0
      %v6542 = vadd.f32 0.0, %v6541
      %v6543 = vpop.f32.mrb[0].mxu0
      %6544 = vmatprep.mubr.f32.mxu0 0.0
      %6545 = vmatmul.mubr.f32.gmra.mrb[0].mxu0 %v6343
      %v6546 = vpop.f32.mrb[0].mxu0
      %v6547 = vadd.f32 0.0, %v6546
      %v6548 = vpop.f32.mrb[0].mxu0
      %6549 = vmatprep.mubr.f32.mxu0 0.0
      %6550 = vmatmul.mubr.f32.gmra.mrb[0].mxu0 %v6346
      %v6551 = vpop.f32.mrb[0].mxu0
      %v6552 = vadd.f32 0.0, %v6551
      %v6553 = vpop.f32.mrb[0].mxu0
      %6554 = vmatprep.mubr.f32.mxu0 0.0
      %6555 = vmatmul.mubr.f32.gmra.mrb[0].mxu0 %v6349
      %v6556 = vpop.f32.mrb[0].mxu0
      %v6557 = vadd.f32 0.0, %v6556
      %v6558 = vpop.f32.mrb[0].mxu0
      %6559 = vmatprep.mubr.f32.mxu0 0.0
      %6560 = vmatmul.mubr.f32.gmra.mrb[0].mxu0 %v6352
      %v6561 = vpop.f32.mrb[0].mxu0
      %v6562 = vadd.f32 0.0, %v6561
      %v6563 = vpop.f32.mrb[0].mxu0
      %6564 = vmatprep.mubr.f32.mxu0 0.0
      %6565 = vmatmul.mubr.f32.gmra.mrb[0].mxu0 %v6355
      %v6566 = vpop.f32.mrb[0].mxu0
      %v6567 = vadd.f32 0.0, %v6566
      %v6568 = vpop.f32.mrb[0].mxu0
      %6569 = vmatprep.mubr.f32.mxu0 0.0
      %6570 = vmatmul.mubr.f32.gmra.mrb[0].mxu0 %v6358
      %v6571 = vpop.f32.mrb[0].mxu0
      %v6572 = vadd.f32 0.0, %v6571
      %v6573 = vpop.f32.mrb[0].mxu0
      %6574 = vmatprep.mubr.f32.mxu0 0.0
      %6575 = vmatmul.mubr.f32.gmra.mrb[0].mxu0 %v6361
      %v6576 = vpop.f32.mrb[0].mxu0
      %v6577 = vadd.f32 0.0, %v6576
      %v6578 = vpop.f32.mrb[0].mxu0
      %6579 = vmatprep.mubr.f32.mxu0 0.0
      %6580 = vmatmul.mubr.f32.gmra.mrb[0].mxu0 %v6364
      %v6581 = vpop.f32.mrb[0].mxu0
      %v6582 = vadd.f32 0.0, %v6581
      %v6583 = vpop.f32.mrb[0].mxu0
      %6584 = vmatprep.mubr.f32.mxu0 0.0
      %6585 = vmatmul.mubr.f32.gmra.mrb[0].mxu0 %v6367
      %v6586 = vpop.f32.mrb[0].mxu0
      %v6587 = vadd.f32 0.0, %v6586
      %v6588 = vpop.f32.mrb[0].mxu0
      %6589 = vmatprep.mubr.f32.mxu0 0.0
      %6590 = vmatmul.mubr.f32.gmra.mrb[0].mxu0 %v6370
      %v6591 = vpop.f32.mrb[0].mxu0
      %v6592 = vadd.f32 0.0, %v6591
      %v6593 = vpop.f32.mrb[0].mxu0
      %6594 = vmatprep.mubr.f32.mxu0 0.0
      %6595 = vmatmul.mubr.f32.gmra.mrb[0].mxu0 %v6373
      %v6596 = vpop.f32.mrb[0].mxu0
      %v6597 = vadd.f32 0.0, %v6596
      %v6598 = vpop.f32.mrb[0].mxu0
      %6599 = vdwg.mxu0
      %v6600 = vadd.f32 %v6212, %v6442
      %v6601 = vadd.f32 %v6213, %v6447
      %v6602 = vadd.f32 %v6214, %v6452
      %v6603 = vadd.f32 %v6215, %v6457
      %v6604 = vadd.f32 %v6216, %v6462
      %v6605 = vadd.f32 %v6217, %v6467
      %v6606 = vadd.f32 %v6218, %v6472
      %v6607 = vadd.f32 %v6219, %v6477
      %v6608 = vadd.f32 %v6220, %v6482
      %v6609 = vadd.f32 %v6221, %v6487
      %v6610 = vadd.f32 %v6222, %v6492
      %v6611 = vadd.f32 %v6223, %v6497
      %v6612 = vadd.f32 %v6224, %v6502
      %v6613 = vadd.f32 %v6225, %v6507
      %v6614 = vadd.f32 %v6226, %v6512
      %v6615 = vadd.f32 %v6227, %v6517
      %v6616 = vadd.f32 %v6228, %v6522
      %v6617 = vadd.f32 %v6229, %v6527
      %v6618 = vadd.f32 %v6230, %v6532
      %v6619 = vadd.f32 %v6231, %v6537
      %v6620 = vadd.f32 %v6232, %v6542
      %v6621 = vadd.f32 %v6233, %v6547
      %v6622 = vadd.f32 %v6234, %v6552
      %v6623 = vadd.f32 %v6235, %v6557
      %v6624 = vadd.f32 %v6236, %v6562
      %v6625 = vadd.f32 %v6237, %v6567
      %v6626 = vadd.f32 %v6238, %v6572
      %v6627 = vadd.f32 %v6239, %v6577
      %v6628 = vadd.f32 %v6240, %v6582
      %v6629 = vadd.f32 %v6241, %v6587
      %v6630 = vadd.f32 %v6242, %v6592
      %v6631 = vadd.f32 %v6243, %v6597
      %v6632 = vld [vmem:[%s6244 + $0x8] sm:$0xff]
      %v6633 = vld [vmem:[%s6244 + $0x10] sm:$0xff]
      %v6634 = vld [vmem:[%s6244 + $0x28] sm:$0xff]
      %v6635 = vld [vmem:[%s6244 + $0x30] sm:$0xff]
      %v6636 = vld [vmem:[%s6244 + $0x48] sm:$0xff]
      %v6637 = vld [vmem:[%s6244 + $0x50] sm:$0xff]
      %v6638 = vld [vmem:[%s6244 + $0x68] sm:$0xff]
      %v6639 = vld [vmem:[%s6244 + $0x70] sm:$0xff]
      %v6640 = vld [vmem:[%s6244 + $0x88] sm:$0xff]
      %v6641 = vld [vmem:[%s6244 + $0x90] sm:$0xff]
      %v6642 = vld [vmem:[%s6244 + $0xa8] sm:$0xff]
      %v6643 = vld [vmem:[%s6244 + $0xb0] sm:$0xff]
      %v6644 = vld [vmem:[%s6244 + $0xc8] sm:$0xff]
      %v6645 = vld [vmem:[%s6244 + $0xd0] sm:$0xff]
      %v6646 = vld [vmem:[%s6244 + $0xe8] sm:$0xff]
      %v6647 = vld [vmem:[%s6244 + $0xf0] sm:$0xff]
      %v6648 = vld [vmem:[%s6244 + $0x108] sm:$0xff]
      %v6649 = vld [vmem:[%s6244 + $0x110] sm:$0xff]
      %v6650 = vld [vmem:[%s6244 + $0x128] sm:$0xff]
      %v6651 = vld [vmem:[%s6244 + $0x130] sm:$0xff]
      %v6652 = vld [vmem:[%s6244 + $0x148] sm:$0xff]
      %v6653 = vld [vmem:[%s6244 + $0x150] sm:$0xff]
      %v6654 = vld [vmem:[%s6244 + $0x168] sm:$0xff]
      %v6655 = vld [vmem:[%s6244 + $0x170] sm:$0xff]
      %v6656 = vld [vmem:[%s6244 + $0x188] sm:$0xff]
      %v6657 = vld [vmem:[%s6244 + $0x190] sm:$0xff]
      %v6658 = vld [vmem:[%s6244 + $0x1a8] sm:$0xff]
      %v6659 = vld [vmem:[%s6244 + $0x1b0] sm:$0xff]
      %v6660 = vld [vmem:[%s6244 + $0x1c8] sm:$0xff]
      %v6661 = vld [vmem:[%s6244 + $0x1d0] sm:$0xff]
      %v6662 = vld [vmem:[%s6244 + $0x1e8] sm:$0xff]
      %v6663 = vld [vmem:[%s6244 + $0x1f0] sm:$0xff]
      %s6664 = scalar_lea.vmem %s3, 56
      %v6665 = vld [vmem:[%s6664] sm:$0xff]
      %v6667 = vsel %vm3881, %v6632, 0
      %v6670 = vsel %vm3881, %v6633, 0
      %v6673 = vsel %vm3881, %v6634, 0
      %v6676 = vsel %vm3881, %v6635, 0
      %v6679 = vsel %vm3881, %v6636, 0
      %v6682 = vsel %vm3881, %v6637, 0
      %v6685 = vsel %vm3881, %v6638, 0
      %v6688 = vsel %vm3881, %v6639, 0
      %v6691 = vsel %vm3881, %v6640, 0
      %v6694 = vsel %vm3881, %v6641, 0
      %v6697 = vsel %vm3881, %v6642, 0
      %v6700 = vsel %vm3881, %v6643, 0
      %v6703 = vsel %vm3881, %v6644, 0
      %v6706 = vsel %vm3881, %v6645, 0
      %v6709 = vsel %vm3881, %v6646, 0
      %v6712 = vsel %vm3881, %v6647, 0
      %v6715 = vsel %vm3881, %v6648, 0
      %v6718 = vsel %vm3881, %v6649, 0
      %v6721 = vsel %vm3881, %v6650, 0
      %v6724 = vsel %vm3881, %v6651, 0
      %v6727 = vsel %vm3881, %v6652, 0
      %v6730 = vsel %vm3881, %v6653, 0
      %v6733 = vsel %vm3881, %v6654, 0
      %v6736 = vsel %vm3881, %v6655, 0
      %v6739 = vsel %vm3881, %v6656, 0
      %v6742 = vsel %vm3881, %v6657, 0
      %v6745 = vsel %vm3881, %v6658, 0
      %v6748 = vsel %vm3881, %v6659, 0
      %v6751 = vsel %vm3881, %v6660, 0
      %v6754 = vsel %vm3881, %v6661, 0
      %v6757 = vsel %vm3881, %v6662, 0
      %v6760 = vsel %vm3881, %v6663, 0
      %6762 = vmatprep.subr.mxu0 0.0
      %6763 = vmatpush1.msra.mxu0 %v6665
      %6764 = vmatprep.subr.mxu0 0.0
      %6765 = vmatpush1.msra.mxu0 0.0
      %6766 = vmatprep.subr.mxu0 0.0
      %6767 = vmatpush1.msra.mxu0 0.0
      %6768 = vmatprep.subr.mxu0 0.0
      %6769 = vmatpush1.msra.mxu0 0.0
      %6770 = vmatprep.subr.mxu0 0.0
      %6771 = vmatpush1.msra.mxu0 0.0
      %6772 = vmatprep.subr.mxu0 0.0
      %6773 = vmatpush1.msra.mxu0 0.0
      %6774 = vmatprep.subr.mxu0 0.0
      %6775 = vmatpush1.msra.mxu0 0.0
      %6776 = vmatprep.subr.mxu0 0.0
      %6777 = vmatpush1.msra.mxu0 0.0
      %6778 = vmatprep.subr.mxu0 0.0
      %6779 = vmatpush1.msra.mxu0 0.0
      %6780 = vmatprep.subr.mxu0 0.0
      %6781 = vmatpush1.msra.mxu0 0.0
      %6782 = vmatprep.subr.mxu0 0.0
      %6783 = vmatpush1.msra.mxu0 0.0
      %6784 = vmatprep.subr.mxu0 0.0
      %6785 = vmatpush1.msra.mxu0 0.0
      %6786 = vmatprep.subr.mxu0 0.0
      %6787 = vmatpush1.msra.mxu0 0.0
      %6788 = vmatprep.subr.mxu0 0.0
      %6789 = vmatpush1.msra.mxu0 0.0
      %6790 = vmatprep.subr.mxu0 0.0
      %6791 = vmatpush1.msra.mxu0 0.0
      %6792 = vmatprep.subr.mxu0 0.0
      %6793 = vmatpush1.msra.mxu0 0.0
      %6794 = vmatprep.subr.mxu0 0.0
      %6795 = vmatpush1.msra.mxu0 0.0
      %6796 = vmatprep.subr.mxu0 0.0
      %6797 = vmatpush1.msra.mxu0 0.0
      %6798 = vmatprep.subr.mxu0 0.0
      %6799 = vmatpush1.msra.mxu0 0.0
      %6800 = vmatprep.subr.mxu0 0.0
      %6801 = vmatpush1.msra.mxu0 0.0
      %6802 = vmatprep.subr.mxu0 0.0
      %6803 = vmatpush1.msra.mxu0 0.0
      %6804 = vmatprep.subr.mxu0 0.0
      %6805 = vmatpush1.msra.mxu0 0.0
      %6806 = vmatprep.subr.mxu0 0.0
      %6807 = vmatpush1.msra.mxu0 0.0
      %6808 = vmatprep.subr.mxu0 0.0
      %6809 = vmatpush1.msra.mxu0 0.0
      %6810 = vmatprep.subr.mxu0 0.0
      %6811 = vmatpush1.msra.mxu0 0.0
      %6812 = vmatprep.subr.mxu0 0.0
      %6813 = vmatpush1.msra.mxu0 0.0
      %6814 = vmatprep.subr.mxu0 0.0
      %6815 = vmatpush1.msra.mxu0 0.0
      %6816 = vmatprep.subr.mxu0 0.0
      %6817 = vmatpush1.msra.mxu0 0.0
      %6818 = vmatprep.subr.mxu0 0.0
      %6819 = vmatpush1.msra.mxu0 0.0
      %6820 = vmatprep.subr.mxu0 0.0
      %6821 = vmatpush1.msra.mxu0 0.0
      %6822 = vmatprep.subr.mxu0 0.0
      %6823 = vmatpush1.msra.mxu0 0.0
      %6824 = vmatprep.subr.mxu0 0.0
      %6825 = vmatpush1.msra.mxu0 0.0
      %6826 = vmatprep.mubr.f32.mxu0 0.0
      %6827 = vmatmul.mubr.f32.gmra.mrb[0].mxu0 %v6667
      %v6828 = vpop.f32.mrb[0].mxu0
      %v6829 = vadd.f32 0.0, %v6828
      %v6830 = vpop.f32.mrb[0].mxu0
      %6831 = vmatprep.mubr.f32.mxu0 0.0
      %6832 = vmatmul.mubr.f32.gmra.mrb[0].mxu0 %v6670
      %v6833 = vpop.f32.mrb[0].mxu0
      %v6834 = vadd.f32 0.0, %v6833
      %v6835 = vpop.f32.mrb[0].mxu0
      %6836 = vmatprep.mubr.f32.mxu0 0.0
      %6837 = vmatmul.mubr.f32.gmra.mrb[0].mxu0 %v6673
      %v6838 = vpop.f32.mrb[0].mxu0
      %v6839 = vadd.f32 0.0, %v6838
      %v6840 = vpop.f32.mrb[0].mxu0
      %6841 = vmatprep.mubr.f32.mxu0 0.0
      %6842 = vmatmul.mubr.f32.gmra.mrb[0].mxu0 %v6676
      %v6843 = vpop.f32.mrb[0].mxu0
      %v6844 = vadd.f32 0.0, %v6843
      %v6845 = vpop.f32.mrb[0].mxu0
      %6846 = vmatprep.mubr.f32.mxu0 0.0
      %6847 = vmatmul.mubr.f32.gmra.mrb[0].mxu0 %v6679
      %v6848 = vpop.f32.mrb[0].mxu0
      %v6849 = vadd.f32 0.0, %v6848
      %v6850 = vpop.f32.mrb[0].mxu0
      %6851 = vmatprep.mubr.f32.mxu0 0.0
      %6852 = vmatmul.mubr.f32.gmra.mrb[0].mxu0 %v6682
      %v6853 = vpop.f32.mrb[0].mxu0
      %v6854 = vadd.f32 0.0, %v6853
      %v6855 = vpop.f32.mrb[0].mxu0
      %6856 = vmatprep.mubr.f32.mxu0 0.0
      %6857 = vmatmul.mubr.f32.gmra.mrb[0].mxu0 %v6685
      %v6858 = vpop.f32.mrb[0].mxu0
      %v6859 = vadd.f32 0.0, %v6858
      %v6860 = vpop.f32.mrb[0].mxu0
      %6861 = vmatprep.mubr.f32.mxu0 0.0
      %6862 = vmatmul.mubr.f32.gmra.mrb[0].mxu0 %v6688
      %v6863 = vpop.f32.mrb[0].mxu0
      %v6864 = vadd.f32 0.0, %v6863
      %v6865 = vpop.f32.mrb[0].mxu0
      %6866 = vmatprep.mubr.f32.mxu0 0.0
      %6867 = vmatmul.mubr.f32.gmra.mrb[0].mxu0 %v6691
      %v6868 = vpop.f32.mrb[0].mxu0
      %v6869 = vadd.f32 0.0, %v6868
      %v6870 = vpop.f32.mrb[0].mxu0
      %6871 = vmatprep.mubr.f32.mxu0 0.0
      %6872 = vmatmul.mubr.f32.gmra.mrb[0].mxu0 %v6694
      %v6873 = vpop.f32.mrb[0].mxu0
      %v6874 = vadd.f32 0.0, %v6873
      %v6875 = vpop.f32.mrb[0].mxu0
      %6876 = vmatprep.mubr.f32.mxu0 0.0
      %6877 = vmatmul.mubr.f32.gmra.mrb[0].mxu0 %v6697
      %v6878 = vpop.f32.mrb[0].mxu0
      %v6879 = vadd.f32 0.0, %v6878
      %v6880 = vpop.f32.mrb[0].mxu0
      %6881 = vmatprep.mubr.f32.mxu0 0.0
      %6882 = vmatmul.mubr.f32.gmra.mrb[0].mxu0 %v6700
      %v6883 = vpop.f32.mrb[0].mxu0
      %v6884 = vadd.f32 0.0, %v6883
      %v6885 = vpop.f32.mrb[0].mxu0
      %6886 = vmatprep.mubr.f32.mxu0 0.0
      %6887 = vmatmul.mubr.f32.gmra.mrb[0].mxu0 %v6703
      %v6888 = vpop.f32.mrb[0].mxu0
      %v6889 = vadd.f32 0.0, %v6888
      %v6890 = vpop.f32.mrb[0].mxu0
      %6891 = vmatprep.mubr.f32.mxu0 0.0
      %6892 = vmatmul.mubr.f32.gmra.mrb[0].mxu0 %v6706
      %v6893 = vpop.f32.mrb[0].mxu0
      %v6894 = vadd.f32 0.0, %v6893
      %v6895 = vpop.f32.mrb[0].mxu0
      %6896 = vmatprep.mubr.f32.mxu0 0.0
      %6897 = vmatmul.mubr.f32.gmra.mrb[0].mxu0 %v6709
      %v6898 = vpop.f32.mrb[0].mxu0
      %v6899 = vadd.f32 0.0, %v6898
      %v6900 = vpop.f32.mrb[0].mxu0
      %6901 = vmatprep.mubr.f32.mxu0 0.0
      %6902 = vmatmul.mubr.f32.gmra.mrb[0].mxu0 %v6712
      %v6903 = vpop.f32.mrb[0].mxu0
      %v6904 = vadd.f32 0.0, %v6903
      %v6905 = vpop.f32.mrb[0].mxu0
      %6906 = vmatprep.mubr.f32.mxu0 0.0
      %6907 = vmatmul.mubr.f32.gmra.mrb[0].mxu0 %v6715
      %v6908 = vpop.f32.mrb[0].mxu0
      %v6909 = vadd.f32 0.0, %v6908
      %v6910 = vpop.f32.mrb[0].mxu0
      %6911 = vmatprep.mubr.f32.mxu0 0.0
      %6912 = vmatmul.mubr.f32.gmra.mrb[0].mxu0 %v6718
      %v6913 = vpop.f32.mrb[0].mxu0
      %v6914 = vadd.f32 0.0, %v6913
      %v6915 = vpop.f32.mrb[0].mxu0
      %6916 = vmatprep.mubr.f32.mxu0 0.0
      %6917 = vmatmul.mubr.f32.gmra.mrb[0].mxu0 %v6721
      %v6918 = vpop.f32.mrb[0].mxu0
      %v6919 = vadd.f32 0.0, %v6918
      %v6920 = vpop.f32.mrb[0].mxu0
      %6921 = vmatprep.mubr.f32.mxu0 0.0
      %6922 = vmatmul.mubr.f32.gmra.mrb[0].mxu0 %v6724
      %v6923 = vpop.f32.mrb[0].mxu0
      %v6924 = vadd.f32 0.0, %v6923
      %v6925 = vpop.f32.mrb[0].mxu0
      %6926 = vmatprep.mubr.f32.mxu0 0.0
      %6927 = vmatmul.mubr.f32.gmra.mrb[0].mxu0 %v6727
      %v6928 = vpop.f32.mrb[0].mxu0
      %v6929 = vadd.f32 0.0, %v6928
      %v6930 = vpop.f32.mrb[0].mxu0
      %6931 = vmatprep.mubr.f32.mxu0 0.0
      %6932 = vmatmul.mubr.f32.gmra.mrb[0].mxu0 %v6730
      %v6933 = vpop.f32.mrb[0].mxu0
      %v6934 = vadd.f32 0.0, %v6933
      %v6935 = vpop.f32.mrb[0].mxu0
      %6936 = vmatprep.mubr.f32.mxu0 0.0
      %6937 = vmatmul.mubr.f32.gmra.mrb[0].mxu0 %v6733
      %v6938 = vpop.f32.mrb[0].mxu0
      %v6939 = vadd.f32 0.0, %v6938
      %v6940 = vpop.f32.mrb[0].mxu0
      %6941 = vmatprep.mubr.f32.mxu0 0.0
      %6942 = vmatmul.mubr.f32.gmra.mrb[0].mxu0 %v6736
      %v6943 = vpop.f32.mrb[0].mxu0
      %v6944 = vadd.f32 0.0, %v6943
      %v6945 = vpop.f32.mrb[0].mxu0
      %6946 = vmatprep.mubr.f32.mxu0 0.0
      %6947 = vmatmul.mubr.f32.gmra.mrb[0].mxu0 %v6739
      %v6948 = vpop.f32.mrb[0].mxu0
      %v6949 = vadd.f32 0.0, %v6948
      %v6950 = vpop.f32.mrb[0].mxu0
      %6951 = vmatprep.mubr.f32.mxu0 0.0
      %6952 = vmatmul.mubr.f32.gmra.mrb[0].mxu0 %v6742
      %v6953 = vpop.f32.mrb[0].mxu0
      %v6954 = vadd.f32 0.0, %v6953
      %v6955 = vpop.f32.mrb[0].mxu0
      %6956 = vmatprep.mubr.f32.mxu0 0.0
      %6957 = vmatmul.mubr.f32.gmra.mrb[0].mxu0 %v6745
      %v6958 = vpop.f32.mrb[0].mxu0
      %v6959 = vadd.f32 0.0, %v6958
      %v6960 = vpop.f32.mrb[0].mxu0
      %6961 = vmatprep.mubr.f32.mxu0 0.0
      %6962 = vmatmul.mubr.f32.gmra.mrb[0].mxu0 %v6748
      %v6963 = vpop.f32.mrb[0].mxu0
      %v6964 = vadd.f32 0.0, %v6963
      %v6965 = vpop.f32.mrb[0].mxu0
      %6966 = vmatprep.mubr.f32.mxu0 0.0
      %6967 = vmatmul.mubr.f32.gmra.mrb[0].mxu0 %v6751
      %v6968 = vpop.f32.mrb[0].mxu0
      %v6969 = vadd.f32 0.0, %v6968
      %v6970 = vpop.f32.mrb[0].mxu0
      %6971 = vmatprep.mubr.f32.mxu0 0.0
      %6972 = vmatmul.mubr.f32.gmra.mrb[0].mxu0 %v6754
      %v6973 = vpop.f32.mrb[0].mxu0
      %v6974 = vadd.f32 0.0, %v6973
      %v6975 = vpop.f32.mrb[0].mxu0
      %6976 = vmatprep.mubr.f32.mxu0 0.0
      %6977 = vmatmul.mubr.f32.gmra.mrb[0].mxu0 %v6757
      %v6978 = vpop.f32.mrb[0].mxu0
      %v6979 = vadd.f32 0.0, %v6978
      %v6980 = vpop.f32.mrb[0].mxu0
      %6981 = vmatprep.mubr.f32.mxu0 0.0
      %6982 = vmatmul.mubr.f32.gmra.mrb[0].mxu0 %v6760
      %v6983 = vpop.f32.mrb[0].mxu0
      %v6984 = vadd.f32 0.0, %v6983
      %v6985 = vpop.f32.mrb[0].mxu0
      %6986 = vdwg.mxu0
      %v6987 = vadd.f32 %v6600, %v6829
      %v6988 = vadd.f32 %v6601, %v6834
      %v6989 = vadd.f32 %v6602, %v6839
      %v6990 = vadd.f32 %v6603, %v6844
      %v6991 = vadd.f32 %v6604, %v6849
      %v6992 = vadd.f32 %v6605, %v6854
      %v6993 = vadd.f32 %v6606, %v6859
      %v6994 = vadd.f32 %v6607, %v6864
      %v6995 = vadd.f32 %v6608, %v6869
      %v6996 = vadd.f32 %v6609, %v6874
      %v6997 = vadd.f32 %v6610, %v6879
      %v6998 = vadd.f32 %v6611, %v6884
      %v6999 = vadd.f32 %v6612, %v6889
      %v7000 = vadd.f32 %v6613, %v6894
      %v7001 = vadd.f32 %v6614, %v6899
      %v7002 = vadd.f32 %v6615, %v6904
      %v7003 = vadd.f32 %v6616, %v6909
      %v7004 = vadd.f32 %v6617, %v6914
      %v7005 = vadd.f32 %v6618, %v6919
      %v7006 = vadd.f32 %v6619, %v6924
      %v7007 = vadd.f32 %v6620, %v6929
      %v7008 = vadd.f32 %v6621, %v6934
      %v7009 = vadd.f32 %v6622, %v6939
      %v7010 = vadd.f32 %v6623, %v6944
      %v7011 = vadd.f32 %v6624, %v6949
      %v7012 = vadd.f32 %v6625, %v6954
      %v7013 = vadd.f32 %v6626, %v6959
      %v7014 = vadd.f32 %v6627, %v6964
      %v7015 = vadd.f32 %v6628, %v6969
      %v7016 = vadd.f32 %v6629, %v6974
      %v7017 = vadd.f32 %v6630, %v6979
      %v7018 = vadd.f32 %v6631, %v6984
      %v7019 = vld [vmem:[%s6244 + $0x9] sm:$0xff]
      %v7020 = vld [vmem:[%s6244 + $0x11] sm:$0xff]
      %v7021 = vld [vmem:[%s6244 + $0x29] sm:$0xff]
      %v7022 = vld [vmem:[%s6244 + $0x31] sm:$0xff]
      %v7023 = vld [vmem:[%s6244 + $0x49] sm:$0xff]
      %v7024 = vld [vmem:[%s6244 + $0x51] sm:$0xff]
      %v7025 = vld [vmem:[%s6244 + $0x69] sm:$0xff]
      %v7026 = vld [vmem:[%s6244 + $0x71] sm:$0xff]
      %v7027 = vld [vmem:[%s6244 + $0x89] sm:$0xff]
      %v7028 = vld [vmem:[%s6244 + $0x91] sm:$0xff]
      %v7029 = vld [vmem:[%s6244 + $0xa9] sm:$0xff]
      %v7030 = vld [vmem:[%s6244 + $0xb1] sm:$0xff]
      %v7031 = vld [vmem:[%s6244 + $0xc9] sm:$0xff]
      %v7032 = vld [vmem:[%s6244 + $0xd1] sm:$0xff]
      %v7033 = vld [vmem:[%s6244 + $0xe9] sm:$0xff]
      %v7034 = vld [vmem:[%s6244 + $0xf1] sm:$0xff]
      %v7035 = vld [vmem:[%s6244 + $0x109] sm:$0xff]
      %v7036 = vld [vmem:[%s6244 + $0x111] sm:$0xff]
      %v7037 = vld [vmem:[%s6244 + $0x129] sm:$0xff]
      %v7038 = vld [vmem:[%s6244 + $0x131] sm:$0xff]
      %v7039 = vld [vmem:[%s6244 + $0x149] sm:$0xff]
      %v7040 = vld [vmem:[%s6244 + $0x151] sm:$0xff]
      %v7041 = vld [vmem:[%s6244 + $0x169] sm:$0xff]
      %v7042 = vld [vmem:[%s6244 + $0x171] sm:$0xff]
      %v7043 = vld [vmem:[%s6244 + $0x189] sm:$0xff]
      %v7044 = vld [vmem:[%s6244 + $0x191] sm:$0xff]
      %v7045 = vld [vmem:[%s6244 + $0x1a9] sm:$0xff]
      %v7046 = vld [vmem:[%s6244 + $0x1b1] sm:$0xff]
      %v7047 = vld [vmem:[%s6244 + $0x1c9] sm:$0xff]
      %v7048 = vld [vmem:[%s6244 + $0x1d1] sm:$0xff]
      %v7049 = vld [vmem:[%s6244 + $0x1e9] sm:$0xff]
      %v7050 = vld [vmem:[%s6244 + $0x1f1] sm:$0xff]
      %s7051 = scalar_lea.vmem %s3, 64
      %v7052 = vld [vmem:[%s7051] sm:$0xff]
      %v7054 = vsel %vm3881, %v7019, 0
      %v7057 = vsel %vm3881, %v7020, 0
      %v7060 = vsel %vm3881, %v7021, 0
      %v7063 = vsel %vm3881, %v7022, 0
      %v7066 = vsel %vm3881, %v7023, 0
      %v7069 = vsel %vm3881, %v7024, 0
      %v7072 = vsel %vm3881, %v7025, 0
      %v7075 = vsel %vm3881, %v7026, 0
      %v7078 = vsel %vm3881, %v7027, 0
      %v7081 = vsel %vm3881, %v7028, 0
      %v7084 = vsel %vm3881, %v7029, 0
      %v7087 = vsel %vm3881, %v7030, 0
      %v7090 = vsel %vm3881, %v7031, 0
      %v7093 = vsel %vm3881, %v7032, 0
      %v7096 = vsel %vm3881, %v7033, 0
      %v7099 = vsel %vm3881, %v7034, 0
      %v7102 = vsel %vm3881, %v7035, 0
      %v7105 = vsel %vm3881, %v7036, 0
      %v7108 = vsel %vm3881, %v7037, 0
      %v7111 = vsel %vm3881, %v7038, 0
      %v7114 = vsel %vm3881, %v7039, 0
      %v7117 = vsel %vm3881, %v7040, 0
      %v7120 = vsel %vm3881, %v7041, 0
      %v7123 = vsel %vm3881, %v7042, 0
      %v7126 = vsel %vm3881, %v7043, 0
      %v7129 = vsel %vm3881, %v7044, 0
      %v7132 = vsel %vm3881, %v7045, 0
      %v7135 = vsel %vm3881, %v7046, 0
      %v7138 = vsel %vm3881, %v7047, 0
      %v7141 = vsel %vm3881, %v7048, 0
      %v7144 = vsel %vm3881, %v7049, 0
      %v7147 = vsel %vm3881, %v7050, 0
      %7149 = vmatprep.subr.mxu0 0.0
      %7150 = vmatpush1.msra.mxu0 %v7052
      %7151 = vmatprep.subr.mxu0 0.0
      %7152 = vmatpush1.msra.mxu0 0.0
      %7153 = vmatprep.subr.mxu0 0.0
      %7154 = vmatpush1.msra.mxu0 0.0
      %7155 = vmatprep.subr.mxu0 0.0
      %7156 = vmatpush1.msra.mxu0 0.0
      %7157 = vmatprep.subr.mxu0 0.0
      %7158 = vmatpush1.msra.mxu0 0.0
      %7159 = vmatprep.subr.mxu0 0.0
      %7160 = vmatpush1.msra.mxu0 0.0
      %7161 = vmatprep.subr.mxu0 0.0
      %7162 = vmatpush1.msra.mxu0 0.0
      %7163 = vmatprep.subr.mxu0 0.0
      %7164 = vmatpush1.msra.mxu0 0.0
      %7165 = vmatprep.subr.mxu0 0.0
      %7166 = vmatpush1.msra.mxu0 0.0
      %7167 = vmatprep.subr.mxu0 0.0
      %7168 = vmatpush1.msra.mxu0 0.0
      %7169 = vmatprep.subr.mxu0 0.0
      %7170 = vmatpush1.msra.mxu0 0.0
      %7171 = vmatprep.subr.mxu0 0.0
      %7172 = vmatpush1.msra.mxu0 0.0
      %7173 = vmatprep.subr.mxu0 0.0
      %7174 = vmatpush1.msra.mxu0 0.0
      %7175 = vmatprep.subr.mxu0 0.0
      %7176 = vmatpush1.msra.mxu0 0.0
      %7177 = vmatprep.subr.mxu0 0.0
      %7178 = vmatpush1.msra.mxu0 0.0
      %7179 = vmatprep.subr.mxu0 0.0
      %7180 = vmatpush1.msra.mxu0 0.0
      %7181 = vmatprep.subr.mxu0 0.0
      %7182 = vmatpush1.msra.mxu0 0.0
      %7183 = vmatprep.subr.mxu0 0.0
      %7184 = vmatpush1.msra.mxu0 0.0
      %7185 = vmatprep.subr.mxu0 0.0
      %7186 = vmatpush1.msra.mxu0 0.0
      %7187 = vmatprep.subr.mxu0 0.0
      %7188 = vmatpush1.msra.mxu0 0.0
      %7189 = vmatprep.subr.mxu0 0.0
      %7190 = vmatpush1.msra.mxu0 0.0
      %7191 = vmatprep.subr.mxu0 0.0
      %7192 = vmatpush1.msra.mxu0 0.0
      %7193 = vmatprep.subr.mxu0 0.0
      %7194 = vmatpush1.msra.mxu0 0.0
      %7195 = vmatprep.subr.mxu0 0.0
      %7196 = vmatpush1.msra.mxu0 0.0
      %7197 = vmatprep.subr.mxu0 0.0
      %7198 = vmatpush1.msra.mxu0 0.0
      %7199 = vmatprep.subr.mxu0 0.0
      %7200 = vmatpush1.msra.mxu0 0.0
      %7201 = vmatprep.subr.mxu0 0.0
      %7202 = vmatpush1.msra.mxu0 0.0
      %7203 = vmatprep.subr.mxu0 0.0
      %7204 = vmatpush1.msra.mxu0 0.0
      %7205 = vmatprep.subr.mxu0 0.0
      %7206 = vmatpush1.msra.mxu0 0.0
      %7207 = vmatprep.subr.mxu0 0.0
      %7208 = vmatpush1.msra.mxu0 0.0
      %7209 = vmatprep.subr.mxu0 0.0
      %7210 = vmatpush1.msra.mxu0 0.0
      %7211 = vmatprep.subr.mxu0 0.0
      %7212 = vmatpush1.msra.mxu0 0.0
      %7213 = vmatprep.mubr.f32.mxu0 0.0
      %7214 = vmatmul.mubr.f32.gmra.mrb[0].mxu0 %v7054
      %v7215 = vpop.f32.mrb[0].mxu0
      %v7216 = vadd.f32 0.0, %v7215
      %v7217 = vpop.f32.mrb[0].mxu0
      %7218 = vmatprep.mubr.f32.mxu0 0.0
      %7219 = vmatmul.mubr.f32.gmra.mrb[0].mxu0 %v7057
      %v7220 = vpop.f32.mrb[0].mxu0
      %v7221 = vadd.f32 0.0, %v7220
      %v7222 = vpop.f32.mrb[0].mxu0
      %7223 = vmatprep.mubr.f32.mxu0 0.0
      %7224 = vmatmul.mubr.f32.gmra.mrb[0].mxu0 %v7060
      %v7225 = vpop.f32.mrb[0].mxu0
      %v7226 = vadd.f32 0.0, %v7225
      %v7227 = vpop.f32.mrb[0].mxu0
      %7228 = vmatprep.mubr.f32.mxu0 0.0
      %7229 = vmatmul.mubr.f32.gmra.mrb[0].mxu0 %v7063
      %v7230 = vpop.f32.mrb[0].mxu0
      %v7231 = vadd.f32 0.0, %v7230
      %v7232 = vpop.f32.mrb[0].mxu0
      %7233 = vmatprep.mubr.f32.mxu0 0.0
      %7234 = vmatmul.mubr.f32.gmra.mrb[0].mxu0 %v7066
      %v7235 = vpop.f32.mrb[0].mxu0
      %v7236 = vadd.f32 0.0, %v7235
      %v7237 = vpop.f32.mrb[0].mxu0
      %7238 = vmatprep.mubr.f32.mxu0 0.0
      %7239 = vmatmul.mubr.f32.gmra.mrb[0].mxu0 %v7069
      %v7240 = vpop.f32.mrb[0].mxu0
      %v7241 = vadd.f32 0.0, %v7240
      %v7242 = vpop.f32.mrb[0].mxu0
      %7243 = vmatprep.mubr.f32.mxu0 0.0
      %7244 = vmatmul.mubr.f32.gmra.mrb[0].mxu0 %v7072
      %v7245 = vpop.f32.mrb[0].mxu0
      %v7246 = vadd.f32 0.0, %v7245
      %v7247 = vpop.f32.mrb[0].mxu0
      %7248 = vmatprep.mubr.f32.mxu0 0.0
      %7249 = vmatmul.mubr.f32.gmra.mrb[0].mxu0 %v7075
      %v7250 = vpop.f32.mrb[0].mxu0
      %v7251 = vadd.f32 0.0, %v7250
      %v7252 = vpop.f32.mrb[0].mxu0
      %7253 = vmatprep.mubr.f32.mxu0 0.0
      %7254 = vmatmul.mubr.f32.gmra.mrb[0].mxu0 %v7078
      %v7255 = vpop.f32.mrb[0].mxu0
      %v7256 = vadd.f32 0.0, %v7255
      %v7257 = vpop.f32.mrb[0].mxu0
      %7258 = vmatprep.mubr.f32.mxu0 0.0
      %7259 = vmatmul.mubr.f32.gmra.mrb[0].mxu0 %v7081
      %v7260 = vpop.f32.mrb[0].mxu0
      %v7261 = vadd.f32 0.0, %v7260
      %v7262 = vpop.f32.mrb[0].mxu0
      %7263 = vmatprep.mubr.f32.mxu0 0.0
      %7264 = vmatmul.mubr.f32.gmra.mrb[0].mxu0 %v7084
      %v7265 = vpop.f32.mrb[0].mxu0
      %v7266 = vadd.f32 0.0, %v7265
      %v7267 = vpop.f32.mrb[0].mxu0
      %7268 = vmatprep.mubr.f32.mxu0 0.0
      %7269 = vmatmul.mubr.f32.gmra.mrb[0].mxu0 %v7087
      %v7270 = vpop.f32.mrb[0].mxu0
      %v7271 = vadd.f32 0.0, %v7270
      %v7272 = vpop.f32.mrb[0].mxu0
      %7273 = vmatprep.mubr.f32.mxu0 0.0
      %7274 = vmatmul.mubr.f32.gmra.mrb[0].mxu0 %v7090
      %v7275 = vpop.f32.mrb[0].mxu0
      %v7276 = vadd.f32 0.0, %v7275
      %v7277 = vpop.f32.mrb[0].mxu0
      %7278 = vmatprep.mubr.f32.mxu0 0.0
      %7279 = vmatmul.mubr.f32.gmra.mrb[0].mxu0 %v7093
      %v7280 = vpop.f32.mrb[0].mxu0
      %v7281 = vadd.f32 0.0, %v7280
      %v7282 = vpop.f32.mrb[0].mxu0
      %7283 = vmatprep.mubr.f32.mxu0 0.0
      %7284 = vmatmul.mubr.f32.gmra.mrb[0].mxu0 %v7096
      %v7285 = vpop.f32.mrb[0].mxu0
      %v7286 = vadd.f32 0.0, %v7285
      %v7287 = vpop.f32.mrb[0].mxu0
      %7288 = vmatprep.mubr.f32.mxu0 0.0
      %7289 = vmatmul.mubr.f32.gmra.mrb[0].mxu0 %v7099
      %v7290 = vpop.f32.mrb[0].mxu0
      %v7291 = vadd.f32 0.0, %v7290
      %v7292 = vpop.f32.mrb[0].mxu0
      %7293 = vmatprep.mubr.f32.mxu0 0.0
      %7294 = vmatmul.mubr.f32.gmra.mrb[0].mxu0 %v7102
      %v7295 = vpop.f32.mrb[0].mxu0
      %v7296 = vadd.f32 0.0, %v7295
      %v7297 = vpop.f32.mrb[0].mxu0
      %7298 = vmatprep.mubr.f32.mxu0 0.0
      %7299 = vmatmul.mubr.f32.gmra.mrb[0].mxu0 %v7105
      %v7300 = vpop.f32.mrb[0].mxu0
      %v7301 = vadd.f32 0.0, %v7300
      %v7302 = vpop.f32.mrb[0].mxu0
      %7303 = vmatprep.mubr.f32.mxu0 0.0
      %7304 = vmatmul.mubr.f32.gmra.mrb[0].mxu0 %v7108
      %v7305 = vpop.f32.mrb[0].mxu0
      %v7306 = vadd.f32 0.0, %v7305
      %v7307 = vpop.f32.mrb[0].mxu0
      %7308 = vmatprep.mubr.f32.mxu0 0.0
      %7309 = vmatmul.mubr.f32.gmra.mrb[0].mxu0 %v7111
      %v7310 = vpop.f32.mrb[0].mxu0
      %v7311 = vadd.f32 0.0, %v7310
      %v7312 = vpop.f32.mrb[0].mxu0
      %7313 = vmatprep.mubr.f32.mxu0 0.0
      %7314 = vmatmul.mubr.f32.gmra.mrb[0].mxu0 %v7114
      %v7315 = vpop.f32.mrb[0].mxu0
      %v7316 = vadd.f32 0.0, %v7315
      %v7317 = vpop.f32.mrb[0].mxu0
      %7318 = vmatprep.mubr.f32.mxu0 0.0
      %7319 = vmatmul.mubr.f32.gmra.mrb[0].mxu0 %v7117
      %v7320 = vpop.f32.mrb[0].mxu0
      %v7321 = vadd.f32 0.0, %v7320
      %v7322 = vpop.f32.mrb[0].mxu0
      %7323 = vmatprep.mubr.f32.mxu0 0.0
      %7324 = vmatmul.mubr.f32.gmra.mrb[0].mxu0 %v7120
      %v7325 = vpop.f32.mrb[0].mxu0
      %v7326 = vadd.f32 0.0, %v7325
      %v7327 = vpop.f32.mrb[0].mxu0
      %7328 = vmatprep.mubr.f32.mxu0 0.0
      %7329 = vmatmul.mubr.f32.gmra.mrb[0].mxu0 %v7123
      %v7330 = vpop.f32.mrb[0].mxu0
      %v7331 = vadd.f32 0.0, %v7330
      %v7332 = vpop.f32.mrb[0].mxu0
      %7333 = vmatprep.mubr.f32.mxu0 0.0
      %7334 = vmatmul.mubr.f32.gmra.mrb[0].mxu0 %v7126
      %v7335 = vpop.f32.mrb[0].mxu0
      %v7336 = vadd.f32 0.0, %v7335
      %v7337 = vpop.f32.mrb[0].mxu0
      %7338 = vmatprep.mubr.f32.mxu0 0.0
      %7339 = vmatmul.mubr.f32.gmra.mrb[0].mxu0 %v7129
      %v7340 = vpop.f32.mrb[0].mxu0
      %v7341 = vadd.f32 0.0, %v7340
      %v7342 = vpop.f32.mrb[0].mxu0
      %7343 = vmatprep.mubr.f32.mxu0 0.0
      %7344 = vmatmul.mubr.f32.gmra.mrb[0].mxu0 %v7132
      %v7345 = vpop.f32.mrb[0].mxu0
      %v7346 = vadd.f32 0.0, %v7345
      %v7347 = vpop.f32.mrb[0].mxu0
      %7348 = vmatprep.mubr.f32.mxu0 0.0
      %7349 = vmatmul.mubr.f32.gmra.mrb[0].mxu0 %v7135
      %v7350 = vpop.f32.mrb[0].mxu0
      %v7351 = vadd.f32 0.0, %v7350
      %v7352 = vpop.f32.mrb[0].mxu0
      %7353 = vmatprep.mubr.f32.mxu0 0.0
      %7354 = vmatmul.mubr.f32.gmra.mrb[0].mxu0 %v7138
      %v7355 = vpop.f32.mrb[0].mxu0
      %v7356 = vadd.f32 0.0, %v7355
      %v7357 = vpop.f32.mrb[0].mxu0
      %7358 = vmatprep.mubr.f32.mxu0 0.0
      %7359 = vmatmul.mubr.f32.gmra.mrb[0].mxu0 %v7141
      %v7360 = vpop.f32.mrb[0].mxu0
      %v7361 = vadd.f32 0.0, %v7360
      %v7362 = vpop.f32.mrb[0].mxu0
      %7363 = vmatprep.mubr.f32.mxu0 0.0
      %7364 = vmatmul.mubr.f32.gmra.mrb[0].mxu0 %v7144
      %v7365 = vpop.f32.mrb[0].mxu0
      %v7366 = vadd.f32 0.0, %v7365
      %v7367 = vpop.f32.mrb[0].mxu0
      %7368 = vmatprep.mubr.f32.mxu0 0.0
      %7369 = vmatmul.mubr.f32.gmra.mrb[0].mxu0 %v7147
      %v7370 = vpop.f32.mrb[0].mxu0
      %v7371 = vadd.f32 0.0, %v7370
      %v7372 = vpop.f32.mrb[0].mxu0
      %7373 = vdwg.mxu0
      %v7374 = vadd.f32 %v6987, %v7216
      %v7375 = vadd.f32 %v6988, %v7221
      %v7376 = vadd.f32 %v6989, %v7226
      %v7377 = vadd.f32 %v6990, %v7231
      %v7378 = vadd.f32 %v6991, %v7236
      %v7379 = vadd.f32 %v6992, %v7241
      %v7380 = vadd.f32 %v6993, %v7246
      %v7381 = vadd.f32 %v6994, %v7251
      %v7382 = vadd.f32 %v6995, %v7256
      %v7383 = vadd.f32 %v6996, %v7261
      %v7384 = vadd.f32 %v6997, %v7266
      %v7385 = vadd.f32 %v6998, %v7271
      %v7386 = vadd.f32 %v6999, %v7276
      %v7387 = vadd.f32 %v7000, %v7281
      %v7388 = vadd.f32 %v7001, %v7286
      %v7389 = vadd.f32 %v7002, %v7291
      %v7390 = vadd.f32 %v7003, %v7296
      %v7391 = vadd.f32 %v7004, %v7301
      %v7392 = vadd.f32 %v7005, %v7306
      %v7393 = vadd.f32 %v7006, %v7311
      %v7394 = vadd.f32 %v7007, %v7316
      %v7395 = vadd.f32 %v7008, %v7321
      %v7396 = vadd.f32 %v7009, %v7326
      %v7397 = vadd.f32 %v7010, %v7331
      %v7398 = vadd.f32 %v7011, %v7336
      %v7399 = vadd.f32 %v7012, %v7341
      %v7400 = vadd.f32 %v7013, %v7346
      %v7401 = vadd.f32 %v7014, %v7351
      %v7402 = vadd.f32 %v7015, %v7356
      %v7403 = vadd.f32 %v7016, %v7361
      %v7404 = vadd.f32 %v7017, %v7366
      %v7405 = vadd.f32 %v7018, %v7371
      %v7406 = vld [vmem:[%s4] sm:$0x1]
      %v7408 = vlaneseq
      %v7409 = vshrl.u32 %v7408, 7
      %v7410 = vsub.s32 0, %v7409
      %v7411 = vrot.slane %v7406, %v7410
      %v7413 = vadd.f32 %v7374, %v7411
      %v7414 = vadd.f32 %v7375, %v7411
      %v7415 = vadd.f32 %v7376, %v7411
      %v7416 = vadd.f32 %v7377, %v7411
      %v7417 = vadd.f32 %v7378, %v7411
      %v7418 = vadd.f32 %v7379, %v7411
      %v7419 = vadd.f32 %v7380, %v7411
      %v7420 = vadd.f32 %v7381, %v7411
      %v7421 = vadd.f32 %v7382, %v7411
      %v7422 = vadd.f32 %v7383, %v7411
      %v7423 = vadd.f32 %v7384, %v7411
      %v7424 = vadd.f32 %v7385, %v7411
      %v7425 = vadd.f32 %v7386, %v7411
      %v7426 = vadd.f32 %v7387, %v7411
      %v7427 = vadd.f32 %v7388, %v7411
      %v7428 = vadd.f32 %v7389, %v7411
      %v7429 = vadd.f32 %v7390, %v7411
      %v7430 = vadd.f32 %v7391, %v7411
      %v7431 = vadd.f32 %v7392, %v7411
      %v7432 = vadd.f32 %v7393, %v7411
      %v7433 = vadd.f32 %v7394, %v7411
      %v7434 = vadd.f32 %v7395, %v7411
      %v7435 = vadd.f32 %v7396, %v7411
      %v7436 = vadd.f32 %v7397, %v7411
      %v7437 = vadd.f32 %v7398, %v7411
      %v7438 = vadd.f32 %v7399, %v7411
      %v7439 = vadd.f32 %v7400, %v7411
      %v7440 = vadd.f32 %v7401, %v7411
      %v7441 = vadd.f32 %v7402, %v7411
      %v7442 = vadd.f32 %v7403, %v7411
      %v7443 = vadd.f32 %v7404, %v7411
      %v7444 = vadd.f32 %v7405, %v7411
      %v7445 = vmax.f32 %v7413, 0.0
      %v7446 = vmax.f32 %v7414, 0.0
      %v7447 = vmax.f32 %v7415, 0.0
      %v7448 = vmax.f32 %v7416, 0.0
      %v7449 = vmax.f32 %v7417, 0.0
      %v7450 = vmax.f32 %v7418, 0.0
      %v7451 = vmax.f32 %v7419, 0.0
      %v7452 = vmax.f32 %v7420, 0.0
      %v7453 = vmax.f32 %v7421, 0.0
      %v7454 = vmax.f32 %v7422, 0.0
      %v7455 = vmax.f32 %v7423, 0.0
      %v7456 = vmax.f32 %v7424, 0.0
      %v7457 = vmax.f32 %v7425, 0.0
      %v7458 = vmax.f32 %v7426, 0.0
      %v7459 = vmax.f32 %v7427, 0.0
      %v7460 = vmax.f32 %v7428, 0.0
      %v7461 = vmax.f32 %v7429, 0.0
      %v7462 = vmax.f32 %v7430, 0.0
      %v7463 = vmax.f32 %v7431, 0.0
      %v7464 = vmax.f32 %v7432, 0.0
      %v7465 = vmax.f32 %v7433, 0.0
      %v7466 = vmax.f32 %v7434, 0.0
      %v7467 = vmax.f32 %v7435, 0.0
      %v7468 = vmax.f32 %v7436, 0.0
      %v7469 = vmax.f32 %v7437, 0.0
      %v7470 = vmax.f32 %v7438, 0.0
      %v7471 = vmax.f32 %v7439, 0.0
      %v7472 = vmax.f32 %v7440, 0.0
      %v7473 = vmax.f32 %v7441, 0.0
      %v7474 = vmax.f32 %v7442, 0.0
      %v7475 = vmax.f32 %v7443, 0.0
      %v7476 = vmax.f32 %v7444, 0.0
      %7477 = vst.msk [vmem:[%s224] sm:$0xff] %vm3881, %v7445
      %7478 = vst.msk [vmem:[%s224 + $0x8] sm:$0xff] %vm3881, %v7446
      %7479 = vst.msk [vmem:[%s224 + $0x10] sm:$0xff] %vm3881, %v7447
      %7480 = vst.msk [vmem:[%s224 + $0x18] sm:$0xff] %vm3881, %v7448
      %7481 = vst.msk [vmem:[%s224 + $0x20] sm:$0xff] %vm3881, %v7449
      %7482 = vst.msk [vmem:[%s224 + $0x28] sm:$0xff] %vm3881, %v7450
      %7483 = vst.msk [vmem:[%s224 + $0x30] sm:$0xff] %vm3881, %v7451
      %7484 = vst.msk [vmem:[%s224 + $0x38] sm:$0xff] %vm3881, %v7452
      %7485 = vst.msk [vmem:[%s224 + $0x40] sm:$0xff] %vm3881, %v7453
      %7486 = vst.msk [vmem:[%s224 + $0x48] sm:$0xff] %vm3881, %v7454
      %7487 = vst.msk [vmem:[%s224 + $0x50] sm:$0xff] %vm3881, %v7455
      %7488 = vst.msk [vmem:[%s224 + $0x58] sm:$0xff] %vm3881, %v7456
      %7489 = vst.msk [vmem:[%s224 + $0x60] sm:$0xff] %vm3881, %v7457
      %7490 = vst.msk [vmem:[%s224 + $0x68] sm:$0xff] %vm3881, %v7458
      %7491 = vst.msk [vmem:[%s224 + $0x70] sm:$0xff] %vm3881, %v7459
      %7492 = vst.msk [vmem:[%s224 + $0x78] sm:$0xff] %vm3881, %v7460
      %7493 = vst.msk [vmem:[%s224 + $0x80] sm:$0xff] %vm3881, %v7461
      %7494 = vst.msk [vmem:[%s224 + $0x88] sm:$0xff] %vm3881, %v7462
      %7495 = vst.msk [vmem:[%s224 + $0x90] sm:$0xff] %vm3881, %v7463
      %7496 = vst.msk [vmem:[%s224 + $0x98] sm:$0xff] %vm3881, %v7464
      %7497 = vst.msk [vmem:[%s224 + $0xa0] sm:$0xff] %vm3881, %v7465
      %7498 = vst.msk [vmem:[%s224 + $0xa8] sm:$0xff] %vm3881, %v7466
      %7499 = vst.msk [vmem:[%s224 + $0xb0] sm:$0xff] %vm3881, %v7467
      %7500 = vst.msk [vmem:[%s224 + $0xb8] sm:$0xff] %vm3881, %v7468
      %7501 = vst.msk [vmem:[%s224 + $0xc0] sm:$0xff] %vm3881, %v7469
      %7502 = vst.msk [vmem:[%s224 + $0xc8] sm:$0xff] %vm3881, %v7470
      %7503 = vst.msk [vmem:[%s224 + $0xd0] sm:$0xff] %vm3881, %v7471
      %7504 = vst.msk [vmem:[%s224 + $0xd8] sm:$0xff] %vm3881, %v7472
      %7505 = vst.msk [vmem:[%s224 + $0xe0] sm:$0xff] %vm3881, %v7473
      %7506 = vst.msk [vmem:[%s224 + $0xe8] sm:$0xff] %vm3881, %v7474
      %7507 = vst.msk [vmem:[%s224 + $0xf0] sm:$0xff] %vm3881, %v7475
      %7508 = vst.msk [vmem:[%s224 + $0xf8] sm:$0xff] %vm3881, %v7476
      %p7509 = scmp.lt.s32.totalorder %s16, 1
      %s7510 = scalar_select %p7509, %s16, 1
      %s7511 = smul.addr %s7510, 32
      %s7512 = smul.addr %s7511, 8
      %s7513 = scalar_lea.vmem %s5, %s7512
      // Predicated region
      $region41: #{conv_block_forward.1} parent=39 // pred_check
        %p7514 = pneg %p144
      $region42: #{conv_block_forward.1} parent=39 // pred_check_branch
        %7516 = sbr.rel (%p7514) target = $region44
      $region43: #{conv_block_forward.1} parent=39 // pred_region
        _
      $region44: #{conv_block_forward.1} parent=39 // pred_fallthru
        _
    $region40: #{conv_block_forward.1} parent=5 // pred_fallthru
      _
    %p7517 = scmp.le.s32.totalorder 2, %s11
    // Predicated region
    $region45: #{conv_block_forward.1} parent=5 // pred_check
      %p7518 = pneg %p7517
    $region46: #{conv_block_forward.1} parent=5 // pred_check_branch
      %7520 = sbr.rel (%p7518) target = $region48
    $region47: #{conv_block_forward.1} parent=5 // pred_region
      %s7521 = ssub.s32 %s11, 2
      // Predicated region
      $region49: #{conv_block_forward.1} parent=47 // pred_check
        %p7522 = pneg %p150
      $region50: #{conv_block_forward.1} parent=47 // pred_check_branch
        %7524 = sbr.rel (%p7522) target = $region52
      $region51: #{conv_block_forward.1} parent=47 // pred_region
        %p7525 = scmp.lt.s32.totalorder %s17, 1
        %s7526 = scalar_select %p7525, %s17, 1
        %s7527 = smul.addr %s7526, 32
        %s7528 = smul.addr %s7527, 8
        %s7529 = scalar_lea.vmem %s5, %s7528
      $region52: #{conv_block_forward.1} parent=47 // pred_fallthru
        _
    $region48: #{conv_block_forward.1} parent=5 // pred_fallthru
      _
  $region6: #{conv_block_forward.1} parent=0 // loop_footer
    %s15 = sadd.s32 1, %s11
  $region7: #{conv_block_forward.1} parent=0 // loop_footer_branch
    %10 = sbr.rel target = $region3
  $region8: #{conv_block_forward.1} parent=0 // loop_exit
    _

</llo_original>
